<compile_context>
chip_gen: v7x
topology: tpu7x:2x2x1
jax: 0.10.0
libtpu: 0.0.40
codegen_flags: <defaults>
</compile_context>

<pallas_src>
import functools

import jax
import jax.numpy as jnp
import numpy as np
from jax import lax
from jax.experimental import pallas as pl
from jax.experimental.pallas import tpu as pltpu


# ---------------------------------------------------------------------------
# Pallas kernel: fused conv1 -> BN1 -> ReLU -> conv2 -> BN2 -> +res -> ReLU
# ---------------------------------------------------------------------------
def _basic_block_kernel(x_ref, w1_ref, b1_ref, w2_ref, b2_ref, o_ref, y1p_ref,
                        *, H, W, Cp):
    """Fused BasicBlock for one image.

    x_ref  : (H+2, W+2, Cp) f32   spatially-haloed, channel-padded input
    w*_ref : (9*Cp, Cp)     bf16  HWIO conv weights with BN scale folded in
    b*_ref : (1, Cp)        f32   folded BN bias (zero on padded channels)
    o_ref  : (H*W, Cp)      f32   output rows (NHWC, spatial flattened)
    y1p_ref: (H+2, W+2, Cp) f32   VMEM scratch: conv1 output with zero halo
    """

    def conv3x3(patch_at, w_ref):
        # 9-tap on-chip im2col matmul, bf16 operands, f32 accumulation (MXU).
        acc = None
        for t in range(9):
            dy, dx = divmod(t, 3)
            p = patch_at(dy, dx).astype(jnp.bfloat16)
            y = jnp.dot(p, w_ref[pl.ds(t * Cp, Cp), :],
                        preferred_element_type=jnp.float32)
            acc = y if acc is None else acc + y
        return acc

    def x_patch(dy, dx):
        return x_ref[pl.ds(dy, H), pl.ds(dx, W), :].reshape(H * W, Cp)

    def y1_patch(dy, dx):
        return y1p_ref[pl.ds(dy, H), pl.ds(dx, W), :].reshape(H * W, Cp)

    # conv1 -> BN1 (bias only; scale folded into w1) -> ReLU.
    y1 = jnp.maximum(conv3x3(x_patch, w1_ref) + b1_ref[...], 0.0)

    # Stash with a zero halo so conv2's "same" padding is just shifted slices.
    y1p_ref[...] = jnp.zeros_like(y1p_ref)
    y1p_ref[pl.ds(1, H), pl.ds(1, W), :] = y1.reshape(H, W, Cp)

    # conv2 -> BN2 -> + residual (read from the resident input tile) -> ReLU.
    res = x_ref[pl.ds(1, H), pl.ds(1, W), :].reshape(H * W, Cp)
    y2 = conv3x3(y1_patch, w2_ref) + b2_ref[...] + res
    o_ref[...] = jnp.maximum(y2, 0.0).astype(o_ref.dtype)


# ---------------------------------------------------------------------------
# Wrapper: layout glue (pad channels / halo, fold BN into weights) + pallas_call
# ---------------------------------------------------------------------------
def _round_up(x, m):
    return (x + m - 1) // m * m


def _fold_conv_bn(w_hwio, scale, bias, Cp):
    """Fold BN scale into HWIO weights; zero-pad channels to Cp; flatten."""
    kh, kw, cin, cout = w_hwio.shape
    w = w_hwio.astype(jnp.float32) * scale.astype(jnp.float32)[None, None, None, :]
    w = jnp.pad(w, ((0, 0), (0, 0), (0, Cp - cin), (0, Cp - cout)))
    w = w.reshape(kh * kw * Cp, Cp).astype(jnp.bfloat16)
    b = jnp.pad(bias.astype(jnp.float32), (0, Cp - cout)).reshape(1, Cp)
    return w, b


def basic_block_forward(x_nchw, params):
    """out = relu(bn2(conv2(relu(bn1(conv1(x))))) + x), stride=1, no downsample."""
    N, C, H, W = x_nchw.shape
    Cp = _round_up(max(C, 128), 128)          # lane-dense channel padding
    Hp, Wp = H + 2, W + 2

    # NCHW -> NHWC; zero-pad: 1-px spatial halo ("same" conv) + channels -> Cp.
    x = jnp.transpose(x_nchw, (0, 2, 3, 1)).astype(jnp.float32)
    x_pad = jnp.pad(x, ((0, 0), (1, 1), (1, 1), (0, Cp - C)))

    w1, b1 = _fold_conv_bn(params["w1"], params["s1"], params["b1"], Cp)
    w2, b2 = _fold_conv_bn(params["w2"], params["s2"], params["b2"], Cp)

    kernel = functools.partial(_basic_block_kernel, H=H, W=W, Cp=Cp)

    out = pl.pallas_call(
        kernel,
        out_shape=jax.ShapeDtypeStruct((N, H * W, Cp), jnp.float32),
        grid=(N,),
        in_specs=[
            pl.BlockSpec((None, Hp, Wp, Cp), lambda n: (n, 0, 0, 0)),
            pl.BlockSpec((9 * Cp, Cp), lambda n: (0, 0)),
            pl.BlockSpec((1, Cp), lambda n: (0, 0)),
            pl.BlockSpec((9 * Cp, Cp), lambda n: (0, 0)),
            pl.BlockSpec((1, Cp), lambda n: (0, 0)),
        ],
        out_specs=pl.BlockSpec((None, H * W, Cp), lambda n: (n, 0, 0)),
        scratch_shapes=[pltpu.VMEM((Hp, Wp, Cp), jnp.float32)],
        compiler_params=pltpu.CompilerParams(
            dimension_semantics=("parallel",)),
    )(x_pad, w1, b1, w2, b2)

    out = out.reshape(N, H, W, Cp)[..., :C]                       # drop padding
    return jnp.transpose(out, (0, 3, 1, 2)).astype(x_nchw.dtype)  # NHWC -> NCHW


# ---------------------------------------------------------------------------
# BasicBlock parameters (deterministic, synthetic)
# ---------------------------------------------------------------------------
def make_basic_block_params(key, inplanes, planes, dtype=jnp.float32):
    eps = 1e-5
    ks = jax.random.split(key, 10)

    def conv_w(k, cin, cout):
        # PyTorch Conv2d weight is OIHW; convert to HWIO.
        w = 0.1 * jax.random.normal(k, (cout, cin, 3, 3), dtype)
        return jnp.transpose(w, (2, 3, 1, 0))

    def bn_fold(kg, kb, km, kv, c):
        gamma = 1.0 + 0.1 * jax.random.normal(kg, (c,), dtype)
        beta = 0.1 * jax.random.normal(kb, (c,), dtype)
        mean = 0.1 * jax.random.normal(km, (c,), dtype)
        var = 1.0 + jnp.abs(0.1 * jax.random.normal(kv, (c,), dtype))
        scale = gamma / jnp.sqrt(var + eps)
        bias = beta - mean * scale
        return scale, bias

    w1 = conv_w(ks[0], inplanes, planes)
    s1, b1 = bn_fold(ks[1], ks[2], ks[3], ks[4], planes)
    w2 = conv_w(ks[5], planes, planes)
    s2, b2 = bn_fold(ks[6], ks[7], ks[8], ks[9], planes)
    return dict(w1=w1, s1=s1, b1=b1, w2=w2, s2=s2, b2=b2)


# ---------------------------------------------------------------------------
# Pure-JAX f32 reference (lax.conv) for correctness check
# ---------------------------------------------------------------------------
def _ref_forward(x_nchw, params):
    def conv(x, w_hwio):
        return lax.conv_general_dilated(
            x, w_hwio, window_strides=(1, 1), padding="SAME",
            dimension_numbers=("NCHW", "HWIO", "NCHW"))

    def bn(y, s, b):
        return y * s[None, :, None, None] + b[None, :, None, None]

    out = jnp.maximum(bn(conv(x_nchw, params["w1"]), params["s1"], params["b1"]), 0.0)
    out = bn(conv(out, params["w2"]), params["s2"], params["b2"]) + x_nchw
    return jnp.maximum(out, 0.0)


if __name__ == "__main__":
    key = jax.random.PRNGKey(0)
    kx, kp = jax.random.split(key)

    # BasicBlock(inplanes=4, planes=4), input NCHW = (2, 4, 16, 16)
    inplanes = planes = 4
    x = jax.random.normal(kx, (2, inplanes, 16, 16), jnp.float32)
    params = make_basic_block_params(kp, inplanes, planes)

    out = basic_block_forward(x, params)
    out = jax.block_until_ready(out)

    ref = jax.block_until_ready(_ref_forward(x, params))
    # Kernel uses bf16 MXU operands (f32 accumulation) vs. an all-f32 reference,
    # so compare at bf16-appropriate tolerances (expected error ~1e-3).
    np.testing.assert_allclose(np.asarray(out), np.asarray(ref),
                               rtol=3e-2, atol=3e-2)
    print("KERNEL_OK")
</pallas_src>

<mosaic_0001>
module attributes {stable_mosaic.version = 11 : i64} {
  func.func @_basic_block_kernel(%arg0: i32, %arg1: memref<1x18x18x128xf32, #tpu.memory_space<vmem>>, %arg2: memref<1152x128xbf16, #tpu.memory_space<vmem>>, %arg3: memref<1x128xf32, #tpu.memory_space<vmem>>, %arg4: memref<1152x128xbf16, #tpu.memory_space<vmem>>, %arg5: memref<1x128xf32, #tpu.memory_space<vmem>>, %arg6: memref<1x256x128xf32, #tpu.memory_space<vmem>>, %arg7: memref<18x18x128xf32, #tpu.memory_space<vmem>>) attributes {dimension_semantics = [#tpu.dimension_semantics<parallel>], iteration_bounds = array<i64: 2>, scalar_prefetch = 0 : i64, scratch_operands = 1 : i64, tpu.core_type = #tpu.core_type<tc>, window_params = [{transform_indices = @transform_0, window_bounds = array<i64: 1, 18, 18, 128>}, {pipeline_mode = #tpu.pipeline_mode<synchronous>, transform_indices = @transform_1, window_bounds = array<i64: 1152, 128>}, {pipeline_mode = #tpu.pipeline_mode<synchronous>, transform_indices = @transform_2, window_bounds = array<i64: 1, 128>}, {pipeline_mode = #tpu.pipeline_mode<synchronous>, transform_indices = @transform_3, window_bounds = array<i64: 1152, 128>}, {pipeline_mode = #tpu.pipeline_mode<synchronous>, transform_indices = @transform_4, window_bounds = array<i64: 1, 128>}, {transform_indices = @transform_5, window_bounds = array<i64: 1, 256, 128>}]} {
    %c0 = arith.constant 0 : index
    %c0_0 = arith.constant 0 : index
    %c0_1 = arith.constant 0 : index
    %c0_2 = arith.constant 0 : index
    %0 = vector.load %arg1[%c0, %c0_0, %c0_1, %c0_2] : memref<1x18x18x128xf32, #tpu.memory_space<vmem>>, vector<1x16x16x128xf32>
    %1 = vector.shape_cast %0 : vector<1x16x16x128xf32> to vector<16x16x128xf32>
    %2 = vector.shape_cast %1 : vector<16x16x128xf32> to vector<256x128xf32>
    %3 = arith.truncf %2 : vector<256x128xf32> to vector<256x128xbf16>
    %c0_3 = arith.constant 0 : index
    %c0_4 = arith.constant 0 : index
    %4 = vector.load %arg2[%c0_3, %c0_4] : memref<1152x128xbf16, #tpu.memory_space<vmem>>, vector<128x128xbf16>
    %cst = arith.constant dense<0.000000e+00> : vector<256x128xf32>
    %5 = tpu.matmul %3, %4, %cst {dimension_numbers = #tpu.dot_dimension_numbers<[1], [0], [0], [1], [0, 0, 1, 1], [], []>} : vector<256x128xbf16>, vector<128x128xbf16>, vector<256x128xf32> -> vector<256x128xf32>
    %c0_5 = arith.constant 0 : index
    %c0_6 = arith.constant 0 : index
    %c1 = arith.constant 1 : index
    %c0_7 = arith.constant 0 : index
    %6 = vector.load %arg1[%c0_5, %c0_6, %c1, %c0_7] : memref<1x18x18x128xf32, #tpu.memory_space<vmem>>, vector<1x16x16x128xf32>
    %7 = vector.shape_cast %6 : vector<1x16x16x128xf32> to vector<16x16x128xf32>
    %8 = vector.shape_cast %7 : vector<16x16x128xf32> to vector<256x128xf32>
    %9 = arith.truncf %8 : vector<256x128xf32> to vector<256x128xbf16>
    %c128 = arith.constant 128 : index
    %c0_8 = arith.constant 0 : index
    %10 = vector.load %arg2[%c128, %c0_8] : memref<1152x128xbf16, #tpu.memory_space<vmem>>, vector<128x128xbf16>
    %cst_9 = arith.constant dense<0.000000e+00> : vector<256x128xf32>
    %11 = tpu.matmul %9, %10, %cst_9 {dimension_numbers = #tpu.dot_dimension_numbers<[1], [0], [0], [1], [0, 0, 1, 1], [], []>} : vector<256x128xbf16>, vector<128x128xbf16>, vector<256x128xf32> -> vector<256x128xf32>
    %12 = arith.addf %5, %11 : vector<256x128xf32>
    %c0_10 = arith.constant 0 : index
    %c0_11 = arith.constant 0 : index
    %c2 = arith.constant 2 : index
    %c0_12 = arith.constant 0 : index
    %13 = vector.load %arg1[%c0_10, %c0_11, %c2, %c0_12] : memref<1x18x18x128xf32, #tpu.memory_space<vmem>>, vector<1x16x16x128xf32>
    %14 = vector.shape_cast %13 : vector<1x16x16x128xf32> to vector<16x16x128xf32>
    %15 = vector.shape_cast %14 : vector<16x16x128xf32> to vector<256x128xf32>
    %16 = arith.truncf %15 : vector<256x128xf32> to vector<256x128xbf16>
    %c256 = arith.constant 256 : index
    %c0_13 = arith.constant 0 : index
    %17 = vector.load %arg2[%c256, %c0_13] : memref<1152x128xbf16, #tpu.memory_space<vmem>>, vector<128x128xbf16>
    %cst_14 = arith.constant dense<0.000000e+00> : vector<256x128xf32>
    %18 = tpu.matmul %16, %17, %cst_14 {dimension_numbers = #tpu.dot_dimension_numbers<[1], [0], [0], [1], [0, 0, 1, 1], [], []>} : vector<256x128xbf16>, vector<128x128xbf16>, vector<256x128xf32> -> vector<256x128xf32>
    %19 = arith.addf %12, %18 : vector<256x128xf32>
    %c0_15 = arith.constant 0 : index
    %c1_16 = arith.constant 1 : index
    %c0_17 = arith.constant 0 : index
    %c0_18 = arith.constant 0 : index
    %20 = vector.load %arg1[%c0_15, %c1_16, %c0_17, %c0_18] : memref<1x18x18x128xf32, #tpu.memory_space<vmem>>, vector<1x16x16x128xf32>
    %21 = vector.shape_cast %20 : vector<1x16x16x128xf32> to vector<16x16x128xf32>
    %22 = vector.shape_cast %21 : vector<16x16x128xf32> to vector<256x128xf32>
    %23 = arith.truncf %22 : vector<256x128xf32> to vector<256x128xbf16>
    %c384 = arith.constant 384 : index
    %c0_19 = arith.constant 0 : index
    %24 = vector.load %arg2[%c384, %c0_19] : memref<1152x128xbf16, #tpu.memory_space<vmem>>, vector<128x128xbf16>
    %cst_20 = arith.constant dense<0.000000e+00> : vector<256x128xf32>
    %25 = tpu.matmul %23, %24, %cst_20 {dimension_numbers = #tpu.dot_dimension_numbers<[1], [0], [0], [1], [0, 0, 1, 1], [], []>} : vector<256x128xbf16>, vector<128x128xbf16>, vector<256x128xf32> -> vector<256x128xf32>
    %26 = arith.addf %19, %25 : vector<256x128xf32>
    %c0_21 = arith.constant 0 : index
    %c1_22 = arith.constant 1 : index
    %c1_23 = arith.constant 1 : index
    %c0_24 = arith.constant 0 : index
    %27 = vector.load %arg1[%c0_21, %c1_22, %c1_23, %c0_24] : memref<1x18x18x128xf32, #tpu.memory_space<vmem>>, vector<1x16x16x128xf32>
    %28 = vector.shape_cast %27 : vector<1x16x16x128xf32> to vector<16x16x128xf32>
    %29 = vector.shape_cast %28 : vector<16x16x128xf32> to vector<256x128xf32>
    %30 = arith.truncf %29 : vector<256x128xf32> to vector<256x128xbf16>
    %c512 = arith.constant 512 : index
    %c0_25 = arith.constant 0 : index
    %31 = vector.load %arg2[%c512, %c0_25] : memref<1152x128xbf16, #tpu.memory_space<vmem>>, vector<128x128xbf16>
    %cst_26 = arith.constant dense<0.000000e+00> : vector<256x128xf32>
    %32 = tpu.matmul %30, %31, %cst_26 {dimension_numbers = #tpu.dot_dimension_numbers<[1], [0], [0], [1], [0, 0, 1, 1], [], []>} : vector<256x128xbf16>, vector<128x128xbf16>, vector<256x128xf32> -> vector<256x128xf32>
    %33 = arith.addf %26, %32 : vector<256x128xf32>
    %c0_27 = arith.constant 0 : index
    %c1_28 = arith.constant 1 : index
    %c2_29 = arith.constant 2 : index
    %c0_30 = arith.constant 0 : index
    %34 = vector.load %arg1[%c0_27, %c1_28, %c2_29, %c0_30] : memref<1x18x18x128xf32, #tpu.memory_space<vmem>>, vector<1x16x16x128xf32>
    %35 = vector.shape_cast %34 : vector<1x16x16x128xf32> to vector<16x16x128xf32>
    %36 = vector.shape_cast %35 : vector<16x16x128xf32> to vector<256x128xf32>
    %37 = arith.truncf %36 : vector<256x128xf32> to vector<256x128xbf16>
    %c640 = arith.constant 640 : index
    %c0_31 = arith.constant 0 : index
    %38 = vector.load %arg2[%c640, %c0_31] : memref<1152x128xbf16, #tpu.memory_space<vmem>>, vector<128x128xbf16>
    %cst_32 = arith.constant dense<0.000000e+00> : vector<256x128xf32>
    %39 = tpu.matmul %37, %38, %cst_32 {dimension_numbers = #tpu.dot_dimension_numbers<[1], [0], [0], [1], [0, 0, 1, 1], [], []>} : vector<256x128xbf16>, vector<128x128xbf16>, vector<256x128xf32> -> vector<256x128xf32>
    %40 = arith.addf %33, %39 : vector<256x128xf32>
    %c0_33 = arith.constant 0 : index
    %c2_34 = arith.constant 2 : index
    %c0_35 = arith.constant 0 : index
    %c0_36 = arith.constant 0 : index
    %41 = vector.load %arg1[%c0_33, %c2_34, %c0_35, %c0_36] : memref<1x18x18x128xf32, #tpu.memory_space<vmem>>, vector<1x16x16x128xf32>
    %42 = vector.shape_cast %41 : vector<1x16x16x128xf32> to vector<16x16x128xf32>
    %43 = vector.shape_cast %42 : vector<16x16x128xf32> to vector<256x128xf32>
    %44 = arith.truncf %43 : vector<256x128xf32> to vector<256x128xbf16>
    %c768 = arith.constant 768 : index
    %c0_37 = arith.constant 0 : index
    %45 = vector.load %arg2[%c768, %c0_37] : memref<1152x128xbf16, #tpu.memory_space<vmem>>, vector<128x128xbf16>
    %cst_38 = arith.constant dense<0.000000e+00> : vector<256x128xf32>
    %46 = tpu.matmul %44, %45, %cst_38 {dimension_numbers = #tpu.dot_dimension_numbers<[1], [0], [0], [1], [0, 0, 1, 1], [], []>} : vector<256x128xbf16>, vector<128x128xbf16>, vector<256x128xf32> -> vector<256x128xf32>
    %47 = arith.addf %40, %46 : vector<256x128xf32>
    %c0_39 = arith.constant 0 : index
    %c2_40 = arith.constant 2 : index
    %c1_41 = arith.constant 1 : index
    %c0_42 = arith.constant 0 : index
    %48 = vector.load %arg1[%c0_39, %c2_40, %c1_41, %c0_42] : memref<1x18x18x128xf32, #tpu.memory_space<vmem>>, vector<1x16x16x128xf32>
    %49 = vector.shape_cast %48 : vector<1x16x16x128xf32> to vector<16x16x128xf32>
    %50 = vector.shape_cast %49 : vector<16x16x128xf32> to vector<256x128xf32>
    %51 = arith.truncf %50 : vector<256x128xf32> to vector<256x128xbf16>
    %c896 = arith.constant 896 : index
    %c0_43 = arith.constant 0 : index
    %52 = vector.load %arg2[%c896, %c0_43] : memref<1152x128xbf16, #tpu.memory_space<vmem>>, vector<128x128xbf16>
    %cst_44 = arith.constant dense<0.000000e+00> : vector<256x128xf32>
    %53 = tpu.matmul %51, %52, %cst_44 {dimension_numbers = #tpu.dot_dimension_numbers<[1], [0], [0], [1], [0, 0, 1, 1], [], []>} : vector<256x128xbf16>, vector<128x128xbf16>, vector<256x128xf32> -> vector<256x128xf32>
    %54 = arith.addf %47, %53 : vector<256x128xf32>
    %c0_45 = arith.constant 0 : index
    %c2_46 = arith.constant 2 : index
    %c2_47 = arith.constant 2 : index
    %c0_48 = arith.constant 0 : index
    %55 = vector.load %arg1[%c0_45, %c2_46, %c2_47, %c0_48] : memref<1x18x18x128xf32, #tpu.memory_space<vmem>>, vector<1x16x16x128xf32>
    %56 = vector.shape_cast %55 : vector<1x16x16x128xf32> to vector<16x16x128xf32>
    %57 = vector.shape_cast %56 : vector<16x16x128xf32> to vector<256x128xf32>
    %58 = arith.truncf %57 : vector<256x128xf32> to vector<256x128xbf16>
    %c1024 = arith.constant 1024 : index
    %c0_49 = arith.constant 0 : index
    %59 = vector.load %arg2[%c1024, %c0_49] : memref<1152x128xbf16, #tpu.memory_space<vmem>>, vector<128x128xbf16>
    %cst_50 = arith.constant dense<0.000000e+00> : vector<256x128xf32>
    %60 = tpu.matmul %58, %59, %cst_50 {dimension_numbers = #tpu.dot_dimension_numbers<[1], [0], [0], [1], [0, 0, 1, 1], [], []>} : vector<256x128xbf16>, vector<128x128xbf16>, vector<256x128xf32> -> vector<256x128xf32>
    %61 = arith.addf %54, %60 : vector<256x128xf32>
    %c0_51 = arith.constant 0 : index
    %c0_52 = arith.constant 0 : index
    %62 = vector.load %arg3[%c0_51, %c0_52] : memref<1x128xf32, #tpu.memory_space<vmem>>, vector<1x128xf32>
    %63 = vector.broadcast %62 : vector<1x128xf32> to vector<256x128xf32>
    %64 = arith.addf %61, %63 : vector<256x128xf32>
    %cst_53 = arith.constant 0.000000e+00 : f32
    %65 = vector.broadcast %cst_53 : f32 to vector<256x128xf32>
    %66 = arith.maximumf %64, %65 : vector<256x128xf32>
    %cst_54 = arith.constant 0.000000e+00 : f32
    %67 = vector.broadcast %cst_54 : f32 to vector<18x18x128xf32>
    %c0_55 = arith.constant 0 : index
    %c0_56 = arith.constant 0 : index
    %c0_57 = arith.constant 0 : index
    %68 = vector.load %arg7[%c0_55, %c0_56, %c0_57] : memref<18x18x128xf32, #tpu.memory_space<vmem>>, vector<18x18x128xf32>
    tpu.vector_store %arg7[%c0_55, %c0_56, %c0_57], %67 {strides = array<i32>} : memref<18x18x128xf32, #tpu.memory_space<vmem>>, vector<18x18x128xf32>,
    %69 = vector.shape_cast %66 : vector<256x128xf32> to vector<16x16x128xf32>
    %c1_58 = arith.constant 1 : index
    %c1_59 = arith.constant 1 : index
    %c0_60 = arith.constant 0 : index
    %70 = vector.load %arg7[%c1_58, %c1_59, %c0_60] : memref<18x18x128xf32, #tpu.memory_space<vmem>>, vector<16x16x128xf32>
    tpu.vector_store %arg7[%c1_58, %c1_59, %c0_60], %69 {strides = array<i32>} : memref<18x18x128xf32, #tpu.memory_space<vmem>>, vector<16x16x128xf32>,
    %c0_61 = arith.constant 0 : index
    %c1_62 = arith.constant 1 : index
    %c1_63 = arith.constant 1 : index
    %c0_64 = arith.constant 0 : index
    %71 = vector.load %arg1[%c0_61, %c1_62, %c1_63, %c0_64] : memref<1x18x18x128xf32, #tpu.memory_space<vmem>>, vector<1x16x16x128xf32>
    %72 = vector.shape_cast %71 : vector<1x16x16x128xf32> to vector<16x16x128xf32>
    %73 = vector.shape_cast %72 : vector<16x16x128xf32> to vector<256x128xf32>
    %c0_65 = arith.constant 0 : index
    %c0_66 = arith.constant 0 : index
    %c0_67 = arith.constant 0 : index
    %74 = vector.load %arg7[%c0_65, %c0_66, %c0_67] : memref<18x18x128xf32, #tpu.memory_space<vmem>>, vector<16x16x128xf32>
    %75 = vector.shape_cast %74 : vector<16x16x128xf32> to vector<256x128xf32>
    %76 = arith.truncf %75 : vector<256x128xf32> to vector<256x128xbf16>
    %c0_68 = arith.constant 0 : index
    %c0_69 = arith.constant 0 : index
    %77 = vector.load %arg4[%c0_68, %c0_69] : memref<1152x128xbf16, #tpu.memory_space<vmem>>, vector<128x128xbf16>
    %cst_70 = arith.constant dense<0.000000e+00> : vector<256x128xf32>
    %78 = tpu.matmul %76, %77, %cst_70 {dimension_numbers = #tpu.dot_dimension_numbers<[1], [0], [0], [1], [0, 0, 1, 1], [], []>} : vector<256x128xbf16>, vector<128x128xbf16>, vector<256x128xf32> -> vector<256x128xf32>
    %c0_71 = arith.constant 0 : index
    %c1_72 = arith.constant 1 : index
    %c0_73 = arith.constant 0 : index
    %79 = vector.load %arg7[%c0_71, %c1_72, %c0_73] : memref<18x18x128xf32, #tpu.memory_space<vmem>>, vector<16x16x128xf32>
    %80 = vector.shape_cast %79 : vector<16x16x128xf32> to vector<256x128xf32>
    %81 = arith.truncf %80 : vector<256x128xf32> to vector<256x128xbf16>
    %c128_74 = arith.constant 128 : index
    %c0_75 = arith.constant 0 : index
    %82 = vector.load %arg4[%c128_74, %c0_75] : memref<1152x128xbf16, #tpu.memory_space<vmem>>, vector<128x128xbf16>
    %cst_76 = arith.constant dense<0.000000e+00> : vector<256x128xf32>
    %83 = tpu.matmul %81, %82, %cst_76 {dimension_numbers = #tpu.dot_dimension_numbers<[1], [0], [0], [1], [0, 0, 1, 1], [], []>} : vector<256x128xbf16>, vector<128x128xbf16>, vector<256x128xf32> -> vector<256x128xf32>
    %84 = arith.addf %78, %83 : vector<256x128xf32>
    %c0_77 = arith.constant 0 : index
    %c2_78 = arith.constant 2 : index
    %c0_79 = arith.constant 0 : index
    %85 = vector.load %arg7[%c0_77, %c2_78, %c0_79] : memref<18x18x128xf32, #tpu.memory_space<vmem>>, vector<16x16x128xf32>
    %86 = vector.shape_cast %85 : vector<16x16x128xf32> to vector<256x128xf32>
    %87 = arith.truncf %86 : vector<256x128xf32> to vector<256x128xbf16>
    %c256_80 = arith.constant 256 : index
    %c0_81 = arith.constant 0 : index
    %88 = vector.load %arg4[%c256_80, %c0_81] : memref<1152x128xbf16, #tpu.memory_space<vmem>>, vector<128x128xbf16>
    %cst_82 = arith.constant dense<0.000000e+00> : vector<256x128xf32>
    %89 = tpu.matmul %87, %88, %cst_82 {dimension_numbers = #tpu.dot_dimension_numbers<[1], [0], [0], [1], [0, 0, 1, 1], [], []>} : vector<256x128xbf16>, vector<128x128xbf16>, vector<256x128xf32> -> vector<256x128xf32>
    %90 = arith.addf %84, %89 : vector<256x128xf32>
    %c1_83 = arith.constant 1 : index
    %c0_84 = arith.constant 0 : index
    %c0_85 = arith.constant 0 : index
    %91 = vector.load %arg7[%c1_83, %c0_84, %c0_85] : memref<18x18x128xf32, #tpu.memory_space<vmem>>, vector<16x16x128xf32>
    %92 = vector.shape_cast %91 : vector<16x16x128xf32> to vector<256x128xf32>
    %93 = arith.truncf %92 : vector<256x128xf32> to vector<256x128xbf16>
    %c384_86 = arith.constant 384 : index
    %c0_87 = arith.constant 0 : index
    %94 = vector.load %arg4[%c384_86, %c0_87] : memref<1152x128xbf16, #tpu.memory_space<vmem>>, vector<128x128xbf16>
    %cst_88 = arith.constant dense<0.000000e+00> : vector<256x128xf32>
    %95 = tpu.matmul %93, %94, %cst_88 {dimension_numbers = #tpu.dot_dimension_numbers<[1], [0], [0], [1], [0, 0, 1, 1], [], []>} : vector<256x128xbf16>, vector<128x128xbf16>, vector<256x128xf32> -> vector<256x128xf32>
    %96 = arith.addf %90, %95 : vector<256x128xf32>
    %c1_89 = arith.constant 1 : index
    %c1_90 = arith.constant 1 : index
    %c0_91 = arith.constant 0 : index
    %97 = vector.load %arg7[%c1_89, %c1_90, %c0_91] : memref<18x18x128xf32, #tpu.memory_space<vmem>>, vector<16x16x128xf32>
    %98 = vector.shape_cast %97 : vector<16x16x128xf32> to vector<256x128xf32>
    %99 = arith.truncf %98 : vector<256x128xf32> to vector<256x128xbf16>
    %c512_92 = arith.constant 512 : index
    %c0_93 = arith.constant 0 : index
    %100 = vector.load %arg4[%c512_92, %c0_93] : memref<1152x128xbf16, #tpu.memory_space<vmem>>, vector<128x128xbf16>
    %cst_94 = arith.constant dense<0.000000e+00> : vector<256x128xf32>
    %101 = tpu.matmul %99, %100, %cst_94 {dimension_numbers = #tpu.dot_dimension_numbers<[1], [0], [0], [1], [0, 0, 1, 1], [], []>} : vector<256x128xbf16>, vector<128x128xbf16>, vector<256x128xf32> -> vector<256x128xf32>
    %102 = arith.addf %96, %101 : vector<256x128xf32>
    %c1_95 = arith.constant 1 : index
    %c2_96 = arith.constant 2 : index
    %c0_97 = arith.constant 0 : index
    %103 = vector.load %arg7[%c1_95, %c2_96, %c0_97] : memref<18x18x128xf32, #tpu.memory_space<vmem>>, vector<16x16x128xf32>
    %104 = vector.shape_cast %103 : vector<16x16x128xf32> to vector<256x128xf32>
    %105 = arith.truncf %104 : vector<256x128xf32> to vector<256x128xbf16>
    %c640_98 = arith.constant 640 : index
    %c0_99 = arith.constant 0 : index
    %106 = vector.load %arg4[%c640_98, %c0_99] : memref<1152x128xbf16, #tpu.memory_space<vmem>>, vector<128x128xbf16>
    %cst_100 = arith.constant dense<0.000000e+00> : vector<256x128xf32>
    %107 = tpu.matmul %105, %106, %cst_100 {dimension_numbers = #tpu.dot_dimension_numbers<[1], [0], [0], [1], [0, 0, 1, 1], [], []>} : vector<256x128xbf16>, vector<128x128xbf16>, vector<256x128xf32> -> vector<256x128xf32>
    %108 = arith.addf %102, %107 : vector<256x128xf32>
    %c2_101 = arith.constant 2 : index
    %c0_102 = arith.constant 0 : index
    %c0_103 = arith.constant 0 : index
    %109 = vector.load %arg7[%c2_101, %c0_102, %c0_103] : memref<18x18x128xf32, #tpu.memory_space<vmem>>, vector<16x16x128xf32>
    %110 = vector.shape_cast %109 : vector<16x16x128xf32> to vector<256x128xf32>
    %111 = arith.truncf %110 : vector<256x128xf32> to vector<256x128xbf16>
    %c768_104 = arith.constant 768 : index
    %c0_105 = arith.constant 0 : index
    %112 = vector.load %arg4[%c768_104, %c0_105] : memref<1152x128xbf16, #tpu.memory_space<vmem>>, vector<128x128xbf16>
    %cst_106 = arith.constant dense<0.000000e+00> : vector<256x128xf32>
    %113 = tpu.matmul %111, %112, %cst_106 {dimension_numbers = #tpu.dot_dimension_numbers<[1], [0], [0], [1], [0, 0, 1, 1], [], []>} : vector<256x128xbf16>, vector<128x128xbf16>, vector<256x128xf32> -> vector<256x128xf32>
    %114 = arith.addf %108, %113 : vector<256x128xf32>
    %c2_107 = arith.constant 2 : index
    %c1_108 = arith.constant 1 : index
    %c0_109 = arith.constant 0 : index
    %115 = vector.load %arg7[%c2_107, %c1_108, %c0_109] : memref<18x18x128xf32, #tpu.memory_space<vmem>>, vector<16x16x128xf32>
    %116 = vector.shape_cast %115 : vector<16x16x128xf32> to vector<256x128xf32>
    %117 = arith.truncf %116 : vector<256x128xf32> to vector<256x128xbf16>
    %c896_110 = arith.constant 896 : index
    %c0_111 = arith.constant 0 : index
    %118 = vector.load %arg4[%c896_110, %c0_111] : memref<1152x128xbf16, #tpu.memory_space<vmem>>, vector<128x128xbf16>
    %cst_112 = arith.constant dense<0.000000e+00> : vector<256x128xf32>
    %119 = tpu.matmul %117, %118, %cst_112 {dimension_numbers = #tpu.dot_dimension_numbers<[1], [0], [0], [1], [0, 0, 1, 1], [], []>} : vector<256x128xbf16>, vector<128x128xbf16>, vector<256x128xf32> -> vector<256x128xf32>
    %120 = arith.addf %114, %119 : vector<256x128xf32>
    %c2_113 = arith.constant 2 : index
    %c2_114 = arith.constant 2 : index
    %c0_115 = arith.constant 0 : index
    %121 = vector.load %arg7[%c2_113, %c2_114, %c0_115] : memref<18x18x128xf32, #tpu.memory_space<vmem>>, vector<16x16x128xf32>
    %122 = vector.shape_cast %121 : vector<16x16x128xf32> to vector<256x128xf32>
    %123 = arith.truncf %122 : vector<256x128xf32> to vector<256x128xbf16>
    %c1024_116 = arith.constant 1024 : index
    %c0_117 = arith.constant 0 : index
    %124 = vector.load %arg4[%c1024_116, %c0_117] : memref<1152x128xbf16, #tpu.memory_space<vmem>>, vector<128x128xbf16>
    %cst_118 = arith.constant dense<0.000000e+00> : vector<256x128xf32>
    %125 = tpu.matmul %123, %124, %cst_118 {dimension_numbers = #tpu.dot_dimension_numbers<[1], [0], [0], [1], [0, 0, 1, 1], [], []>} : vector<256x128xbf16>, vector<128x128xbf16>, vector<256x128xf32> -> vector<256x128xf32>
    %126 = arith.addf %120, %125 : vector<256x128xf32>
    %c0_119 = arith.constant 0 : index
    %c0_120 = arith.constant 0 : index
    %127 = vector.load %arg5[%c0_119, %c0_120] : memref<1x128xf32, #tpu.memory_space<vmem>>, vector<1x128xf32>
    %128 = vector.broadcast %127 : vector<1x128xf32> to vector<256x128xf32>
    %129 = arith.addf %126, %128 : vector<256x128xf32>
    %130 = arith.addf %129, %73 : vector<256x128xf32>
    %cst_121 = arith.constant 0.000000e+00 : f32
    %131 = vector.broadcast %cst_121 : f32 to vector<256x128xf32>
    %132 = arith.maximumf %130, %131 : vector<256x128xf32>
    %c0_122 = arith.constant 0 : index
    %c0_123 = arith.constant 0 : index
    %c0_124 = arith.constant 0 : index
    %133 = vector.load %arg6[%c0_122, %c0_123, %c0_124] : memref<1x256x128xf32, #tpu.memory_space<vmem>>, vector<1x256x128xf32>
    %134 = vector.shape_cast %133 : vector<1x256x128xf32> to vector<256x128xf32>
    %135 = vector.shape_cast %132 : vector<256x128xf32> to vector<1x256x128xf32>
    tpu.vector_store %arg6[%c0_122, %c0_123, %c0_124], %135 {strides = array<i32>} : memref<1x256x128xf32, #tpu.memory_space<vmem>>, vector<1x256x128xf32>,
    return
  }
  func.func @transform_0(%arg0: i32) -> (i32, i32, i32, i32) {
    %c0_i32 = arith.constant 0 : i32
    %c0_i32_0 = arith.constant 0 : i32
    %c0_i32_1 = arith.constant 0 : i32
    %c0_i32_2 = arith.constant 0 : i32
    return %arg0, %c0_i32, %c0_i32_0, %c0_i32_1 : i32, i32, i32, i32
  }
  func.func @transform_1(%arg0: i32) -> (i32, i32) {
    %c0_i32 = arith.constant 0 : i32
    %c0_i32_0 = arith.constant 0 : i32
    %c0_i32_1 = arith.constant 0 : i32
    return %c0_i32, %c0_i32_0 : i32, i32
  }
  func.func @transform_2(%arg0: i32) -> (i32, i32) {
    %c0_i32 = arith.constant 0 : i32
    %c0_i32_0 = arith.constant 0 : i32
    %c0_i32_1 = arith.constant 0 : i32
    return %c0_i32, %c0_i32_0 : i32, i32
  }
  func.func @transform_3(%arg0: i32) -> (i32, i32) {
    %c0_i32 = arith.constant 0 : i32
    %c0_i32_0 = arith.constant 0 : i32
    %c0_i32_1 = arith.constant 0 : i32
    return %c0_i32, %c0_i32_0 : i32, i32
  }
  func.func @transform_4(%arg0: i32) -> (i32, i32) {
    %c0_i32 = arith.constant 0 : i32
    %c0_i32_0 = arith.constant 0 : i32
    %c0_i32_1 = arith.constant 0 : i32
    return %c0_i32, %c0_i32_0 : i32, i32
  }
  func.func @transform_5(%arg0: i32) -> (i32, i32, i32) {
    %c0_i32 = arith.constant 0 : i32
    %c0_i32_0 = arith.constant 0 : i32
    %c0_i32_1 = arith.constant 0 : i32
    return %arg0, %c0_i32, %c0_i32_0 : i32, i32, i32
  }
}

</mosaic_0001>

<llo_original>
// kernel: tpu_custom_call.1
$region0: #{tpu_custom_call.1}
  #allocation0 [shape = 'u32[]', space=smem, size = 0x4, offset = 0x4, fixed_abs, tag = 'smem constant byte address 0x4 - core index']
  #allocation1 [shape = 'u32[144,128]{1,0:T(1,128)}', space=vmem, size = 0x12000, scoped, tag = 'internal scratch']
  #allocation2 [shape = 'f32[18,18,128]{2,1,0:T(8,128)}', space=vmem, size = 0x36000, scoped, tag = 'scratch operand']
  %s0 = inlined_call_operand.vmem [shape: f32[2,18,18,128], index: 0, kind: input, shape index: {}]
  %s1 = inlined_call_operand.vmem [shape: bf16[1152,128], index: 1, kind: input, shape index: {}]
  %s2 = inlined_call_operand.vmem [shape: f32[1,128], index: 2, kind: input, shape index: {}]
  %s3 = inlined_call_operand.vmem [shape: bf16[1152,128], index: 3, kind: input, shape index: {}]
  %s4 = inlined_call_operand.vmem [shape: f32[1,128], index: 4, kind: input, shape index: {}]
  %s5 = inlined_call_operand.hbm [shape: f32[2,256,128], index: 5, kind: output, shape index: {}]
  %s6 = sld [smem:[#allocation0]]
  $region53: #{tpu_custom_call.1} parent=0
    _
  %s8 = ssub.s32 1, %s6
  %s9 = scalar_select 0, %s8, %s6
  $region1: #{tpu_custom_call.1} parent=0
    #allocation3 [shape = 'u8[262144]{0}', space=vmem, size = 0x40000, scoped, tag = 'output window, operand 0']
    #allocation4 [shape = 's32[2]{0}', space=sflag, size = 0x8, scoped, tag = 'scoped memory for tpu_custom_call.1']
    %10 = vsyncpa [#allocation4], 0
    %s11 = scalar_lea.sflag [#allocation4], 1
    %12 = vsyncpa %s11, 0
    loop: start=0, step=1, limit=4
    $region2: #{tpu_custom_call.1} parent=1 // loop_pre_header
      _
    $region3: #{tpu_custom_call.1} parent=1 // loop_header
      %s14 = sphi 0, %s18
      %p15 = scmp.ge.s32.totalorder %s14, 4
      %s24 = sphi 0, %s26
      %s27 = sphi 0, %s24
      %s28 = sphi 0, %s27
      %s44 = sphi 0, %s28
      %s48 = sphi 0, %s48
      %s50 = sphi 0, %s48
      %s51 = sphi 0, %s50
      %s65 = sphi 0, %s51
      %s69 = sphi 0, %s69
      %s71 = sphi 0, %s69
      %s72 = sphi 0, %s71
      %s86 = sphi 0, %s72
      %s90 = sphi 0, %s90
      %s92 = sphi 0, %s90
      %s93 = sphi 0, %s92
      %s107 = sphi 0, %s93
      %s111 = sphi 0, %s111
      %s113 = sphi 0, %s111
      %s114 = sphi 0, %s113
      %s128 = sphi 0, %s114
      %s134 = sphi 0, %s136
      %s137 = sphi 0, %s134
      %s138 = sphi 0, %s137
      %s154 = sphi 0, %s138
    $region4: #{tpu_custom_call.1} parent=1 // loop_header_branch
      %17 = sbr.rel (%p15) target = $region8
    $region5: #{tpu_custom_call.1} parent=1 // loop_body
      %s19 = ssub.s32 %s14, 1
      %s20 = ssub.s32 %s14, 2
      %s21 = sadd.s32 %s14, 1
      %s22 = ssub.s32 %s14, %s21
      %p23 = scmp.eq.s32.totalorder %s22, 0
      %s25 = sadd.s32 %s24, 1
      %s26 = scalar_select %p23, %s24, %s25
      %p29 = pneg %p23
      %p30 = scmp.eq.s32.totalorder %s14, 1
      %p31 = por %p29, %p30
      %p32 = scmp.ne.s32.totalorder %s24, %s27
      %p33 = scmp.eq.s32.totalorder %s14, 0
      %p34 = por %p32, %p33
      %p35 = scmp.ne.s32.totalorder %s24, %s27
      %p36 = scmp.eq.s32.totalorder %s19, 1
      %p37 = por %p35, %p36
      %p38 = scmp.ne.s32.totalorder %s27, %s28
      %p39 = scmp.eq.s32.totalorder %s19, 0
      %p40 = por %p38, %p39
      %p41 = scmp.ne.s32.totalorder %s27, %s28
      %p42 = scmp.eq.s32.totalorder %s20, 1
      %p43 = por %p41, %p42
      %p45 = scmp.ne.s32.totalorder %s28, %s44
      %p46 = scmp.eq.s32.totalorder %s20, 0
      %p47 = por %p45, %p46
      %s49 = sadd.s32 %s48, 1
      %p52 = scmp.eq.s32.totalorder %s14, 1
      %p53 = scmp.ne.s32.totalorder %s48, %s50
      %p54 = scmp.eq.s32.totalorder %s14, 0
      %p55 = por %p53, %p54
      %p56 = scmp.ne.s32.totalorder %s48, %s50
      %p57 = scmp.eq.s32.totalorder %s19, 1
      %p58 = por %p56, %p57
      %p59 = scmp.ne.s32.totalorder %s50, %s51
      %p60 = scmp.eq.s32.totalorder %s19, 0
      %p61 = por %p59, %p60
      %p62 = scmp.ne.s32.totalorder %s50, %s51
      %p63 = scmp.eq.s32.totalorder %s20, 1
      %p64 = por %p62, %p63
      %p66 = scmp.ne.s32.totalorder %s51, %s65
      %p67 = scmp.eq.s32.totalorder %s20, 0
      %p68 = por %p66, %p67
      %s70 = sadd.s32 %s69, 1
      %p73 = scmp.eq.s32.totalorder %s14, 1
      %p74 = scmp.ne.s32.totalorder %s69, %s71
      %p75 = scmp.eq.s32.totalorder %s14, 0
      %p76 = por %p74, %p75
      %p77 = scmp.ne.s32.totalorder %s69, %s71
      %p78 = scmp.eq.s32.totalorder %s19, 1
      %p79 = por %p77, %p78
      %p80 = scmp.ne.s32.totalorder %s71, %s72
      %p81 = scmp.eq.s32.totalorder %s19, 0
      %p82 = por %p80, %p81
      %p83 = scmp.ne.s32.totalorder %s71, %s72
      %p84 = scmp.eq.s32.totalorder %s20, 1
      %p85 = por %p83, %p84
      %p87 = scmp.ne.s32.totalorder %s72, %s86
      %p88 = scmp.eq.s32.totalorder %s20, 0
      %p89 = por %p87, %p88
      %s91 = sadd.s32 %s90, 1
      %p94 = scmp.eq.s32.totalorder %s14, 1
      %p95 = scmp.ne.s32.totalorder %s90, %s92
      %p96 = scmp.eq.s32.totalorder %s14, 0
      %p97 = por %p95, %p96
      %p98 = scmp.ne.s32.totalorder %s90, %s92
      %p99 = scmp.eq.s32.totalorder %s19, 1
      %p100 = por %p98, %p99
      %p101 = scmp.ne.s32.totalorder %s92, %s93
      %p102 = scmp.eq.s32.totalorder %s19, 0
      %p103 = por %p101, %p102
      %p104 = scmp.ne.s32.totalorder %s92, %s93
      %p105 = scmp.eq.s32.totalorder %s20, 1
      %p106 = por %p104, %p105
      %p108 = scmp.ne.s32.totalorder %s93, %s107
      %p109 = scmp.eq.s32.totalorder %s20, 0
      %p110 = por %p108, %p109
      %s112 = sadd.s32 %s111, 1
      %p115 = scmp.eq.s32.totalorder %s14, 1
      %p116 = scmp.ne.s32.totalorder %s111, %s113
      %p117 = scmp.eq.s32.totalorder %s14, 0
      %p118 = por %p116, %p117
      %p119 = scmp.ne.s32.totalorder %s111, %s113
      %p120 = scmp.eq.s32.totalorder %s19, 1
      %p121 = por %p119, %p120
      %p122 = scmp.ne.s32.totalorder %s113, %s114
      %p123 = scmp.eq.s32.totalorder %s19, 0
      %p124 = por %p122, %p123
      %p125 = scmp.ne.s32.totalorder %s113, %s114
      %p126 = scmp.eq.s32.totalorder %s20, 1
      %p127 = por %p125, %p126
      %p129 = scmp.ne.s32.totalorder %s114, %s128
      %p130 = scmp.eq.s32.totalorder %s20, 0
      %p131 = por %p129, %p130
      %s132 = ssub.s32 %s14, %s21
      %p133 = scmp.eq.s32.totalorder %s132, 0
      %s135 = sadd.s32 %s134, 1
      %s136 = scalar_select %p133, %s134, %s135
      %p139 = pneg %p133
      %p140 = scmp.eq.s32.totalorder %s14, 1
      %p141 = por %p139, %p140
      %p142 = scmp.ne.s32.totalorder %s134, %s137
      %p143 = scmp.eq.s32.totalorder %s14, 0
      %p144 = por %p142, %p143
      %p145 = scmp.ne.s32.totalorder %s134, %s137
      %p146 = scmp.eq.s32.totalorder %s19, 1
      %p147 = por %p145, %p146
      %p148 = scmp.ne.s32.totalorder %s137, %s138
      %p149 = scmp.eq.s32.totalorder %s19, 0
      %p150 = por %p148, %p149
      %p151 = scmp.ne.s32.totalorder %s137, %s138
      %p152 = scmp.eq.s32.totalorder %s20, 1
      %p153 = por %p151, %p152
      %p155 = scmp.ne.s32.totalorder %s138, %s154
      %p156 = scmp.eq.s32.totalorder %s20, 0
      %p157 = por %p155, %p156
      %p158 = scmp.le.s32.totalorder 1, %s14
      %p159 = scmp.lt.s32.totalorder %s14, 3
      %p160 = pnand %p158, %p159
      %p161 = pneg %p160
      // Predicated region
      $region9: #{tpu_custom_call.1} parent=5 // pred_check
        _
      $region10: #{tpu_custom_call.1} parent=5 // pred_check_branch
        %163 = sbr.rel (%p160) target = $region12
      $region11: #{tpu_custom_call.1} parent=5 // pred_region
        %s164 = ssub.s32 %s14, 1
        // Predicated region
        $region13: #{tpu_custom_call.1} parent=11 // pred_check
          %p165 = pneg %p61
        $region14: #{tpu_custom_call.1} parent=11 // pred_check_branch
          %167 = sbr.rel (%p165) target = $region16
        $region15: #{tpu_custom_call.1} parent=11 // pred_region
          _
        $region16: #{tpu_custom_call.1} parent=11 // pred_fallthru
          _
        // Predicated region
        $region17: #{tpu_custom_call.1} parent=11 // pred_check
          %p168 = pneg %p82
        $region18: #{tpu_custom_call.1} parent=11 // pred_check_branch
          %170 = sbr.rel (%p168) target = $region20
        $region19: #{tpu_custom_call.1} parent=11 // pred_region
          _
        $region20: #{tpu_custom_call.1} parent=11 // pred_fallthru
          _
        // Predicated region
        $region21: #{tpu_custom_call.1} parent=11 // pred_check
          %p171 = pneg %p103
        $region22: #{tpu_custom_call.1} parent=11 // pred_check_branch
          %173 = sbr.rel (%p171) target = $region24
        $region23: #{tpu_custom_call.1} parent=11 // pred_region
          _
        $region24: #{tpu_custom_call.1} parent=11 // pred_fallthru
          _
        // Predicated region
        $region25: #{tpu_custom_call.1} parent=11 // pred_check
          %p174 = pneg %p124
        $region26: #{tpu_custom_call.1} parent=11 // pred_check_branch
          %176 = sbr.rel (%p174) target = $region28
        $region27: #{tpu_custom_call.1} parent=11 // pred_region
          _
        $region28: #{tpu_custom_call.1} parent=11 // pred_fallthru
          _
      $region12: #{tpu_custom_call.1} parent=5 // pred_fallthru
        _
      %p177 = scmp.lt.s32.totalorder %s14, 2
      // Predicated region
      $region29: #{tpu_custom_call.1} parent=5 // pred_check
        %p178 = pneg %p177
      $region30: #{tpu_custom_call.1} parent=5 // pred_check_branch
        %180 = sbr.rel (%p178) target = $region32
      $region31: #{tpu_custom_call.1} parent=5 // pred_region
        // Predicated region
        $region33: #{tpu_custom_call.1} parent=31 // pred_check
          %p181 = pneg %p34
        $region34: #{tpu_custom_call.1} parent=31 // pred_check_branch
          %183 = sbr.rel (%p181) target = $region36
        $region35: #{tpu_custom_call.1} parent=31 // pred_region
          %p184 = scmp.lt.s32.totalorder %s14, 1
          %s185 = scalar_select %p184, %s14, 1
          %s186 = smul.addr %s185, 54
          %s187 = smul.addr %s186, 8
          %s188 = scalar_lea.vmem %s0, %s187
        $region36: #{tpu_custom_call.1} parent=31 // pred_fallthru
          _
      $region32: #{tpu_custom_call.1} parent=5 // pred_fallthru
        _
      %p189 = scmp.le.s32.totalorder 1, %s14
      %p190 = scmp.lt.s32.totalorder %s14, 3
      %p191 = pnand %p189, %p190
      %p192 = pneg %p191
      // Predicated region
      $region37: #{tpu_custom_call.1} parent=5 // pred_check
        _
      $region38: #{tpu_custom_call.1} parent=5 // pred_check_branch
        %194 = sbr.rel (%p191) target = $region40
      $region39: #{tpu_custom_call.1} parent=5 // pred_region
        %s195 = ssub.s32 %s14, 1
        %p196 = scmp.lt.s32.totalorder %s19, 1
        %s197 = scalar_select %p196, %s19, 1
        %s198 = smul.addr %s197, 54
        %s199 = smul.addr %s198, 8
        %s200 = scalar_lea.vmem %s0, %s199
        %p201 = pneg %p40
        %p202 = pneg %p37
        %p203 = pneg %p61
        %p204 = pneg %p58
        %p205 = pneg %p82
        %p206 = pneg %p79
        %p207 = pneg %p103
        %p208 = pneg %p100
        %p209 = pneg %p124
        %p210 = pneg %p121
        %p211 = pneg %p150
        %p212 = pneg %p147
        %s213 = sand.u32 %s137, 1
        %s214 = scalar_lea.sflag [#allocation4], %s213
        %s215 = sand.u32 %s137, 1
        %s216 = smul.addr %s215, 256
        %s217 = scalar_lea.vmem [#allocation3], %s216
        %p218 = scmp.lt.s32.totalorder %s19, 1
        %s219 = scalar_select %p218, %s19, 1
        %s220 = smul.addr %s219, 54
        %s221 = smul.addr %s220, 8
        %s222 = scalar_lea.vmem %s0, %s221
        %v224 = vld [vmem:[%s222] sm:$0xff]
        %v225 = vld [vmem:[%s222 + $0x8] sm:$0xff]
        %v226 = vld [vmem:[%s222 + $0x18] sm:$0xff]
        %v227 = vld [vmem:[%s222 + $0x20] sm:$0xff]
        %v228 = vld [vmem:[%s222 + $0x30] sm:$0xff]
        %v229 = vld [vmem:[%s222 + $0x38] sm:$0xff]
        %v230 = vld [vmem:[%s222 + $0x48] sm:$0xff]
        %v231 = vld [vmem:[%s222 + $0x50] sm:$0xff]
        %v232 = vld [vmem:[%s222 + $0x60] sm:$0xff]
        %v233 = vld [vmem:[%s222 + $0x68] sm:$0xff]
        %v234 = vld [vmem:[%s222 + $0x78] sm:$0xff]
        %v235 = vld [vmem:[%s222 + $0x80] sm:$0xff]
        %v236 = vld [vmem:[%s222 + $0x90] sm:$0xff]
        %v237 = vld [vmem:[%s222 + $0x98] sm:$0xff]
        %v238 = vld [vmem:[%s222 + $0xa8] sm:$0xff]
        %v239 = vld [vmem:[%s222 + $0xb0] sm:$0xff]
        %v240 = vld [vmem:[%s222 + $0xc0] sm:$0xff]
        %v241 = vld [vmem:[%s222 + $0xc8] sm:$0xff]
        %v242 = vld [vmem:[%s222 + $0xd8] sm:$0xff]
        %v243 = vld [vmem:[%s222 + $0xe0] sm:$0xff]
        %v244 = vld [vmem:[%s222 + $0xf0] sm:$0xff]
        %v245 = vld [vmem:[%s222 + $0xf8] sm:$0xff]
        %v246 = vld [vmem:[%s222 + $0x108] sm:$0xff]
        %v247 = vld [vmem:[%s222 + $0x110] sm:$0xff]
        %v248 = vld [vmem:[%s222 + $0x120] sm:$0xff]
        %v249 = vld [vmem:[%s222 + $0x128] sm:$0xff]
        %v250 = vld [vmem:[%s222 + $0x138] sm:$0xff]
        %v251 = vld [vmem:[%s222 + $0x140] sm:$0xff]
        %v252 = vld [vmem:[%s222 + $0x150] sm:$0xff]
        %v253 = vld [vmem:[%s222 + $0x158] sm:$0xff]
        %v254 = vld [vmem:[%s222 + $0x168] sm:$0xff]
        %v255 = vld [vmem:[%s222 + $0x170] sm:$0xff]
        %v256 = vpack.c.bf16 %v225, %v224
        %v257 = vpack.c.bf16 %v227, %v226
        %v258 = vpack.c.bf16 %v229, %v228
        %v259 = vpack.c.bf16 %v231, %v230
        %v260 = vpack.c.bf16 %v233, %v232
        %v261 = vpack.c.bf16 %v235, %v234
        %v262 = vpack.c.bf16 %v237, %v236
        %v263 = vpack.c.bf16 %v239, %v238
        %v264 = vpack.c.bf16 %v241, %v240
        %v265 = vpack.c.bf16 %v243, %v242
        %v266 = vpack.c.bf16 %v245, %v244
        %v267 = vpack.c.bf16 %v247, %v246
        %v268 = vpack.c.bf16 %v249, %v248
        %v269 = vpack.c.bf16 %v251, %v250
        %v270 = vpack.c.bf16 %v253, %v252
        %v271 = vpack.c.bf16 %v255, %v254
        %v272 = vld [vmem:[%s1] sm:$0xf]
        %v273 = vld [vmem:[%s1 + $0x4] sm:$0xf]
        %v274 = vld [vmem:[%s1 + $0x8] sm:$0xf]
        %v275 = vld [vmem:[%s1 + $0xc] sm:$0xf]
        %v276 = vld [vmem:[%s1 + $0x10] sm:$0xf]
        %v277 = vld [vmem:[%s1 + $0x14] sm:$0xf]
        %v278 = vld [vmem:[%s1 + $0x18] sm:$0xf]
        %v279 = vld [vmem:[%s1 + $0x1c] sm:$0xf]
        %v280 = vld [vmem:[%s1 + $0x20] sm:$0xf]
        %v281 = vld [vmem:[%s1 + $0x24] sm:$0xf]
        %v282 = vld [vmem:[%s1 + $0x28] sm:$0xf]
        %v283 = vld [vmem:[%s1 + $0x2c] sm:$0xf]
        %v284 = vld [vmem:[%s1 + $0x30] sm:$0xf]
        %v285 = vld [vmem:[%s1 + $0x34] sm:$0xf]
        %v286 = vld [vmem:[%s1 + $0x38] sm:$0xf]
        %v287 = vld [vmem:[%s1 + $0x3c] sm:$0xf]
        %v288 = vld [vmem:[%s222 + $0x1] sm:$0xff]
        %v289 = vld [vmem:[%s222 + $0x9] sm:$0xff]
        %v290 = vld [vmem:[%s222 + $0x19] sm:$0xff]
        %v291 = vld [vmem:[%s222 + $0x21] sm:$0xff]
        %v292 = vld [vmem:[%s222 + $0x31] sm:$0xff]
        %v293 = vld [vmem:[%s222 + $0x39] sm:$0xff]
        %v294 = vld [vmem:[%s222 + $0x49] sm:$0xff]
        %v295 = vld [vmem:[%s222 + $0x51] sm:$0xff]
        %v296 = vld [vmem:[%s222 + $0x61] sm:$0xff]
        %v297 = vld [vmem:[%s222 + $0x69] sm:$0xff]
        %v298 = vld [vmem:[%s222 + $0x79] sm:$0xff]
        %v299 = vld [vmem:[%s222 + $0x81] sm:$0xff]
        %v300 = vld [vmem:[%s222 + $0x91] sm:$0xff]
        %v301 = vld [vmem:[%s222 + $0x99] sm:$0xff]
        %v302 = vld [vmem:[%s222 + $0xa9] sm:$0xff]
        %v303 = vld [vmem:[%s222 + $0xb1] sm:$0xff]
        %v304 = vld [vmem:[%s222 + $0xc1] sm:$0xff]
        %v305 = vld [vmem:[%s222 + $0xc9] sm:$0xff]
        %v306 = vld [vmem:[%s222 + $0xd9] sm:$0xff]
        %v307 = vld [vmem:[%s222 + $0xe1] sm:$0xff]
        %v308 = vld [vmem:[%s222 + $0xf1] sm:$0xff]
        %v309 = vld [vmem:[%s222 + $0xf9] sm:$0xff]
        %v310 = vld [vmem:[%s222 + $0x109] sm:$0xff]
        %v311 = vld [vmem:[%s222 + $0x111] sm:$0xff]
        %v312 = vld [vmem:[%s222 + $0x121] sm:$0xff]
        %v313 = vld [vmem:[%s222 + $0x129] sm:$0xff]
        %v314 = vld [vmem:[%s222 + $0x139] sm:$0xff]
        %v315 = vld [vmem:[%s222 + $0x141] sm:$0xff]
        %v316 = vld [vmem:[%s222 + $0x151] sm:$0xff]
        %v317 = vld [vmem:[%s222 + $0x159] sm:$0xff]
        %v318 = vld [vmem:[%s222 + $0x169] sm:$0xff]
        %v319 = vld [vmem:[%s222 + $0x171] sm:$0xff]
        %v320 = vpack.c.bf16 %v289, %v288
        %v321 = vpack.c.bf16 %v291, %v290
        %v322 = vpack.c.bf16 %v293, %v292
        %v323 = vpack.c.bf16 %v295, %v294
        %v324 = vpack.c.bf16 %v297, %v296
        %v325 = vpack.c.bf16 %v299, %v298
        %v326 = vpack.c.bf16 %v301, %v300
        %v327 = vpack.c.bf16 %v303, %v302
        %v328 = vpack.c.bf16 %v305, %v304
        %v329 = vpack.c.bf16 %v307, %v306
        %v330 = vpack.c.bf16 %v309, %v308
        %v331 = vpack.c.bf16 %v311, %v310
        %v332 = vpack.c.bf16 %v313, %v312
        %v333 = vpack.c.bf16 %v315, %v314
        %v334 = vpack.c.bf16 %v317, %v316
        %v335 = vpack.c.bf16 %v319, %v318
        %v336 = vld [vmem:[%s1 + $0x40] sm:$0xf]
        %v337 = vld [vmem:[%s1 + $0x44] sm:$0xf]
        %v338 = vld [vmem:[%s1 + $0x48] sm:$0xf]
        %v339 = vld [vmem:[%s1 + $0x4c] sm:$0xf]
        %v340 = vld [vmem:[%s1 + $0x50] sm:$0xf]
        %v341 = vld [vmem:[%s1 + $0x54] sm:$0xf]
        %v342 = vld [vmem:[%s1 + $0x58] sm:$0xf]
        %v343 = vld [vmem:[%s1 + $0x5c] sm:$0xf]
        %v344 = vld [vmem:[%s1 + $0x60] sm:$0xf]
        %v345 = vld [vmem:[%s1 + $0x64] sm:$0xf]
        %v346 = vld [vmem:[%s1 + $0x68] sm:$0xf]
        %v347 = vld [vmem:[%s1 + $0x6c] sm:$0xf]
        %v348 = vld [vmem:[%s1 + $0x70] sm:$0xf]
        %v349 = vld [vmem:[%s1 + $0x74] sm:$0xf]
        %v350 = vld [vmem:[%s1 + $0x78] sm:$0xf]
        %v351 = vld [vmem:[%s1 + $0x7c] sm:$0xf]
        %v368 = vunpack.c.l.b16 %v336
        %v369 = vunpack.c.l.b16 %v337
        %v370 = vunpack.c.l.b16 %v338
        %v371 = vunpack.c.l.b16 %v339
        %v372 = vunpack.c.l.b16 %v340
        %v373 = vunpack.c.l.b16 %v341
        %v374 = vunpack.c.l.b16 %v342
        %v375 = vunpack.c.l.b16 %v343
        %v376 = vunpack.c.l.b16 %v344
        %v377 = vunpack.c.l.b16 %v345
        %v378 = vunpack.c.l.b16 %v346
        %v379 = vunpack.c.l.b16 %v347
        %v380 = vunpack.c.l.b16 %v348
        %v381 = vunpack.c.l.b16 %v349
        %v382 = vunpack.c.l.b16 %v350
        %v383 = vunpack.c.l.b16 %v351
        %v384 = vpack.c.b16 %v369, %v368
        %v385 = vpack.c.b16 %v371, %v370
        %v386 = vpack.c.b16 %v373, %v372
        %v387 = vpack.c.b16 %v375, %v374
        %v388 = vpack.c.b16 %v377, %v376
        %v389 = vpack.c.b16 %v379, %v378
        %v390 = vpack.c.b16 %v381, %v380
        %v391 = vpack.c.b16 %v383, %v382
        %400 = vmatprep.subr.bf16.mxu0 0
        %401 = vmatpush1.bf16.msra.mxu0 %v384
        %402 = vmatprep.subr.bf16.mxu0 0
        %403 = vmatpush1.bf16.msra.mxu0 %v385
        %404 = vmatprep.subr.bf16.mxu0 0
        %405 = vmatpush1.bf16.msra.mxu0 %v386
        %406 = vmatprep.subr.bf16.mxu0 0
        %407 = vmatpush1.bf16.msra.mxu0 %v387
        %408 = vmatprep.subr.bf16.mxu0 0
        %409 = vmatpush1.bf16.msra.mxu0 %v388
        %410 = vmatprep.subr.bf16.mxu0 0
        %411 = vmatpush1.bf16.msra.mxu0 %v389
        %412 = vmatprep.subr.bf16.mxu0 0
        %413 = vmatpush1.bf16.msra.mxu0 %v390
        %414 = vmatprep.subr.bf16.mxu0 0
        %415 = vmatpush1.bf16.msra.mxu0 %v391
        %416 = vmatprep.subr.bf16.mxu0 0
        %417 = vmatpush1.bf16.msra.mxu0 0
        %418 = vmatprep.subr.bf16.mxu0 0
        %419 = vmatpush1.bf16.msra.mxu0 0
        %420 = vmatprep.subr.bf16.mxu0 0
        %421 = vmatpush1.bf16.msra.mxu0 0
        %422 = vmatprep.subr.bf16.mxu0 0
        %423 = vmatpush1.bf16.msra.mxu0 0
        %424 = vmatprep.subr.bf16.mxu0 0
        %425 = vmatpush1.bf16.msra.mxu0 0
        %426 = vmatprep.subr.bf16.mxu0 0
        %427 = vmatpush1.bf16.msra.mxu0 0
        %428 = vmatprep.subr.bf16.mxu0 0
        %429 = vmatpush1.bf16.msra.mxu0 0
        %430 = vmatprep.subr.bf16.mxu0 0
        %431 = vmatpush1.bf16.msra.mxu0 0
        %432 = vmatprep.mubr.bf16.mxu0 0
        %433 = vmatmul.mubr.bf16.gmra.mrb[0].mxu0 %v320
        %v434 = vpop.f32.mrb[0].mxu0
        %v435 = vadd.f32 0.0, %v434
        %v436 = vpop.f32.mrb[0].mxu0
        %v437 = vpop.f32.mrb[0].mxu0
        %v438 = vadd.f32 0.0, %v437
        %v439 = vpop.f32.mrb[0].mxu0
        %440 = vmatprep.mubr.bf16.mxu0 0
        %441 = vmatmul.mubr.bf16.gmra.mrb[0].mxu0 %v321
        %v442 = vpop.f32.mrb[0].mxu0
        %v443 = vadd.f32 0.0, %v442
        %v444 = vpop.f32.mrb[0].mxu0
        %v445 = vpop.f32.mrb[0].mxu0
        %v446 = vadd.f32 0.0, %v445
        %v447 = vpop.f32.mrb[0].mxu0
        %448 = vmatprep.mubr.bf16.mxu0 0
        %449 = vmatmul.mubr.bf16.gmra.mrb[0].mxu0 %v322
        %v450 = vpop.f32.mrb[0].mxu0
        %v451 = vadd.f32 0.0, %v450
        %v452 = vpop.f32.mrb[0].mxu0
        %v453 = vpop.f32.mrb[0].mxu0
        %v454 = vadd.f32 0.0, %v453
        %v455 = vpop.f32.mrb[0].mxu0
        %456 = vmatprep.mubr.bf16.mxu0 0
        %457 = vmatmul.mubr.bf16.gmra.mrb[0].mxu0 %v323
        %v458 = vpop.f32.mrb[0].mxu0
        %v459 = vadd.f32 0.0, %v458
        %v460 = vpop.f32.mrb[0].mxu0
        %v461 = vpop.f32.mrb[0].mxu0
        %v462 = vadd.f32 0.0, %v461
        %v463 = vpop.f32.mrb[0].mxu0
        %464 = vmatprep.mubr.bf16.mxu0 0
        %465 = vmatmul.mubr.bf16.gmra.mrb[0].mxu0 %v324
        %v466 = vpop.f32.mrb[0].mxu0
        %v467 = vadd.f32 0.0, %v466
        %v468 = vpop.f32.mrb[0].mxu0
        %v469 = vpop.f32.mrb[0].mxu0
        %v470 = vadd.f32 0.0, %v469
        %v471 = vpop.f32.mrb[0].mxu0
        %472 = vmatprep.mubr.bf16.mxu0 0
        %473 = vmatmul.mubr.bf16.gmra.mrb[0].mxu0 %v325
        %v474 = vpop.f32.mrb[0].mxu0
        %v475 = vadd.f32 0.0, %v474
        %v476 = vpop.f32.mrb[0].mxu0
        %v477 = vpop.f32.mrb[0].mxu0
        %v478 = vadd.f32 0.0, %v477
        %v479 = vpop.f32.mrb[0].mxu0
        %480 = vmatprep.mubr.bf16.mxu0 0
        %481 = vmatmul.mubr.bf16.gmra.mrb[0].mxu0 %v326
        %v482 = vpop.f32.mrb[0].mxu0
        %v483 = vadd.f32 0.0, %v482
        %v484 = vpop.f32.mrb[0].mxu0
        %v485 = vpop.f32.mrb[0].mxu0
        %v486 = vadd.f32 0.0, %v485
        %v487 = vpop.f32.mrb[0].mxu0
        %488 = vmatprep.mubr.bf16.mxu0 0
        %489 = vmatmul.mubr.bf16.gmra.mrb[0].mxu0 %v327
        %v490 = vpop.f32.mrb[0].mxu0
        %v491 = vadd.f32 0.0, %v490
        %v492 = vpop.f32.mrb[0].mxu0
        %v493 = vpop.f32.mrb[0].mxu0
        %v494 = vadd.f32 0.0, %v493
        %v495 = vpop.f32.mrb[0].mxu0
        %496 = vmatprep.mubr.bf16.mxu0 0
        %497 = vmatmul.mubr.bf16.gmra.mrb[0].mxu0 %v328
        %v498 = vpop.f32.mrb[0].mxu0
        %v499 = vadd.f32 0.0, %v498
        %v500 = vpop.f32.mrb[0].mxu0
        %v501 = vpop.f32.mrb[0].mxu0
        %v502 = vadd.f32 0.0, %v501
        %v503 = vpop.f32.mrb[0].mxu0
        %504 = vmatprep.mubr.bf16.mxu0 0
        %505 = vmatmul.mubr.bf16.gmra.mrb[0].mxu0 %v329
        %v506 = vpop.f32.mrb[0].mxu0
        %v507 = vadd.f32 0.0, %v506
        %v508 = vpop.f32.mrb[0].mxu0
        %v509 = vpop.f32.mrb[0].mxu0
        %v510 = vadd.f32 0.0, %v509
        %v511 = vpop.f32.mrb[0].mxu0
        %512 = vmatprep.mubr.bf16.mxu0 0
        %513 = vmatmul.mubr.bf16.gmra.mrb[0].mxu0 %v330
        %v514 = vpop.f32.mrb[0].mxu0
        %v515 = vadd.f32 0.0, %v514
        %v516 = vpop.f32.mrb[0].mxu0
        %v517 = vpop.f32.mrb[0].mxu0
        %v518 = vadd.f32 0.0, %v517
        %v519 = vpop.f32.mrb[0].mxu0
        %520 = vmatprep.mubr.bf16.mxu0 0
        %521 = vmatmul.mubr.bf16.gmra.mrb[0].mxu0 %v331
        %v522 = vpop.f32.mrb[0].mxu0
        %v523 = vadd.f32 0.0, %v522
        %v524 = vpop.f32.mrb[0].mxu0
        %v525 = vpop.f32.mrb[0].mxu0
        %v526 = vadd.f32 0.0, %v525
        %v527 = vpop.f32.mrb[0].mxu0
        %528 = vmatprep.mubr.bf16.mxu0 0
        %529 = vmatmul.mubr.bf16.gmra.mrb[0].mxu0 %v332
        %v530 = vpop.f32.mrb[0].mxu0
        %v531 = vadd.f32 0.0, %v530
        %v532 = vpop.f32.mrb[0].mxu0
        %v533 = vpop.f32.mrb[0].mxu0
        %v534 = vadd.f32 0.0, %v533
        %v535 = vpop.f32.mrb[0].mxu0
        %536 = vmatprep.mubr.bf16.mxu0 0
        %537 = vmatmul.mubr.bf16.gmra.mrb[0].mxu0 %v333
        %v538 = vpop.f32.mrb[0].mxu0
        %v539 = vadd.f32 0.0, %v538
        %v540 = vpop.f32.mrb[0].mxu0
        %v541 = vpop.f32.mrb[0].mxu0
        %v542 = vadd.f32 0.0, %v541
        %v543 = vpop.f32.mrb[0].mxu0
        %544 = vmatprep.mubr.bf16.mxu0 0
        %545 = vmatmul.mubr.bf16.gmra.mrb[0].mxu0 %v334
        %v546 = vpop.f32.mrb[0].mxu0
        %v547 = vadd.f32 0.0, %v546
        %v548 = vpop.f32.mrb[0].mxu0
        %v549 = vpop.f32.mrb[0].mxu0
        %v550 = vadd.f32 0.0, %v549
        %v551 = vpop.f32.mrb[0].mxu0
        %552 = vmatprep.mubr.bf16.mxu0 0
        %553 = vmatmul.mubr.bf16.gmra.mrb[0].mxu0 %v335
        %v554 = vpop.f32.mrb[0].mxu0
        %v555 = vadd.f32 0.0, %v554
        %v556 = vpop.f32.mrb[0].mxu0
        %v557 = vpop.f32.mrb[0].mxu0
        %v558 = vadd.f32 0.0, %v557
        %v559 = vpop.f32.mrb[0].mxu0
        %560 = vdwg.mxu0
        %v577 = vunpack.c.l.b16 %v272
        %v578 = vunpack.c.l.b16 %v273
        %v579 = vunpack.c.l.b16 %v274
        %v580 = vunpack.c.l.b16 %v275
        %v581 = vunpack.c.l.b16 %v276
        %v582 = vunpack.c.l.b16 %v277
        %v583 = vunpack.c.l.b16 %v278
        %v584 = vunpack.c.l.b16 %v279
        %v585 = vunpack.c.l.b16 %v280
        %v586 = vunpack.c.l.b16 %v281
        %v587 = vunpack.c.l.b16 %v282
        %v588 = vunpack.c.l.b16 %v283
        %v589 = vunpack.c.l.b16 %v284
        %v590 = vunpack.c.l.b16 %v285
        %v591 = vunpack.c.l.b16 %v286
        %v592 = vunpack.c.l.b16 %v287
        %v593 = vpack.c.b16 %v578, %v577
        %v594 = vpack.c.b16 %v580, %v579
        %v595 = vpack.c.b16 %v582, %v581
        %v596 = vpack.c.b16 %v584, %v583
        %v597 = vpack.c.b16 %v586, %v585
        %v598 = vpack.c.b16 %v588, %v587
        %v599 = vpack.c.b16 %v590, %v589
        %v600 = vpack.c.b16 %v592, %v591
        %609 = vmatprep.subr.bf16.mxu0 0
        %610 = vmatpush1.bf16.msra.mxu0 %v593
        %611 = vmatprep.subr.bf16.mxu0 0
        %612 = vmatpush1.bf16.msra.mxu0 %v594
        %613 = vmatprep.subr.bf16.mxu0 0
        %614 = vmatpush1.bf16.msra.mxu0 %v595
        %615 = vmatprep.subr.bf16.mxu0 0
        %616 = vmatpush1.bf16.msra.mxu0 %v596
        %617 = vmatprep.subr.bf16.mxu0 0
        %618 = vmatpush1.bf16.msra.mxu0 %v597
        %619 = vmatprep.subr.bf16.mxu0 0
        %620 = vmatpush1.bf16.msra.mxu0 %v598
        %621 = vmatprep.subr.bf16.mxu0 0
        %622 = vmatpush1.bf16.msra.mxu0 %v599
        %623 = vmatprep.subr.bf16.mxu0 0
        %624 = vmatpush1.bf16.msra.mxu0 %v600
        %625 = vmatprep.subr.bf16.mxu0 0
        %626 = vmatpush1.bf16.msra.mxu0 0
        %627 = vmatprep.subr.bf16.mxu0 0
        %628 = vmatpush1.bf16.msra.mxu0 0
        %629 = vmatprep.subr.bf16.mxu0 0
        %630 = vmatpush1.bf16.msra.mxu0 0
        %631 = vmatprep.subr.bf16.mxu0 0
        %632 = vmatpush1.bf16.msra.mxu0 0
        %633 = vmatprep.subr.bf16.mxu0 0
        %634 = vmatpush1.bf16.msra.mxu0 0
        %635 = vmatprep.subr.bf16.mxu0 0
        %636 = vmatpush1.bf16.msra.mxu0 0
        %637 = vmatprep.subr.bf16.mxu0 0
        %638 = vmatpush1.bf16.msra.mxu0 0
        %639 = vmatprep.subr.bf16.mxu0 0
        %640 = vmatpush1.bf16.msra.mxu0 0
        %641 = vmatprep.mubr.bf16.mxu0 0
        %642 = vmatmul.mubr.bf16.gmra.mrb[0].mxu0 %v256
        %v643 = vpop.f32.mrb[0].mxu0
        %v644 = vadd.f32 %v435, %v643
        %v645 = vpop.f32.mrb[0].mxu0
        %v646 = vpop.f32.mrb[0].mxu0
        %v647 = vadd.f32 %v438, %v646
        %v648 = vpop.f32.mrb[0].mxu0
        %649 = vmatprep.mubr.bf16.mxu0 0
        %650 = vmatmul.mubr.bf16.gmra.mrb[0].mxu0 %v257
        %v651 = vpop.f32.mrb[0].mxu0
        %v652 = vadd.f32 %v443, %v651
        %v653 = vpop.f32.mrb[0].mxu0
        %v654 = vpop.f32.mrb[0].mxu0
        %v655 = vadd.f32 %v446, %v654
        %v656 = vpop.f32.mrb[0].mxu0
        %657 = vmatprep.mubr.bf16.mxu0 0
        %658 = vmatmul.mubr.bf16.gmra.mrb[0].mxu0 %v258
        %v659 = vpop.f32.mrb[0].mxu0
        %v660 = vadd.f32 %v451, %v659
        %v661 = vpop.f32.mrb[0].mxu0
        %v662 = vpop.f32.mrb[0].mxu0
        %v663 = vadd.f32 %v454, %v662
        %v664 = vpop.f32.mrb[0].mxu0
        %665 = vmatprep.mubr.bf16.mxu0 0
        %666 = vmatmul.mubr.bf16.gmra.mrb[0].mxu0 %v259
        %v667 = vpop.f32.mrb[0].mxu0
        %v668 = vadd.f32 %v459, %v667
        %v669 = vpop.f32.mrb[0].mxu0
        %v670 = vpop.f32.mrb[0].mxu0
        %v671 = vadd.f32 %v462, %v670
        %v672 = vpop.f32.mrb[0].mxu0
        %673 = vmatprep.mubr.bf16.mxu0 0
        %674 = vmatmul.mubr.bf16.gmra.mrb[0].mxu0 %v260
        %v675 = vpop.f32.mrb[0].mxu0
        %v676 = vadd.f32 %v467, %v675
        %v677 = vpop.f32.mrb[0].mxu0
        %v678 = vpop.f32.mrb[0].mxu0
        %v679 = vadd.f32 %v470, %v678
        %v680 = vpop.f32.mrb[0].mxu0
        %681 = vmatprep.mubr.bf16.mxu0 0
        %682 = vmatmul.mubr.bf16.gmra.mrb[0].mxu0 %v261
        %v683 = vpop.f32.mrb[0].mxu0
        %v684 = vadd.f32 %v475, %v683
        %v685 = vpop.f32.mrb[0].mxu0
        %v686 = vpop.f32.mrb[0].mxu0
        %v687 = vadd.f32 %v478, %v686
        %v688 = vpop.f32.mrb[0].mxu0
        %689 = vmatprep.mubr.bf16.mxu0 0
        %690 = vmatmul.mubr.bf16.gmra.mrb[0].mxu0 %v262
        %v691 = vpop.f32.mrb[0].mxu0
        %v692 = vadd.f32 %v483, %v691
        %v693 = vpop.f32.mrb[0].mxu0
        %v694 = vpop.f32.mrb[0].mxu0
        %v695 = vadd.f32 %v486, %v694
        %v696 = vpop.f32.mrb[0].mxu0
        %697 = vmatprep.mubr.bf16.mxu0 0
        %698 = vmatmul.mubr.bf16.gmra.mrb[0].mxu0 %v263
        %v699 = vpop.f32.mrb[0].mxu0
        %v700 = vadd.f32 %v491, %v699
        %v701 = vpop.f32.mrb[0].mxu0
        %v702 = vpop.f32.mrb[0].mxu0
        %v703 = vadd.f32 %v494, %v702
        %v704 = vpop.f32.mrb[0].mxu0
        %705 = vmatprep.mubr.bf16.mxu0 0
        %706 = vmatmul.mubr.bf16.gmra.mrb[0].mxu0 %v264
        %v707 = vpop.f32.mrb[0].mxu0
        %v708 = vadd.f32 %v499, %v707
        %v709 = vpop.f32.mrb[0].mxu0
        %v710 = vpop.f32.mrb[0].mxu0
        %v711 = vadd.f32 %v502, %v710
        %v712 = vpop.f32.mrb[0].mxu0
        %713 = vmatprep.mubr.bf16.mxu0 0
        %714 = vmatmul.mubr.bf16.gmra.mrb[0].mxu0 %v265
        %v715 = vpop.f32.mrb[0].mxu0
        %v716 = vadd.f32 %v507, %v715
        %v717 = vpop.f32.mrb[0].mxu0
        %v718 = vpop.f32.mrb[0].mxu0
        %v719 = vadd.f32 %v510, %v718
        %v720 = vpop.f32.mrb[0].mxu0
        %721 = vmatprep.mubr.bf16.mxu0 0
        %722 = vmatmul.mubr.bf16.gmra.mrb[0].mxu0 %v266
        %v723 = vpop.f32.mrb[0].mxu0
        %v724 = vadd.f32 %v515, %v723
        %v725 = vpop.f32.mrb[0].mxu0
        %v726 = vpop.f32.mrb[0].mxu0
        %v727 = vadd.f32 %v518, %v726
        %v728 = vpop.f32.mrb[0].mxu0
        %729 = vmatprep.mubr.bf16.mxu0 0
        %730 = vmatmul.mubr.bf16.gmra.mrb[0].mxu0 %v267
        %v731 = vpop.f32.mrb[0].mxu0
        %v732 = vadd.f32 %v523, %v731
        %v733 = vpop.f32.mrb[0].mxu0
        %v734 = vpop.f32.mrb[0].mxu0
        %v735 = vadd.f32 %v526, %v734
        %v736 = vpop.f32.mrb[0].mxu0
        %737 = vmatprep.mubr.bf16.mxu0 0
        %738 = vmatmul.mubr.bf16.gmra.mrb[0].mxu0 %v268
        %v739 = vpop.f32.mrb[0].mxu0
        %v740 = vadd.f32 %v531, %v739
        %v741 = vpop.f32.mrb[0].mxu0
        %v742 = vpop.f32.mrb[0].mxu0
        %v743 = vadd.f32 %v534, %v742
        %v744 = vpop.f32.mrb[0].mxu0
        %745 = vmatprep.mubr.bf16.mxu0 0
        %746 = vmatmul.mubr.bf16.gmra.mrb[0].mxu0 %v269
        %v747 = vpop.f32.mrb[0].mxu0
        %v748 = vadd.f32 %v539, %v747
        %v749 = vpop.f32.mrb[0].mxu0
        %v750 = vpop.f32.mrb[0].mxu0
        %v751 = vadd.f32 %v542, %v750
        %v752 = vpop.f32.mrb[0].mxu0
        %753 = vmatprep.mubr.bf16.mxu0 0
        %754 = vmatmul.mubr.bf16.gmra.mrb[0].mxu0 %v270
        %v755 = vpop.f32.mrb[0].mxu0
        %v756 = vadd.f32 %v547, %v755
        %v757 = vpop.f32.mrb[0].mxu0
        %v758 = vpop.f32.mrb[0].mxu0
        %v759 = vadd.f32 %v550, %v758
        %v760 = vpop.f32.mrb[0].mxu0
        %761 = vmatprep.mubr.bf16.mxu0 0
        %762 = vmatmul.mubr.bf16.gmra.mrb[0].mxu0 %v271
        %v763 = vpop.f32.mrb[0].mxu0
        %v764 = vadd.f32 %v555, %v763
        %v765 = vpop.f32.mrb[0].mxu0
        %v766 = vpop.f32.mrb[0].mxu0
        %v767 = vadd.f32 %v558, %v766
        %v768 = vpop.f32.mrb[0].mxu0
        %769 = vdwg.mxu0
        %v770 = vld [vmem:[%s222 + $0x2] sm:$0xff]
        %v771 = vld [vmem:[%s222 + $0xa] sm:$0xff]
        %v772 = vld [vmem:[%s222 + $0x1a] sm:$0xff]
        %v773 = vld [vmem:[%s222 + $0x22] sm:$0xff]
        %v774 = vld [vmem:[%s222 + $0x32] sm:$0xff]
        %v775 = vld [vmem:[%s222 + $0x3a] sm:$0xff]
        %v776 = vld [vmem:[%s222 + $0x4a] sm:$0xff]
        %v777 = vld [vmem:[%s222 + $0x52] sm:$0xff]
        %v778 = vld [vmem:[%s222 + $0x62] sm:$0xff]
        %v779 = vld [vmem:[%s222 + $0x6a] sm:$0xff]
        %v780 = vld [vmem:[%s222 + $0x7a] sm:$0xff]
        %v781 = vld [vmem:[%s222 + $0x82] sm:$0xff]
        %v782 = vld [vmem:[%s222 + $0x92] sm:$0xff]
        %v783 = vld [vmem:[%s222 + $0x9a] sm:$0xff]
        %v784 = vld [vmem:[%s222 + $0xaa] sm:$0xff]
        %v785 = vld [vmem:[%s222 + $0xb2] sm:$0xff]
        %v786 = vld [vmem:[%s222 + $0xc2] sm:$0xff]
        %v787 = vld [vmem:[%s222 + $0xca] sm:$0xff]
        %v788 = vld [vmem:[%s222 + $0xda] sm:$0xff]
        %v789 = vld [vmem:[%s222 + $0xe2] sm:$0xff]
        %v790 = vld [vmem:[%s222 + $0xf2] sm:$0xff]
        %v791 = vld [vmem:[%s222 + $0xfa] sm:$0xff]
        %v792 = vld [vmem:[%s222 + $0x10a] sm:$0xff]
        %v793 = vld [vmem:[%s222 + $0x112] sm:$0xff]
        %v794 = vld [vmem:[%s222 + $0x122] sm:$0xff]
        %v795 = vld [vmem:[%s222 + $0x12a] sm:$0xff]
        %v796 = vld [vmem:[%s222 + $0x13a] sm:$0xff]
        %v797 = vld [vmem:[%s222 + $0x142] sm:$0xff]
        %v798 = vld [vmem:[%s222 + $0x152] sm:$0xff]
        %v799 = vld [vmem:[%s222 + $0x15a] sm:$0xff]
        %v800 = vld [vmem:[%s222 + $0x16a] sm:$0xff]
        %v801 = vld [vmem:[%s222 + $0x172] sm:$0xff]
        %v802 = vpack.c.bf16 %v771, %v770
        %v803 = vpack.c.bf16 %v773, %v772
        %v804 = vpack.c.bf16 %v775, %v774
        %v805 = vpack.c.bf16 %v777, %v776
        %v806 = vpack.c.bf16 %v779, %v778
        %v807 = vpack.c.bf16 %v781, %v780
        %v808 = vpack.c.bf16 %v783, %v782
        %v809 = vpack.c.bf16 %v785, %v784
        %v810 = vpack.c.bf16 %v787, %v786
        %v811 = vpack.c.bf16 %v789, %v788
        %v812 = vpack.c.bf16 %v791, %v790
        %v813 = vpack.c.bf16 %v793, %v792
        %v814 = vpack.c.bf16 %v795, %v794
        %v815 = vpack.c.bf16 %v797, %v796
        %v816 = vpack.c.bf16 %v799, %v798
        %v817 = vpack.c.bf16 %v801, %v800
        %v818 = vld [vmem:[%s1 + $0x80] sm:$0xf]
        %v819 = vld [vmem:[%s1 + $0x84] sm:$0xf]
        %v820 = vld [vmem:[%s1 + $0x88] sm:$0xf]
        %v821 = vld [vmem:[%s1 + $0x8c] sm:$0xf]
        %v822 = vld [vmem:[%s1 + $0x90] sm:$0xf]
        %v823 = vld [vmem:[%s1 + $0x94] sm:$0xf]
        %v824 = vld [vmem:[%s1 + $0x98] sm:$0xf]
        %v825 = vld [vmem:[%s1 + $0x9c] sm:$0xf]
        %v826 = vld [vmem:[%s1 + $0xa0] sm:$0xf]
        %v827 = vld [vmem:[%s1 + $0xa4] sm:$0xf]
        %v828 = vld [vmem:[%s1 + $0xa8] sm:$0xf]
        %v829 = vld [vmem:[%s1 + $0xac] sm:$0xf]
        %v830 = vld [vmem:[%s1 + $0xb0] sm:$0xf]
        %v831 = vld [vmem:[%s1 + $0xb4] sm:$0xf]
        %v832 = vld [vmem:[%s1 + $0xb8] sm:$0xf]
        %v833 = vld [vmem:[%s1 + $0xbc] sm:$0xf]
        %v850 = vunpack.c.l.b16 %v818
        %v851 = vunpack.c.l.b16 %v819
        %v852 = vunpack.c.l.b16 %v820
        %v853 = vunpack.c.l.b16 %v821
        %v854 = vunpack.c.l.b16 %v822
        %v855 = vunpack.c.l.b16 %v823
        %v856 = vunpack.c.l.b16 %v824
        %v857 = vunpack.c.l.b16 %v825
        %v858 = vunpack.c.l.b16 %v826
        %v859 = vunpack.c.l.b16 %v827
        %v860 = vunpack.c.l.b16 %v828
        %v861 = vunpack.c.l.b16 %v829
        %v862 = vunpack.c.l.b16 %v830
        %v863 = vunpack.c.l.b16 %v831
        %v864 = vunpack.c.l.b16 %v832
        %v865 = vunpack.c.l.b16 %v833
        %v866 = vpack.c.b16 %v851, %v850
        %v867 = vpack.c.b16 %v853, %v852
        %v868 = vpack.c.b16 %v855, %v854
        %v869 = vpack.c.b16 %v857, %v856
        %v870 = vpack.c.b16 %v859, %v858
        %v871 = vpack.c.b16 %v861, %v860
        %v872 = vpack.c.b16 %v863, %v862
        %v873 = vpack.c.b16 %v865, %v864
        %882 = vmatprep.subr.bf16.mxu0 0
        %883 = vmatpush1.bf16.msra.mxu0 %v866
        %884 = vmatprep.subr.bf16.mxu0 0
        %885 = vmatpush1.bf16.msra.mxu0 %v867
        %886 = vmatprep.subr.bf16.mxu0 0
        %887 = vmatpush1.bf16.msra.mxu0 %v868
        %888 = vmatprep.subr.bf16.mxu0 0
        %889 = vmatpush1.bf16.msra.mxu0 %v869
        %890 = vmatprep.subr.bf16.mxu0 0
        %891 = vmatpush1.bf16.msra.mxu0 %v870
        %892 = vmatprep.subr.bf16.mxu0 0
        %893 = vmatpush1.bf16.msra.mxu0 %v871
        %894 = vmatprep.subr.bf16.mxu0 0
        %895 = vmatpush1.bf16.msra.mxu0 %v872
        %896 = vmatprep.subr.bf16.mxu0 0
        %897 = vmatpush1.bf16.msra.mxu0 %v873
        %898 = vmatprep.subr.bf16.mxu0 0
        %899 = vmatpush1.bf16.msra.mxu0 0
        %900 = vmatprep.subr.bf16.mxu0 0
        %901 = vmatpush1.bf16.msra.mxu0 0
        %902 = vmatprep.subr.bf16.mxu0 0
        %903 = vmatpush1.bf16.msra.mxu0 0
        %904 = vmatprep.subr.bf16.mxu0 0
        %905 = vmatpush1.bf16.msra.mxu0 0
        %906 = vmatprep.subr.bf16.mxu0 0
        %907 = vmatpush1.bf16.msra.mxu0 0
        %908 = vmatprep.subr.bf16.mxu0 0
        %909 = vmatpush1.bf16.msra.mxu0 0
        %910 = vmatprep.subr.bf16.mxu0 0
        %911 = vmatpush1.bf16.msra.mxu0 0
        %912 = vmatprep.subr.bf16.mxu0 0
        %913 = vmatpush1.bf16.msra.mxu0 0
        %914 = vmatprep.mubr.bf16.mxu0 0
        %915 = vmatmul.mubr.bf16.gmra.mrb[0].mxu0 %v802
        %v916 = vpop.f32.mrb[0].mxu0
        %v917 = vadd.f32 0.0, %v916
        %v918 = vpop.f32.mrb[0].mxu0
        %v919 = vpop.f32.mrb[0].mxu0
        %v920 = vadd.f32 0.0, %v919
        %v921 = vpop.f32.mrb[0].mxu0
        %922 = vmatprep.mubr.bf16.mxu0 0
        %923 = vmatmul.mubr.bf16.gmra.mrb[0].mxu0 %v803
        %v924 = vpop.f32.mrb[0].mxu0
        %v925 = vadd.f32 0.0, %v924
        %v926 = vpop.f32.mrb[0].mxu0
        %v927 = vpop.f32.mrb[0].mxu0
        %v928 = vadd.f32 0.0, %v927
        %v929 = vpop.f32.mrb[0].mxu0
        %930 = vmatprep.mubr.bf16.mxu0 0
        %931 = vmatmul.mubr.bf16.gmra.mrb[0].mxu0 %v804
        %v932 = vpop.f32.mrb[0].mxu0
        %v933 = vadd.f32 0.0, %v932
        %v934 = vpop.f32.mrb[0].mxu0
        %v935 = vpop.f32.mrb[0].mxu0
        %v936 = vadd.f32 0.0, %v935
        %v937 = vpop.f32.mrb[0].mxu0
        %938 = vmatprep.mubr.bf16.mxu0 0
        %939 = vmatmul.mubr.bf16.gmra.mrb[0].mxu0 %v805
        %v940 = vpop.f32.mrb[0].mxu0
        %v941 = vadd.f32 0.0, %v940
        %v942 = vpop.f32.mrb[0].mxu0
        %v943 = vpop.f32.mrb[0].mxu0
        %v944 = vadd.f32 0.0, %v943
        %v945 = vpop.f32.mrb[0].mxu0
        %946 = vmatprep.mubr.bf16.mxu0 0
        %947 = vmatmul.mubr.bf16.gmra.mrb[0].mxu0 %v806
        %v948 = vpop.f32.mrb[0].mxu0
        %v949 = vadd.f32 0.0, %v948
        %v950 = vpop.f32.mrb[0].mxu0
        %v951 = vpop.f32.mrb[0].mxu0
        %v952 = vadd.f32 0.0, %v951
        %v953 = vpop.f32.mrb[0].mxu0
        %954 = vmatprep.mubr.bf16.mxu0 0
        %955 = vmatmul.mubr.bf16.gmra.mrb[0].mxu0 %v807
        %v956 = vpop.f32.mrb[0].mxu0
        %v957 = vadd.f32 0.0, %v956
        %v958 = vpop.f32.mrb[0].mxu0
        %v959 = vpop.f32.mrb[0].mxu0
        %v960 = vadd.f32 0.0, %v959
        %v961 = vpop.f32.mrb[0].mxu0
        %962 = vmatprep.mubr.bf16.mxu0 0
        %963 = vmatmul.mubr.bf16.gmra.mrb[0].mxu0 %v808
        %v964 = vpop.f32.mrb[0].mxu0
        %v965 = vadd.f32 0.0, %v964
        %v966 = vpop.f32.mrb[0].mxu0
        %v967 = vpop.f32.mrb[0].mxu0
        %v968 = vadd.f32 0.0, %v967
        %v969 = vpop.f32.mrb[0].mxu0
        %970 = vmatprep.mubr.bf16.mxu0 0
        %971 = vmatmul.mubr.bf16.gmra.mrb[0].mxu0 %v809
        %v972 = vpop.f32.mrb[0].mxu0
        %v973 = vadd.f32 0.0, %v972
        %v974 = vpop.f32.mrb[0].mxu0
        %v975 = vpop.f32.mrb[0].mxu0
        %v976 = vadd.f32 0.0, %v975
        %v977 = vpop.f32.mrb[0].mxu0
        %978 = vmatprep.mubr.bf16.mxu0 0
        %979 = vmatmul.mubr.bf16.gmra.mrb[0].mxu0 %v810
        %v980 = vpop.f32.mrb[0].mxu0
        %v981 = vadd.f32 0.0, %v980
        %v982 = vpop.f32.mrb[0].mxu0
        %v983 = vpop.f32.mrb[0].mxu0
        %v984 = vadd.f32 0.0, %v983
        %v985 = vpop.f32.mrb[0].mxu0
        %986 = vmatprep.mubr.bf16.mxu0 0
        %987 = vmatmul.mubr.bf16.gmra.mrb[0].mxu0 %v811
        %v988 = vpop.f32.mrb[0].mxu0
        %v989 = vadd.f32 0.0, %v988
        %v990 = vpop.f32.mrb[0].mxu0
        %v991 = vpop.f32.mrb[0].mxu0
        %v992 = vadd.f32 0.0, %v991
        %v993 = vpop.f32.mrb[0].mxu0
        %994 = vmatprep.mubr.bf16.mxu0 0
        %995 = vmatmul.mubr.bf16.gmra.mrb[0].mxu0 %v812
        %v996 = vpop.f32.mrb[0].mxu0
        %v997 = vadd.f32 0.0, %v996
        %v998 = vpop.f32.mrb[0].mxu0
        %v999 = vpop.f32.mrb[0].mxu0
        %v1000 = vadd.f32 0.0, %v999
        %v1001 = vpop.f32.mrb[0].mxu0
        %1002 = vmatprep.mubr.bf16.mxu0 0
        %1003 = vmatmul.mubr.bf16.gmra.mrb[0].mxu0 %v813
        %v1004 = vpop.f32.mrb[0].mxu0
        %v1005 = vadd.f32 0.0, %v1004
        %v1006 = vpop.f32.mrb[0].mxu0
        %v1007 = vpop.f32.mrb[0].mxu0
        %v1008 = vadd.f32 0.0, %v1007
        %v1009 = vpop.f32.mrb[0].mxu0
        %1010 = vmatprep.mubr.bf16.mxu0 0
        %1011 = vmatmul.mubr.bf16.gmra.mrb[0].mxu0 %v814
        %v1012 = vpop.f32.mrb[0].mxu0
        %v1013 = vadd.f32 0.0, %v1012
        %v1014 = vpop.f32.mrb[0].mxu0
        %v1015 = vpop.f32.mrb[0].mxu0
        %v1016 = vadd.f32 0.0, %v1015
        %v1017 = vpop.f32.mrb[0].mxu0
        %1018 = vmatprep.mubr.bf16.mxu0 0
        %1019 = vmatmul.mubr.bf16.gmra.mrb[0].mxu0 %v815
        %v1020 = vpop.f32.mrb[0].mxu0
        %v1021 = vadd.f32 0.0, %v1020
        %v1022 = vpop.f32.mrb[0].mxu0
        %v1023 = vpop.f32.mrb[0].mxu0
        %v1024 = vadd.f32 0.0, %v1023
        %v1025 = vpop.f32.mrb[0].mxu0
        %1026 = vmatprep.mubr.bf16.mxu0 0
        %1027 = vmatmul.mubr.bf16.gmra.mrb[0].mxu0 %v816
        %v1028 = vpop.f32.mrb[0].mxu0
        %v1029 = vadd.f32 0.0, %v1028
        %v1030 = vpop.f32.mrb[0].mxu0
        %v1031 = vpop.f32.mrb[0].mxu0
        %v1032 = vadd.f32 0.0, %v1031
        %v1033 = vpop.f32.mrb[0].mxu0
        %1034 = vmatprep.mubr.bf16.mxu0 0
        %1035 = vmatmul.mubr.bf16.gmra.mrb[0].mxu0 %v817
        %v1036 = vpop.f32.mrb[0].mxu0
        %v1037 = vadd.f32 0.0, %v1036
        %v1038 = vpop.f32.mrb[0].mxu0
        %v1039 = vpop.f32.mrb[0].mxu0
        %v1040 = vadd.f32 0.0, %v1039
        %v1041 = vpop.f32.mrb[0].mxu0
        %1042 = vdwg.mxu0
        %v1043 = vadd.f32 %v644, %v917
        %v1044 = vadd.f32 %v647, %v920
        %v1045 = vadd.f32 %v652, %v925
        %v1046 = vadd.f32 %v655, %v928
        %v1047 = vadd.f32 %v660, %v933
        %v1048 = vadd.f32 %v663, %v936
        %v1049 = vadd.f32 %v668, %v941
        %v1050 = vadd.f32 %v671, %v944
        %v1051 = vadd.f32 %v676, %v949
        %v1052 = vadd.f32 %v679, %v952
        %v1053 = vadd.f32 %v684, %v957
        %v1054 = vadd.f32 %v687, %v960
        %v1055 = vadd.f32 %v692, %v965
        %v1056 = vadd.f32 %v695, %v968
        %v1057 = vadd.f32 %v700, %v973
        %v1058 = vadd.f32 %v703, %v976
        %v1059 = vadd.f32 %v708, %v981
        %v1060 = vadd.f32 %v711, %v984
        %v1061 = vadd.f32 %v716, %v989
        %v1062 = vadd.f32 %v719, %v992
        %v1063 = vadd.f32 %v724, %v997
        %v1064 = vadd.f32 %v727, %v1000
        %v1065 = vadd.f32 %v732, %v1005
        %v1066 = vadd.f32 %v735, %v1008
        %v1067 = vadd.f32 %v740, %v1013
        %v1068 = vadd.f32 %v743, %v1016
        %v1069 = vadd.f32 %v748, %v1021
        %v1070 = vadd.f32 %v751, %v1024
        %v1071 = vadd.f32 %v756, %v1029
        %v1072 = vadd.f32 %v759, %v1032
        %v1073 = vadd.f32 %v764, %v1037
        %v1074 = vadd.f32 %v767, %v1040
        %s1075 = scalar_lea.vmem %s222, 24
        %v1076 = vld [vmem:[%s1075] sm:$0xff]
        %v1077 = vld [vmem:[%s1075 + $0x8] sm:$0xff]
        %v1078 = vld [vmem:[%s1075 + $0x18] sm:$0xff]
        %v1079 = vld [vmem:[%s1075 + $0x20] sm:$0xff]
        %v1080 = vld [vmem:[%s1075 + $0x30] sm:$0xff]
        %v1081 = vld [vmem:[%s1075 + $0x38] sm:$0xff]
        %v1082 = vld [vmem:[%s1075 + $0x48] sm:$0xff]
        %v1083 = vld [vmem:[%s1075 + $0x50] sm:$0xff]
        %v1084 = vld [vmem:[%s1075 + $0x60] sm:$0xff]
        %v1085 = vld [vmem:[%s1075 + $0x68] sm:$0xff]
        %v1086 = vld [vmem:[%s1075 + $0x78] sm:$0xff]
        %v1087 = vld [vmem:[%s1075 + $0x80] sm:$0xff]
        %v1088 = vld [vmem:[%s1075 + $0x90] sm:$0xff]
        %v1089 = vld [vmem:[%s1075 + $0x98] sm:$0xff]
        %v1090 = vld [vmem:[%s1075 + $0xa8] sm:$0xff]
        %v1091 = vld [vmem:[%s1075 + $0xb0] sm:$0xff]
        %v1092 = vld [vmem:[%s1075 + $0xc0] sm:$0xff]
        %v1093 = vld [vmem:[%s1075 + $0xc8] sm:$0xff]
        %v1094 = vld [vmem:[%s1075 + $0xd8] sm:$0xff]
        %v1095 = vld [vmem:[%s1075 + $0xe0] sm:$0xff]
        %v1096 = vld [vmem:[%s1075 + $0xf0] sm:$0xff]
        %v1097 = vld [vmem:[%s1075 + $0xf8] sm:$0xff]
        %v1098 = vld [vmem:[%s1075 + $0x108] sm:$0xff]
        %v1099 = vld [vmem:[%s1075 + $0x110] sm:$0xff]
        %v1100 = vld [vmem:[%s1075 + $0x120] sm:$0xff]
        %v1101 = vld [vmem:[%s1075 + $0x128] sm:$0xff]
        %v1102 = vld [vmem:[%s1075 + $0x138] sm:$0xff]
        %v1103 = vld [vmem:[%s1075 + $0x140] sm:$0xff]
        %v1104 = vld [vmem:[%s1075 + $0x150] sm:$0xff]
        %v1105 = vld [vmem:[%s1075 + $0x158] sm:$0xff]
        %v1106 = vld [vmem:[%s1075 + $0x168] sm:$0xff]
        %v1107 = vld [vmem:[%s1075 + $0x170] sm:$0xff]
        %v1108 = vpack.c.bf16 %v1077, %v1076
        %v1109 = vpack.c.bf16 %v1079, %v1078
        %v1110 = vpack.c.bf16 %v1081, %v1080
        %v1111 = vpack.c.bf16 %v1083, %v1082
        %v1112 = vpack.c.bf16 %v1085, %v1084
        %v1113 = vpack.c.bf16 %v1087, %v1086
        %v1114 = vpack.c.bf16 %v1089, %v1088
        %v1115 = vpack.c.bf16 %v1091, %v1090
        %v1116 = vpack.c.bf16 %v1093, %v1092
        %v1117 = vpack.c.bf16 %v1095, %v1094
        %v1118 = vpack.c.bf16 %v1097, %v1096
        %v1119 = vpack.c.bf16 %v1099, %v1098
        %v1120 = vpack.c.bf16 %v1101, %v1100
        %v1121 = vpack.c.bf16 %v1103, %v1102
        %v1122 = vpack.c.bf16 %v1105, %v1104
        %v1123 = vpack.c.bf16 %v1107, %v1106
        %v1124 = vld [vmem:[%s1 + $0xc0] sm:$0xf]
        %v1125 = vld [vmem:[%s1 + $0xc4] sm:$0xf]
        %v1126 = vld [vmem:[%s1 + $0xc8] sm:$0xf]
        %v1127 = vld [vmem:[%s1 + $0xcc] sm:$0xf]
        %v1128 = vld [vmem:[%s1 + $0xd0] sm:$0xf]
        %v1129 = vld [vmem:[%s1 + $0xd4] sm:$0xf]
        %v1130 = vld [vmem:[%s1 + $0xd8] sm:$0xf]
        %v1131 = vld [vmem:[%s1 + $0xdc] sm:$0xf]
        %v1132 = vld [vmem:[%s1 + $0xe0] sm:$0xf]
        %v1133 = vld [vmem:[%s1 + $0xe4] sm:$0xf]
        %v1134 = vld [vmem:[%s1 + $0xe8] sm:$0xf]
        %v1135 = vld [vmem:[%s1 + $0xec] sm:$0xf]
        %v1136 = vld [vmem:[%s1 + $0xf0] sm:$0xf]
        %v1137 = vld [vmem:[%s1 + $0xf4] sm:$0xf]
        %v1138 = vld [vmem:[%s1 + $0xf8] sm:$0xf]
        %v1139 = vld [vmem:[%s1 + $0xfc] sm:$0xf]
        %v1156 = vunpack.c.l.b16 %v1124
        %v1157 = vunpack.c.l.b16 %v1125
        %v1158 = vunpack.c.l.b16 %v1126
        %v1159 = vunpack.c.l.b16 %v1127
        %v1160 = vunpack.c.l.b16 %v1128
        %v1161 = vunpack.c.l.b16 %v1129
        %v1162 = vunpack.c.l.b16 %v1130
        %v1163 = vunpack.c.l.b16 %v1131
        %v1164 = vunpack.c.l.b16 %v1132
        %v1165 = vunpack.c.l.b16 %v1133
        %v1166 = vunpack.c.l.b16 %v1134
        %v1167 = vunpack.c.l.b16 %v1135
        %v1168 = vunpack.c.l.b16 %v1136
        %v1169 = vunpack.c.l.b16 %v1137
        %v1170 = vunpack.c.l.b16 %v1138
        %v1171 = vunpack.c.l.b16 %v1139
        %v1172 = vpack.c.b16 %v1157, %v1156
        %v1173 = vpack.c.b16 %v1159, %v1158
        %v1174 = vpack.c.b16 %v1161, %v1160
        %v1175 = vpack.c.b16 %v1163, %v1162
        %v1176 = vpack.c.b16 %v1165, %v1164
        %v1177 = vpack.c.b16 %v1167, %v1166
        %v1178 = vpack.c.b16 %v1169, %v1168
        %v1179 = vpack.c.b16 %v1171, %v1170
        %1188 = vmatprep.subr.bf16.mxu0 0
        %1189 = vmatpush1.bf16.msra.mxu0 %v1172
        %1190 = vmatprep.subr.bf16.mxu0 0
        %1191 = vmatpush1.bf16.msra.mxu0 %v1173
        %1192 = vmatprep.subr.bf16.mxu0 0
        %1193 = vmatpush1.bf16.msra.mxu0 %v1174
        %1194 = vmatprep.subr.bf16.mxu0 0
        %1195 = vmatpush1.bf16.msra.mxu0 %v1175
        %1196 = vmatprep.subr.bf16.mxu0 0
        %1197 = vmatpush1.bf16.msra.mxu0 %v1176
        %1198 = vmatprep.subr.bf16.mxu0 0
        %1199 = vmatpush1.bf16.msra.mxu0 %v1177
        %1200 = vmatprep.subr.bf16.mxu0 0
        %1201 = vmatpush1.bf16.msra.mxu0 %v1178
        %1202 = vmatprep.subr.bf16.mxu0 0
        %1203 = vmatpush1.bf16.msra.mxu0 %v1179
        %1204 = vmatprep.subr.bf16.mxu0 0
        %1205 = vmatpush1.bf16.msra.mxu0 0
        %1206 = vmatprep.subr.bf16.mxu0 0
        %1207 = vmatpush1.bf16.msra.mxu0 0
        %1208 = vmatprep.subr.bf16.mxu0 0
        %1209 = vmatpush1.bf16.msra.mxu0 0
        %1210 = vmatprep.subr.bf16.mxu0 0
        %1211 = vmatpush1.bf16.msra.mxu0 0
        %1212 = vmatprep.subr.bf16.mxu0 0
        %1213 = vmatpush1.bf16.msra.mxu0 0
        %1214 = vmatprep.subr.bf16.mxu0 0
        %1215 = vmatpush1.bf16.msra.mxu0 0
        %1216 = vmatprep.subr.bf16.mxu0 0
        %1217 = vmatpush1.bf16.msra.mxu0 0
        %1218 = vmatprep.subr.bf16.mxu0 0
        %1219 = vmatpush1.bf16.msra.mxu0 0
        %1220 = vmatprep.mubr.bf16.mxu0 0
        %1221 = vmatmul.mubr.bf16.gmra.mrb[0].mxu0 %v1108
        %v1222 = vpop.f32.mrb[0].mxu0
        %v1223 = vadd.f32 0.0, %v1222
        %v1224 = vpop.f32.mrb[0].mxu0
        %v1225 = vpop.f32.mrb[0].mxu0
        %v1226 = vadd.f32 0.0, %v1225
        %v1227 = vpop.f32.mrb[0].mxu0
        %1228 = vmatprep.mubr.bf16.mxu0 0
        %1229 = vmatmul.mubr.bf16.gmra.mrb[0].mxu0 %v1109
        %v1230 = vpop.f32.mrb[0].mxu0
        %v1231 = vadd.f32 0.0, %v1230
        %v1232 = vpop.f32.mrb[0].mxu0
        %v1233 = vpop.f32.mrb[0].mxu0
        %v1234 = vadd.f32 0.0, %v1233
        %v1235 = vpop.f32.mrb[0].mxu0
        %1236 = vmatprep.mubr.bf16.mxu0 0
        %1237 = vmatmul.mubr.bf16.gmra.mrb[0].mxu0 %v1110
        %v1238 = vpop.f32.mrb[0].mxu0
        %v1239 = vadd.f32 0.0, %v1238
        %v1240 = vpop.f32.mrb[0].mxu0
        %v1241 = vpop.f32.mrb[0].mxu0
        %v1242 = vadd.f32 0.0, %v1241
        %v1243 = vpop.f32.mrb[0].mxu0
        %1244 = vmatprep.mubr.bf16.mxu0 0
        %1245 = vmatmul.mubr.bf16.gmra.mrb[0].mxu0 %v1111
        %v1246 = vpop.f32.mrb[0].mxu0
        %v1247 = vadd.f32 0.0, %v1246
        %v1248 = vpop.f32.mrb[0].mxu0
        %v1249 = vpop.f32.mrb[0].mxu0
        %v1250 = vadd.f32 0.0, %v1249
        %v1251 = vpop.f32.mrb[0].mxu0
        %1252 = vmatprep.mubr.bf16.mxu0 0
        %1253 = vmatmul.mubr.bf16.gmra.mrb[0].mxu0 %v1112
        %v1254 = vpop.f32.mrb[0].mxu0
        %v1255 = vadd.f32 0.0, %v1254
        %v1256 = vpop.f32.mrb[0].mxu0
        %v1257 = vpop.f32.mrb[0].mxu0
        %v1258 = vadd.f32 0.0, %v1257
        %v1259 = vpop.f32.mrb[0].mxu0
        %1260 = vmatprep.mubr.bf16.mxu0 0
        %1261 = vmatmul.mubr.bf16.gmra.mrb[0].mxu0 %v1113
        %v1262 = vpop.f32.mrb[0].mxu0
        %v1263 = vadd.f32 0.0, %v1262
        %v1264 = vpop.f32.mrb[0].mxu0
        %v1265 = vpop.f32.mrb[0].mxu0
        %v1266 = vadd.f32 0.0, %v1265
        %v1267 = vpop.f32.mrb[0].mxu0
        %1268 = vmatprep.mubr.bf16.mxu0 0
        %1269 = vmatmul.mubr.bf16.gmra.mrb[0].mxu0 %v1114
        %v1270 = vpop.f32.mrb[0].mxu0
        %v1271 = vadd.f32 0.0, %v1270
        %v1272 = vpop.f32.mrb[0].mxu0
        %v1273 = vpop.f32.mrb[0].mxu0
        %v1274 = vadd.f32 0.0, %v1273
        %v1275 = vpop.f32.mrb[0].mxu0
        %1276 = vmatprep.mubr.bf16.mxu0 0
        %1277 = vmatmul.mubr.bf16.gmra.mrb[0].mxu0 %v1115
        %v1278 = vpop.f32.mrb[0].mxu0
        %v1279 = vadd.f32 0.0, %v1278
        %v1280 = vpop.f32.mrb[0].mxu0
        %v1281 = vpop.f32.mrb[0].mxu0
        %v1282 = vadd.f32 0.0, %v1281
        %v1283 = vpop.f32.mrb[0].mxu0
        %1284 = vmatprep.mubr.bf16.mxu0 0
        %1285 = vmatmul.mubr.bf16.gmra.mrb[0].mxu0 %v1116
        %v1286 = vpop.f32.mrb[0].mxu0
        %v1287 = vadd.f32 0.0, %v1286
        %v1288 = vpop.f32.mrb[0].mxu0
        %v1289 = vpop.f32.mrb[0].mxu0
        %v1290 = vadd.f32 0.0, %v1289
        %v1291 = vpop.f32.mrb[0].mxu0
        %1292 = vmatprep.mubr.bf16.mxu0 0
        %1293 = vmatmul.mubr.bf16.gmra.mrb[0].mxu0 %v1117
        %v1294 = vpop.f32.mrb[0].mxu0
        %v1295 = vadd.f32 0.0, %v1294
        %v1296 = vpop.f32.mrb[0].mxu0
        %v1297 = vpop.f32.mrb[0].mxu0
        %v1298 = vadd.f32 0.0, %v1297
        %v1299 = vpop.f32.mrb[0].mxu0
        %1300 = vmatprep.mubr.bf16.mxu0 0
        %1301 = vmatmul.mubr.bf16.gmra.mrb[0].mxu0 %v1118
        %v1302 = vpop.f32.mrb[0].mxu0
        %v1303 = vadd.f32 0.0, %v1302
        %v1304 = vpop.f32.mrb[0].mxu0
        %v1305 = vpop.f32.mrb[0].mxu0
        %v1306 = vadd.f32 0.0, %v1305
        %v1307 = vpop.f32.mrb[0].mxu0
        %1308 = vmatprep.mubr.bf16.mxu0 0
        %1309 = vmatmul.mubr.bf16.gmra.mrb[0].mxu0 %v1119
        %v1310 = vpop.f32.mrb[0].mxu0
        %v1311 = vadd.f32 0.0, %v1310
        %v1312 = vpop.f32.mrb[0].mxu0
        %v1313 = vpop.f32.mrb[0].mxu0
        %v1314 = vadd.f32 0.0, %v1313
        %v1315 = vpop.f32.mrb[0].mxu0
        %1316 = vmatprep.mubr.bf16.mxu0 0
        %1317 = vmatmul.mubr.bf16.gmra.mrb[0].mxu0 %v1120
        %v1318 = vpop.f32.mrb[0].mxu0
        %v1319 = vadd.f32 0.0, %v1318
        %v1320 = vpop.f32.mrb[0].mxu0
        %v1321 = vpop.f32.mrb[0].mxu0
        %v1322 = vadd.f32 0.0, %v1321
        %v1323 = vpop.f32.mrb[0].mxu0
        %1324 = vmatprep.mubr.bf16.mxu0 0
        %1325 = vmatmul.mubr.bf16.gmra.mrb[0].mxu0 %v1121
        %v1326 = vpop.f32.mrb[0].mxu0
        %v1327 = vadd.f32 0.0, %v1326
        %v1328 = vpop.f32.mrb[0].mxu0
        %v1329 = vpop.f32.mrb[0].mxu0
        %v1330 = vadd.f32 0.0, %v1329
        %v1331 = vpop.f32.mrb[0].mxu0
        %1332 = vmatprep.mubr.bf16.mxu0 0
        %1333 = vmatmul.mubr.bf16.gmra.mrb[0].mxu0 %v1122
        %v1334 = vpop.f32.mrb[0].mxu0
        %v1335 = vadd.f32 0.0, %v1334
        %v1336 = vpop.f32.mrb[0].mxu0
        %v1337 = vpop.f32.mrb[0].mxu0
        %v1338 = vadd.f32 0.0, %v1337
        %v1339 = vpop.f32.mrb[0].mxu0
        %1340 = vmatprep.mubr.bf16.mxu0 0
        %1341 = vmatmul.mubr.bf16.gmra.mrb[0].mxu0 %v1123
        %v1342 = vpop.f32.mrb[0].mxu0
        %v1343 = vadd.f32 0.0, %v1342
        %v1344 = vpop.f32.mrb[0].mxu0
        %v1345 = vpop.f32.mrb[0].mxu0
        %v1346 = vadd.f32 0.0, %v1345
        %v1347 = vpop.f32.mrb[0].mxu0
        %1348 = vdwg.mxu0
        %v1349 = vadd.f32 %v1043, %v1223
        %v1350 = vadd.f32 %v1044, %v1226
        %v1351 = vadd.f32 %v1045, %v1231
        %v1352 = vadd.f32 %v1046, %v1234
        %v1353 = vadd.f32 %v1047, %v1239
        %v1354 = vadd.f32 %v1048, %v1242
        %v1355 = vadd.f32 %v1049, %v1247
        %v1356 = vadd.f32 %v1050, %v1250
        %v1357 = vadd.f32 %v1051, %v1255
        %v1358 = vadd.f32 %v1052, %v1258
        %v1359 = vadd.f32 %v1053, %v1263
        %v1360 = vadd.f32 %v1054, %v1266
        %v1361 = vadd.f32 %v1055, %v1271
        %v1362 = vadd.f32 %v1056, %v1274
        %v1363 = vadd.f32 %v1057, %v1279
        %v1364 = vadd.f32 %v1058, %v1282
        %v1365 = vadd.f32 %v1059, %v1287
        %v1366 = vadd.f32 %v1060, %v1290
        %v1367 = vadd.f32 %v1061, %v1295
        %v1368 = vadd.f32 %v1062, %v1298
        %v1369 = vadd.f32 %v1063, %v1303
        %v1370 = vadd.f32 %v1064, %v1306
        %v1371 = vadd.f32 %v1065, %v1311
        %v1372 = vadd.f32 %v1066, %v1314
        %v1373 = vadd.f32 %v1067, %v1319
        %v1374 = vadd.f32 %v1068, %v1322
        %v1375 = vadd.f32 %v1069, %v1327
        %v1376 = vadd.f32 %v1070, %v1330
        %v1377 = vadd.f32 %v1071, %v1335
        %v1378 = vadd.f32 %v1072, %v1338
        %v1379 = vadd.f32 %v1073, %v1343
        %v1380 = vadd.f32 %v1074, %v1346
        %v1381 = vld [vmem:[%s1075 + $0x1] sm:$0xff]
        %v1382 = vld [vmem:[%s1075 + $0x9] sm:$0xff]
        %v1383 = vld [vmem:[%s1075 + $0x19] sm:$0xff]
        %v1384 = vld [vmem:[%s1075 + $0x21] sm:$0xff]
        %v1385 = vld [vmem:[%s1075 + $0x31] sm:$0xff]
        %v1386 = vld [vmem:[%s1075 + $0x39] sm:$0xff]
        %v1387 = vld [vmem:[%s1075 + $0x49] sm:$0xff]
        %v1388 = vld [vmem:[%s1075 + $0x51] sm:$0xff]
        %v1389 = vld [vmem:[%s1075 + $0x61] sm:$0xff]
        %v1390 = vld [vmem:[%s1075 + $0x69] sm:$0xff]
        %v1391 = vld [vmem:[%s1075 + $0x79] sm:$0xff]
        %v1392 = vld [vmem:[%s1075 + $0x81] sm:$0xff]
        %v1393 = vld [vmem:[%s1075 + $0x91] sm:$0xff]
        %v1394 = vld [vmem:[%s1075 + $0x99] sm:$0xff]
        %v1395 = vld [vmem:[%s1075 + $0xa9] sm:$0xff]
        %v1396 = vld [vmem:[%s1075 + $0xb1] sm:$0xff]
        %v1397 = vld [vmem:[%s1075 + $0xc1] sm:$0xff]
        %v1398 = vld [vmem:[%s1075 + $0xc9] sm:$0xff]
        %v1399 = vld [vmem:[%s1075 + $0xd9] sm:$0xff]
        %v1400 = vld [vmem:[%s1075 + $0xe1] sm:$0xff]
        %v1401 = vld [vmem:[%s1075 + $0xf1] sm:$0xff]
        %v1402 = vld [vmem:[%s1075 + $0xf9] sm:$0xff]
        %v1403 = vld [vmem:[%s1075 + $0x109] sm:$0xff]
        %v1404 = vld [vmem:[%s1075 + $0x111] sm:$0xff]
        %v1405 = vld [vmem:[%s1075 + $0x121] sm:$0xff]
        %v1406 = vld [vmem:[%s1075 + $0x129] sm:$0xff]
        %v1407 = vld [vmem:[%s1075 + $0x139] sm:$0xff]
        %v1408 = vld [vmem:[%s1075 + $0x141] sm:$0xff]
        %v1409 = vld [vmem:[%s1075 + $0x151] sm:$0xff]
        %v1410 = vld [vmem:[%s1075 + $0x159] sm:$0xff]
        %v1411 = vld [vmem:[%s1075 + $0x169] sm:$0xff]
        %v1412 = vld [vmem:[%s1075 + $0x171] sm:$0xff]
        %v1413 = vpack.c.bf16 %v1382, %v1381
        %v1414 = vpack.c.bf16 %v1384, %v1383
        %v1415 = vpack.c.bf16 %v1386, %v1385
        %v1416 = vpack.c.bf16 %v1388, %v1387
        %v1417 = vpack.c.bf16 %v1390, %v1389
        %v1418 = vpack.c.bf16 %v1392, %v1391
        %v1419 = vpack.c.bf16 %v1394, %v1393
        %v1420 = vpack.c.bf16 %v1396, %v1395
        %v1421 = vpack.c.bf16 %v1398, %v1397
        %v1422 = vpack.c.bf16 %v1400, %v1399
        %v1423 = vpack.c.bf16 %v1402, %v1401
        %v1424 = vpack.c.bf16 %v1404, %v1403
        %v1425 = vpack.c.bf16 %v1406, %v1405
        %v1426 = vpack.c.bf16 %v1408, %v1407
        %v1427 = vpack.c.bf16 %v1410, %v1409
        %v1428 = vpack.c.bf16 %v1412, %v1411
        %v1429 = vld [vmem:[%s1 + $0x100] sm:$0xf]
        %v1430 = vld [vmem:[%s1 + $0x104] sm:$0xf]
        %v1431 = vld [vmem:[%s1 + $0x108] sm:$0xf]
        %v1432 = vld [vmem:[%s1 + $0x10c] sm:$0xf]
        %v1433 = vld [vmem:[%s1 + $0x110] sm:$0xf]
        %v1434 = vld [vmem:[%s1 + $0x114] sm:$0xf]
        %v1435 = vld [vmem:[%s1 + $0x118] sm:$0xf]
        %v1436 = vld [vmem:[%s1 + $0x11c] sm:$0xf]
        %v1437 = vld [vmem:[%s1 + $0x120] sm:$0xf]
        %v1438 = vld [vmem:[%s1 + $0x124] sm:$0xf]
        %v1439 = vld [vmem:[%s1 + $0x128] sm:$0xf]
        %v1440 = vld [vmem:[%s1 + $0x12c] sm:$0xf]
        %v1441 = vld [vmem:[%s1 + $0x130] sm:$0xf]
        %v1442 = vld [vmem:[%s1 + $0x134] sm:$0xf]
        %v1443 = vld [vmem:[%s1 + $0x138] sm:$0xf]
        %v1444 = vld [vmem:[%s1 + $0x13c] sm:$0xf]
        %v1461 = vunpack.c.l.b16 %v1429
        %v1462 = vunpack.c.l.b16 %v1430
        %v1463 = vunpack.c.l.b16 %v1431
        %v1464 = vunpack.c.l.b16 %v1432
        %v1465 = vunpack.c.l.b16 %v1433
        %v1466 = vunpack.c.l.b16 %v1434
        %v1467 = vunpack.c.l.b16 %v1435
        %v1468 = vunpack.c.l.b16 %v1436
        %v1469 = vunpack.c.l.b16 %v1437
        %v1470 = vunpack.c.l.b16 %v1438
        %v1471 = vunpack.c.l.b16 %v1439
        %v1472 = vunpack.c.l.b16 %v1440
        %v1473 = vunpack.c.l.b16 %v1441
        %v1474 = vunpack.c.l.b16 %v1442
        %v1475 = vunpack.c.l.b16 %v1443
        %v1476 = vunpack.c.l.b16 %v1444
        %v1477 = vpack.c.b16 %v1462, %v1461
        %v1478 = vpack.c.b16 %v1464, %v1463
        %v1479 = vpack.c.b16 %v1466, %v1465
        %v1480 = vpack.c.b16 %v1468, %v1467
        %v1481 = vpack.c.b16 %v1470, %v1469
        %v1482 = vpack.c.b16 %v1472, %v1471
        %v1483 = vpack.c.b16 %v1474, %v1473
        %v1484 = vpack.c.b16 %v1476, %v1475
        %1493 = vmatprep.subr.bf16.mxu0 0
        %1494 = vmatpush1.bf16.msra.mxu0 %v1477
        %1495 = vmatprep.subr.bf16.mxu0 0
        %1496 = vmatpush1.bf16.msra.mxu0 %v1478
        %1497 = vmatprep.subr.bf16.mxu0 0
        %1498 = vmatpush1.bf16.msra.mxu0 %v1479
        %1499 = vmatprep.subr.bf16.mxu0 0
        %1500 = vmatpush1.bf16.msra.mxu0 %v1480
        %1501 = vmatprep.subr.bf16.mxu0 0
        %1502 = vmatpush1.bf16.msra.mxu0 %v1481
        %1503 = vmatprep.subr.bf16.mxu0 0
        %1504 = vmatpush1.bf16.msra.mxu0 %v1482
        %1505 = vmatprep.subr.bf16.mxu0 0
        %1506 = vmatpush1.bf16.msra.mxu0 %v1483
        %1507 = vmatprep.subr.bf16.mxu0 0
        %1508 = vmatpush1.bf16.msra.mxu0 %v1484
        %1509 = vmatprep.subr.bf16.mxu0 0
        %1510 = vmatpush1.bf16.msra.mxu0 0
        %1511 = vmatprep.subr.bf16.mxu0 0
        %1512 = vmatpush1.bf16.msra.mxu0 0
        %1513 = vmatprep.subr.bf16.mxu0 0
        %1514 = vmatpush1.bf16.msra.mxu0 0
        %1515 = vmatprep.subr.bf16.mxu0 0
        %1516 = vmatpush1.bf16.msra.mxu0 0
        %1517 = vmatprep.subr.bf16.mxu0 0
        %1518 = vmatpush1.bf16.msra.mxu0 0
        %1519 = vmatprep.subr.bf16.mxu0 0
        %1520 = vmatpush1.bf16.msra.mxu0 0
        %1521 = vmatprep.subr.bf16.mxu0 0
        %1522 = vmatpush1.bf16.msra.mxu0 0
        %1523 = vmatprep.subr.bf16.mxu0 0
        %1524 = vmatpush1.bf16.msra.mxu0 0
        %1525 = vmatprep.mubr.bf16.mxu0 0
        %1526 = vmatmul.mubr.bf16.gmra.mrb[0].mxu0 %v1413
        %v1527 = vpop.f32.mrb[0].mxu0
        %v1528 = vadd.f32 0.0, %v1527
        %v1529 = vpop.f32.mrb[0].mxu0
        %v1530 = vpop.f32.mrb[0].mxu0
        %v1531 = vadd.f32 0.0, %v1530
        %v1532 = vpop.f32.mrb[0].mxu0
        %1533 = vmatprep.mubr.bf16.mxu0 0
        %1534 = vmatmul.mubr.bf16.gmra.mrb[0].mxu0 %v1414
        %v1535 = vpop.f32.mrb[0].mxu0
        %v1536 = vadd.f32 0.0, %v1535
        %v1537 = vpop.f32.mrb[0].mxu0
        %v1538 = vpop.f32.mrb[0].mxu0
        %v1539 = vadd.f32 0.0, %v1538
        %v1540 = vpop.f32.mrb[0].mxu0
        %1541 = vmatprep.mubr.bf16.mxu0 0
        %1542 = vmatmul.mubr.bf16.gmra.mrb[0].mxu0 %v1415
        %v1543 = vpop.f32.mrb[0].mxu0
        %v1544 = vadd.f32 0.0, %v1543
        %v1545 = vpop.f32.mrb[0].mxu0
        %v1546 = vpop.f32.mrb[0].mxu0
        %v1547 = vadd.f32 0.0, %v1546
        %v1548 = vpop.f32.mrb[0].mxu0
        %1549 = vmatprep.mubr.bf16.mxu0 0
        %1550 = vmatmul.mubr.bf16.gmra.mrb[0].mxu0 %v1416
        %v1551 = vpop.f32.mrb[0].mxu0
        %v1552 = vadd.f32 0.0, %v1551
        %v1553 = vpop.f32.mrb[0].mxu0
        %v1554 = vpop.f32.mrb[0].mxu0
        %v1555 = vadd.f32 0.0, %v1554
        %v1556 = vpop.f32.mrb[0].mxu0
        %1557 = vmatprep.mubr.bf16.mxu0 0
        %1558 = vmatmul.mubr.bf16.gmra.mrb[0].mxu0 %v1417
        %v1559 = vpop.f32.mrb[0].mxu0
        %v1560 = vadd.f32 0.0, %v1559
        %v1561 = vpop.f32.mrb[0].mxu0
        %v1562 = vpop.f32.mrb[0].mxu0
        %v1563 = vadd.f32 0.0, %v1562
        %v1564 = vpop.f32.mrb[0].mxu0
        %1565 = vmatprep.mubr.bf16.mxu0 0
        %1566 = vmatmul.mubr.bf16.gmra.mrb[0].mxu0 %v1418
        %v1567 = vpop.f32.mrb[0].mxu0
        %v1568 = vadd.f32 0.0, %v1567
        %v1569 = vpop.f32.mrb[0].mxu0
        %v1570 = vpop.f32.mrb[0].mxu0
        %v1571 = vadd.f32 0.0, %v1570
        %v1572 = vpop.f32.mrb[0].mxu0
        %1573 = vmatprep.mubr.bf16.mxu0 0
        %1574 = vmatmul.mubr.bf16.gmra.mrb[0].mxu0 %v1419
        %v1575 = vpop.f32.mrb[0].mxu0
        %v1576 = vadd.f32 0.0, %v1575
        %v1577 = vpop.f32.mrb[0].mxu0
        %v1578 = vpop.f32.mrb[0].mxu0
        %v1579 = vadd.f32 0.0, %v1578
        %v1580 = vpop.f32.mrb[0].mxu0
        %1581 = vmatprep.mubr.bf16.mxu0 0
        %1582 = vmatmul.mubr.bf16.gmra.mrb[0].mxu0 %v1420
        %v1583 = vpop.f32.mrb[0].mxu0
        %v1584 = vadd.f32 0.0, %v1583
        %v1585 = vpop.f32.mrb[0].mxu0
        %v1586 = vpop.f32.mrb[0].mxu0
        %v1587 = vadd.f32 0.0, %v1586
        %v1588 = vpop.f32.mrb[0].mxu0
        %1589 = vmatprep.mubr.bf16.mxu0 0
        %1590 = vmatmul.mubr.bf16.gmra.mrb[0].mxu0 %v1421
        %v1591 = vpop.f32.mrb[0].mxu0
        %v1592 = vadd.f32 0.0, %v1591
        %v1593 = vpop.f32.mrb[0].mxu0
        %v1594 = vpop.f32.mrb[0].mxu0
        %v1595 = vadd.f32 0.0, %v1594
        %v1596 = vpop.f32.mrb[0].mxu0
        %1597 = vmatprep.mubr.bf16.mxu0 0
        %1598 = vmatmul.mubr.bf16.gmra.mrb[0].mxu0 %v1422
        %v1599 = vpop.f32.mrb[0].mxu0
        %v1600 = vadd.f32 0.0, %v1599
        %v1601 = vpop.f32.mrb[0].mxu0
        %v1602 = vpop.f32.mrb[0].mxu0
        %v1603 = vadd.f32 0.0, %v1602
        %v1604 = vpop.f32.mrb[0].mxu0
        %1605 = vmatprep.mubr.bf16.mxu0 0
        %1606 = vmatmul.mubr.bf16.gmra.mrb[0].mxu0 %v1423
        %v1607 = vpop.f32.mrb[0].mxu0
        %v1608 = vadd.f32 0.0, %v1607
        %v1609 = vpop.f32.mrb[0].mxu0
        %v1610 = vpop.f32.mrb[0].mxu0
        %v1611 = vadd.f32 0.0, %v1610
        %v1612 = vpop.f32.mrb[0].mxu0
        %1613 = vmatprep.mubr.bf16.mxu0 0
        %1614 = vmatmul.mubr.bf16.gmra.mrb[0].mxu0 %v1424
        %v1615 = vpop.f32.mrb[0].mxu0
        %v1616 = vadd.f32 0.0, %v1615
        %v1617 = vpop.f32.mrb[0].mxu0
        %v1618 = vpop.f32.mrb[0].mxu0
        %v1619 = vadd.f32 0.0, %v1618
        %v1620 = vpop.f32.mrb[0].mxu0
        %1621 = vmatprep.mubr.bf16.mxu0 0
        %1622 = vmatmul.mubr.bf16.gmra.mrb[0].mxu0 %v1425
        %v1623 = vpop.f32.mrb[0].mxu0
        %v1624 = vadd.f32 0.0, %v1623
        %v1625 = vpop.f32.mrb[0].mxu0
        %v1626 = vpop.f32.mrb[0].mxu0
        %v1627 = vadd.f32 0.0, %v1626
        %v1628 = vpop.f32.mrb[0].mxu0
        %1629 = vmatprep.mubr.bf16.mxu0 0
        %1630 = vmatmul.mubr.bf16.gmra.mrb[0].mxu0 %v1426
        %v1631 = vpop.f32.mrb[0].mxu0
        %v1632 = vadd.f32 0.0, %v1631
        %v1633 = vpop.f32.mrb[0].mxu0
        %v1634 = vpop.f32.mrb[0].mxu0
        %v1635 = vadd.f32 0.0, %v1634
        %v1636 = vpop.f32.mrb[0].mxu0
        %1637 = vmatprep.mubr.bf16.mxu0 0
        %1638 = vmatmul.mubr.bf16.gmra.mrb[0].mxu0 %v1427
        %v1639 = vpop.f32.mrb[0].mxu0
        %v1640 = vadd.f32 0.0, %v1639
        %v1641 = vpop.f32.mrb[0].mxu0
        %v1642 = vpop.f32.mrb[0].mxu0
        %v1643 = vadd.f32 0.0, %v1642
        %v1644 = vpop.f32.mrb[0].mxu0
        %1645 = vmatprep.mubr.bf16.mxu0 0
        %1646 = vmatmul.mubr.bf16.gmra.mrb[0].mxu0 %v1428
        %v1647 = vpop.f32.mrb[0].mxu0
        %v1648 = vadd.f32 0.0, %v1647
        %v1649 = vpop.f32.mrb[0].mxu0
        %v1650 = vpop.f32.mrb[0].mxu0
        %v1651 = vadd.f32 0.0, %v1650
        %v1652 = vpop.f32.mrb[0].mxu0
        %1653 = vdwg.mxu0
        %v1654 = vadd.f32 %v1349, %v1528
        %v1655 = vadd.f32 %v1350, %v1531
        %v1656 = vadd.f32 %v1351, %v1536
        %v1657 = vadd.f32 %v1352, %v1539
        %v1658 = vadd.f32 %v1353, %v1544
        %v1659 = vadd.f32 %v1354, %v1547
        %v1660 = vadd.f32 %v1355, %v1552
        %v1661 = vadd.f32 %v1356, %v1555
        %v1662 = vadd.f32 %v1357, %v1560
        %v1663 = vadd.f32 %v1358, %v1563
        %v1664 = vadd.f32 %v1359, %v1568
        %v1665 = vadd.f32 %v1360, %v1571
        %v1666 = vadd.f32 %v1361, %v1576
        %v1667 = vadd.f32 %v1362, %v1579
        %v1668 = vadd.f32 %v1363, %v1584
        %v1669 = vadd.f32 %v1364, %v1587
        %v1670 = vadd.f32 %v1365, %v1592
        %v1671 = vadd.f32 %v1366, %v1595
        %v1672 = vadd.f32 %v1367, %v1600
        %v1673 = vadd.f32 %v1368, %v1603
        %v1674 = vadd.f32 %v1369, %v1608
        %v1675 = vadd.f32 %v1370, %v1611
        %v1676 = vadd.f32 %v1371, %v1616
        %v1677 = vadd.f32 %v1372, %v1619
        %v1678 = vadd.f32 %v1373, %v1624
        %v1679 = vadd.f32 %v1374, %v1627
        %v1680 = vadd.f32 %v1375, %v1632
        %v1681 = vadd.f32 %v1376, %v1635
        %v1682 = vadd.f32 %v1377, %v1640
        %v1683 = vadd.f32 %v1378, %v1643
        %v1684 = vadd.f32 %v1379, %v1648
        %v1685 = vadd.f32 %v1380, %v1651
        %v1686 = vld [vmem:[%s1075 + $0x2] sm:$0xff]
        %v1687 = vld [vmem:[%s1075 + $0xa] sm:$0xff]
        %v1688 = vld [vmem:[%s1075 + $0x1a] sm:$0xff]
        %v1689 = vld [vmem:[%s1075 + $0x22] sm:$0xff]
        %v1690 = vld [vmem:[%s1075 + $0x32] sm:$0xff]
        %v1691 = vld [vmem:[%s1075 + $0x3a] sm:$0xff]
        %v1692 = vld [vmem:[%s1075 + $0x4a] sm:$0xff]
        %v1693 = vld [vmem:[%s1075 + $0x52] sm:$0xff]
        %v1694 = vld [vmem:[%s1075 + $0x62] sm:$0xff]
        %v1695 = vld [vmem:[%s1075 + $0x6a] sm:$0xff]
        %v1696 = vld [vmem:[%s1075 + $0x7a] sm:$0xff]
        %v1697 = vld [vmem:[%s1075 + $0x82] sm:$0xff]
        %v1698 = vld [vmem:[%s1075 + $0x92] sm:$0xff]
        %v1699 = vld [vmem:[%s1075 + $0x9a] sm:$0xff]
        %v1700 = vld [vmem:[%s1075 + $0xaa] sm:$0xff]
        %v1701 = vld [vmem:[%s1075 + $0xb2] sm:$0xff]
        %v1702 = vld [vmem:[%s1075 + $0xc2] sm:$0xff]
        %v1703 = vld [vmem:[%s1075 + $0xca] sm:$0xff]
        %v1704 = vld [vmem:[%s1075 + $0xda] sm:$0xff]
        %v1705 = vld [vmem:[%s1075 + $0xe2] sm:$0xff]
        %v1706 = vld [vmem:[%s1075 + $0xf2] sm:$0xff]
        %v1707 = vld [vmem:[%s1075 + $0xfa] sm:$0xff]
        %v1708 = vld [vmem:[%s1075 + $0x10a] sm:$0xff]
        %v1709 = vld [vmem:[%s1075 + $0x112] sm:$0xff]
        %v1710 = vld [vmem:[%s1075 + $0x122] sm:$0xff]
        %v1711 = vld [vmem:[%s1075 + $0x12a] sm:$0xff]
        %v1712 = vld [vmem:[%s1075 + $0x13a] sm:$0xff]
        %v1713 = vld [vmem:[%s1075 + $0x142] sm:$0xff]
        %v1714 = vld [vmem:[%s1075 + $0x152] sm:$0xff]
        %v1715 = vld [vmem:[%s1075 + $0x15a] sm:$0xff]
        %v1716 = vld [vmem:[%s1075 + $0x16a] sm:$0xff]
        %v1717 = vld [vmem:[%s1075 + $0x172] sm:$0xff]
        %v1718 = vpack.c.bf16 %v1687, %v1686
        %v1719 = vpack.c.bf16 %v1689, %v1688
        %v1720 = vpack.c.bf16 %v1691, %v1690
        %v1721 = vpack.c.bf16 %v1693, %v1692
        %v1722 = vpack.c.bf16 %v1695, %v1694
        %v1723 = vpack.c.bf16 %v1697, %v1696
        %v1724 = vpack.c.bf16 %v1699, %v1698
        %v1725 = vpack.c.bf16 %v1701, %v1700
        %v1726 = vpack.c.bf16 %v1703, %v1702
        %v1727 = vpack.c.bf16 %v1705, %v1704
        %v1728 = vpack.c.bf16 %v1707, %v1706
        %v1729 = vpack.c.bf16 %v1709, %v1708
        %v1730 = vpack.c.bf16 %v1711, %v1710
        %v1731 = vpack.c.bf16 %v1713, %v1712
        %v1732 = vpack.c.bf16 %v1715, %v1714
        %v1733 = vpack.c.bf16 %v1717, %v1716
        %v1734 = vld [vmem:[%s1 + $0x140] sm:$0xf]
        %v1735 = vld [vmem:[%s1 + $0x144] sm:$0xf]
        %v1736 = vld [vmem:[%s1 + $0x148] sm:$0xf]
        %v1737 = vld [vmem:[%s1 + $0x14c] sm:$0xf]
        %v1738 = vld [vmem:[%s1 + $0x150] sm:$0xf]
        %v1739 = vld [vmem:[%s1 + $0x154] sm:$0xf]
        %v1740 = vld [vmem:[%s1 + $0x158] sm:$0xf]
        %v1741 = vld [vmem:[%s1 + $0x15c] sm:$0xf]
        %v1742 = vld [vmem:[%s1 + $0x160] sm:$0xf]
        %v1743 = vld [vmem:[%s1 + $0x164] sm:$0xf]
        %v1744 = vld [vmem:[%s1 + $0x168] sm:$0xf]
        %v1745 = vld [vmem:[%s1 + $0x16c] sm:$0xf]
        %v1746 = vld [vmem:[%s1 + $0x170] sm:$0xf]
        %v1747 = vld [vmem:[%s1 + $0x174] sm:$0xf]
        %v1748 = vld [vmem:[%s1 + $0x178] sm:$0xf]
        %v1749 = vld [vmem:[%s1 + $0x17c] sm:$0xf]
        %v1766 = vunpack.c.l.b16 %v1734
        %v1767 = vunpack.c.l.b16 %v1735
        %v1768 = vunpack.c.l.b16 %v1736
        %v1769 = vunpack.c.l.b16 %v1737
        %v1770 = vunpack.c.l.b16 %v1738
        %v1771 = vunpack.c.l.b16 %v1739
        %v1772 = vunpack.c.l.b16 %v1740
        %v1773 = vunpack.c.l.b16 %v1741
        %v1774 = vunpack.c.l.b16 %v1742
        %v1775 = vunpack.c.l.b16 %v1743
        %v1776 = vunpack.c.l.b16 %v1744
        %v1777 = vunpack.c.l.b16 %v1745
        %v1778 = vunpack.c.l.b16 %v1746
        %v1779 = vunpack.c.l.b16 %v1747
        %v1780 = vunpack.c.l.b16 %v1748
        %v1781 = vunpack.c.l.b16 %v1749
        %v1782 = vpack.c.b16 %v1767, %v1766
        %v1783 = vpack.c.b16 %v1769, %v1768
        %v1784 = vpack.c.b16 %v1771, %v1770
        %v1785 = vpack.c.b16 %v1773, %v1772
        %v1786 = vpack.c.b16 %v1775, %v1774
        %v1787 = vpack.c.b16 %v1777, %v1776
        %v1788 = vpack.c.b16 %v1779, %v1778
        %v1789 = vpack.c.b16 %v1781, %v1780
        %1798 = vmatprep.subr.bf16.mxu0 0
        %1799 = vmatpush1.bf16.msra.mxu0 %v1782
        %1800 = vmatprep.subr.bf16.mxu0 0
        %1801 = vmatpush1.bf16.msra.mxu0 %v1783
        %1802 = vmatprep.subr.bf16.mxu0 0
        %1803 = vmatpush1.bf16.msra.mxu0 %v1784
        %1804 = vmatprep.subr.bf16.mxu0 0
        %1805 = vmatpush1.bf16.msra.mxu0 %v1785
        %1806 = vmatprep.subr.bf16.mxu0 0
        %1807 = vmatpush1.bf16.msra.mxu0 %v1786
        %1808 = vmatprep.subr.bf16.mxu0 0
        %1809 = vmatpush1.bf16.msra.mxu0 %v1787
        %1810 = vmatprep.subr.bf16.mxu0 0
        %1811 = vmatpush1.bf16.msra.mxu0 %v1788
        %1812 = vmatprep.subr.bf16.mxu0 0
        %1813 = vmatpush1.bf16.msra.mxu0 %v1789
        %1814 = vmatprep.subr.bf16.mxu0 0
        %1815 = vmatpush1.bf16.msra.mxu0 0
        %1816 = vmatprep.subr.bf16.mxu0 0
        %1817 = vmatpush1.bf16.msra.mxu0 0
        %1818 = vmatprep.subr.bf16.mxu0 0
        %1819 = vmatpush1.bf16.msra.mxu0 0
        %1820 = vmatprep.subr.bf16.mxu0 0
        %1821 = vmatpush1.bf16.msra.mxu0 0
        %1822 = vmatprep.subr.bf16.mxu0 0
        %1823 = vmatpush1.bf16.msra.mxu0 0
        %1824 = vmatprep.subr.bf16.mxu0 0
        %1825 = vmatpush1.bf16.msra.mxu0 0
        %1826 = vmatprep.subr.bf16.mxu0 0
        %1827 = vmatpush1.bf16.msra.mxu0 0
        %1828 = vmatprep.subr.bf16.mxu0 0
        %1829 = vmatpush1.bf16.msra.mxu0 0
        %1830 = vmatprep.mubr.bf16.mxu0 0
        %1831 = vmatmul.mubr.bf16.gmra.mrb[0].mxu0 %v1718
        %v1832 = vpop.f32.mrb[0].mxu0
        %v1833 = vadd.f32 0.0, %v1832
        %v1834 = vpop.f32.mrb[0].mxu0
        %v1835 = vpop.f32.mrb[0].mxu0
        %v1836 = vadd.f32 0.0, %v1835
        %v1837 = vpop.f32.mrb[0].mxu0
        %1838 = vmatprep.mubr.bf16.mxu0 0
        %1839 = vmatmul.mubr.bf16.gmra.mrb[0].mxu0 %v1719
        %v1840 = vpop.f32.mrb[0].mxu0
        %v1841 = vadd.f32 0.0, %v1840
        %v1842 = vpop.f32.mrb[0].mxu0
        %v1843 = vpop.f32.mrb[0].mxu0
        %v1844 = vadd.f32 0.0, %v1843
        %v1845 = vpop.f32.mrb[0].mxu0
        %1846 = vmatprep.mubr.bf16.mxu0 0
        %1847 = vmatmul.mubr.bf16.gmra.mrb[0].mxu0 %v1720
        %v1848 = vpop.f32.mrb[0].mxu0
        %v1849 = vadd.f32 0.0, %v1848
        %v1850 = vpop.f32.mrb[0].mxu0
        %v1851 = vpop.f32.mrb[0].mxu0
        %v1852 = vadd.f32 0.0, %v1851
        %v1853 = vpop.f32.mrb[0].mxu0
        %1854 = vmatprep.mubr.bf16.mxu0 0
        %1855 = vmatmul.mubr.bf16.gmra.mrb[0].mxu0 %v1721
        %v1856 = vpop.f32.mrb[0].mxu0
        %v1857 = vadd.f32 0.0, %v1856
        %v1858 = vpop.f32.mrb[0].mxu0
        %v1859 = vpop.f32.mrb[0].mxu0
        %v1860 = vadd.f32 0.0, %v1859
        %v1861 = vpop.f32.mrb[0].mxu0
        %1862 = vmatprep.mubr.bf16.mxu0 0
        %1863 = vmatmul.mubr.bf16.gmra.mrb[0].mxu0 %v1722
        %v1864 = vpop.f32.mrb[0].mxu0
        %v1865 = vadd.f32 0.0, %v1864
        %v1866 = vpop.f32.mrb[0].mxu0
        %v1867 = vpop.f32.mrb[0].mxu0
        %v1868 = vadd.f32 0.0, %v1867
        %v1869 = vpop.f32.mrb[0].mxu0
        %1870 = vmatprep.mubr.bf16.mxu0 0
        %1871 = vmatmul.mubr.bf16.gmra.mrb[0].mxu0 %v1723
        %v1872 = vpop.f32.mrb[0].mxu0
        %v1873 = vadd.f32 0.0, %v1872
        %v1874 = vpop.f32.mrb[0].mxu0
        %v1875 = vpop.f32.mrb[0].mxu0
        %v1876 = vadd.f32 0.0, %v1875
        %v1877 = vpop.f32.mrb[0].mxu0
        %1878 = vmatprep.mubr.bf16.mxu0 0
        %1879 = vmatmul.mubr.bf16.gmra.mrb[0].mxu0 %v1724
        %v1880 = vpop.f32.mrb[0].mxu0
        %v1881 = vadd.f32 0.0, %v1880
        %v1882 = vpop.f32.mrb[0].mxu0
        %v1883 = vpop.f32.mrb[0].mxu0
        %v1884 = vadd.f32 0.0, %v1883
        %v1885 = vpop.f32.mrb[0].mxu0
        %1886 = vmatprep.mubr.bf16.mxu0 0
        %1887 = vmatmul.mubr.bf16.gmra.mrb[0].mxu0 %v1725
        %v1888 = vpop.f32.mrb[0].mxu0
        %v1889 = vadd.f32 0.0, %v1888
        %v1890 = vpop.f32.mrb[0].mxu0
        %v1891 = vpop.f32.mrb[0].mxu0
        %v1892 = vadd.f32 0.0, %v1891
        %v1893 = vpop.f32.mrb[0].mxu0
        %1894 = vmatprep.mubr.bf16.mxu0 0
        %1895 = vmatmul.mubr.bf16.gmra.mrb[0].mxu0 %v1726
        %v1896 = vpop.f32.mrb[0].mxu0
        %v1897 = vadd.f32 0.0, %v1896
        %v1898 = vpop.f32.mrb[0].mxu0
        %v1899 = vpop.f32.mrb[0].mxu0
        %v1900 = vadd.f32 0.0, %v1899
        %v1901 = vpop.f32.mrb[0].mxu0
        %1902 = vmatprep.mubr.bf16.mxu0 0
        %1903 = vmatmul.mubr.bf16.gmra.mrb[0].mxu0 %v1727
        %v1904 = vpop.f32.mrb[0].mxu0
        %v1905 = vadd.f32 0.0, %v1904
        %v1906 = vpop.f32.mrb[0].mxu0
        %v1907 = vpop.f32.mrb[0].mxu0
        %v1908 = vadd.f32 0.0, %v1907
        %v1909 = vpop.f32.mrb[0].mxu0
        %1910 = vmatprep.mubr.bf16.mxu0 0
        %1911 = vmatmul.mubr.bf16.gmra.mrb[0].mxu0 %v1728
        %v1912 = vpop.f32.mrb[0].mxu0
        %v1913 = vadd.f32 0.0, %v1912
        %v1914 = vpop.f32.mrb[0].mxu0
        %v1915 = vpop.f32.mrb[0].mxu0
        %v1916 = vadd.f32 0.0, %v1915
        %v1917 = vpop.f32.mrb[0].mxu0
        %1918 = vmatprep.mubr.bf16.mxu0 0
        %1919 = vmatmul.mubr.bf16.gmra.mrb[0].mxu0 %v1729
        %v1920 = vpop.f32.mrb[0].mxu0
        %v1921 = vadd.f32 0.0, %v1920
        %v1922 = vpop.f32.mrb[0].mxu0
        %v1923 = vpop.f32.mrb[0].mxu0
        %v1924 = vadd.f32 0.0, %v1923
        %v1925 = vpop.f32.mrb[0].mxu0
        %1926 = vmatprep.mubr.bf16.mxu0 0
        %1927 = vmatmul.mubr.bf16.gmra.mrb[0].mxu0 %v1730
        %v1928 = vpop.f32.mrb[0].mxu0
        %v1929 = vadd.f32 0.0, %v1928
        %v1930 = vpop.f32.mrb[0].mxu0
        %v1931 = vpop.f32.mrb[0].mxu0
        %v1932 = vadd.f32 0.0, %v1931
        %v1933 = vpop.f32.mrb[0].mxu0
        %1934 = vmatprep.mubr.bf16.mxu0 0
        %1935 = vmatmul.mubr.bf16.gmra.mrb[0].mxu0 %v1731
        %v1936 = vpop.f32.mrb[0].mxu0
        %v1937 = vadd.f32 0.0, %v1936
        %v1938 = vpop.f32.mrb[0].mxu0
        %v1939 = vpop.f32.mrb[0].mxu0
        %v1940 = vadd.f32 0.0, %v1939
        %v1941 = vpop.f32.mrb[0].mxu0
        %1942 = vmatprep.mubr.bf16.mxu0 0
        %1943 = vmatmul.mubr.bf16.gmra.mrb[0].mxu0 %v1732
        %v1944 = vpop.f32.mrb[0].mxu0
        %v1945 = vadd.f32 0.0, %v1944
        %v1946 = vpop.f32.mrb[0].mxu0
        %v1947 = vpop.f32.mrb[0].mxu0
        %v1948 = vadd.f32 0.0, %v1947
        %v1949 = vpop.f32.mrb[0].mxu0
        %1950 = vmatprep.mubr.bf16.mxu0 0
        %1951 = vmatmul.mubr.bf16.gmra.mrb[0].mxu0 %v1733
        %v1952 = vpop.f32.mrb[0].mxu0
        %v1953 = vadd.f32 0.0, %v1952
        %v1954 = vpop.f32.mrb[0].mxu0
        %v1955 = vpop.f32.mrb[0].mxu0
        %v1956 = vadd.f32 0.0, %v1955
        %v1957 = vpop.f32.mrb[0].mxu0
        %1958 = vdwg.mxu0
        %v1959 = vadd.f32 %v1654, %v1833
        %v1960 = vadd.f32 %v1655, %v1836
        %v1961 = vadd.f32 %v1656, %v1841
        %v1962 = vadd.f32 %v1657, %v1844
        %v1963 = vadd.f32 %v1658, %v1849
        %v1964 = vadd.f32 %v1659, %v1852
        %v1965 = vadd.f32 %v1660, %v1857
        %v1966 = vadd.f32 %v1661, %v1860
        %v1967 = vadd.f32 %v1662, %v1865
        %v1968 = vadd.f32 %v1663, %v1868
        %v1969 = vadd.f32 %v1664, %v1873
        %v1970 = vadd.f32 %v1665, %v1876
        %v1971 = vadd.f32 %v1666, %v1881
        %v1972 = vadd.f32 %v1667, %v1884
        %v1973 = vadd.f32 %v1668, %v1889
        %v1974 = vadd.f32 %v1669, %v1892
        %v1975 = vadd.f32 %v1670, %v1897
        %v1976 = vadd.f32 %v1671, %v1900
        %v1977 = vadd.f32 %v1672, %v1905
        %v1978 = vadd.f32 %v1673, %v1908
        %v1979 = vadd.f32 %v1674, %v1913
        %v1980 = vadd.f32 %v1675, %v1916
        %v1981 = vadd.f32 %v1676, %v1921
        %v1982 = vadd.f32 %v1677, %v1924
        %v1983 = vadd.f32 %v1678, %v1929
        %v1984 = vadd.f32 %v1679, %v1932
        %v1985 = vadd.f32 %v1680, %v1937
        %v1986 = vadd.f32 %v1681, %v1940
        %v1987 = vadd.f32 %v1682, %v1945
        %v1988 = vadd.f32 %v1683, %v1948
        %v1989 = vadd.f32 %v1684, %v1953
        %v1990 = vadd.f32 %v1685, %v1956
        %s1991 = scalar_lea.vmem %s222, 48
        %v1992 = vld [vmem:[%s1991] sm:$0xff]
        %v1993 = vld [vmem:[%s1991 + $0x8] sm:$0xff]
        %v1994 = vld [vmem:[%s1991 + $0x18] sm:$0xff]
        %v1995 = vld [vmem:[%s1991 + $0x20] sm:$0xff]
        %v1996 = vld [vmem:[%s1991 + $0x30] sm:$0xff]
        %v1997 = vld [vmem:[%s1991 + $0x38] sm:$0xff]
        %v1998 = vld [vmem:[%s1991 + $0x48] sm:$0xff]
        %v1999 = vld [vmem:[%s1991 + $0x50] sm:$0xff]
        %v2000 = vld [vmem:[%s1991 + $0x60] sm:$0xff]
        %v2001 = vld [vmem:[%s1991 + $0x68] sm:$0xff]
        %v2002 = vld [vmem:[%s1991 + $0x78] sm:$0xff]
        %v2003 = vld [vmem:[%s1991 + $0x80] sm:$0xff]
        %v2004 = vld [vmem:[%s1991 + $0x90] sm:$0xff]
        %v2005 = vld [vmem:[%s1991 + $0x98] sm:$0xff]
        %v2006 = vld [vmem:[%s1991 + $0xa8] sm:$0xff]
        %v2007 = vld [vmem:[%s1991 + $0xb0] sm:$0xff]
        %v2008 = vld [vmem:[%s1991 + $0xc0] sm:$0xff]
        %v2009 = vld [vmem:[%s1991 + $0xc8] sm:$0xff]
        %v2010 = vld [vmem:[%s1991 + $0xd8] sm:$0xff]
        %v2011 = vld [vmem:[%s1991 + $0xe0] sm:$0xff]
        %v2012 = vld [vmem:[%s1991 + $0xf0] sm:$0xff]
        %v2013 = vld [vmem:[%s1991 + $0xf8] sm:$0xff]
        %v2014 = vld [vmem:[%s1991 + $0x108] sm:$0xff]
        %v2015 = vld [vmem:[%s1991 + $0x110] sm:$0xff]
        %v2016 = vld [vmem:[%s1991 + $0x120] sm:$0xff]
        %v2017 = vld [vmem:[%s1991 + $0x128] sm:$0xff]
        %v2018 = vld [vmem:[%s1991 + $0x138] sm:$0xff]
        %v2019 = vld [vmem:[%s1991 + $0x140] sm:$0xff]
        %v2020 = vld [vmem:[%s1991 + $0x150] sm:$0xff]
        %v2021 = vld [vmem:[%s1991 + $0x158] sm:$0xff]
        %v2022 = vld [vmem:[%s1991 + $0x168] sm:$0xff]
        %v2023 = vld [vmem:[%s1991 + $0x170] sm:$0xff]
        %v2024 = vpack.c.bf16 %v1993, %v1992
        %v2025 = vpack.c.bf16 %v1995, %v1994
        %v2026 = vpack.c.bf16 %v1997, %v1996
        %v2027 = vpack.c.bf16 %v1999, %v1998
        %v2028 = vpack.c.bf16 %v2001, %v2000
        %v2029 = vpack.c.bf16 %v2003, %v2002
        %v2030 = vpack.c.bf16 %v2005, %v2004
        %v2031 = vpack.c.bf16 %v2007, %v2006
        %v2032 = vpack.c.bf16 %v2009, %v2008
        %v2033 = vpack.c.bf16 %v2011, %v2010
        %v2034 = vpack.c.bf16 %v2013, %v2012
        %v2035 = vpack.c.bf16 %v2015, %v2014
        %v2036 = vpack.c.bf16 %v2017, %v2016
        %v2037 = vpack.c.bf16 %v2019, %v2018
        %v2038 = vpack.c.bf16 %v2021, %v2020
        %v2039 = vpack.c.bf16 %v2023, %v2022
        %v2040 = vld [vmem:[%s1 + $0x180] sm:$0xf]
        %v2041 = vld [vmem:[%s1 + $0x184] sm:$0xf]
        %v2042 = vld [vmem:[%s1 + $0x188] sm:$0xf]
        %v2043 = vld [vmem:[%s1 + $0x18c] sm:$0xf]
        %v2044 = vld [vmem:[%s1 + $0x190] sm:$0xf]
        %v2045 = vld [vmem:[%s1 + $0x194] sm:$0xf]
        %v2046 = vld [vmem:[%s1 + $0x198] sm:$0xf]
        %v2047 = vld [vmem:[%s1 + $0x19c] sm:$0xf]
        %v2048 = vld [vmem:[%s1 + $0x1a0] sm:$0xf]
        %v2049 = vld [vmem:[%s1 + $0x1a4] sm:$0xf]
        %v2050 = vld [vmem:[%s1 + $0x1a8] sm:$0xf]
        %v2051 = vld [vmem:[%s1 + $0x1ac] sm:$0xf]
        %v2052 = vld [vmem:[%s1 + $0x1b0] sm:$0xf]
        %v2053 = vld [vmem:[%s1 + $0x1b4] sm:$0xf]
        %v2054 = vld [vmem:[%s1 + $0x1b8] sm:$0xf]
        %v2055 = vld [vmem:[%s1 + $0x1bc] sm:$0xf]
        %v2072 = vunpack.c.l.b16 %v2040
        %v2073 = vunpack.c.l.b16 %v2041
        %v2074 = vunpack.c.l.b16 %v2042
        %v2075 = vunpack.c.l.b16 %v2043
        %v2076 = vunpack.c.l.b16 %v2044
        %v2077 = vunpack.c.l.b16 %v2045
        %v2078 = vunpack.c.l.b16 %v2046
        %v2079 = vunpack.c.l.b16 %v2047
        %v2080 = vunpack.c.l.b16 %v2048
        %v2081 = vunpack.c.l.b16 %v2049
        %v2082 = vunpack.c.l.b16 %v2050
        %v2083 = vunpack.c.l.b16 %v2051
        %v2084 = vunpack.c.l.b16 %v2052
        %v2085 = vunpack.c.l.b16 %v2053
        %v2086 = vunpack.c.l.b16 %v2054
        %v2087 = vunpack.c.l.b16 %v2055
        %v2088 = vpack.c.b16 %v2073, %v2072
        %v2089 = vpack.c.b16 %v2075, %v2074
        %v2090 = vpack.c.b16 %v2077, %v2076
        %v2091 = vpack.c.b16 %v2079, %v2078
        %v2092 = vpack.c.b16 %v2081, %v2080
        %v2093 = vpack.c.b16 %v2083, %v2082
        %v2094 = vpack.c.b16 %v2085, %v2084
        %v2095 = vpack.c.b16 %v2087, %v2086
        %2104 = vmatprep.subr.bf16.mxu0 0
        %2105 = vmatpush1.bf16.msra.mxu0 %v2088
        %2106 = vmatprep.subr.bf16.mxu0 0
        %2107 = vmatpush1.bf16.msra.mxu0 %v2089
        %2108 = vmatprep.subr.bf16.mxu0 0
        %2109 = vmatpush1.bf16.msra.mxu0 %v2090
        %2110 = vmatprep.subr.bf16.mxu0 0
        %2111 = vmatpush1.bf16.msra.mxu0 %v2091
        %2112 = vmatprep.subr.bf16.mxu0 0
        %2113 = vmatpush1.bf16.msra.mxu0 %v2092
        %2114 = vmatprep.subr.bf16.mxu0 0
        %2115 = vmatpush1.bf16.msra.mxu0 %v2093
        %2116 = vmatprep.subr.bf16.mxu0 0
        %2117 = vmatpush1.bf16.msra.mxu0 %v2094
        %2118 = vmatprep.subr.bf16.mxu0 0
        %2119 = vmatpush1.bf16.msra.mxu0 %v2095
        %2120 = vmatprep.subr.bf16.mxu0 0
        %2121 = vmatpush1.bf16.msra.mxu0 0
        %2122 = vmatprep.subr.bf16.mxu0 0
        %2123 = vmatpush1.bf16.msra.mxu0 0
        %2124 = vmatprep.subr.bf16.mxu0 0
        %2125 = vmatpush1.bf16.msra.mxu0 0
        %2126 = vmatprep.subr.bf16.mxu0 0
        %2127 = vmatpush1.bf16.msra.mxu0 0
        %2128 = vmatprep.subr.bf16.mxu0 0
        %2129 = vmatpush1.bf16.msra.mxu0 0
        %2130 = vmatprep.subr.bf16.mxu0 0
        %2131 = vmatpush1.bf16.msra.mxu0 0
        %2132 = vmatprep.subr.bf16.mxu0 0
        %2133 = vmatpush1.bf16.msra.mxu0 0
        %2134 = vmatprep.subr.bf16.mxu0 0
        %2135 = vmatpush1.bf16.msra.mxu0 0
        %2136 = vmatprep.mubr.bf16.mxu0 0
        %2137 = vmatmul.mubr.bf16.gmra.mrb[0].mxu0 %v2024
        %v2138 = vpop.f32.mrb[0].mxu0
        %v2139 = vadd.f32 0.0, %v2138
        %v2140 = vpop.f32.mrb[0].mxu0
        %v2141 = vpop.f32.mrb[0].mxu0
        %v2142 = vadd.f32 0.0, %v2141
        %v2143 = vpop.f32.mrb[0].mxu0
        %2144 = vmatprep.mubr.bf16.mxu0 0
        %2145 = vmatmul.mubr.bf16.gmra.mrb[0].mxu0 %v2025
        %v2146 = vpop.f32.mrb[0].mxu0
        %v2147 = vadd.f32 0.0, %v2146
        %v2148 = vpop.f32.mrb[0].mxu0
        %v2149 = vpop.f32.mrb[0].mxu0
        %v2150 = vadd.f32 0.0, %v2149
        %v2151 = vpop.f32.mrb[0].mxu0
        %2152 = vmatprep.mubr.bf16.mxu0 0
        %2153 = vmatmul.mubr.bf16.gmra.mrb[0].mxu0 %v2026
        %v2154 = vpop.f32.mrb[0].mxu0
        %v2155 = vadd.f32 0.0, %v2154
        %v2156 = vpop.f32.mrb[0].mxu0
        %v2157 = vpop.f32.mrb[0].mxu0
        %v2158 = vadd.f32 0.0, %v2157
        %v2159 = vpop.f32.mrb[0].mxu0
        %2160 = vmatprep.mubr.bf16.mxu0 0
        %2161 = vmatmul.mubr.bf16.gmra.mrb[0].mxu0 %v2027
        %v2162 = vpop.f32.mrb[0].mxu0
        %v2163 = vadd.f32 0.0, %v2162
        %v2164 = vpop.f32.mrb[0].mxu0
        %v2165 = vpop.f32.mrb[0].mxu0
        %v2166 = vadd.f32 0.0, %v2165
        %v2167 = vpop.f32.mrb[0].mxu0
        %2168 = vmatprep.mubr.bf16.mxu0 0
        %2169 = vmatmul.mubr.bf16.gmra.mrb[0].mxu0 %v2028
        %v2170 = vpop.f32.mrb[0].mxu0
        %v2171 = vadd.f32 0.0, %v2170
        %v2172 = vpop.f32.mrb[0].mxu0
        %v2173 = vpop.f32.mrb[0].mxu0
        %v2174 = vadd.f32 0.0, %v2173
        %v2175 = vpop.f32.mrb[0].mxu0
        %2176 = vmatprep.mubr.bf16.mxu0 0
        %2177 = vmatmul.mubr.bf16.gmra.mrb[0].mxu0 %v2029
        %v2178 = vpop.f32.mrb[0].mxu0
        %v2179 = vadd.f32 0.0, %v2178
        %v2180 = vpop.f32.mrb[0].mxu0
        %v2181 = vpop.f32.mrb[0].mxu0
        %v2182 = vadd.f32 0.0, %v2181
        %v2183 = vpop.f32.mrb[0].mxu0
        %2184 = vmatprep.mubr.bf16.mxu0 0
        %2185 = vmatmul.mubr.bf16.gmra.mrb[0].mxu0 %v2030
        %v2186 = vpop.f32.mrb[0].mxu0
        %v2187 = vadd.f32 0.0, %v2186
        %v2188 = vpop.f32.mrb[0].mxu0
        %v2189 = vpop.f32.mrb[0].mxu0
        %v2190 = vadd.f32 0.0, %v2189
        %v2191 = vpop.f32.mrb[0].mxu0
        %2192 = vmatprep.mubr.bf16.mxu0 0
        %2193 = vmatmul.mubr.bf16.gmra.mrb[0].mxu0 %v2031
        %v2194 = vpop.f32.mrb[0].mxu0
        %v2195 = vadd.f32 0.0, %v2194
        %v2196 = vpop.f32.mrb[0].mxu0
        %v2197 = vpop.f32.mrb[0].mxu0
        %v2198 = vadd.f32 0.0, %v2197
        %v2199 = vpop.f32.mrb[0].mxu0
        %2200 = vmatprep.mubr.bf16.mxu0 0
        %2201 = vmatmul.mubr.bf16.gmra.mrb[0].mxu0 %v2032
        %v2202 = vpop.f32.mrb[0].mxu0
        %v2203 = vadd.f32 0.0, %v2202
        %v2204 = vpop.f32.mrb[0].mxu0
        %v2205 = vpop.f32.mrb[0].mxu0
        %v2206 = vadd.f32 0.0, %v2205
        %v2207 = vpop.f32.mrb[0].mxu0
        %2208 = vmatprep.mubr.bf16.mxu0 0
        %2209 = vmatmul.mubr.bf16.gmra.mrb[0].mxu0 %v2033
        %v2210 = vpop.f32.mrb[0].mxu0
        %v2211 = vadd.f32 0.0, %v2210
        %v2212 = vpop.f32.mrb[0].mxu0
        %v2213 = vpop.f32.mrb[0].mxu0
        %v2214 = vadd.f32 0.0, %v2213
        %v2215 = vpop.f32.mrb[0].mxu0
        %2216 = vmatprep.mubr.bf16.mxu0 0
        %2217 = vmatmul.mubr.bf16.gmra.mrb[0].mxu0 %v2034
        %v2218 = vpop.f32.mrb[0].mxu0
        %v2219 = vadd.f32 0.0, %v2218
        %v2220 = vpop.f32.mrb[0].mxu0
        %v2221 = vpop.f32.mrb[0].mxu0
        %v2222 = vadd.f32 0.0, %v2221
        %v2223 = vpop.f32.mrb[0].mxu0
        %2224 = vmatprep.mubr.bf16.mxu0 0
        %2225 = vmatmul.mubr.bf16.gmra.mrb[0].mxu0 %v2035
        %v2226 = vpop.f32.mrb[0].mxu0
        %v2227 = vadd.f32 0.0, %v2226
        %v2228 = vpop.f32.mrb[0].mxu0
        %v2229 = vpop.f32.mrb[0].mxu0
        %v2230 = vadd.f32 0.0, %v2229
        %v2231 = vpop.f32.mrb[0].mxu0
        %2232 = vmatprep.mubr.bf16.mxu0 0
        %2233 = vmatmul.mubr.bf16.gmra.mrb[0].mxu0 %v2036
        %v2234 = vpop.f32.mrb[0].mxu0
        %v2235 = vadd.f32 0.0, %v2234
        %v2236 = vpop.f32.mrb[0].mxu0
        %v2237 = vpop.f32.mrb[0].mxu0
        %v2238 = vadd.f32 0.0, %v2237
        %v2239 = vpop.f32.mrb[0].mxu0
        %2240 = vmatprep.mubr.bf16.mxu0 0
        %2241 = vmatmul.mubr.bf16.gmra.mrb[0].mxu0 %v2037
        %v2242 = vpop.f32.mrb[0].mxu0
        %v2243 = vadd.f32 0.0, %v2242
        %v2244 = vpop.f32.mrb[0].mxu0
        %v2245 = vpop.f32.mrb[0].mxu0
        %v2246 = vadd.f32 0.0, %v2245
        %v2247 = vpop.f32.mrb[0].mxu0
        %2248 = vmatprep.mubr.bf16.mxu0 0
        %2249 = vmatmul.mubr.bf16.gmra.mrb[0].mxu0 %v2038
        %v2250 = vpop.f32.mrb[0].mxu0
        %v2251 = vadd.f32 0.0, %v2250
        %v2252 = vpop.f32.mrb[0].mxu0
        %v2253 = vpop.f32.mrb[0].mxu0
        %v2254 = vadd.f32 0.0, %v2253
        %v2255 = vpop.f32.mrb[0].mxu0
        %2256 = vmatprep.mubr.bf16.mxu0 0
        %2257 = vmatmul.mubr.bf16.gmra.mrb[0].mxu0 %v2039
        %v2258 = vpop.f32.mrb[0].mxu0
        %v2259 = vadd.f32 0.0, %v2258
        %v2260 = vpop.f32.mrb[0].mxu0
        %v2261 = vpop.f32.mrb[0].mxu0
        %v2262 = vadd.f32 0.0, %v2261
        %v2263 = vpop.f32.mrb[0].mxu0
        %2264 = vdwg.mxu0
        %v2265 = vadd.f32 %v1959, %v2139
        %v2266 = vadd.f32 %v1960, %v2142
        %v2267 = vadd.f32 %v1961, %v2147
        %v2268 = vadd.f32 %v1962, %v2150
        %v2269 = vadd.f32 %v1963, %v2155
        %v2270 = vadd.f32 %v1964, %v2158
        %v2271 = vadd.f32 %v1965, %v2163
        %v2272 = vadd.f32 %v1966, %v2166
        %v2273 = vadd.f32 %v1967, %v2171
        %v2274 = vadd.f32 %v1968, %v2174
        %v2275 = vadd.f32 %v1969, %v2179
        %v2276 = vadd.f32 %v1970, %v2182
        %v2277 = vadd.f32 %v1971, %v2187
        %v2278 = vadd.f32 %v1972, %v2190
        %v2279 = vadd.f32 %v1973, %v2195
        %v2280 = vadd.f32 %v1974, %v2198
        %v2281 = vadd.f32 %v1975, %v2203
        %v2282 = vadd.f32 %v1976, %v2206
        %v2283 = vadd.f32 %v1977, %v2211
        %v2284 = vadd.f32 %v1978, %v2214
        %v2285 = vadd.f32 %v1979, %v2219
        %v2286 = vadd.f32 %v1980, %v2222
        %v2287 = vadd.f32 %v1981, %v2227
        %v2288 = vadd.f32 %v1982, %v2230
        %v2289 = vadd.f32 %v1983, %v2235
        %v2290 = vadd.f32 %v1984, %v2238
        %v2291 = vadd.f32 %v1985, %v2243
        %v2292 = vadd.f32 %v1986, %v2246
        %v2293 = vadd.f32 %v1987, %v2251
        %v2294 = vadd.f32 %v1988, %v2254
        %v2295 = vadd.f32 %v1989, %v2259
        %v2296 = vadd.f32 %v1990, %v2262
        %v2297 = vld [vmem:[%s1991 + $0x1] sm:$0xff]
        %v2298 = vld [vmem:[%s1991 + $0x9] sm:$0xff]
        %v2299 = vld [vmem:[%s1991 + $0x19] sm:$0xff]
        %v2300 = vld [vmem:[%s1991 + $0x21] sm:$0xff]
        %v2301 = vld [vmem:[%s1991 + $0x31] sm:$0xff]
        %v2302 = vld [vmem:[%s1991 + $0x39] sm:$0xff]
        %v2303 = vld [vmem:[%s1991 + $0x49] sm:$0xff]
        %v2304 = vld [vmem:[%s1991 + $0x51] sm:$0xff]
        %v2305 = vld [vmem:[%s1991 + $0x61] sm:$0xff]
        %v2306 = vld [vmem:[%s1991 + $0x69] sm:$0xff]
        %v2307 = vld [vmem:[%s1991 + $0x79] sm:$0xff]
        %v2308 = vld [vmem:[%s1991 + $0x81] sm:$0xff]
        %v2309 = vld [vmem:[%s1991 + $0x91] sm:$0xff]
        %v2310 = vld [vmem:[%s1991 + $0x99] sm:$0xff]
        %v2311 = vld [vmem:[%s1991 + $0xa9] sm:$0xff]
        %v2312 = vld [vmem:[%s1991 + $0xb1] sm:$0xff]
        %v2313 = vld [vmem:[%s1991 + $0xc1] sm:$0xff]
        %v2314 = vld [vmem:[%s1991 + $0xc9] sm:$0xff]
        %v2315 = vld [vmem:[%s1991 + $0xd9] sm:$0xff]
        %v2316 = vld [vmem:[%s1991 + $0xe1] sm:$0xff]
        %v2317 = vld [vmem:[%s1991 + $0xf1] sm:$0xff]
        %v2318 = vld [vmem:[%s1991 + $0xf9] sm:$0xff]
        %v2319 = vld [vmem:[%s1991 + $0x109] sm:$0xff]
        %v2320 = vld [vmem:[%s1991 + $0x111] sm:$0xff]
        %v2321 = vld [vmem:[%s1991 + $0x121] sm:$0xff]
        %v2322 = vld [vmem:[%s1991 + $0x129] sm:$0xff]
        %v2323 = vld [vmem:[%s1991 + $0x139] sm:$0xff]
        %v2324 = vld [vmem:[%s1991 + $0x141] sm:$0xff]
        %v2325 = vld [vmem:[%s1991 + $0x151] sm:$0xff]
        %v2326 = vld [vmem:[%s1991 + $0x159] sm:$0xff]
        %v2327 = vld [vmem:[%s1991 + $0x169] sm:$0xff]
        %v2328 = vld [vmem:[%s1991 + $0x171] sm:$0xff]
        %v2329 = vpack.c.bf16 %v2298, %v2297
        %v2330 = vpack.c.bf16 %v2300, %v2299
        %v2331 = vpack.c.bf16 %v2302, %v2301
        %v2332 = vpack.c.bf16 %v2304, %v2303
        %v2333 = vpack.c.bf16 %v2306, %v2305
        %v2334 = vpack.c.bf16 %v2308, %v2307
        %v2335 = vpack.c.bf16 %v2310, %v2309
        %v2336 = vpack.c.bf16 %v2312, %v2311
        %v2337 = vpack.c.bf16 %v2314, %v2313
        %v2338 = vpack.c.bf16 %v2316, %v2315
        %v2339 = vpack.c.bf16 %v2318, %v2317
        %v2340 = vpack.c.bf16 %v2320, %v2319
        %v2341 = vpack.c.bf16 %v2322, %v2321
        %v2342 = vpack.c.bf16 %v2324, %v2323
        %v2343 = vpack.c.bf16 %v2326, %v2325
        %v2344 = vpack.c.bf16 %v2328, %v2327
        %v2345 = vld [vmem:[%s1 + $0x1c0] sm:$0xf]
        %v2346 = vld [vmem:[%s1 + $0x1c4] sm:$0xf]
        %v2347 = vld [vmem:[%s1 + $0x1c8] sm:$0xf]
        %v2348 = vld [vmem:[%s1 + $0x1cc] sm:$0xf]
        %v2349 = vld [vmem:[%s1 + $0x1d0] sm:$0xf]
        %v2350 = vld [vmem:[%s1 + $0x1d4] sm:$0xf]
        %v2351 = vld [vmem:[%s1 + $0x1d8] sm:$0xf]
        %v2352 = vld [vmem:[%s1 + $0x1dc] sm:$0xf]
        %v2353 = vld [vmem:[%s1 + $0x1e0] sm:$0xf]
        %v2354 = vld [vmem:[%s1 + $0x1e4] sm:$0xf]
        %v2355 = vld [vmem:[%s1 + $0x1e8] sm:$0xf]
        %v2356 = vld [vmem:[%s1 + $0x1ec] sm:$0xf]
        %v2357 = vld [vmem:[%s1 + $0x1f0] sm:$0xf]
        %v2358 = vld [vmem:[%s1 + $0x1f4] sm:$0xf]
        %v2359 = vld [vmem:[%s1 + $0x1f8] sm:$0xf]
        %v2360 = vld [vmem:[%s1 + $0x1fc] sm:$0xf]
        %v2377 = vunpack.c.l.b16 %v2345
        %v2378 = vunpack.c.l.b16 %v2346
        %v2379 = vunpack.c.l.b16 %v2347
        %v2380 = vunpack.c.l.b16 %v2348
        %v2381 = vunpack.c.l.b16 %v2349
        %v2382 = vunpack.c.l.b16 %v2350
        %v2383 = vunpack.c.l.b16 %v2351
        %v2384 = vunpack.c.l.b16 %v2352
        %v2385 = vunpack.c.l.b16 %v2353
        %v2386 = vunpack.c.l.b16 %v2354
        %v2387 = vunpack.c.l.b16 %v2355
        %v2388 = vunpack.c.l.b16 %v2356
        %v2389 = vunpack.c.l.b16 %v2357
        %v2390 = vunpack.c.l.b16 %v2358
        %v2391 = vunpack.c.l.b16 %v2359
        %v2392 = vunpack.c.l.b16 %v2360
        %v2393 = vpack.c.b16 %v2378, %v2377
        %v2394 = vpack.c.b16 %v2380, %v2379
        %v2395 = vpack.c.b16 %v2382, %v2381
        %v2396 = vpack.c.b16 %v2384, %v2383
        %v2397 = vpack.c.b16 %v2386, %v2385
        %v2398 = vpack.c.b16 %v2388, %v2387
        %v2399 = vpack.c.b16 %v2390, %v2389
        %v2400 = vpack.c.b16 %v2392, %v2391
        %2409 = vmatprep.subr.bf16.mxu0 0
        %2410 = vmatpush1.bf16.msra.mxu0 %v2393
        %2411 = vmatprep.subr.bf16.mxu0 0
        %2412 = vmatpush1.bf16.msra.mxu0 %v2394
        %2413 = vmatprep.subr.bf16.mxu0 0
        %2414 = vmatpush1.bf16.msra.mxu0 %v2395
        %2415 = vmatprep.subr.bf16.mxu0 0
        %2416 = vmatpush1.bf16.msra.mxu0 %v2396
        %2417 = vmatprep.subr.bf16.mxu0 0
        %2418 = vmatpush1.bf16.msra.mxu0 %v2397
        %2419 = vmatprep.subr.bf16.mxu0 0
        %2420 = vmatpush1.bf16.msra.mxu0 %v2398
        %2421 = vmatprep.subr.bf16.mxu0 0
        %2422 = vmatpush1.bf16.msra.mxu0 %v2399
        %2423 = vmatprep.subr.bf16.mxu0 0
        %2424 = vmatpush1.bf16.msra.mxu0 %v2400
        %2425 = vmatprep.subr.bf16.mxu0 0
        %2426 = vmatpush1.bf16.msra.mxu0 0
        %2427 = vmatprep.subr.bf16.mxu0 0
        %2428 = vmatpush1.bf16.msra.mxu0 0
        %2429 = vmatprep.subr.bf16.mxu0 0
        %2430 = vmatpush1.bf16.msra.mxu0 0
        %2431 = vmatprep.subr.bf16.mxu0 0
        %2432 = vmatpush1.bf16.msra.mxu0 0
        %2433 = vmatprep.subr.bf16.mxu0 0
        %2434 = vmatpush1.bf16.msra.mxu0 0
        %2435 = vmatprep.subr.bf16.mxu0 0
        %2436 = vmatpush1.bf16.msra.mxu0 0
        %2437 = vmatprep.subr.bf16.mxu0 0
        %2438 = vmatpush1.bf16.msra.mxu0 0
        %2439 = vmatprep.subr.bf16.mxu0 0
        %2440 = vmatpush1.bf16.msra.mxu0 0
        %2441 = vmatprep.mubr.bf16.mxu0 0
        %2442 = vmatmul.mubr.bf16.gmra.mrb[0].mxu0 %v2329
        %v2443 = vpop.f32.mrb[0].mxu0
        %v2444 = vadd.f32 0.0, %v2443
        %v2445 = vpop.f32.mrb[0].mxu0
        %v2446 = vpop.f32.mrb[0].mxu0
        %v2447 = vadd.f32 0.0, %v2446
        %v2448 = vpop.f32.mrb[0].mxu0
        %2449 = vmatprep.mubr.bf16.mxu0 0
        %2450 = vmatmul.mubr.bf16.gmra.mrb[0].mxu0 %v2330
        %v2451 = vpop.f32.mrb[0].mxu0
        %v2452 = vadd.f32 0.0, %v2451
        %v2453 = vpop.f32.mrb[0].mxu0
        %v2454 = vpop.f32.mrb[0].mxu0
        %v2455 = vadd.f32 0.0, %v2454
        %v2456 = vpop.f32.mrb[0].mxu0
        %2457 = vmatprep.mubr.bf16.mxu0 0
        %2458 = vmatmul.mubr.bf16.gmra.mrb[0].mxu0 %v2331
        %v2459 = vpop.f32.mrb[0].mxu0
        %v2460 = vadd.f32 0.0, %v2459
        %v2461 = vpop.f32.mrb[0].mxu0
        %v2462 = vpop.f32.mrb[0].mxu0
        %v2463 = vadd.f32 0.0, %v2462
        %v2464 = vpop.f32.mrb[0].mxu0
        %2465 = vmatprep.mubr.bf16.mxu0 0
        %2466 = vmatmul.mubr.bf16.gmra.mrb[0].mxu0 %v2332
        %v2467 = vpop.f32.mrb[0].mxu0
        %v2468 = vadd.f32 0.0, %v2467
        %v2469 = vpop.f32.mrb[0].mxu0
        %v2470 = vpop.f32.mrb[0].mxu0
        %v2471 = vadd.f32 0.0, %v2470
        %v2472 = vpop.f32.mrb[0].mxu0
        %2473 = vmatprep.mubr.bf16.mxu0 0
        %2474 = vmatmul.mubr.bf16.gmra.mrb[0].mxu0 %v2333
        %v2475 = vpop.f32.mrb[0].mxu0
        %v2476 = vadd.f32 0.0, %v2475
        %v2477 = vpop.f32.mrb[0].mxu0
        %v2478 = vpop.f32.mrb[0].mxu0
        %v2479 = vadd.f32 0.0, %v2478
        %v2480 = vpop.f32.mrb[0].mxu0
        %2481 = vmatprep.mubr.bf16.mxu0 0
        %2482 = vmatmul.mubr.bf16.gmra.mrb[0].mxu0 %v2334
        %v2483 = vpop.f32.mrb[0].mxu0
        %v2484 = vadd.f32 0.0, %v2483
        %v2485 = vpop.f32.mrb[0].mxu0
        %v2486 = vpop.f32.mrb[0].mxu0
        %v2487 = vadd.f32 0.0, %v2486
        %v2488 = vpop.f32.mrb[0].mxu0
        %2489 = vmatprep.mubr.bf16.mxu0 0
        %2490 = vmatmul.mubr.bf16.gmra.mrb[0].mxu0 %v2335
        %v2491 = vpop.f32.mrb[0].mxu0
        %v2492 = vadd.f32 0.0, %v2491
        %v2493 = vpop.f32.mrb[0].mxu0
        %v2494 = vpop.f32.mrb[0].mxu0
        %v2495 = vadd.f32 0.0, %v2494
        %v2496 = vpop.f32.mrb[0].mxu0
        %2497 = vmatprep.mubr.bf16.mxu0 0
        %2498 = vmatmul.mubr.bf16.gmra.mrb[0].mxu0 %v2336
        %v2499 = vpop.f32.mrb[0].mxu0
        %v2500 = vadd.f32 0.0, %v2499
        %v2501 = vpop.f32.mrb[0].mxu0
        %v2502 = vpop.f32.mrb[0].mxu0
        %v2503 = vadd.f32 0.0, %v2502
        %v2504 = vpop.f32.mrb[0].mxu0
        %2505 = vmatprep.mubr.bf16.mxu0 0
        %2506 = vmatmul.mubr.bf16.gmra.mrb[0].mxu0 %v2337
        %v2507 = vpop.f32.mrb[0].mxu0
        %v2508 = vadd.f32 0.0, %v2507
        %v2509 = vpop.f32.mrb[0].mxu0
        %v2510 = vpop.f32.mrb[0].mxu0
        %v2511 = vadd.f32 0.0, %v2510
        %v2512 = vpop.f32.mrb[0].mxu0
        %2513 = vmatprep.mubr.bf16.mxu0 0
        %2514 = vmatmul.mubr.bf16.gmra.mrb[0].mxu0 %v2338
        %v2515 = vpop.f32.mrb[0].mxu0
        %v2516 = vadd.f32 0.0, %v2515
        %v2517 = vpop.f32.mrb[0].mxu0
        %v2518 = vpop.f32.mrb[0].mxu0
        %v2519 = vadd.f32 0.0, %v2518
        %v2520 = vpop.f32.mrb[0].mxu0
        %2521 = vmatprep.mubr.bf16.mxu0 0
        %2522 = vmatmul.mubr.bf16.gmra.mrb[0].mxu0 %v2339
        %v2523 = vpop.f32.mrb[0].mxu0
        %v2524 = vadd.f32 0.0, %v2523
        %v2525 = vpop.f32.mrb[0].mxu0
        %v2526 = vpop.f32.mrb[0].mxu0
        %v2527 = vadd.f32 0.0, %v2526
        %v2528 = vpop.f32.mrb[0].mxu0
        %2529 = vmatprep.mubr.bf16.mxu0 0
        %2530 = vmatmul.mubr.bf16.gmra.mrb[0].mxu0 %v2340
        %v2531 = vpop.f32.mrb[0].mxu0
        %v2532 = vadd.f32 0.0, %v2531
        %v2533 = vpop.f32.mrb[0].mxu0
        %v2534 = vpop.f32.mrb[0].mxu0
        %v2535 = vadd.f32 0.0, %v2534
        %v2536 = vpop.f32.mrb[0].mxu0
        %2537 = vmatprep.mubr.bf16.mxu0 0
        %2538 = vmatmul.mubr.bf16.gmra.mrb[0].mxu0 %v2341
        %v2539 = vpop.f32.mrb[0].mxu0
        %v2540 = vadd.f32 0.0, %v2539
        %v2541 = vpop.f32.mrb[0].mxu0
        %v2542 = vpop.f32.mrb[0].mxu0
        %v2543 = vadd.f32 0.0, %v2542
        %v2544 = vpop.f32.mrb[0].mxu0
        %2545 = vmatprep.mubr.bf16.mxu0 0
        %2546 = vmatmul.mubr.bf16.gmra.mrb[0].mxu0 %v2342
        %v2547 = vpop.f32.mrb[0].mxu0
        %v2548 = vadd.f32 0.0, %v2547
        %v2549 = vpop.f32.mrb[0].mxu0
        %v2550 = vpop.f32.mrb[0].mxu0
        %v2551 = vadd.f32 0.0, %v2550
        %v2552 = vpop.f32.mrb[0].mxu0
        %2553 = vmatprep.mubr.bf16.mxu0 0
        %2554 = vmatmul.mubr.bf16.gmra.mrb[0].mxu0 %v2343
        %v2555 = vpop.f32.mrb[0].mxu0
        %v2556 = vadd.f32 0.0, %v2555
        %v2557 = vpop.f32.mrb[0].mxu0
        %v2558 = vpop.f32.mrb[0].mxu0
        %v2559 = vadd.f32 0.0, %v2558
        %v2560 = vpop.f32.mrb[0].mxu0
        %2561 = vmatprep.mubr.bf16.mxu0 0
        %2562 = vmatmul.mubr.bf16.gmra.mrb[0].mxu0 %v2344
        %v2563 = vpop.f32.mrb[0].mxu0
        %v2564 = vadd.f32 0.0, %v2563
        %v2565 = vpop.f32.mrb[0].mxu0
        %v2566 = vpop.f32.mrb[0].mxu0
        %v2567 = vadd.f32 0.0, %v2566
        %v2568 = vpop.f32.mrb[0].mxu0
        %2569 = vdwg.mxu0
        %v2570 = vadd.f32 %v2265, %v2444
        %v2571 = vadd.f32 %v2266, %v2447
        %v2572 = vadd.f32 %v2267, %v2452
        %v2573 = vadd.f32 %v2268, %v2455
        %v2574 = vadd.f32 %v2269, %v2460
        %v2575 = vadd.f32 %v2270, %v2463
        %v2576 = vadd.f32 %v2271, %v2468
        %v2577 = vadd.f32 %v2272, %v2471
        %v2578 = vadd.f32 %v2273, %v2476
        %v2579 = vadd.f32 %v2274, %v2479
        %v2580 = vadd.f32 %v2275, %v2484
        %v2581 = vadd.f32 %v2276, %v2487
        %v2582 = vadd.f32 %v2277, %v2492
        %v2583 = vadd.f32 %v2278, %v2495
        %v2584 = vadd.f32 %v2279, %v2500
        %v2585 = vadd.f32 %v2280, %v2503
        %v2586 = vadd.f32 %v2281, %v2508
        %v2587 = vadd.f32 %v2282, %v2511
        %v2588 = vadd.f32 %v2283, %v2516
        %v2589 = vadd.f32 %v2284, %v2519
        %v2590 = vadd.f32 %v2285, %v2524
        %v2591 = vadd.f32 %v2286, %v2527
        %v2592 = vadd.f32 %v2287, %v2532
        %v2593 = vadd.f32 %v2288, %v2535
        %v2594 = vadd.f32 %v2289, %v2540
        %v2595 = vadd.f32 %v2290, %v2543
        %v2596 = vadd.f32 %v2291, %v2548
        %v2597 = vadd.f32 %v2292, %v2551
        %v2598 = vadd.f32 %v2293, %v2556
        %v2599 = vadd.f32 %v2294, %v2559
        %v2600 = vadd.f32 %v2295, %v2564
        %v2601 = vadd.f32 %v2296, %v2567
        %v2602 = vld [vmem:[%s1991 + $0x2] sm:$0xff]
        %v2603 = vld [vmem:[%s1991 + $0xa] sm:$0xff]
        %v2604 = vld [vmem:[%s1991 + $0x1a] sm:$0xff]
        %v2605 = vld [vmem:[%s1991 + $0x22] sm:$0xff]
        %v2606 = vld [vmem:[%s1991 + $0x32] sm:$0xff]
        %v2607 = vld [vmem:[%s1991 + $0x3a] sm:$0xff]
        %v2608 = vld [vmem:[%s1991 + $0x4a] sm:$0xff]
        %v2609 = vld [vmem:[%s1991 + $0x52] sm:$0xff]
        %v2610 = vld [vmem:[%s1991 + $0x62] sm:$0xff]
        %v2611 = vld [vmem:[%s1991 + $0x6a] sm:$0xff]
        %v2612 = vld [vmem:[%s1991 + $0x7a] sm:$0xff]
        %v2613 = vld [vmem:[%s1991 + $0x82] sm:$0xff]
        %v2614 = vld [vmem:[%s1991 + $0x92] sm:$0xff]
        %v2615 = vld [vmem:[%s1991 + $0x9a] sm:$0xff]
        %v2616 = vld [vmem:[%s1991 + $0xaa] sm:$0xff]
        %v2617 = vld [vmem:[%s1991 + $0xb2] sm:$0xff]
        %v2618 = vld [vmem:[%s1991 + $0xc2] sm:$0xff]
        %v2619 = vld [vmem:[%s1991 + $0xca] sm:$0xff]
        %v2620 = vld [vmem:[%s1991 + $0xda] sm:$0xff]
        %v2621 = vld [vmem:[%s1991 + $0xe2] sm:$0xff]
        %v2622 = vld [vmem:[%s1991 + $0xf2] sm:$0xff]
        %v2623 = vld [vmem:[%s1991 + $0xfa] sm:$0xff]
        %v2624 = vld [vmem:[%s1991 + $0x10a] sm:$0xff]
        %v2625 = vld [vmem:[%s1991 + $0x112] sm:$0xff]
        %v2626 = vld [vmem:[%s1991 + $0x122] sm:$0xff]
        %v2627 = vld [vmem:[%s1991 + $0x12a] sm:$0xff]
        %v2628 = vld [vmem:[%s1991 + $0x13a] sm:$0xff]
        %v2629 = vld [vmem:[%s1991 + $0x142] sm:$0xff]
        %v2630 = vld [vmem:[%s1991 + $0x152] sm:$0xff]
        %v2631 = vld [vmem:[%s1991 + $0x15a] sm:$0xff]
        %v2632 = vld [vmem:[%s1991 + $0x16a] sm:$0xff]
        %v2633 = vld [vmem:[%s1991 + $0x172] sm:$0xff]
        %v2634 = vpack.c.bf16 %v2603, %v2602
        %v2635 = vpack.c.bf16 %v2605, %v2604
        %v2636 = vpack.c.bf16 %v2607, %v2606
        %v2637 = vpack.c.bf16 %v2609, %v2608
        %v2638 = vpack.c.bf16 %v2611, %v2610
        %v2639 = vpack.c.bf16 %v2613, %v2612
        %v2640 = vpack.c.bf16 %v2615, %v2614
        %v2641 = vpack.c.bf16 %v2617, %v2616
        %v2642 = vpack.c.bf16 %v2619, %v2618
        %v2643 = vpack.c.bf16 %v2621, %v2620
        %v2644 = vpack.c.bf16 %v2623, %v2622
        %v2645 = vpack.c.bf16 %v2625, %v2624
        %v2646 = vpack.c.bf16 %v2627, %v2626
        %v2647 = vpack.c.bf16 %v2629, %v2628
        %v2648 = vpack.c.bf16 %v2631, %v2630
        %v2649 = vpack.c.bf16 %v2633, %v2632
        %v2650 = vld [vmem:[%s1 + $0x200] sm:$0xf]
        %v2651 = vld [vmem:[%s1 + $0x204] sm:$0xf]
        %v2652 = vld [vmem:[%s1 + $0x208] sm:$0xf]
        %v2653 = vld [vmem:[%s1 + $0x20c] sm:$0xf]
        %v2654 = vld [vmem:[%s1 + $0x210] sm:$0xf]
        %v2655 = vld [vmem:[%s1 + $0x214] sm:$0xf]
        %v2656 = vld [vmem:[%s1 + $0x218] sm:$0xf]
        %v2657 = vld [vmem:[%s1 + $0x21c] sm:$0xf]
        %v2658 = vld [vmem:[%s1 + $0x220] sm:$0xf]
        %v2659 = vld [vmem:[%s1 + $0x224] sm:$0xf]
        %v2660 = vld [vmem:[%s1 + $0x228] sm:$0xf]
        %v2661 = vld [vmem:[%s1 + $0x22c] sm:$0xf]
        %v2662 = vld [vmem:[%s1 + $0x230] sm:$0xf]
        %v2663 = vld [vmem:[%s1 + $0x234] sm:$0xf]
        %v2664 = vld [vmem:[%s1 + $0x238] sm:$0xf]
        %v2665 = vld [vmem:[%s1 + $0x23c] sm:$0xf]
        %v2682 = vunpack.c.l.b16 %v2650
        %v2683 = vunpack.c.l.b16 %v2651
        %v2684 = vunpack.c.l.b16 %v2652
        %v2685 = vunpack.c.l.b16 %v2653
        %v2686 = vunpack.c.l.b16 %v2654
        %v2687 = vunpack.c.l.b16 %v2655
        %v2688 = vunpack.c.l.b16 %v2656
        %v2689 = vunpack.c.l.b16 %v2657
        %v2690 = vunpack.c.l.b16 %v2658
        %v2691 = vunpack.c.l.b16 %v2659
        %v2692 = vunpack.c.l.b16 %v2660
        %v2693 = vunpack.c.l.b16 %v2661
        %v2694 = vunpack.c.l.b16 %v2662
        %v2695 = vunpack.c.l.b16 %v2663
        %v2696 = vunpack.c.l.b16 %v2664
        %v2697 = vunpack.c.l.b16 %v2665
        %v2698 = vpack.c.b16 %v2683, %v2682
        %v2699 = vpack.c.b16 %v2685, %v2684
        %v2700 = vpack.c.b16 %v2687, %v2686
        %v2701 = vpack.c.b16 %v2689, %v2688
        %v2702 = vpack.c.b16 %v2691, %v2690
        %v2703 = vpack.c.b16 %v2693, %v2692
        %v2704 = vpack.c.b16 %v2695, %v2694
        %v2705 = vpack.c.b16 %v2697, %v2696
        %2714 = vmatprep.subr.bf16.mxu0 0
        %2715 = vmatpush1.bf16.msra.mxu0 %v2698
        %2716 = vmatprep.subr.bf16.mxu0 0
        %2717 = vmatpush1.bf16.msra.mxu0 %v2699
        %2718 = vmatprep.subr.bf16.mxu0 0
        %2719 = vmatpush1.bf16.msra.mxu0 %v2700
        %2720 = vmatprep.subr.bf16.mxu0 0
        %2721 = vmatpush1.bf16.msra.mxu0 %v2701
        %2722 = vmatprep.subr.bf16.mxu0 0
        %2723 = vmatpush1.bf16.msra.mxu0 %v2702
        %2724 = vmatprep.subr.bf16.mxu0 0
        %2725 = vmatpush1.bf16.msra.mxu0 %v2703
        %2726 = vmatprep.subr.bf16.mxu0 0
        %2727 = vmatpush1.bf16.msra.mxu0 %v2704
        %2728 = vmatprep.subr.bf16.mxu0 0
        %2729 = vmatpush1.bf16.msra.mxu0 %v2705
        %2730 = vmatprep.subr.bf16.mxu0 0
        %2731 = vmatpush1.bf16.msra.mxu0 0
        %2732 = vmatprep.subr.bf16.mxu0 0
        %2733 = vmatpush1.bf16.msra.mxu0 0
        %2734 = vmatprep.subr.bf16.mxu0 0
        %2735 = vmatpush1.bf16.msra.mxu0 0
        %2736 = vmatprep.subr.bf16.mxu0 0
        %2737 = vmatpush1.bf16.msra.mxu0 0
        %2738 = vmatprep.subr.bf16.mxu0 0
        %2739 = vmatpush1.bf16.msra.mxu0 0
        %2740 = vmatprep.subr.bf16.mxu0 0
        %2741 = vmatpush1.bf16.msra.mxu0 0
        %2742 = vmatprep.subr.bf16.mxu0 0
        %2743 = vmatpush1.bf16.msra.mxu0 0
        %2744 = vmatprep.subr.bf16.mxu0 0
        %2745 = vmatpush1.bf16.msra.mxu0 0
        %2746 = vmatprep.mubr.bf16.mxu0 0
        %2747 = vmatmul.mubr.bf16.gmra.mrb[0].mxu0 %v2634
        %v2748 = vpop.f32.mrb[0].mxu0
        %v2749 = vadd.f32 0.0, %v2748
        %v2750 = vpop.f32.mrb[0].mxu0
        %v2751 = vpop.f32.mrb[0].mxu0
        %v2752 = vadd.f32 0.0, %v2751
        %v2753 = vpop.f32.mrb[0].mxu0
        %2754 = vmatprep.mubr.bf16.mxu0 0
        %2755 = vmatmul.mubr.bf16.gmra.mrb[0].mxu0 %v2635
        %v2756 = vpop.f32.mrb[0].mxu0
        %v2757 = vadd.f32 0.0, %v2756
        %v2758 = vpop.f32.mrb[0].mxu0
        %v2759 = vpop.f32.mrb[0].mxu0
        %v2760 = vadd.f32 0.0, %v2759
        %v2761 = vpop.f32.mrb[0].mxu0
        %2762 = vmatprep.mubr.bf16.mxu0 0
        %2763 = vmatmul.mubr.bf16.gmra.mrb[0].mxu0 %v2636
        %v2764 = vpop.f32.mrb[0].mxu0
        %v2765 = vadd.f32 0.0, %v2764
        %v2766 = vpop.f32.mrb[0].mxu0
        %v2767 = vpop.f32.mrb[0].mxu0
        %v2768 = vadd.f32 0.0, %v2767
        %v2769 = vpop.f32.mrb[0].mxu0
        %2770 = vmatprep.mubr.bf16.mxu0 0
        %2771 = vmatmul.mubr.bf16.gmra.mrb[0].mxu0 %v2637
        %v2772 = vpop.f32.mrb[0].mxu0
        %v2773 = vadd.f32 0.0, %v2772
        %v2774 = vpop.f32.mrb[0].mxu0
        %v2775 = vpop.f32.mrb[0].mxu0
        %v2776 = vadd.f32 0.0, %v2775
        %v2777 = vpop.f32.mrb[0].mxu0
        %2778 = vmatprep.mubr.bf16.mxu0 0
        %2779 = vmatmul.mubr.bf16.gmra.mrb[0].mxu0 %v2638
        %v2780 = vpop.f32.mrb[0].mxu0
        %v2781 = vadd.f32 0.0, %v2780
        %v2782 = vpop.f32.mrb[0].mxu0
        %v2783 = vpop.f32.mrb[0].mxu0
        %v2784 = vadd.f32 0.0, %v2783
        %v2785 = vpop.f32.mrb[0].mxu0
        %2786 = vmatprep.mubr.bf16.mxu0 0
        %2787 = vmatmul.mubr.bf16.gmra.mrb[0].mxu0 %v2639
        %v2788 = vpop.f32.mrb[0].mxu0
        %v2789 = vadd.f32 0.0, %v2788
        %v2790 = vpop.f32.mrb[0].mxu0
        %v2791 = vpop.f32.mrb[0].mxu0
        %v2792 = vadd.f32 0.0, %v2791
        %v2793 = vpop.f32.mrb[0].mxu0
        %2794 = vmatprep.mubr.bf16.mxu0 0
        %2795 = vmatmul.mubr.bf16.gmra.mrb[0].mxu0 %v2640
        %v2796 = vpop.f32.mrb[0].mxu0
        %v2797 = vadd.f32 0.0, %v2796
        %v2798 = vpop.f32.mrb[0].mxu0
        %v2799 = vpop.f32.mrb[0].mxu0
        %v2800 = vadd.f32 0.0, %v2799
        %v2801 = vpop.f32.mrb[0].mxu0
        %2802 = vmatprep.mubr.bf16.mxu0 0
        %2803 = vmatmul.mubr.bf16.gmra.mrb[0].mxu0 %v2641
        %v2804 = vpop.f32.mrb[0].mxu0
        %v2805 = vadd.f32 0.0, %v2804
        %v2806 = vpop.f32.mrb[0].mxu0
        %v2807 = vpop.f32.mrb[0].mxu0
        %v2808 = vadd.f32 0.0, %v2807
        %v2809 = vpop.f32.mrb[0].mxu0
        %2810 = vmatprep.mubr.bf16.mxu0 0
        %2811 = vmatmul.mubr.bf16.gmra.mrb[0].mxu0 %v2642
        %v2812 = vpop.f32.mrb[0].mxu0
        %v2813 = vadd.f32 0.0, %v2812
        %v2814 = vpop.f32.mrb[0].mxu0
        %v2815 = vpop.f32.mrb[0].mxu0
        %v2816 = vadd.f32 0.0, %v2815
        %v2817 = vpop.f32.mrb[0].mxu0
        %2818 = vmatprep.mubr.bf16.mxu0 0
        %2819 = vmatmul.mubr.bf16.gmra.mrb[0].mxu0 %v2643
        %v2820 = vpop.f32.mrb[0].mxu0
        %v2821 = vadd.f32 0.0, %v2820
        %v2822 = vpop.f32.mrb[0].mxu0
        %v2823 = vpop.f32.mrb[0].mxu0
        %v2824 = vadd.f32 0.0, %v2823
        %v2825 = vpop.f32.mrb[0].mxu0
        %2826 = vmatprep.mubr.bf16.mxu0 0
        %2827 = vmatmul.mubr.bf16.gmra.mrb[0].mxu0 %v2644
        %v2828 = vpop.f32.mrb[0].mxu0
        %v2829 = vadd.f32 0.0, %v2828
        %v2830 = vpop.f32.mrb[0].mxu0
        %v2831 = vpop.f32.mrb[0].mxu0
        %v2832 = vadd.f32 0.0, %v2831
        %v2833 = vpop.f32.mrb[0].mxu0
        %2834 = vmatprep.mubr.bf16.mxu0 0
        %2835 = vmatmul.mubr.bf16.gmra.mrb[0].mxu0 %v2645
        %v2836 = vpop.f32.mrb[0].mxu0
        %v2837 = vadd.f32 0.0, %v2836
        %v2838 = vpop.f32.mrb[0].mxu0
        %v2839 = vpop.f32.mrb[0].mxu0
        %v2840 = vadd.f32 0.0, %v2839
        %v2841 = vpop.f32.mrb[0].mxu0
        %2842 = vmatprep.mubr.bf16.mxu0 0
        %2843 = vmatmul.mubr.bf16.gmra.mrb[0].mxu0 %v2646
        %v2844 = vpop.f32.mrb[0].mxu0
        %v2845 = vadd.f32 0.0, %v2844
        %v2846 = vpop.f32.mrb[0].mxu0
        %v2847 = vpop.f32.mrb[0].mxu0
        %v2848 = vadd.f32 0.0, %v2847
        %v2849 = vpop.f32.mrb[0].mxu0
        %2850 = vmatprep.mubr.bf16.mxu0 0
        %2851 = vmatmul.mubr.bf16.gmra.mrb[0].mxu0 %v2647
        %v2852 = vpop.f32.mrb[0].mxu0
        %v2853 = vadd.f32 0.0, %v2852
        %v2854 = vpop.f32.mrb[0].mxu0
        %v2855 = vpop.f32.mrb[0].mxu0
        %v2856 = vadd.f32 0.0, %v2855
        %v2857 = vpop.f32.mrb[0].mxu0
        %2858 = vmatprep.mubr.bf16.mxu0 0
        %2859 = vmatmul.mubr.bf16.gmra.mrb[0].mxu0 %v2648
        %v2860 = vpop.f32.mrb[0].mxu0
        %v2861 = vadd.f32 0.0, %v2860
        %v2862 = vpop.f32.mrb[0].mxu0
        %v2863 = vpop.f32.mrb[0].mxu0
        %v2864 = vadd.f32 0.0, %v2863
        %v2865 = vpop.f32.mrb[0].mxu0
        %2866 = vmatprep.mubr.bf16.mxu0 0
        %2867 = vmatmul.mubr.bf16.gmra.mrb[0].mxu0 %v2649
        %v2868 = vpop.f32.mrb[0].mxu0
        %v2869 = vadd.f32 0.0, %v2868
        %v2870 = vpop.f32.mrb[0].mxu0
        %v2871 = vpop.f32.mrb[0].mxu0
        %v2872 = vadd.f32 0.0, %v2871
        %v2873 = vpop.f32.mrb[0].mxu0
        %2874 = vdwg.mxu0
        %v2875 = vadd.f32 %v2570, %v2749
        %v2876 = vadd.f32 %v2571, %v2752
        %v2877 = vadd.f32 %v2572, %v2757
        %v2878 = vadd.f32 %v2573, %v2760
        %v2879 = vadd.f32 %v2574, %v2765
        %v2880 = vadd.f32 %v2575, %v2768
        %v2881 = vadd.f32 %v2576, %v2773
        %v2882 = vadd.f32 %v2577, %v2776
        %v2883 = vadd.f32 %v2578, %v2781
        %v2884 = vadd.f32 %v2579, %v2784
        %v2885 = vadd.f32 %v2580, %v2789
        %v2886 = vadd.f32 %v2581, %v2792
        %v2887 = vadd.f32 %v2582, %v2797
        %v2888 = vadd.f32 %v2583, %v2800
        %v2889 = vadd.f32 %v2584, %v2805
        %v2890 = vadd.f32 %v2585, %v2808
        %v2891 = vadd.f32 %v2586, %v2813
        %v2892 = vadd.f32 %v2587, %v2816
        %v2893 = vadd.f32 %v2588, %v2821
        %v2894 = vadd.f32 %v2589, %v2824
        %v2895 = vadd.f32 %v2590, %v2829
        %v2896 = vadd.f32 %v2591, %v2832
        %v2897 = vadd.f32 %v2592, %v2837
        %v2898 = vadd.f32 %v2593, %v2840
        %v2899 = vadd.f32 %v2594, %v2845
        %v2900 = vadd.f32 %v2595, %v2848
        %v2901 = vadd.f32 %v2596, %v2853
        %v2902 = vadd.f32 %v2597, %v2856
        %v2903 = vadd.f32 %v2598, %v2861
        %v2904 = vadd.f32 %v2599, %v2864
        %v2905 = vadd.f32 %v2600, %v2869
        %v2906 = vadd.f32 %v2601, %v2872
        %v2907 = vld [vmem:[%s2] sm:$0x1]
        %v2909 = vlaneseq
        %v2910 = vshrl.u32 %v2909, 7
        %v2911 = vsub.s32 0, %v2910
        %v2912 = vrot.slane %v2907, %v2911
        %v2914 = vadd.f32 %v2875, %v2912
        %v2915 = vadd.f32 %v2876, %v2912
        %v2916 = vadd.f32 %v2877, %v2912
        %v2917 = vadd.f32 %v2878, %v2912
        %v2918 = vadd.f32 %v2879, %v2912
        %v2919 = vadd.f32 %v2880, %v2912
        %v2920 = vadd.f32 %v2881, %v2912
        %v2921 = vadd.f32 %v2882, %v2912
        %v2922 = vadd.f32 %v2883, %v2912
        %v2923 = vadd.f32 %v2884, %v2912
        %v2924 = vadd.f32 %v2885, %v2912
        %v2925 = vadd.f32 %v2886, %v2912
        %v2926 = vadd.f32 %v2887, %v2912
        %v2927 = vadd.f32 %v2888, %v2912
        %v2928 = vadd.f32 %v2889, %v2912
        %v2929 = vadd.f32 %v2890, %v2912
        %v2930 = vadd.f32 %v2891, %v2912
        %v2931 = vadd.f32 %v2892, %v2912
        %v2932 = vadd.f32 %v2893, %v2912
        %v2933 = vadd.f32 %v2894, %v2912
        %v2934 = vadd.f32 %v2895, %v2912
        %v2935 = vadd.f32 %v2896, %v2912
        %v2936 = vadd.f32 %v2897, %v2912
        %v2937 = vadd.f32 %v2898, %v2912
        %v2938 = vadd.f32 %v2899, %v2912
        %v2939 = vadd.f32 %v2900, %v2912
        %v2940 = vadd.f32 %v2901, %v2912
        %v2941 = vadd.f32 %v2902, %v2912
        %v2942 = vadd.f32 %v2903, %v2912
        %v2943 = vadd.f32 %v2904, %v2912
        %v2944 = vadd.f32 %v2905, %v2912
        %v2945 = vadd.f32 %v2906, %v2912
        %v2946 = vmax.f32 %v2914, 0.0
        %v2947 = vmax.f32 %v2915, 0.0
        %v2948 = vmax.f32 %v2916, 0.0
        %v2949 = vmax.f32 %v2917, 0.0
        %v2950 = vmax.f32 %v2918, 0.0
        %v2951 = vmax.f32 %v2919, 0.0
        %v2952 = vmax.f32 %v2920, 0.0
        %v2953 = vmax.f32 %v2921, 0.0
        %v2954 = vmax.f32 %v2922, 0.0
        %v2955 = vmax.f32 %v2923, 0.0
        %v2956 = vmax.f32 %v2924, 0.0
        %v2957 = vmax.f32 %v2925, 0.0
        %v2958 = vmax.f32 %v2926, 0.0
        %v2959 = vmax.f32 %v2927, 0.0
        %v2960 = vmax.f32 %v2928, 0.0
        %v2961 = vmax.f32 %v2929, 0.0
        %v2962 = vmax.f32 %v2930, 0.0
        %v2963 = vmax.f32 %v2931, 0.0
        %v2964 = vmax.f32 %v2932, 0.0
        %v2965 = vmax.f32 %v2933, 0.0
        %v2966 = vmax.f32 %v2934, 0.0
        %v2967 = vmax.f32 %v2935, 0.0
        %v2968 = vmax.f32 %v2936, 0.0
        %v2969 = vmax.f32 %v2937, 0.0
        %v2970 = vmax.f32 %v2938, 0.0
        %v2971 = vmax.f32 %v2939, 0.0
        %v2972 = vmax.f32 %v2940, 0.0
        %v2973 = vmax.f32 %v2941, 0.0
        %v2974 = vmax.f32 %v2942, 0.0
        %v2975 = vmax.f32 %v2943, 0.0
        %v2976 = vmax.f32 %v2944, 0.0
        %v2977 = vmax.f32 %v2945, 0.0
        %2978 = vst [vmem:[#allocation2] sm:$0xff] 0.0
        %2979 = vst [vmem:[#allocation2 + $0x8] sm:$0xff] 0.0
        %2980 = vst [vmem:[#allocation2 + $0x10] sm:$0x3] 0.0
        %2981 = vst [vmem:[#allocation2 + $0x18] sm:$0xff] 0.0
        %2982 = vst [vmem:[#allocation2 + $0x20] sm:$0xff] 0.0
        %2983 = vst [vmem:[#allocation2 + $0x28] sm:$0x3] 0.0
        %2984 = vst [vmem:[#allocation2 + $0x30] sm:$0xff] 0.0
        %2985 = vst [vmem:[#allocation2 + $0x38] sm:$0xff] 0.0
        %2986 = vst [vmem:[#allocation2 + $0x40] sm:$0x3] 0.0
        %2987 = vst [vmem:[#allocation2 + $0x48] sm:$0xff] 0.0
        %2988 = vst [vmem:[#allocation2 + $0x50] sm:$0xff] 0.0
        %2989 = vst [vmem:[#allocation2 + $0x58] sm:$0x3] 0.0
        %2990 = vst [vmem:[#allocation2 + $0x60] sm:$0xff] 0.0
        %2991 = vst [vmem:[#allocation2 + $0x68] sm:$0xff] 0.0
        %2992 = vst [vmem:[#allocation2 + $0x70] sm:$0x3] 0.0
        %2993 = vst [vmem:[#allocation2 + $0x78] sm:$0xff] 0.0
        %2994 = vst [vmem:[#allocation2 + $0x80] sm:$0xff] 0.0
        %2995 = vst [vmem:[#allocation2 + $0x88] sm:$0x3] 0.0
        %2996 = vst [vmem:[#allocation2 + $0x90] sm:$0xff] 0.0
        %2997 = vst [vmem:[#allocation2 + $0x98] sm:$0xff] 0.0
        %2998 = vst [vmem:[#allocation2 + $0xa0] sm:$0x3] 0.0
        %2999 = vst [vmem:[#allocation2 + $0xa8] sm:$0xff] 0.0
        %3000 = vst [vmem:[#allocation2 + $0xb0] sm:$0xff] 0.0
        %3001 = vst [vmem:[#allocation2 + $0xb8] sm:$0x3] 0.0
        %3002 = vst [vmem:[#allocation2 + $0xc0] sm:$0xff] 0.0
        %3003 = vst [vmem:[#allocation2 + $0xc8] sm:$0xff] 0.0
        %3004 = vst [vmem:[#allocation2 + $0xd0] sm:$0x3] 0.0
        %3005 = vst [vmem:[#allocation2 + $0xd8] sm:$0xff] 0.0
        %3006 = vst [vmem:[#allocation2 + $0xe0] sm:$0xff] 0.0
        %3007 = vst [vmem:[#allocation2 + $0xe8] sm:$0x3] 0.0
        %3008 = vst [vmem:[#allocation2 + $0xf0] sm:$0xff] 0.0
        %3009 = vst [vmem:[#allocation2 + $0xf8] sm:$0xff] 0.0
        %3010 = vst [vmem:[#allocation2 + $0x100] sm:$0x3] 0.0
        %3011 = vst [vmem:[#allocation2 + $0x108] sm:$0xff] 0.0
        %3012 = vst [vmem:[#allocation2 + $0x110] sm:$0xff] 0.0
        %3013 = vst [vmem:[#allocation2 + $0x118] sm:$0x3] 0.0
        %3014 = vst [vmem:[#allocation2 + $0x120] sm:$0xff] 0.0
        %3015 = vst [vmem:[#allocation2 + $0x128] sm:$0xff] 0.0
        %3016 = vst [vmem:[#allocation2 + $0x130] sm:$0x3] 0.0
        %3017 = vst [vmem:[#allocation2 + $0x138] sm:$0xff] 0.0
        %3018 = vst [vmem:[#allocation2 + $0x140] sm:$0xff] 0.0
        %3019 = vst [vmem:[#allocation2 + $0x148] sm:$0x3] 0.0
        %3020 = vst [vmem:[#allocation2 + $0x150] sm:$0xff] 0.0
        %3021 = vst [vmem:[#allocation2 + $0x158] sm:$0xff] 0.0
        %3022 = vst [vmem:[#allocation2 + $0x160] sm:$0x3] 0.0
        %3023 = vst [vmem:[#allocation2 + $0x168] sm:$0xff] 0.0
        %3024 = vst [vmem:[#allocation2 + $0x170] sm:$0xff] 0.0
        %3025 = vst [vmem:[#allocation2 + $0x178] sm:$0x3] 0.0
        %3026 = vst [vmem:[#allocation2 + $0x180] sm:$0xff] 0.0
        %3027 = vst [vmem:[#allocation2 + $0x188] sm:$0xff] 0.0
        %3028 = vst [vmem:[#allocation2 + $0x190] sm:$0x3] 0.0
        %3029 = vst [vmem:[#allocation2 + $0x198] sm:$0xff] 0.0
        %3030 = vst [vmem:[#allocation2 + $0x1a0] sm:$0xff] 0.0
        %3031 = vst [vmem:[#allocation2 + $0x1a8] sm:$0x3] 0.0
        %s3032 = scalar_lea.vmem [#allocation2], 24
        %3033 = vst [vmem:[%s3032 + $0x1] sm:$0xff] %v2946
        %3034 = vst [vmem:[%s3032 + $0x9] sm:$0xff] %v2947
        %3035 = vst [vmem:[%s3032 + $0x19] sm:$0xff] %v2948
        %3036 = vst [vmem:[%s3032 + $0x21] sm:$0xff] %v2949
        %3037 = vst [vmem:[%s3032 + $0x31] sm:$0xff] %v2950
        %3038 = vst [vmem:[%s3032 + $0x39] sm:$0xff] %v2951
        %3039 = vst [vmem:[%s3032 + $0x49] sm:$0xff] %v2952
        %3040 = vst [vmem:[%s3032 + $0x51] sm:$0xff] %v2953
        %3041 = vst [vmem:[%s3032 + $0x61] sm:$0xff] %v2954
        %3042 = vst [vmem:[%s3032 + $0x69] sm:$0xff] %v2955
        %3043 = vst [vmem:[%s3032 + $0x79] sm:$0xff] %v2956
        %3044 = vst [vmem:[%s3032 + $0x81] sm:$0xff] %v2957
        %3045 = vst [vmem:[%s3032 + $0x91] sm:$0xff] %v2958
        %3046 = vst [vmem:[%s3032 + $0x99] sm:$0xff] %v2959
        %3047 = vst [vmem:[%s3032 + $0xa9] sm:$0xff] %v2960
        %3048 = vst [vmem:[%s3032 + $0xb1] sm:$0xff] %v2961
        %3049 = vst [vmem:[%s3032 + $0xc1] sm:$0xff] %v2962
        %3050 = vst [vmem:[%s3032 + $0xc9] sm:$0xff] %v2963
        %3051 = vst [vmem:[%s3032 + $0xd9] sm:$0xff] %v2964
        %3052 = vst [vmem:[%s3032 + $0xe1] sm:$0xff] %v2965
        %3053 = vst [vmem:[%s3032 + $0xf1] sm:$0xff] %v2966
        %3054 = vst [vmem:[%s3032 + $0xf9] sm:$0xff] %v2967
        %3055 = vst [vmem:[%s3032 + $0x109] sm:$0xff] %v2968
        %3056 = vst [vmem:[%s3032 + $0x111] sm:$0xff] %v2969
        %3057 = vst [vmem:[%s3032 + $0x121] sm:$0xff] %v2970
        %3058 = vst [vmem:[%s3032 + $0x129] sm:$0xff] %v2971
        %3059 = vst [vmem:[%s3032 + $0x139] sm:$0xff] %v2972
        %3060 = vst [vmem:[%s3032 + $0x141] sm:$0xff] %v2973
        %3061 = vst [vmem:[%s3032 + $0x151] sm:$0xff] %v2974
        %3062 = vst [vmem:[%s3032 + $0x159] sm:$0xff] %v2975
        %3063 = vst [vmem:[%s3032 + $0x169] sm:$0xff] %v2976
        %3064 = vst [vmem:[%s3032 + $0x171] sm:$0xff] %v2977
        %v3065 = vld [vmem:[%s1075 + $0x1] sm:$0xff]
        %v3066 = vld [vmem:[%s1075 + $0x9] sm:$0xff]
        %v3067 = vld [vmem:[%s1075 + $0x19] sm:$0xff]
        %v3068 = vld [vmem:[%s1075 + $0x21] sm:$0xff]
        %v3069 = vld [vmem:[%s1075 + $0x31] sm:$0xff]
        %v3070 = vld [vmem:[%s1075 + $0x39] sm:$0xff]
        %v3071 = vld [vmem:[%s1075 + $0x49] sm:$0xff]
        %v3072 = vld [vmem:[%s1075 + $0x51] sm:$0xff]
        %v3073 = vld [vmem:[%s1075 + $0x61] sm:$0xff]
        %v3074 = vld [vmem:[%s1075 + $0x69] sm:$0xff]
        %v3075 = vld [vmem:[%s1075 + $0x79] sm:$0xff]
        %v3076 = vld [vmem:[%s1075 + $0x81] sm:$0xff]
        %v3077 = vld [vmem:[%s1075 + $0x91] sm:$0xff]
        %v3078 = vld [vmem:[%s1075 + $0x99] sm:$0xff]
        %v3079 = vld [vmem:[%s1075 + $0xa9] sm:$0xff]
        %v3080 = vld [vmem:[%s1075 + $0xb1] sm:$0xff]
        %v3081 = vld [vmem:[%s1075 + $0xc1] sm:$0xff]
        %v3082 = vld [vmem:[%s1075 + $0xc9] sm:$0xff]
        %v3083 = vld [vmem:[%s1075 + $0xd9] sm:$0xff]
        %v3084 = vld [vmem:[%s1075 + $0xe1] sm:$0xff]
        %v3085 = vld [vmem:[%s1075 + $0xf1] sm:$0xff]
        %v3086 = vld [vmem:[%s1075 + $0xf9] sm:$0xff]
        %v3087 = vld [vmem:[%s1075 + $0x109] sm:$0xff]
        %v3088 = vld [vmem:[%s1075 + $0x111] sm:$0xff]
        %v3089 = vld [vmem:[%s1075 + $0x121] sm:$0xff]
        %v3090 = vld [vmem:[%s1075 + $0x129] sm:$0xff]
        %v3091 = vld [vmem:[%s1075 + $0x139] sm:$0xff]
        %v3092 = vld [vmem:[%s1075 + $0x141] sm:$0xff]
        %v3093 = vld [vmem:[%s1075 + $0x151] sm:$0xff]
        %v3094 = vld [vmem:[%s1075 + $0x159] sm:$0xff]
        %v3095 = vld [vmem:[%s1075 + $0x169] sm:$0xff]
        %v3096 = vld [vmem:[%s1075 + $0x171] sm:$0xff]
        %v3097 = vld [vmem:[#allocation2] sm:$0xff]
        %v3098 = vld [vmem:[#allocation2 + $0x8] sm:$0xff]
        %v3099 = vld [vmem:[#allocation2 + $0x18] sm:$0xff]
        %v3100 = vld [vmem:[#allocation2 + $0x20] sm:$0xff]
        %v3101 = vld [vmem:[#allocation2 + $0x30] sm:$0xff]
        %v3102 = vld [vmem:[#allocation2 + $0x38] sm:$0xff]
        %v3103 = vld [vmem:[#allocation2 + $0x48] sm:$0xff]
        %v3104 = vld [vmem:[#allocation2 + $0x50] sm:$0xff]
        %v3105 = vld [vmem:[#allocation2 + $0x60] sm:$0xff]
        %v3106 = vld [vmem:[#allocation2 + $0x68] sm:$0xff]
        %v3107 = vld [vmem:[#allocation2 + $0x78] sm:$0xff]
        %v3108 = vld [vmem:[#allocation2 + $0x80] sm:$0xff]
        %v3109 = vld [vmem:[#allocation2 + $0x90] sm:$0xff]
        %v3110 = vld [vmem:[#allocation2 + $0x98] sm:$0xff]
        %v3111 = vld [vmem:[#allocation2 + $0xa8] sm:$0xff]
        %v3112 = vld [vmem:[#allocation2 + $0xb0] sm:$0xff]
        %v3113 = vld [vmem:[#allocation2 + $0xc0] sm:$0xff]
        %v3114 = vld [vmem:[#allocation2 + $0xc8] sm:$0xff]
        %v3115 = vld [vmem:[#allocation2 + $0xd8] sm:$0xff]
        %v3116 = vld [vmem:[#allocation2 + $0xe0] sm:$0xff]
        %v3117 = vld [vmem:[#allocation2 + $0xf0] sm:$0xff]
        %v3118 = vld [vmem:[#allocation2 + $0xf8] sm:$0xff]
        %v3119 = vld [vmem:[#allocation2 + $0x108] sm:$0xff]
        %v3120 = vld [vmem:[#allocation2 + $0x110] sm:$0xff]
        %v3121 = vld [vmem:[#allocation2 + $0x120] sm:$0xff]
        %v3122 = vld [vmem:[#allocation2 + $0x128] sm:$0xff]
        %v3123 = vld [vmem:[#allocation2 + $0x138] sm:$0xff]
        %v3124 = vld [vmem:[#allocation2 + $0x140] sm:$0xff]
        %v3125 = vld [vmem:[#allocation2 + $0x150] sm:$0xff]
        %v3126 = vld [vmem:[#allocation2 + $0x158] sm:$0xff]
        %v3127 = vld [vmem:[#allocation2 + $0x168] sm:$0xff]
        %v3128 = vld [vmem:[#allocation2 + $0x170] sm:$0xff]
        %v3129 = vpack.c.bf16 %v3098, %v3097
        %v3130 = vpack.c.bf16 %v3100, %v3099
        %v3131 = vpack.c.bf16 %v3102, %v3101
        %v3132 = vpack.c.bf16 %v3104, %v3103
        %v3133 = vpack.c.bf16 %v3106, %v3105
        %v3134 = vpack.c.bf16 %v3108, %v3107
        %v3135 = vpack.c.bf16 %v3110, %v3109
        %v3136 = vpack.c.bf16 %v3112, %v3111
        %v3137 = vpack.c.bf16 %v3114, %v3113
        %v3138 = vpack.c.bf16 %v3116, %v3115
        %v3139 = vpack.c.bf16 %v3118, %v3117
        %v3140 = vpack.c.bf16 %v3120, %v3119
        %v3141 = vpack.c.bf16 %v3122, %v3121
        %v3142 = vpack.c.bf16 %v3124, %v3123
        %v3143 = vpack.c.bf16 %v3126, %v3125
        %v3144 = vpack.c.bf16 %v3128, %v3127
        %v3145 = vld [vmem:[%s3] sm:$0xf]
        %v3146 = vld [vmem:[%s3 + $0x4] sm:$0xf]
        %v3147 = vld [vmem:[%s3 + $0x8] sm:$0xf]
        %v3148 = vld [vmem:[%s3 + $0xc] sm:$0xf]
        %v3149 = vld [vmem:[%s3 + $0x10] sm:$0xf]
        %v3150 = vld [vmem:[%s3 + $0x14] sm:$0xf]
        %v3151 = vld [vmem:[%s3 + $0x18] sm:$0xf]
        %v3152 = vld [vmem:[%s3 + $0x1c] sm:$0xf]
        %v3153 = vld [vmem:[%s3 + $0x20] sm:$0xf]
        %v3154 = vld [vmem:[%s3 + $0x24] sm:$0xf]
        %v3155 = vld [vmem:[%s3 + $0x28] sm:$0xf]
        %v3156 = vld [vmem:[%s3 + $0x2c] sm:$0xf]
        %v3157 = vld [vmem:[%s3 + $0x30] sm:$0xf]
        %v3158 = vld [vmem:[%s3 + $0x34] sm:$0xf]
        %v3159 = vld [vmem:[%s3 + $0x38] sm:$0xf]
        %v3160 = vld [vmem:[%s3 + $0x3c] sm:$0xf]
        %v3161 = vld [vmem:[#allocation2 + $0x1] sm:$0xff]
        %v3162 = vld [vmem:[#allocation2 + $0x9] sm:$0xff]
        %v3163 = vld [vmem:[#allocation2 + $0x19] sm:$0xff]
        %v3164 = vld [vmem:[#allocation2 + $0x21] sm:$0xff]
        %v3165 = vld [vmem:[#allocation2 + $0x31] sm:$0xff]
        %v3166 = vld [vmem:[#allocation2 + $0x39] sm:$0xff]
        %v3167 = vld [vmem:[#allocation2 + $0x49] sm:$0xff]
        %v3168 = vld [vmem:[#allocation2 + $0x51] sm:$0xff]
        %v3169 = vld [vmem:[#allocation2 + $0x61] sm:$0xff]
        %v3170 = vld [vmem:[#allocation2 + $0x69] sm:$0xff]
        %v3171 = vld [vmem:[#allocation2 + $0x79] sm:$0xff]
        %v3172 = vld [vmem:[#allocation2 + $0x81] sm:$0xff]
        %v3173 = vld [vmem:[#allocation2 + $0x91] sm:$0xff]
        %v3174 = vld [vmem:[#allocation2 + $0x99] sm:$0xff]
        %v3175 = vld [vmem:[#allocation2 + $0xa9] sm:$0xff]
        %v3176 = vld [vmem:[#allocation2 + $0xb1] sm:$0xff]
        %v3177 = vld [vmem:[#allocation2 + $0xc1] sm:$0xff]
        %v3178 = vld [vmem:[#allocation2 + $0xc9] sm:$0xff]
        %v3179 = vld [vmem:[#allocation2 + $0xd9] sm:$0xff]
        %v3180 = vld [vmem:[#allocation2 + $0xe1] sm:$0xff]
        %v3181 = vld [vmem:[#allocation2 + $0xf1] sm:$0xff]
        %v3182 = vld [vmem:[#allocation2 + $0xf9] sm:$0xff]
        %v3183 = vld [vmem:[#allocation2 + $0x109] sm:$0xff]
        %v3184 = vld [vmem:[#allocation2 + $0x111] sm:$0xff]
        %v3185 = vld [vmem:[#allocation2 + $0x121] sm:$0xff]
        %v3186 = vld [vmem:[#allocation2 + $0x129] sm:$0xff]
        %v3187 = vld [vmem:[#allocation2 + $0x139] sm:$0xff]
        %v3188 = vld [vmem:[#allocation2 + $0x141] sm:$0xff]
        %v3189 = vld [vmem:[#allocation2 + $0x151] sm:$0xff]
        %v3190 = vld [vmem:[#allocation2 + $0x159] sm:$0xff]
        %v3191 = vld [vmem:[#allocation2 + $0x169] sm:$0xff]
        %v3192 = vld [vmem:[#allocation2 + $0x171] sm:$0xff]
        %v3193 = vpack.c.bf16 %v3162, %v3161
        %v3194 = vpack.c.bf16 %v3164, %v3163
        %v3195 = vpack.c.bf16 %v3166, %v3165
        %v3196 = vpack.c.bf16 %v3168, %v3167
        %v3197 = vpack.c.bf16 %v3170, %v3169
        %v3198 = vpack.c.bf16 %v3172, %v3171
        %v3199 = vpack.c.bf16 %v3174, %v3173
        %v3200 = vpack.c.bf16 %v3176, %v3175
        %v3201 = vpack.c.bf16 %v3178, %v3177
        %v3202 = vpack.c.bf16 %v3180, %v3179
        %v3203 = vpack.c.bf16 %v3182, %v3181
        %v3204 = vpack.c.bf16 %v3184, %v3183
        %v3205 = vpack.c.bf16 %v3186, %v3185
        %v3206 = vpack.c.bf16 %v3188, %v3187
        %v3207 = vpack.c.bf16 %v3190, %v3189
        %v3208 = vpack.c.bf16 %v3192, %v3191
        %v3209 = vld [vmem:[%s3 + $0x40] sm:$0xf]
        %v3210 = vld [vmem:[%s3 + $0x44] sm:$0xf]
        %v3211 = vld [vmem:[%s3 + $0x48] sm:$0xf]
        %v3212 = vld [vmem:[%s3 + $0x4c] sm:$0xf]
        %v3213 = vld [vmem:[%s3 + $0x50] sm:$0xf]
        %v3214 = vld [vmem:[%s3 + $0x54] sm:$0xf]
        %v3215 = vld [vmem:[%s3 + $0x58] sm:$0xf]
        %v3216 = vld [vmem:[%s3 + $0x5c] sm:$0xf]
        %v3217 = vld [vmem:[%s3 + $0x60] sm:$0xf]
        %v3218 = vld [vmem:[%s3 + $0x64] sm:$0xf]
        %v3219 = vld [vmem:[%s3 + $0x68] sm:$0xf]
        %v3220 = vld [vmem:[%s3 + $0x6c] sm:$0xf]
        %v3221 = vld [vmem:[%s3 + $0x70] sm:$0xf]
        %v3222 = vld [vmem:[%s3 + $0x74] sm:$0xf]
        %v3223 = vld [vmem:[%s3 + $0x78] sm:$0xf]
        %v3224 = vld [vmem:[%s3 + $0x7c] sm:$0xf]
        %v3241 = vunpack.c.l.b16 %v3209
        %v3242 = vunpack.c.l.b16 %v3210
        %v3243 = vunpack.c.l.b16 %v3211
        %v3244 = vunpack.c.l.b16 %v3212
        %v3245 = vunpack.c.l.b16 %v3213
        %v3246 = vunpack.c.l.b16 %v3214
        %v3247 = vunpack.c.l.b16 %v3215
        %v3248 = vunpack.c.l.b16 %v3216
        %v3249 = vunpack.c.l.b16 %v3217
        %v3250 = vunpack.c.l.b16 %v3218
        %v3251 = vunpack.c.l.b16 %v3219
        %v3252 = vunpack.c.l.b16 %v3220
        %v3253 = vunpack.c.l.b16 %v3221
        %v3254 = vunpack.c.l.b16 %v3222
        %v3255 = vunpack.c.l.b16 %v3223
        %v3256 = vunpack.c.l.b16 %v3224
        %v3257 = vpack.c.b16 %v3242, %v3241
        %v3258 = vpack.c.b16 %v3244, %v3243
        %v3259 = vpack.c.b16 %v3246, %v3245
        %v3260 = vpack.c.b16 %v3248, %v3247
        %v3261 = vpack.c.b16 %v3250, %v3249
        %v3262 = vpack.c.b16 %v3252, %v3251
        %v3263 = vpack.c.b16 %v3254, %v3253
        %v3264 = vpack.c.b16 %v3256, %v3255
        %3273 = vmatprep.subr.bf16.mxu0 0
        %3274 = vmatpush1.bf16.msra.mxu0 %v3257
        %3275 = vmatprep.subr.bf16.mxu0 0
        %3276 = vmatpush1.bf16.msra.mxu0 %v3258
        %3277 = vmatprep.subr.bf16.mxu0 0
        %3278 = vmatpush1.bf16.msra.mxu0 %v3259
        %3279 = vmatprep.subr.bf16.mxu0 0
        %3280 = vmatpush1.bf16.msra.mxu0 %v3260
        %3281 = vmatprep.subr.bf16.mxu0 0
        %3282 = vmatpush1.bf16.msra.mxu0 %v3261
        %3283 = vmatprep.subr.bf16.mxu0 0
        %3284 = vmatpush1.bf16.msra.mxu0 %v3262
        %3285 = vmatprep.subr.bf16.mxu0 0
        %3286 = vmatpush1.bf16.msra.mxu0 %v3263
        %3287 = vmatprep.subr.bf16.mxu0 0
        %3288 = vmatpush1.bf16.msra.mxu0 %v3264
        %3289 = vmatprep.subr.bf16.mxu0 0
        %3290 = vmatpush1.bf16.msra.mxu0 0
        %3291 = vmatprep.subr.bf16.mxu0 0
        %3292 = vmatpush1.bf16.msra.mxu0 0
        %3293 = vmatprep.subr.bf16.mxu0 0
        %3294 = vmatpush1.bf16.msra.mxu0 0
        %3295 = vmatprep.subr.bf16.mxu0 0
        %3296 = vmatpush1.bf16.msra.mxu0 0
        %3297 = vmatprep.subr.bf16.mxu0 0
        %3298 = vmatpush1.bf16.msra.mxu0 0
        %3299 = vmatprep.subr.bf16.mxu0 0
        %3300 = vmatpush1.bf16.msra.mxu0 0
        %3301 = vmatprep.subr.bf16.mxu0 0
        %3302 = vmatpush1.bf16.msra.mxu0 0
        %3303 = vmatprep.subr.bf16.mxu0 0
        %3304 = vmatpush1.bf16.msra.mxu0 0
        %3305 = vmatprep.mubr.bf16.mxu0 0
        %3306 = vmatmul.mubr.bf16.gmra.mrb[0].mxu0 %v3193
        %v3307 = vpop.f32.mrb[0].mxu0
        %v3308 = vadd.f32 0.0, %v3307
        %v3309 = vpop.f32.mrb[0].mxu0
        %v3310 = vpop.f32.mrb[0].mxu0
        %v3311 = vadd.f32 0.0, %v3310
        %v3312 = vpop.f32.mrb[0].mxu0
        %3313 = vmatprep.mubr.bf16.mxu0 0
        %3314 = vmatmul.mubr.bf16.gmra.mrb[0].mxu0 %v3194
        %v3315 = vpop.f32.mrb[0].mxu0
        %v3316 = vadd.f32 0.0, %v3315
        %v3317 = vpop.f32.mrb[0].mxu0
        %v3318 = vpop.f32.mrb[0].mxu0
        %v3319 = vadd.f32 0.0, %v3318
        %v3320 = vpop.f32.mrb[0].mxu0
        %3321 = vmatprep.mubr.bf16.mxu0 0
        %3322 = vmatmul.mubr.bf16.gmra.mrb[0].mxu0 %v3195
        %v3323 = vpop.f32.mrb[0].mxu0
        %v3324 = vadd.f32 0.0, %v3323
        %v3325 = vpop.f32.mrb[0].mxu0
        %v3326 = vpop.f32.mrb[0].mxu0
        %v3327 = vadd.f32 0.0, %v3326
        %v3328 = vpop.f32.mrb[0].mxu0
        %3329 = vmatprep.mubr.bf16.mxu0 0
        %3330 = vmatmul.mubr.bf16.gmra.mrb[0].mxu0 %v3196
        %v3331 = vpop.f32.mrb[0].mxu0
        %v3332 = vadd.f32 0.0, %v3331
        %v3333 = vpop.f32.mrb[0].mxu0
        %v3334 = vpop.f32.mrb[0].mxu0
        %v3335 = vadd.f32 0.0, %v3334
        %v3336 = vpop.f32.mrb[0].mxu0
        %3337 = vmatprep.mubr.bf16.mxu0 0
        %3338 = vmatmul.mubr.bf16.gmra.mrb[0].mxu0 %v3197
        %v3339 = vpop.f32.mrb[0].mxu0
        %v3340 = vadd.f32 0.0, %v3339
        %v3341 = vpop.f32.mrb[0].mxu0
        %v3342 = vpop.f32.mrb[0].mxu0
        %v3343 = vadd.f32 0.0, %v3342
        %v3344 = vpop.f32.mrb[0].mxu0
        %3345 = vmatprep.mubr.bf16.mxu0 0
        %3346 = vmatmul.mubr.bf16.gmra.mrb[0].mxu0 %v3198
        %v3347 = vpop.f32.mrb[0].mxu0
        %v3348 = vadd.f32 0.0, %v3347
        %v3349 = vpop.f32.mrb[0].mxu0
        %v3350 = vpop.f32.mrb[0].mxu0
        %v3351 = vadd.f32 0.0, %v3350
        %v3352 = vpop.f32.mrb[0].mxu0
        %3353 = vmatprep.mubr.bf16.mxu0 0
        %3354 = vmatmul.mubr.bf16.gmra.mrb[0].mxu0 %v3199
        %v3355 = vpop.f32.mrb[0].mxu0
        %v3356 = vadd.f32 0.0, %v3355
        %v3357 = vpop.f32.mrb[0].mxu0
        %v3358 = vpop.f32.mrb[0].mxu0
        %v3359 = vadd.f32 0.0, %v3358
        %v3360 = vpop.f32.mrb[0].mxu0
        %3361 = vmatprep.mubr.bf16.mxu0 0
        %3362 = vmatmul.mubr.bf16.gmra.mrb[0].mxu0 %v3200
        %v3363 = vpop.f32.mrb[0].mxu0
        %v3364 = vadd.f32 0.0, %v3363
        %v3365 = vpop.f32.mrb[0].mxu0
        %v3366 = vpop.f32.mrb[0].mxu0
        %v3367 = vadd.f32 0.0, %v3366
        %v3368 = vpop.f32.mrb[0].mxu0
        %3369 = vmatprep.mubr.bf16.mxu0 0
        %3370 = vmatmul.mubr.bf16.gmra.mrb[0].mxu0 %v3201
        %v3371 = vpop.f32.mrb[0].mxu0
        %v3372 = vadd.f32 0.0, %v3371
        %v3373 = vpop.f32.mrb[0].mxu0
        %v3374 = vpop.f32.mrb[0].mxu0
        %v3375 = vadd.f32 0.0, %v3374
        %v3376 = vpop.f32.mrb[0].mxu0
        %3377 = vmatprep.mubr.bf16.mxu0 0
        %3378 = vmatmul.mubr.bf16.gmra.mrb[0].mxu0 %v3202
        %v3379 = vpop.f32.mrb[0].mxu0
        %v3380 = vadd.f32 0.0, %v3379
        %v3381 = vpop.f32.mrb[0].mxu0
        %v3382 = vpop.f32.mrb[0].mxu0
        %v3383 = vadd.f32 0.0, %v3382
        %v3384 = vpop.f32.mrb[0].mxu0
        %3385 = vmatprep.mubr.bf16.mxu0 0
        %3386 = vmatmul.mubr.bf16.gmra.mrb[0].mxu0 %v3203
        %v3387 = vpop.f32.mrb[0].mxu0
        %v3388 = vadd.f32 0.0, %v3387
        %v3389 = vpop.f32.mrb[0].mxu0
        %v3390 = vpop.f32.mrb[0].mxu0
        %v3391 = vadd.f32 0.0, %v3390
        %v3392 = vpop.f32.mrb[0].mxu0
        %3393 = vmatprep.mubr.bf16.mxu0 0
        %3394 = vmatmul.mubr.bf16.gmra.mrb[0].mxu0 %v3204
        %v3395 = vpop.f32.mrb[0].mxu0
        %v3396 = vadd.f32 0.0, %v3395
        %v3397 = vpop.f32.mrb[0].mxu0
        %v3398 = vpop.f32.mrb[0].mxu0
        %v3399 = vadd.f32 0.0, %v3398
        %v3400 = vpop.f32.mrb[0].mxu0
        %3401 = vmatprep.mubr.bf16.mxu0 0
        %3402 = vmatmul.mubr.bf16.gmra.mrb[0].mxu0 %v3205
        %v3403 = vpop.f32.mrb[0].mxu0
        %v3404 = vadd.f32 0.0, %v3403
        %v3405 = vpop.f32.mrb[0].mxu0
        %v3406 = vpop.f32.mrb[0].mxu0
        %v3407 = vadd.f32 0.0, %v3406
        %v3408 = vpop.f32.mrb[0].mxu0
        %3409 = vmatprep.mubr.bf16.mxu0 0
        %3410 = vmatmul.mubr.bf16.gmra.mrb[0].mxu0 %v3206
        %v3411 = vpop.f32.mrb[0].mxu0
        %v3412 = vadd.f32 0.0, %v3411
        %v3413 = vpop.f32.mrb[0].mxu0
        %v3414 = vpop.f32.mrb[0].mxu0
        %v3415 = vadd.f32 0.0, %v3414
        %v3416 = vpop.f32.mrb[0].mxu0
        %3417 = vmatprep.mubr.bf16.mxu0 0
        %3418 = vmatmul.mubr.bf16.gmra.mrb[0].mxu0 %v3207
        %v3419 = vpop.f32.mrb[0].mxu0
        %v3420 = vadd.f32 0.0, %v3419
        %v3421 = vpop.f32.mrb[0].mxu0
        %v3422 = vpop.f32.mrb[0].mxu0
        %v3423 = vadd.f32 0.0, %v3422
        %v3424 = vpop.f32.mrb[0].mxu0
        %3425 = vmatprep.mubr.bf16.mxu0 0
        %3426 = vmatmul.mubr.bf16.gmra.mrb[0].mxu0 %v3208
        %v3427 = vpop.f32.mrb[0].mxu0
        %v3428 = vadd.f32 0.0, %v3427
        %v3429 = vpop.f32.mrb[0].mxu0
        %v3430 = vpop.f32.mrb[0].mxu0
        %v3431 = vadd.f32 0.0, %v3430
        %v3432 = vpop.f32.mrb[0].mxu0
        %3433 = vdwg.mxu0
        %v3450 = vunpack.c.l.b16 %v3145
        %v3451 = vunpack.c.l.b16 %v3146
        %v3452 = vunpack.c.l.b16 %v3147
        %v3453 = vunpack.c.l.b16 %v3148
        %v3454 = vunpack.c.l.b16 %v3149
        %v3455 = vunpack.c.l.b16 %v3150
        %v3456 = vunpack.c.l.b16 %v3151
        %v3457 = vunpack.c.l.b16 %v3152
        %v3458 = vunpack.c.l.b16 %v3153
        %v3459 = vunpack.c.l.b16 %v3154
        %v3460 = vunpack.c.l.b16 %v3155
        %v3461 = vunpack.c.l.b16 %v3156
        %v3462 = vunpack.c.l.b16 %v3157
        %v3463 = vunpack.c.l.b16 %v3158
        %v3464 = vunpack.c.l.b16 %v3159
        %v3465 = vunpack.c.l.b16 %v3160
        %v3466 = vpack.c.b16 %v3451, %v3450
        %v3467 = vpack.c.b16 %v3453, %v3452
        %v3468 = vpack.c.b16 %v3455, %v3454
        %v3469 = vpack.c.b16 %v3457, %v3456
        %v3470 = vpack.c.b16 %v3459, %v3458
        %v3471 = vpack.c.b16 %v3461, %v3460
        %v3472 = vpack.c.b16 %v3463, %v3462
        %v3473 = vpack.c.b16 %v3465, %v3464
        %3482 = vmatprep.subr.bf16.mxu0 0
        %3483 = vmatpush1.bf16.msra.mxu0 %v3466
        %3484 = vmatprep.subr.bf16.mxu0 0
        %3485 = vmatpush1.bf16.msra.mxu0 %v3467
        %3486 = vmatprep.subr.bf16.mxu0 0
        %3487 = vmatpush1.bf16.msra.mxu0 %v3468
        %3488 = vmatprep.subr.bf16.mxu0 0
        %3489 = vmatpush1.bf16.msra.mxu0 %v3469
        %3490 = vmatprep.subr.bf16.mxu0 0
        %3491 = vmatpush1.bf16.msra.mxu0 %v3470
        %3492 = vmatprep.subr.bf16.mxu0 0
        %3493 = vmatpush1.bf16.msra.mxu0 %v3471
        %3494 = vmatprep.subr.bf16.mxu0 0
        %3495 = vmatpush1.bf16.msra.mxu0 %v3472
        %3496 = vmatprep.subr.bf16.mxu0 0
        %3497 = vmatpush1.bf16.msra.mxu0 %v3473
        %3498 = vmatprep.subr.bf16.mxu0 0
        %3499 = vmatpush1.bf16.msra.mxu0 0
        %3500 = vmatprep.subr.bf16.mxu0 0
        %3501 = vmatpush1.bf16.msra.mxu0 0
        %3502 = vmatprep.subr.bf16.mxu0 0
        %3503 = vmatpush1.bf16.msra.mxu0 0
        %3504 = vmatprep.subr.bf16.mxu0 0
        %3505 = vmatpush1.bf16.msra.mxu0 0
        %3506 = vmatprep.subr.bf16.mxu0 0
        %3507 = vmatpush1.bf16.msra.mxu0 0
        %3508 = vmatprep.subr.bf16.mxu0 0
        %3509 = vmatpush1.bf16.msra.mxu0 0
        %3510 = vmatprep.subr.bf16.mxu0 0
        %3511 = vmatpush1.bf16.msra.mxu0 0
        %3512 = vmatprep.subr.bf16.mxu0 0
        %3513 = vmatpush1.bf16.msra.mxu0 0
        %3514 = vmatprep.mubr.bf16.mxu0 0
        %3515 = vmatmul.mubr.bf16.gmra.mrb[0].mxu0 %v3129
        %v3516 = vpop.f32.mrb[0].mxu0
        %v3517 = vadd.f32 %v3308, %v3516
        %v3518 = vpop.f32.mrb[0].mxu0
        %v3519 = vpop.f32.mrb[0].mxu0
        %v3520 = vadd.f32 %v3311, %v3519
        %v3521 = vpop.f32.mrb[0].mxu0
        %3522 = vmatprep.mubr.bf16.mxu0 0
        %3523 = vmatmul.mubr.bf16.gmra.mrb[0].mxu0 %v3130
        %v3524 = vpop.f32.mrb[0].mxu0
        %v3525 = vadd.f32 %v3316, %v3524
        %v3526 = vpop.f32.mrb[0].mxu0
        %v3527 = vpop.f32.mrb[0].mxu0
        %v3528 = vadd.f32 %v3319, %v3527
        %v3529 = vpop.f32.mrb[0].mxu0
        %3530 = vmatprep.mubr.bf16.mxu0 0
        %3531 = vmatmul.mubr.bf16.gmra.mrb[0].mxu0 %v3131
        %v3532 = vpop.f32.mrb[0].mxu0
        %v3533 = vadd.f32 %v3324, %v3532
        %v3534 = vpop.f32.mrb[0].mxu0
        %v3535 = vpop.f32.mrb[0].mxu0
        %v3536 = vadd.f32 %v3327, %v3535
        %v3537 = vpop.f32.mrb[0].mxu0
        %3538 = vmatprep.mubr.bf16.mxu0 0
        %3539 = vmatmul.mubr.bf16.gmra.mrb[0].mxu0 %v3132
        %v3540 = vpop.f32.mrb[0].mxu0
        %v3541 = vadd.f32 %v3332, %v3540
        %v3542 = vpop.f32.mrb[0].mxu0
        %v3543 = vpop.f32.mrb[0].mxu0
        %v3544 = vadd.f32 %v3335, %v3543
        %v3545 = vpop.f32.mrb[0].mxu0
        %3546 = vmatprep.mubr.bf16.mxu0 0
        %3547 = vmatmul.mubr.bf16.gmra.mrb[0].mxu0 %v3133
        %v3548 = vpop.f32.mrb[0].mxu0
        %v3549 = vadd.f32 %v3340, %v3548
        %v3550 = vpop.f32.mrb[0].mxu0
        %v3551 = vpop.f32.mrb[0].mxu0
        %v3552 = vadd.f32 %v3343, %v3551
        %v3553 = vpop.f32.mrb[0].mxu0
        %3554 = vmatprep.mubr.bf16.mxu0 0
        %3555 = vmatmul.mubr.bf16.gmra.mrb[0].mxu0 %v3134
        %v3556 = vpop.f32.mrb[0].mxu0
        %v3557 = vadd.f32 %v3348, %v3556
        %v3558 = vpop.f32.mrb[0].mxu0
        %v3559 = vpop.f32.mrb[0].mxu0
        %v3560 = vadd.f32 %v3351, %v3559
        %v3561 = vpop.f32.mrb[0].mxu0
        %3562 = vmatprep.mubr.bf16.mxu0 0
        %3563 = vmatmul.mubr.bf16.gmra.mrb[0].mxu0 %v3135
        %v3564 = vpop.f32.mrb[0].mxu0
        %v3565 = vadd.f32 %v3356, %v3564
        %v3566 = vpop.f32.mrb[0].mxu0
        %v3567 = vpop.f32.mrb[0].mxu0
        %v3568 = vadd.f32 %v3359, %v3567
        %v3569 = vpop.f32.mrb[0].mxu0
        %3570 = vmatprep.mubr.bf16.mxu0 0
        %3571 = vmatmul.mubr.bf16.gmra.mrb[0].mxu0 %v3136
        %v3572 = vpop.f32.mrb[0].mxu0
        %v3573 = vadd.f32 %v3364, %v3572
        %v3574 = vpop.f32.mrb[0].mxu0
        %v3575 = vpop.f32.mrb[0].mxu0
        %v3576 = vadd.f32 %v3367, %v3575
        %v3577 = vpop.f32.mrb[0].mxu0
        %3578 = vmatprep.mubr.bf16.mxu0 0
        %3579 = vmatmul.mubr.bf16.gmra.mrb[0].mxu0 %v3137
        %v3580 = vpop.f32.mrb[0].mxu0
        %v3581 = vadd.f32 %v3372, %v3580
        %v3582 = vpop.f32.mrb[0].mxu0
        %v3583 = vpop.f32.mrb[0].mxu0
        %v3584 = vadd.f32 %v3375, %v3583
        %v3585 = vpop.f32.mrb[0].mxu0
        %3586 = vmatprep.mubr.bf16.mxu0 0
        %3587 = vmatmul.mubr.bf16.gmra.mrb[0].mxu0 %v3138
        %v3588 = vpop.f32.mrb[0].mxu0
        %v3589 = vadd.f32 %v3380, %v3588
        %v3590 = vpop.f32.mrb[0].mxu0
        %v3591 = vpop.f32.mrb[0].mxu0
        %v3592 = vadd.f32 %v3383, %v3591
        %v3593 = vpop.f32.mrb[0].mxu0
        %3594 = vmatprep.mubr.bf16.mxu0 0
        %3595 = vmatmul.mubr.bf16.gmra.mrb[0].mxu0 %v3139
        %v3596 = vpop.f32.mrb[0].mxu0
        %v3597 = vadd.f32 %v3388, %v3596
        %v3598 = vpop.f32.mrb[0].mxu0
        %v3599 = vpop.f32.mrb[0].mxu0
        %v3600 = vadd.f32 %v3391, %v3599
        %v3601 = vpop.f32.mrb[0].mxu0
        %3602 = vmatprep.mubr.bf16.mxu0 0
        %3603 = vmatmul.mubr.bf16.gmra.mrb[0].mxu0 %v3140
        %v3604 = vpop.f32.mrb[0].mxu0
        %v3605 = vadd.f32 %v3396, %v3604
        %v3606 = vpop.f32.mrb[0].mxu0
        %v3607 = vpop.f32.mrb[0].mxu0
        %v3608 = vadd.f32 %v3399, %v3607
        %v3609 = vpop.f32.mrb[0].mxu0
        %3610 = vmatprep.mubr.bf16.mxu0 0
        %3611 = vmatmul.mubr.bf16.gmra.mrb[0].mxu0 %v3141
        %v3612 = vpop.f32.mrb[0].mxu0
        %v3613 = vadd.f32 %v3404, %v3612
        %v3614 = vpop.f32.mrb[0].mxu0
        %v3615 = vpop.f32.mrb[0].mxu0
        %v3616 = vadd.f32 %v3407, %v3615
        %v3617 = vpop.f32.mrb[0].mxu0
        %3618 = vmatprep.mubr.bf16.mxu0 0
        %3619 = vmatmul.mubr.bf16.gmra.mrb[0].mxu0 %v3142
        %v3620 = vpop.f32.mrb[0].mxu0
        %v3621 = vadd.f32 %v3412, %v3620
        %v3622 = vpop.f32.mrb[0].mxu0
        %v3623 = vpop.f32.mrb[0].mxu0
        %v3624 = vadd.f32 %v3415, %v3623
        %v3625 = vpop.f32.mrb[0].mxu0
        %3626 = vmatprep.mubr.bf16.mxu0 0
        %3627 = vmatmul.mubr.bf16.gmra.mrb[0].mxu0 %v3143
        %v3628 = vpop.f32.mrb[0].mxu0
        %v3629 = vadd.f32 %v3420, %v3628
        %v3630 = vpop.f32.mrb[0].mxu0
        %v3631 = vpop.f32.mrb[0].mxu0
        %v3632 = vadd.f32 %v3423, %v3631
        %v3633 = vpop.f32.mrb[0].mxu0
        %3634 = vmatprep.mubr.bf16.mxu0 0
        %3635 = vmatmul.mubr.bf16.gmra.mrb[0].mxu0 %v3144
        %v3636 = vpop.f32.mrb[0].mxu0
        %v3637 = vadd.f32 %v3428, %v3636
        %v3638 = vpop.f32.mrb[0].mxu0
        %v3639 = vpop.f32.mrb[0].mxu0
        %v3640 = vadd.f32 %v3431, %v3639
        %v3641 = vpop.f32.mrb[0].mxu0
        %3642 = vdwg.mxu0
        %v3643 = vld [vmem:[#allocation2 + $0x2] sm:$0xff]
        %v3644 = vld [vmem:[#allocation2 + $0xa] sm:$0xff]
        %v3645 = vld [vmem:[#allocation2 + $0x1a] sm:$0xff]
        %v3646 = vld [vmem:[#allocation2 + $0x22] sm:$0xff]
        %v3647 = vld [vmem:[#allocation2 + $0x32] sm:$0xff]
        %v3648 = vld [vmem:[#allocation2 + $0x3a] sm:$0xff]
        %v3649 = vld [vmem:[#allocation2 + $0x4a] sm:$0xff]
        %v3650 = vld [vmem:[#allocation2 + $0x52] sm:$0xff]
        %v3651 = vld [vmem:[#allocation2 + $0x62] sm:$0xff]
        %v3652 = vld [vmem:[#allocation2 + $0x6a] sm:$0xff]
        %v3653 = vld [vmem:[#allocation2 + $0x7a] sm:$0xff]
        %v3654 = vld [vmem:[#allocation2 + $0x82] sm:$0xff]
        %v3655 = vld [vmem:[#allocation2 + $0x92] sm:$0xff]
        %v3656 = vld [vmem:[#allocation2 + $0x9a] sm:$0xff]
        %v3657 = vld [vmem:[#allocation2 + $0xaa] sm:$0xff]
        %v3658 = vld [vmem:[#allocation2 + $0xb2] sm:$0xff]
        %v3659 = vld [vmem:[#allocation2 + $0xc2] sm:$0xff]
        %v3660 = vld [vmem:[#allocation2 + $0xca] sm:$0xff]
        %v3661 = vld [vmem:[#allocation2 + $0xda] sm:$0xff]
        %v3662 = vld [vmem:[#allocation2 + $0xe2] sm:$0xff]
        %v3663 = vld [vmem:[#allocation2 + $0xf2] sm:$0xff]
        %v3664 = vld [vmem:[#allocation2 + $0xfa] sm:$0xff]
        %v3665 = vld [vmem:[#allocation2 + $0x10a] sm:$0xff]
        %v3666 = vld [vmem:[#allocation2 + $0x112] sm:$0xff]
        %v3667 = vld [vmem:[#allocation2 + $0x122] sm:$0xff]
        %v3668 = vld [vmem:[#allocation2 + $0x12a] sm:$0xff]
        %v3669 = vld [vmem:[#allocation2 + $0x13a] sm:$0xff]
        %v3670 = vld [vmem:[#allocation2 + $0x142] sm:$0xff]
        %v3671 = vld [vmem:[#allocation2 + $0x152] sm:$0xff]
        %v3672 = vld [vmem:[#allocation2 + $0x15a] sm:$0xff]
        %v3673 = vld [vmem:[#allocation2 + $0x16a] sm:$0xff]
        %v3674 = vld [vmem:[#allocation2 + $0x172] sm:$0xff]
        %v3675 = vpack.c.bf16 %v3644, %v3643
        %v3676 = vpack.c.bf16 %v3646, %v3645
        %v3677 = vpack.c.bf16 %v3648, %v3647
        %v3678 = vpack.c.bf16 %v3650, %v3649
        %v3679 = vpack.c.bf16 %v3652, %v3651
        %v3680 = vpack.c.bf16 %v3654, %v3653
        %v3681 = vpack.c.bf16 %v3656, %v3655
        %v3682 = vpack.c.bf16 %v3658, %v3657
        %v3683 = vpack.c.bf16 %v3660, %v3659
        %v3684 = vpack.c.bf16 %v3662, %v3661
        %v3685 = vpack.c.bf16 %v3664, %v3663
        %v3686 = vpack.c.bf16 %v3666, %v3665
        %v3687 = vpack.c.bf16 %v3668, %v3667
        %v3688 = vpack.c.bf16 %v3670, %v3669
        %v3689 = vpack.c.bf16 %v3672, %v3671
        %v3690 = vpack.c.bf16 %v3674, %v3673
        %v3691 = vld [vmem:[%s3 + $0x80] sm:$0xf]
        %v3692 = vld [vmem:[%s3 + $0x84] sm:$0xf]
        %v3693 = vld [vmem:[%s3 + $0x88] sm:$0xf]
        %v3694 = vld [vmem:[%s3 + $0x8c] sm:$0xf]
        %v3695 = vld [vmem:[%s3 + $0x90] sm:$0xf]
        %v3696 = vld [vmem:[%s3 + $0x94] sm:$0xf]
        %v3697 = vld [vmem:[%s3 + $0x98] sm:$0xf]
        %v3698 = vld [vmem:[%s3 + $0x9c] sm:$0xf]
        %v3699 = vld [vmem:[%s3 + $0xa0] sm:$0xf]
        %v3700 = vld [vmem:[%s3 + $0xa4] sm:$0xf]
        %v3701 = vld [vmem:[%s3 + $0xa8] sm:$0xf]
        %v3702 = vld [vmem:[%s3 + $0xac] sm:$0xf]
        %v3703 = vld [vmem:[%s3 + $0xb0] sm:$0xf]
        %v3704 = vld [vmem:[%s3 + $0xb4] sm:$0xf]
        %v3705 = vld [vmem:[%s3 + $0xb8] sm:$0xf]
        %v3706 = vld [vmem:[%s3 + $0xbc] sm:$0xf]
        %v3723 = vunpack.c.l.b16 %v3691
        %v3724 = vunpack.c.l.b16 %v3692
        %v3725 = vunpack.c.l.b16 %v3693
        %v3726 = vunpack.c.l.b16 %v3694
        %v3727 = vunpack.c.l.b16 %v3695
        %v3728 = vunpack.c.l.b16 %v3696
        %v3729 = vunpack.c.l.b16 %v3697
        %v3730 = vunpack.c.l.b16 %v3698
        %v3731 = vunpack.c.l.b16 %v3699
        %v3732 = vunpack.c.l.b16 %v3700
        %v3733 = vunpack.c.l.b16 %v3701
        %v3734 = vunpack.c.l.b16 %v3702
        %v3735 = vunpack.c.l.b16 %v3703
        %v3736 = vunpack.c.l.b16 %v3704
        %v3737 = vunpack.c.l.b16 %v3705
        %v3738 = vunpack.c.l.b16 %v3706
        %v3739 = vpack.c.b16 %v3724, %v3723
        %v3740 = vpack.c.b16 %v3726, %v3725
        %v3741 = vpack.c.b16 %v3728, %v3727
        %v3742 = vpack.c.b16 %v3730, %v3729
        %v3743 = vpack.c.b16 %v3732, %v3731
        %v3744 = vpack.c.b16 %v3734, %v3733
        %v3745 = vpack.c.b16 %v3736, %v3735
        %v3746 = vpack.c.b16 %v3738, %v3737
        %3755 = vmatprep.subr.bf16.mxu0 0
        %3756 = vmatpush1.bf16.msra.mxu0 %v3739
        %3757 = vmatprep.subr.bf16.mxu0 0
        %3758 = vmatpush1.bf16.msra.mxu0 %v3740
        %3759 = vmatprep.subr.bf16.mxu0 0
        %3760 = vmatpush1.bf16.msra.mxu0 %v3741
        %3761 = vmatprep.subr.bf16.mxu0 0
        %3762 = vmatpush1.bf16.msra.mxu0 %v3742
        %3763 = vmatprep.subr.bf16.mxu0 0
        %3764 = vmatpush1.bf16.msra.mxu0 %v3743
        %3765 = vmatprep.subr.bf16.mxu0 0
        %3766 = vmatpush1.bf16.msra.mxu0 %v3744
        %3767 = vmatprep.subr.bf16.mxu0 0
        %3768 = vmatpush1.bf16.msra.mxu0 %v3745
        %3769 = vmatprep.subr.bf16.mxu0 0
        %3770 = vmatpush1.bf16.msra.mxu0 %v3746
        %3771 = vmatprep.subr.bf16.mxu0 0
        %3772 = vmatpush1.bf16.msra.mxu0 0
        %3773 = vmatprep.subr.bf16.mxu0 0
        %3774 = vmatpush1.bf16.msra.mxu0 0
        %3775 = vmatprep.subr.bf16.mxu0 0
        %3776 = vmatpush1.bf16.msra.mxu0 0
        %3777 = vmatprep.subr.bf16.mxu0 0
        %3778 = vmatpush1.bf16.msra.mxu0 0
        %3779 = vmatprep.subr.bf16.mxu0 0
        %3780 = vmatpush1.bf16.msra.mxu0 0
        %3781 = vmatprep.subr.bf16.mxu0 0
        %3782 = vmatpush1.bf16.msra.mxu0 0
        %3783 = vmatprep.subr.bf16.mxu0 0
        %3784 = vmatpush1.bf16.msra.mxu0 0
        %3785 = vmatprep.subr.bf16.mxu0 0
        %3786 = vmatpush1.bf16.msra.mxu0 0
        %3787 = vmatprep.mubr.bf16.mxu0 0
        %3788 = vmatmul.mubr.bf16.gmra.mrb[0].mxu0 %v3675
        %v3789 = vpop.f32.mrb[0].mxu0
        %v3790 = vadd.f32 0.0, %v3789
        %v3791 = vpop.f32.mrb[0].mxu0
        %v3792 = vpop.f32.mrb[0].mxu0
        %v3793 = vadd.f32 0.0, %v3792
        %v3794 = vpop.f32.mrb[0].mxu0
        %3795 = vmatprep.mubr.bf16.mxu0 0
        %3796 = vmatmul.mubr.bf16.gmra.mrb[0].mxu0 %v3676
        %v3797 = vpop.f32.mrb[0].mxu0
        %v3798 = vadd.f32 0.0, %v3797
        %v3799 = vpop.f32.mrb[0].mxu0
        %v3800 = vpop.f32.mrb[0].mxu0
        %v3801 = vadd.f32 0.0, %v3800
        %v3802 = vpop.f32.mrb[0].mxu0
        %3803 = vmatprep.mubr.bf16.mxu0 0
        %3804 = vmatmul.mubr.bf16.gmra.mrb[0].mxu0 %v3677
        %v3805 = vpop.f32.mrb[0].mxu0
        %v3806 = vadd.f32 0.0, %v3805
        %v3807 = vpop.f32.mrb[0].mxu0
        %v3808 = vpop.f32.mrb[0].mxu0
        %v3809 = vadd.f32 0.0, %v3808
        %v3810 = vpop.f32.mrb[0].mxu0
        %3811 = vmatprep.mubr.bf16.mxu0 0
        %3812 = vmatmul.mubr.bf16.gmra.mrb[0].mxu0 %v3678
        %v3813 = vpop.f32.mrb[0].mxu0
        %v3814 = vadd.f32 0.0, %v3813
        %v3815 = vpop.f32.mrb[0].mxu0
        %v3816 = vpop.f32.mrb[0].mxu0
        %v3817 = vadd.f32 0.0, %v3816
        %v3818 = vpop.f32.mrb[0].mxu0
        %3819 = vmatprep.mubr.bf16.mxu0 0
        %3820 = vmatmul.mubr.bf16.gmra.mrb[0].mxu0 %v3679
        %v3821 = vpop.f32.mrb[0].mxu0
        %v3822 = vadd.f32 0.0, %v3821
        %v3823 = vpop.f32.mrb[0].mxu0
        %v3824 = vpop.f32.mrb[0].mxu0
        %v3825 = vadd.f32 0.0, %v3824
        %v3826 = vpop.f32.mrb[0].mxu0
        %3827 = vmatprep.mubr.bf16.mxu0 0
        %3828 = vmatmul.mubr.bf16.gmra.mrb[0].mxu0 %v3680
        %v3829 = vpop.f32.mrb[0].mxu0
        %v3830 = vadd.f32 0.0, %v3829
        %v3831 = vpop.f32.mrb[0].mxu0
        %v3832 = vpop.f32.mrb[0].mxu0
        %v3833 = vadd.f32 0.0, %v3832
        %v3834 = vpop.f32.mrb[0].mxu0
        %3835 = vmatprep.mubr.bf16.mxu0 0
        %3836 = vmatmul.mubr.bf16.gmra.mrb[0].mxu0 %v3681
        %v3837 = vpop.f32.mrb[0].mxu0
        %v3838 = vadd.f32 0.0, %v3837
        %v3839 = vpop.f32.mrb[0].mxu0
        %v3840 = vpop.f32.mrb[0].mxu0
        %v3841 = vadd.f32 0.0, %v3840
        %v3842 = vpop.f32.mrb[0].mxu0
        %3843 = vmatprep.mubr.bf16.mxu0 0
        %3844 = vmatmul.mubr.bf16.gmra.mrb[0].mxu0 %v3682
        %v3845 = vpop.f32.mrb[0].mxu0
        %v3846 = vadd.f32 0.0, %v3845
        %v3847 = vpop.f32.mrb[0].mxu0
        %v3848 = vpop.f32.mrb[0].mxu0
        %v3849 = vadd.f32 0.0, %v3848
        %v3850 = vpop.f32.mrb[0].mxu0
        %3851 = vmatprep.mubr.bf16.mxu0 0
        %3852 = vmatmul.mubr.bf16.gmra.mrb[0].mxu0 %v3683
        %v3853 = vpop.f32.mrb[0].mxu0
        %v3854 = vadd.f32 0.0, %v3853
        %v3855 = vpop.f32.mrb[0].mxu0
        %v3856 = vpop.f32.mrb[0].mxu0
        %v3857 = vadd.f32 0.0, %v3856
        %v3858 = vpop.f32.mrb[0].mxu0
        %3859 = vmatprep.mubr.bf16.mxu0 0
        %3860 = vmatmul.mubr.bf16.gmra.mrb[0].mxu0 %v3684
        %v3861 = vpop.f32.mrb[0].mxu0
        %v3862 = vadd.f32 0.0, %v3861
        %v3863 = vpop.f32.mrb[0].mxu0
        %v3864 = vpop.f32.mrb[0].mxu0
        %v3865 = vadd.f32 0.0, %v3864
        %v3866 = vpop.f32.mrb[0].mxu0
        %3867 = vmatprep.mubr.bf16.mxu0 0
        %3868 = vmatmul.mubr.bf16.gmra.mrb[0].mxu0 %v3685
        %v3869 = vpop.f32.mrb[0].mxu0
        %v3870 = vadd.f32 0.0, %v3869
        %v3871 = vpop.f32.mrb[0].mxu0
        %v3872 = vpop.f32.mrb[0].mxu0
        %v3873 = vadd.f32 0.0, %v3872
        %v3874 = vpop.f32.mrb[0].mxu0
        %3875 = vmatprep.mubr.bf16.mxu0 0
        %3876 = vmatmul.mubr.bf16.gmra.mrb[0].mxu0 %v3686
        %v3877 = vpop.f32.mrb[0].mxu0
        %v3878 = vadd.f32 0.0, %v3877
        %v3879 = vpop.f32.mrb[0].mxu0
        %v3880 = vpop.f32.mrb[0].mxu0
        %v3881 = vadd.f32 0.0, %v3880
        %v3882 = vpop.f32.mrb[0].mxu0
        %3883 = vmatprep.mubr.bf16.mxu0 0
        %3884 = vmatmul.mubr.bf16.gmra.mrb[0].mxu0 %v3687
        %v3885 = vpop.f32.mrb[0].mxu0
        %v3886 = vadd.f32 0.0, %v3885
        %v3887 = vpop.f32.mrb[0].mxu0
        %v3888 = vpop.f32.mrb[0].mxu0
        %v3889 = vadd.f32 0.0, %v3888
        %v3890 = vpop.f32.mrb[0].mxu0
        %3891 = vmatprep.mubr.bf16.mxu0 0
        %3892 = vmatmul.mubr.bf16.gmra.mrb[0].mxu0 %v3688
        %v3893 = vpop.f32.mrb[0].mxu0
        %v3894 = vadd.f32 0.0, %v3893
        %v3895 = vpop.f32.mrb[0].mxu0
        %v3896 = vpop.f32.mrb[0].mxu0
        %v3897 = vadd.f32 0.0, %v3896
        %v3898 = vpop.f32.mrb[0].mxu0
        %3899 = vmatprep.mubr.bf16.mxu0 0
        %3900 = vmatmul.mubr.bf16.gmra.mrb[0].mxu0 %v3689
        %v3901 = vpop.f32.mrb[0].mxu0
        %v3902 = vadd.f32 0.0, %v3901
        %v3903 = vpop.f32.mrb[0].mxu0
        %v3904 = vpop.f32.mrb[0].mxu0
        %v3905 = vadd.f32 0.0, %v3904
        %v3906 = vpop.f32.mrb[0].mxu0
        %3907 = vmatprep.mubr.bf16.mxu0 0
        %3908 = vmatmul.mubr.bf16.gmra.mrb[0].mxu0 %v3690
        %v3909 = vpop.f32.mrb[0].mxu0
        %v3910 = vadd.f32 0.0, %v3909
        %v3911 = vpop.f32.mrb[0].mxu0
        %v3912 = vpop.f32.mrb[0].mxu0
        %v3913 = vadd.f32 0.0, %v3912
        %v3914 = vpop.f32.mrb[0].mxu0
        %3915 = vdwg.mxu0
        %v3916 = vadd.f32 %v3517, %v3790
        %v3917 = vadd.f32 %v3520, %v3793
        %v3918 = vadd.f32 %v3525, %v3798
        %v3919 = vadd.f32 %v3528, %v3801
        %v3920 = vadd.f32 %v3533, %v3806
        %v3921 = vadd.f32 %v3536, %v3809
        %v3922 = vadd.f32 %v3541, %v3814
        %v3923 = vadd.f32 %v3544, %v3817
        %v3924 = vadd.f32 %v3549, %v3822
        %v3925 = vadd.f32 %v3552, %v3825
        %v3926 = vadd.f32 %v3557, %v3830
        %v3927 = vadd.f32 %v3560, %v3833
        %v3928 = vadd.f32 %v3565, %v3838
        %v3929 = vadd.f32 %v3568, %v3841
        %v3930 = vadd.f32 %v3573, %v3846
        %v3931 = vadd.f32 %v3576, %v3849
        %v3932 = vadd.f32 %v3581, %v3854
        %v3933 = vadd.f32 %v3584, %v3857
        %v3934 = vadd.f32 %v3589, %v3862
        %v3935 = vadd.f32 %v3592, %v3865
        %v3936 = vadd.f32 %v3597, %v3870
        %v3937 = vadd.f32 %v3600, %v3873
        %v3938 = vadd.f32 %v3605, %v3878
        %v3939 = vadd.f32 %v3608, %v3881
        %v3940 = vadd.f32 %v3613, %v3886
        %v3941 = vadd.f32 %v3616, %v3889
        %v3942 = vadd.f32 %v3621, %v3894
        %v3943 = vadd.f32 %v3624, %v3897
        %v3944 = vadd.f32 %v3629, %v3902
        %v3945 = vadd.f32 %v3632, %v3905
        %v3946 = vadd.f32 %v3637, %v3910
        %v3947 = vadd.f32 %v3640, %v3913
        %v3948 = vld [vmem:[%s3032] sm:$0xff]
        %v3949 = vld [vmem:[%s3032 + $0x8] sm:$0xff]
        %v3950 = vld [vmem:[%s3032 + $0x18] sm:$0xff]
        %v3951 = vld [vmem:[%s3032 + $0x20] sm:$0xff]
        %v3952 = vld [vmem:[%s3032 + $0x30] sm:$0xff]
        %v3953 = vld [vmem:[%s3032 + $0x38] sm:$0xff]
        %v3954 = vld [vmem:[%s3032 + $0x48] sm:$0xff]
        %v3955 = vld [vmem:[%s3032 + $0x50] sm:$0xff]
        %v3956 = vld [vmem:[%s3032 + $0x60] sm:$0xff]
        %v3957 = vld [vmem:[%s3032 + $0x68] sm:$0xff]
        %v3958 = vld [vmem:[%s3032 + $0x78] sm:$0xff]
        %v3959 = vld [vmem:[%s3032 + $0x80] sm:$0xff]
        %v3960 = vld [vmem:[%s3032 + $0x90] sm:$0xff]
        %v3961 = vld [vmem:[%s3032 + $0x98] sm:$0xff]
        %v3962 = vld [vmem:[%s3032 + $0xa8] sm:$0xff]
        %v3963 = vld [vmem:[%s3032 + $0xb0] sm:$0xff]
        %v3964 = vld [vmem:[%s3032 + $0xc0] sm:$0xff]
        %v3965 = vld [vmem:[%s3032 + $0xc8] sm:$0xff]
        %v3966 = vld [vmem:[%s3032 + $0xd8] sm:$0xff]
        %v3967 = vld [vmem:[%s3032 + $0xe0] sm:$0xff]
        %v3968 = vld [vmem:[%s3032 + $0xf0] sm:$0xff]
        %v3969 = vld [vmem:[%s3032 + $0xf8] sm:$0xff]
        %v3970 = vld [vmem:[%s3032 + $0x108] sm:$0xff]
        %v3971 = vld [vmem:[%s3032 + $0x110] sm:$0xff]
        %v3972 = vld [vmem:[%s3032 + $0x120] sm:$0xff]
        %v3973 = vld [vmem:[%s3032 + $0x128] sm:$0xff]
        %v3974 = vld [vmem:[%s3032 + $0x138] sm:$0xff]
        %v3975 = vld [vmem:[%s3032 + $0x140] sm:$0xff]
        %v3976 = vld [vmem:[%s3032 + $0x150] sm:$0xff]
        %v3977 = vld [vmem:[%s3032 + $0x158] sm:$0xff]
        %v3978 = vld [vmem:[%s3032 + $0x168] sm:$0xff]
        %v3979 = vld [vmem:[%s3032 + $0x170] sm:$0xff]
        %v3980 = vpack.c.bf16 %v3949, %v3948
        %v3981 = vpack.c.bf16 %v3951, %v3950
        %v3982 = vpack.c.bf16 %v3953, %v3952
        %v3983 = vpack.c.bf16 %v3955, %v3954
        %v3984 = vpack.c.bf16 %v3957, %v3956
        %v3985 = vpack.c.bf16 %v3959, %v3958
        %v3986 = vpack.c.bf16 %v3961, %v3960
        %v3987 = vpack.c.bf16 %v3963, %v3962
        %v3988 = vpack.c.bf16 %v3965, %v3964
        %v3989 = vpack.c.bf16 %v3967, %v3966
        %v3990 = vpack.c.bf16 %v3969, %v3968
        %v3991 = vpack.c.bf16 %v3971, %v3970
        %v3992 = vpack.c.bf16 %v3973, %v3972
        %v3993 = vpack.c.bf16 %v3975, %v3974
        %v3994 = vpack.c.bf16 %v3977, %v3976
        %v3995 = vpack.c.bf16 %v3979, %v3978
        %v3996 = vld [vmem:[%s3 + $0xc0] sm:$0xf]
        %v3997 = vld [vmem:[%s3 + $0xc4] sm:$0xf]
        %v3998 = vld [vmem:[%s3 + $0xc8] sm:$0xf]
        %v3999 = vld [vmem:[%s3 + $0xcc] sm:$0xf]
        %v4000 = vld [vmem:[%s3 + $0xd0] sm:$0xf]
        %v4001 = vld [vmem:[%s3 + $0xd4] sm:$0xf]
        %v4002 = vld [vmem:[%s3 + $0xd8] sm:$0xf]
        %v4003 = vld [vmem:[%s3 + $0xdc] sm:$0xf]
        %v4004 = vld [vmem:[%s3 + $0xe0] sm:$0xf]
        %v4005 = vld [vmem:[%s3 + $0xe4] sm:$0xf]
        %v4006 = vld [vmem:[%s3 + $0xe8] sm:$0xf]
        %v4007 = vld [vmem:[%s3 + $0xec] sm:$0xf]
        %v4008 = vld [vmem:[%s3 + $0xf0] sm:$0xf]
        %v4009 = vld [vmem:[%s3 + $0xf4] sm:$0xf]
        %v4010 = vld [vmem:[%s3 + $0xf8] sm:$0xf]
        %v4011 = vld [vmem:[%s3 + $0xfc] sm:$0xf]
        %v4028 = vunpack.c.l.b16 %v3996
        %v4029 = vunpack.c.l.b16 %v3997
        %v4030 = vunpack.c.l.b16 %v3998
        %v4031 = vunpack.c.l.b16 %v3999
        %v4032 = vunpack.c.l.b16 %v4000
        %v4033 = vunpack.c.l.b16 %v4001
        %v4034 = vunpack.c.l.b16 %v4002
        %v4035 = vunpack.c.l.b16 %v4003
        %v4036 = vunpack.c.l.b16 %v4004
        %v4037 = vunpack.c.l.b16 %v4005
        %v4038 = vunpack.c.l.b16 %v4006
        %v4039 = vunpack.c.l.b16 %v4007
        %v4040 = vunpack.c.l.b16 %v4008
        %v4041 = vunpack.c.l.b16 %v4009
        %v4042 = vunpack.c.l.b16 %v4010
        %v4043 = vunpack.c.l.b16 %v4011
        %v4044 = vpack.c.b16 %v4029, %v4028
        %v4045 = vpack.c.b16 %v4031, %v4030
        %v4046 = vpack.c.b16 %v4033, %v4032
        %v4047 = vpack.c.b16 %v4035, %v4034
        %v4048 = vpack.c.b16 %v4037, %v4036
        %v4049 = vpack.c.b16 %v4039, %v4038
        %v4050 = vpack.c.b16 %v4041, %v4040
        %v4051 = vpack.c.b16 %v4043, %v4042
        %4060 = vmatprep.subr.bf16.mxu0 0
        %4061 = vmatpush1.bf16.msra.mxu0 %v4044
        %4062 = vmatprep.subr.bf16.mxu0 0
        %4063 = vmatpush1.bf16.msra.mxu0 %v4045
        %4064 = vmatprep.subr.bf16.mxu0 0
        %4065 = vmatpush1.bf16.msra.mxu0 %v4046
        %4066 = vmatprep.subr.bf16.mxu0 0
        %4067 = vmatpush1.bf16.msra.mxu0 %v4047
        %4068 = vmatprep.subr.bf16.mxu0 0
        %4069 = vmatpush1.bf16.msra.mxu0 %v4048
        %4070 = vmatprep.subr.bf16.mxu0 0
        %4071 = vmatpush1.bf16.msra.mxu0 %v4049
        %4072 = vmatprep.subr.bf16.mxu0 0
        %4073 = vmatpush1.bf16.msra.mxu0 %v4050
        %4074 = vmatprep.subr.bf16.mxu0 0
        %4075 = vmatpush1.bf16.msra.mxu0 %v4051
        %4076 = vmatprep.subr.bf16.mxu0 0
        %4077 = vmatpush1.bf16.msra.mxu0 0
        %4078 = vmatprep.subr.bf16.mxu0 0
        %4079 = vmatpush1.bf16.msra.mxu0 0
        %4080 = vmatprep.subr.bf16.mxu0 0
        %4081 = vmatpush1.bf16.msra.mxu0 0
        %4082 = vmatprep.subr.bf16.mxu0 0
        %4083 = vmatpush1.bf16.msra.mxu0 0
        %4084 = vmatprep.subr.bf16.mxu0 0
        %4085 = vmatpush1.bf16.msra.mxu0 0
        %4086 = vmatprep.subr.bf16.mxu0 0
        %4087 = vmatpush1.bf16.msra.mxu0 0
        %4088 = vmatprep.subr.bf16.mxu0 0
        %4089 = vmatpush1.bf16.msra.mxu0 0
        %4090 = vmatprep.subr.bf16.mxu0 0
        %4091 = vmatpush1.bf16.msra.mxu0 0
        %4092 = vmatprep.mubr.bf16.mxu0 0
        %4093 = vmatmul.mubr.bf16.gmra.mrb[0].mxu0 %v3980
        %v4094 = vpop.f32.mrb[0].mxu0
        %v4095 = vadd.f32 0.0, %v4094
        %v4096 = vpop.f32.mrb[0].mxu0
        %v4097 = vpop.f32.mrb[0].mxu0
        %v4098 = vadd.f32 0.0, %v4097
        %v4099 = vpop.f32.mrb[0].mxu0
        %4100 = vmatprep.mubr.bf16.mxu0 0
        %4101 = vmatmul.mubr.bf16.gmra.mrb[0].mxu0 %v3981
        %v4102 = vpop.f32.mrb[0].mxu0
        %v4103 = vadd.f32 0.0, %v4102
        %v4104 = vpop.f32.mrb[0].mxu0
        %v4105 = vpop.f32.mrb[0].mxu0
        %v4106 = vadd.f32 0.0, %v4105
        %v4107 = vpop.f32.mrb[0].mxu0
        %4108 = vmatprep.mubr.bf16.mxu0 0
        %4109 = vmatmul.mubr.bf16.gmra.mrb[0].mxu0 %v3982
        %v4110 = vpop.f32.mrb[0].mxu0
        %v4111 = vadd.f32 0.0, %v4110
        %v4112 = vpop.f32.mrb[0].mxu0
        %v4113 = vpop.f32.mrb[0].mxu0
        %v4114 = vadd.f32 0.0, %v4113
        %v4115 = vpop.f32.mrb[0].mxu0
        %4116 = vmatprep.mubr.bf16.mxu0 0
        %4117 = vmatmul.mubr.bf16.gmra.mrb[0].mxu0 %v3983
        %v4118 = vpop.f32.mrb[0].mxu0
        %v4119 = vadd.f32 0.0, %v4118
        %v4120 = vpop.f32.mrb[0].mxu0
        %v4121 = vpop.f32.mrb[0].mxu0
        %v4122 = vadd.f32 0.0, %v4121
        %v4123 = vpop.f32.mrb[0].mxu0
        %4124 = vmatprep.mubr.bf16.mxu0 0
        %4125 = vmatmul.mubr.bf16.gmra.mrb[0].mxu0 %v3984
        %v4126 = vpop.f32.mrb[0].mxu0
        %v4127 = vadd.f32 0.0, %v4126
        %v4128 = vpop.f32.mrb[0].mxu0
        %v4129 = vpop.f32.mrb[0].mxu0
        %v4130 = vadd.f32 0.0, %v4129
        %v4131 = vpop.f32.mrb[0].mxu0
        %4132 = vmatprep.mubr.bf16.mxu0 0
        %4133 = vmatmul.mubr.bf16.gmra.mrb[0].mxu0 %v3985
        %v4134 = vpop.f32.mrb[0].mxu0
        %v4135 = vadd.f32 0.0, %v4134
        %v4136 = vpop.f32.mrb[0].mxu0
        %v4137 = vpop.f32.mrb[0].mxu0
        %v4138 = vadd.f32 0.0, %v4137
        %v4139 = vpop.f32.mrb[0].mxu0
        %4140 = vmatprep.mubr.bf16.mxu0 0
        %4141 = vmatmul.mubr.bf16.gmra.mrb[0].mxu0 %v3986
        %v4142 = vpop.f32.mrb[0].mxu0
        %v4143 = vadd.f32 0.0, %v4142
        %v4144 = vpop.f32.mrb[0].mxu0
        %v4145 = vpop.f32.mrb[0].mxu0
        %v4146 = vadd.f32 0.0, %v4145
        %v4147 = vpop.f32.mrb[0].mxu0
        %4148 = vmatprep.mubr.bf16.mxu0 0
        %4149 = vmatmul.mubr.bf16.gmra.mrb[0].mxu0 %v3987
        %v4150 = vpop.f32.mrb[0].mxu0
        %v4151 = vadd.f32 0.0, %v4150
        %v4152 = vpop.f32.mrb[0].mxu0
        %v4153 = vpop.f32.mrb[0].mxu0
        %v4154 = vadd.f32 0.0, %v4153
        %v4155 = vpop.f32.mrb[0].mxu0
        %4156 = vmatprep.mubr.bf16.mxu0 0
        %4157 = vmatmul.mubr.bf16.gmra.mrb[0].mxu0 %v3988
        %v4158 = vpop.f32.mrb[0].mxu0
        %v4159 = vadd.f32 0.0, %v4158
        %v4160 = vpop.f32.mrb[0].mxu0
        %v4161 = vpop.f32.mrb[0].mxu0
        %v4162 = vadd.f32 0.0, %v4161
        %v4163 = vpop.f32.mrb[0].mxu0
        %4164 = vmatprep.mubr.bf16.mxu0 0
        %4165 = vmatmul.mubr.bf16.gmra.mrb[0].mxu0 %v3989
        %v4166 = vpop.f32.mrb[0].mxu0
        %v4167 = vadd.f32 0.0, %v4166
        %v4168 = vpop.f32.mrb[0].mxu0
        %v4169 = vpop.f32.mrb[0].mxu0
        %v4170 = vadd.f32 0.0, %v4169
        %v4171 = vpop.f32.mrb[0].mxu0
        %4172 = vmatprep.mubr.bf16.mxu0 0
        %4173 = vmatmul.mubr.bf16.gmra.mrb[0].mxu0 %v3990
        %v4174 = vpop.f32.mrb[0].mxu0
        %v4175 = vadd.f32 0.0, %v4174
        %v4176 = vpop.f32.mrb[0].mxu0
        %v4177 = vpop.f32.mrb[0].mxu0
        %v4178 = vadd.f32 0.0, %v4177
        %v4179 = vpop.f32.mrb[0].mxu0
        %4180 = vmatprep.mubr.bf16.mxu0 0
        %4181 = vmatmul.mubr.bf16.gmra.mrb[0].mxu0 %v3991
        %v4182 = vpop.f32.mrb[0].mxu0
        %v4183 = vadd.f32 0.0, %v4182
        %v4184 = vpop.f32.mrb[0].mxu0
        %v4185 = vpop.f32.mrb[0].mxu0
        %v4186 = vadd.f32 0.0, %v4185
        %v4187 = vpop.f32.mrb[0].mxu0
        %4188 = vmatprep.mubr.bf16.mxu0 0
        %4189 = vmatmul.mubr.bf16.gmra.mrb[0].mxu0 %v3992
        %v4190 = vpop.f32.mrb[0].mxu0
        %v4191 = vadd.f32 0.0, %v4190
        %v4192 = vpop.f32.mrb[0].mxu0
        %v4193 = vpop.f32.mrb[0].mxu0
        %v4194 = vadd.f32 0.0, %v4193
        %v4195 = vpop.f32.mrb[0].mxu0
        %4196 = vmatprep.mubr.bf16.mxu0 0
        %4197 = vmatmul.mubr.bf16.gmra.mrb[0].mxu0 %v3993
        %v4198 = vpop.f32.mrb[0].mxu0
        %v4199 = vadd.f32 0.0, %v4198
        %v4200 = vpop.f32.mrb[0].mxu0
        %v4201 = vpop.f32.mrb[0].mxu0
        %v4202 = vadd.f32 0.0, %v4201
        %v4203 = vpop.f32.mrb[0].mxu0
        %4204 = vmatprep.mubr.bf16.mxu0 0
        %4205 = vmatmul.mubr.bf16.gmra.mrb[0].mxu0 %v3994
        %v4206 = vpop.f32.mrb[0].mxu0
        %v4207 = vadd.f32 0.0, %v4206
        %v4208 = vpop.f32.mrb[0].mxu0
        %v4209 = vpop.f32.mrb[0].mxu0
        %v4210 = vadd.f32 0.0, %v4209
        %v4211 = vpop.f32.mrb[0].mxu0
        %4212 = vmatprep.mubr.bf16.mxu0 0
        %4213 = vmatmul.mubr.bf16.gmra.mrb[0].mxu0 %v3995
        %v4214 = vpop.f32.mrb[0].mxu0
        %v4215 = vadd.f32 0.0, %v4214
        %v4216 = vpop.f32.mrb[0].mxu0
        %v4217 = vpop.f32.mrb[0].mxu0
        %v4218 = vadd.f32 0.0, %v4217
        %v4219 = vpop.f32.mrb[0].mxu0
        %4220 = vdwg.mxu0
        %v4221 = vadd.f32 %v3916, %v4095
        %v4222 = vadd.f32 %v3917, %v4098
        %v4223 = vadd.f32 %v3918, %v4103
        %v4224 = vadd.f32 %v3919, %v4106
        %v4225 = vadd.f32 %v3920, %v4111
        %v4226 = vadd.f32 %v3921, %v4114
        %v4227 = vadd.f32 %v3922, %v4119
        %v4228 = vadd.f32 %v3923, %v4122
        %v4229 = vadd.f32 %v3924, %v4127
        %v4230 = vadd.f32 %v3925, %v4130
        %v4231 = vadd.f32 %v3926, %v4135
        %v4232 = vadd.f32 %v3927, %v4138
        %v4233 = vadd.f32 %v3928, %v4143
        %v4234 = vadd.f32 %v3929, %v4146
        %v4235 = vadd.f32 %v3930, %v4151
        %v4236 = vadd.f32 %v3931, %v4154
        %v4237 = vadd.f32 %v3932, %v4159
        %v4238 = vadd.f32 %v3933, %v4162
        %v4239 = vadd.f32 %v3934, %v4167
        %v4240 = vadd.f32 %v3935, %v4170
        %v4241 = vadd.f32 %v3936, %v4175
        %v4242 = vadd.f32 %v3937, %v4178
        %v4243 = vadd.f32 %v3938, %v4183
        %v4244 = vadd.f32 %v3939, %v4186
        %v4245 = vadd.f32 %v3940, %v4191
        %v4246 = vadd.f32 %v3941, %v4194
        %v4247 = vadd.f32 %v3942, %v4199
        %v4248 = vadd.f32 %v3943, %v4202
        %v4249 = vadd.f32 %v3944, %v4207
        %v4250 = vadd.f32 %v3945, %v4210
        %v4251 = vadd.f32 %v3946, %v4215
        %v4252 = vadd.f32 %v3947, %v4218
        %v4253 = vld [vmem:[%s3032 + $0x1] sm:$0xff]
        %v4254 = vld [vmem:[%s3032 + $0x9] sm:$0xff]
        %v4255 = vld [vmem:[%s3032 + $0x19] sm:$0xff]
        %v4256 = vld [vmem:[%s3032 + $0x21] sm:$0xff]
        %v4257 = vld [vmem:[%s3032 + $0x31] sm:$0xff]
        %v4258 = vld [vmem:[%s3032 + $0x39] sm:$0xff]
        %v4259 = vld [vmem:[%s3032 + $0x49] sm:$0xff]
        %v4260 = vld [vmem:[%s3032 + $0x51] sm:$0xff]
        %v4261 = vld [vmem:[%s3032 + $0x61] sm:$0xff]
        %v4262 = vld [vmem:[%s3032 + $0x69] sm:$0xff]
        %v4263 = vld [vmem:[%s3032 + $0x79] sm:$0xff]
        %v4264 = vld [vmem:[%s3032 + $0x81] sm:$0xff]
        %v4265 = vld [vmem:[%s3032 + $0x91] sm:$0xff]
        %v4266 = vld [vmem:[%s3032 + $0x99] sm:$0xff]
        %v4267 = vld [vmem:[%s3032 + $0xa9] sm:$0xff]
        %v4268 = vld [vmem:[%s3032 + $0xb1] sm:$0xff]
        %v4269 = vld [vmem:[%s3032 + $0xc1] sm:$0xff]
        %v4270 = vld [vmem:[%s3032 + $0xc9] sm:$0xff]
        %v4271 = vld [vmem:[%s3032 + $0xd9] sm:$0xff]
        %v4272 = vld [vmem:[%s3032 + $0xe1] sm:$0xff]
        %v4273 = vld [vmem:[%s3032 + $0xf1] sm:$0xff]
        %v4274 = vld [vmem:[%s3032 + $0xf9] sm:$0xff]
        %v4275 = vld [vmem:[%s3032 + $0x109] sm:$0xff]
        %v4276 = vld [vmem:[%s3032 + $0x111] sm:$0xff]
        %v4277 = vld [vmem:[%s3032 + $0x121] sm:$0xff]
        %v4278 = vld [vmem:[%s3032 + $0x129] sm:$0xff]
        %v4279 = vld [vmem:[%s3032 + $0x139] sm:$0xff]
        %v4280 = vld [vmem:[%s3032 + $0x141] sm:$0xff]
        %v4281 = vld [vmem:[%s3032 + $0x151] sm:$0xff]
        %v4282 = vld [vmem:[%s3032 + $0x159] sm:$0xff]
        %v4283 = vld [vmem:[%s3032 + $0x169] sm:$0xff]
        %v4284 = vld [vmem:[%s3032 + $0x171] sm:$0xff]
        %v4285 = vpack.c.bf16 %v4254, %v4253
        %v4286 = vpack.c.bf16 %v4256, %v4255
        %v4287 = vpack.c.bf16 %v4258, %v4257
        %v4288 = vpack.c.bf16 %v4260, %v4259
        %v4289 = vpack.c.bf16 %v4262, %v4261
        %v4290 = vpack.c.bf16 %v4264, %v4263
        %v4291 = vpack.c.bf16 %v4266, %v4265
        %v4292 = vpack.c.bf16 %v4268, %v4267
        %v4293 = vpack.c.bf16 %v4270, %v4269
        %v4294 = vpack.c.bf16 %v4272, %v4271
        %v4295 = vpack.c.bf16 %v4274, %v4273
        %v4296 = vpack.c.bf16 %v4276, %v4275
        %v4297 = vpack.c.bf16 %v4278, %v4277
        %v4298 = vpack.c.bf16 %v4280, %v4279
        %v4299 = vpack.c.bf16 %v4282, %v4281
        %v4300 = vpack.c.bf16 %v4284, %v4283
        %v4301 = vld [vmem:[%s3 + $0x100] sm:$0xf]
        %v4302 = vld [vmem:[%s3 + $0x104] sm:$0xf]
        %v4303 = vld [vmem:[%s3 + $0x108] sm:$0xf]
        %v4304 = vld [vmem:[%s3 + $0x10c] sm:$0xf]
        %v4305 = vld [vmem:[%s3 + $0x110] sm:$0xf]
        %v4306 = vld [vmem:[%s3 + $0x114] sm:$0xf]
        %v4307 = vld [vmem:[%s3 + $0x118] sm:$0xf]
        %v4308 = vld [vmem:[%s3 + $0x11c] sm:$0xf]
        %v4309 = vld [vmem:[%s3 + $0x120] sm:$0xf]
        %v4310 = vld [vmem:[%s3 + $0x124] sm:$0xf]
        %v4311 = vld [vmem:[%s3 + $0x128] sm:$0xf]
        %v4312 = vld [vmem:[%s3 + $0x12c] sm:$0xf]
        %v4313 = vld [vmem:[%s3 + $0x130] sm:$0xf]
        %v4314 = vld [vmem:[%s3 + $0x134] sm:$0xf]
        %v4315 = vld [vmem:[%s3 + $0x138] sm:$0xf]
        %v4316 = vld [vmem:[%s3 + $0x13c] sm:$0xf]
        %v4333 = vunpack.c.l.b16 %v4301
        %v4334 = vunpack.c.l.b16 %v4302
        %v4335 = vunpack.c.l.b16 %v4303
        %v4336 = vunpack.c.l.b16 %v4304
        %v4337 = vunpack.c.l.b16 %v4305
        %v4338 = vunpack.c.l.b16 %v4306
        %v4339 = vunpack.c.l.b16 %v4307
        %v4340 = vunpack.c.l.b16 %v4308
        %v4341 = vunpack.c.l.b16 %v4309
        %v4342 = vunpack.c.l.b16 %v4310
        %v4343 = vunpack.c.l.b16 %v4311
        %v4344 = vunpack.c.l.b16 %v4312
        %v4345 = vunpack.c.l.b16 %v4313
        %v4346 = vunpack.c.l.b16 %v4314
        %v4347 = vunpack.c.l.b16 %v4315
        %v4348 = vunpack.c.l.b16 %v4316
        %v4349 = vpack.c.b16 %v4334, %v4333
        %v4350 = vpack.c.b16 %v4336, %v4335
        %v4351 = vpack.c.b16 %v4338, %v4337
        %v4352 = vpack.c.b16 %v4340, %v4339
        %v4353 = vpack.c.b16 %v4342, %v4341
        %v4354 = vpack.c.b16 %v4344, %v4343
        %v4355 = vpack.c.b16 %v4346, %v4345
        %v4356 = vpack.c.b16 %v4348, %v4347
        %4365 = vmatprep.subr.bf16.mxu0 0
        %4366 = vmatpush1.bf16.msra.mxu0 %v4349
        %4367 = vmatprep.subr.bf16.mxu0 0
        %4368 = vmatpush1.bf16.msra.mxu0 %v4350
        %4369 = vmatprep.subr.bf16.mxu0 0
        %4370 = vmatpush1.bf16.msra.mxu0 %v4351
        %4371 = vmatprep.subr.bf16.mxu0 0
        %4372 = vmatpush1.bf16.msra.mxu0 %v4352
        %4373 = vmatprep.subr.bf16.mxu0 0
        %4374 = vmatpush1.bf16.msra.mxu0 %v4353
        %4375 = vmatprep.subr.bf16.mxu0 0
        %4376 = vmatpush1.bf16.msra.mxu0 %v4354
        %4377 = vmatprep.subr.bf16.mxu0 0
        %4378 = vmatpush1.bf16.msra.mxu0 %v4355
        %4379 = vmatprep.subr.bf16.mxu0 0
        %4380 = vmatpush1.bf16.msra.mxu0 %v4356
        %4381 = vmatprep.subr.bf16.mxu0 0
        %4382 = vmatpush1.bf16.msra.mxu0 0
        %4383 = vmatprep.subr.bf16.mxu0 0
        %4384 = vmatpush1.bf16.msra.mxu0 0
        %4385 = vmatprep.subr.bf16.mxu0 0
        %4386 = vmatpush1.bf16.msra.mxu0 0
        %4387 = vmatprep.subr.bf16.mxu0 0
        %4388 = vmatpush1.bf16.msra.mxu0 0
        %4389 = vmatprep.subr.bf16.mxu0 0
        %4390 = vmatpush1.bf16.msra.mxu0 0
        %4391 = vmatprep.subr.bf16.mxu0 0
        %4392 = vmatpush1.bf16.msra.mxu0 0
        %4393 = vmatprep.subr.bf16.mxu0 0
        %4394 = vmatpush1.bf16.msra.mxu0 0
        %4395 = vmatprep.subr.bf16.mxu0 0
        %4396 = vmatpush1.bf16.msra.mxu0 0
        %4397 = vmatprep.mubr.bf16.mxu0 0
        %4398 = vmatmul.mubr.bf16.gmra.mrb[0].mxu0 %v4285
        %v4399 = vpop.f32.mrb[0].mxu0
        %v4400 = vadd.f32 0.0, %v4399
        %v4401 = vpop.f32.mrb[0].mxu0
        %v4402 = vpop.f32.mrb[0].mxu0
        %v4403 = vadd.f32 0.0, %v4402
        %v4404 = vpop.f32.mrb[0].mxu0
        %4405 = vmatprep.mubr.bf16.mxu0 0
        %4406 = vmatmul.mubr.bf16.gmra.mrb[0].mxu0 %v4286
        %v4407 = vpop.f32.mrb[0].mxu0
        %v4408 = vadd.f32 0.0, %v4407
        %v4409 = vpop.f32.mrb[0].mxu0
        %v4410 = vpop.f32.mrb[0].mxu0
        %v4411 = vadd.f32 0.0, %v4410
        %v4412 = vpop.f32.mrb[0].mxu0
        %4413 = vmatprep.mubr.bf16.mxu0 0
        %4414 = vmatmul.mubr.bf16.gmra.mrb[0].mxu0 %v4287
        %v4415 = vpop.f32.mrb[0].mxu0
        %v4416 = vadd.f32 0.0, %v4415
        %v4417 = vpop.f32.mrb[0].mxu0
        %v4418 = vpop.f32.mrb[0].mxu0
        %v4419 = vadd.f32 0.0, %v4418
        %v4420 = vpop.f32.mrb[0].mxu0
        %4421 = vmatprep.mubr.bf16.mxu0 0
        %4422 = vmatmul.mubr.bf16.gmra.mrb[0].mxu0 %v4288
        %v4423 = vpop.f32.mrb[0].mxu0
        %v4424 = vadd.f32 0.0, %v4423
        %v4425 = vpop.f32.mrb[0].mxu0
        %v4426 = vpop.f32.mrb[0].mxu0
        %v4427 = vadd.f32 0.0, %v4426
        %v4428 = vpop.f32.mrb[0].mxu0
        %4429 = vmatprep.mubr.bf16.mxu0 0
        %4430 = vmatmul.mubr.bf16.gmra.mrb[0].mxu0 %v4289
        %v4431 = vpop.f32.mrb[0].mxu0
        %v4432 = vadd.f32 0.0, %v4431
        %v4433 = vpop.f32.mrb[0].mxu0
        %v4434 = vpop.f32.mrb[0].mxu0
        %v4435 = vadd.f32 0.0, %v4434
        %v4436 = vpop.f32.mrb[0].mxu0
        %4437 = vmatprep.mubr.bf16.mxu0 0
        %4438 = vmatmul.mubr.bf16.gmra.mrb[0].mxu0 %v4290
        %v4439 = vpop.f32.mrb[0].mxu0
        %v4440 = vadd.f32 0.0, %v4439
        %v4441 = vpop.f32.mrb[0].mxu0
        %v4442 = vpop.f32.mrb[0].mxu0
        %v4443 = vadd.f32 0.0, %v4442
        %v4444 = vpop.f32.mrb[0].mxu0
        %4445 = vmatprep.mubr.bf16.mxu0 0
        %4446 = vmatmul.mubr.bf16.gmra.mrb[0].mxu0 %v4291
        %v4447 = vpop.f32.mrb[0].mxu0
        %v4448 = vadd.f32 0.0, %v4447
        %v4449 = vpop.f32.mrb[0].mxu0
        %v4450 = vpop.f32.mrb[0].mxu0
        %v4451 = vadd.f32 0.0, %v4450
        %v4452 = vpop.f32.mrb[0].mxu0
        %4453 = vmatprep.mubr.bf16.mxu0 0
        %4454 = vmatmul.mubr.bf16.gmra.mrb[0].mxu0 %v4292
        %v4455 = vpop.f32.mrb[0].mxu0
        %v4456 = vadd.f32 0.0, %v4455
        %v4457 = vpop.f32.mrb[0].mxu0
        %v4458 = vpop.f32.mrb[0].mxu0
        %v4459 = vadd.f32 0.0, %v4458
        %v4460 = vpop.f32.mrb[0].mxu0
        %4461 = vmatprep.mubr.bf16.mxu0 0
        %4462 = vmatmul.mubr.bf16.gmra.mrb[0].mxu0 %v4293
        %v4463 = vpop.f32.mrb[0].mxu0
        %v4464 = vadd.f32 0.0, %v4463
        %v4465 = vpop.f32.mrb[0].mxu0
        %v4466 = vpop.f32.mrb[0].mxu0
        %v4467 = vadd.f32 0.0, %v4466
        %v4468 = vpop.f32.mrb[0].mxu0
        %4469 = vmatprep.mubr.bf16.mxu0 0
        %4470 = vmatmul.mubr.bf16.gmra.mrb[0].mxu0 %v4294
        %v4471 = vpop.f32.mrb[0].mxu0
        %v4472 = vadd.f32 0.0, %v4471
        %v4473 = vpop.f32.mrb[0].mxu0
        %v4474 = vpop.f32.mrb[0].mxu0
        %v4475 = vadd.f32 0.0, %v4474
        %v4476 = vpop.f32.mrb[0].mxu0
        %4477 = vmatprep.mubr.bf16.mxu0 0
        %4478 = vmatmul.mubr.bf16.gmra.mrb[0].mxu0 %v4295
        %v4479 = vpop.f32.mrb[0].mxu0
        %v4480 = vadd.f32 0.0, %v4479
        %v4481 = vpop.f32.mrb[0].mxu0
        %v4482 = vpop.f32.mrb[0].mxu0
        %v4483 = vadd.f32 0.0, %v4482
        %v4484 = vpop.f32.mrb[0].mxu0
        %4485 = vmatprep.mubr.bf16.mxu0 0
        %4486 = vmatmul.mubr.bf16.gmra.mrb[0].mxu0 %v4296
        %v4487 = vpop.f32.mrb[0].mxu0
        %v4488 = vadd.f32 0.0, %v4487
        %v4489 = vpop.f32.mrb[0].mxu0
        %v4490 = vpop.f32.mrb[0].mxu0
        %v4491 = vadd.f32 0.0, %v4490
        %v4492 = vpop.f32.mrb[0].mxu0
        %4493 = vmatprep.mubr.bf16.mxu0 0
        %4494 = vmatmul.mubr.bf16.gmra.mrb[0].mxu0 %v4297
        %v4495 = vpop.f32.mrb[0].mxu0
        %v4496 = vadd.f32 0.0, %v4495
        %v4497 = vpop.f32.mrb[0].mxu0
        %v4498 = vpop.f32.mrb[0].mxu0
        %v4499 = vadd.f32 0.0, %v4498
        %v4500 = vpop.f32.mrb[0].mxu0
        %4501 = vmatprep.mubr.bf16.mxu0 0
        %4502 = vmatmul.mubr.bf16.gmra.mrb[0].mxu0 %v4298
        %v4503 = vpop.f32.mrb[0].mxu0
        %v4504 = vadd.f32 0.0, %v4503
        %v4505 = vpop.f32.mrb[0].mxu0
        %v4506 = vpop.f32.mrb[0].mxu0
        %v4507 = vadd.f32 0.0, %v4506
        %v4508 = vpop.f32.mrb[0].mxu0
        %4509 = vmatprep.mubr.bf16.mxu0 0
        %4510 = vmatmul.mubr.bf16.gmra.mrb[0].mxu0 %v4299
        %v4511 = vpop.f32.mrb[0].mxu0
        %v4512 = vadd.f32 0.0, %v4511
        %v4513 = vpop.f32.mrb[0].mxu0
        %v4514 = vpop.f32.mrb[0].mxu0
        %v4515 = vadd.f32 0.0, %v4514
        %v4516 = vpop.f32.mrb[0].mxu0
        %4517 = vmatprep.mubr.bf16.mxu0 0
        %4518 = vmatmul.mubr.bf16.gmra.mrb[0].mxu0 %v4300
        %v4519 = vpop.f32.mrb[0].mxu0
        %v4520 = vadd.f32 0.0, %v4519
        %v4521 = vpop.f32.mrb[0].mxu0
        %v4522 = vpop.f32.mrb[0].mxu0
        %v4523 = vadd.f32 0.0, %v4522
        %v4524 = vpop.f32.mrb[0].mxu0
        %4525 = vdwg.mxu0
        %v4526 = vadd.f32 %v4221, %v4400
        %v4527 = vadd.f32 %v4222, %v4403
        %v4528 = vadd.f32 %v4223, %v4408
        %v4529 = vadd.f32 %v4224, %v4411
        %v4530 = vadd.f32 %v4225, %v4416
        %v4531 = vadd.f32 %v4226, %v4419
        %v4532 = vadd.f32 %v4227, %v4424
        %v4533 = vadd.f32 %v4228, %v4427
        %v4534 = vadd.f32 %v4229, %v4432
        %v4535 = vadd.f32 %v4230, %v4435
        %v4536 = vadd.f32 %v4231, %v4440
        %v4537 = vadd.f32 %v4232, %v4443
        %v4538 = vadd.f32 %v4233, %v4448
        %v4539 = vadd.f32 %v4234, %v4451
        %v4540 = vadd.f32 %v4235, %v4456
        %v4541 = vadd.f32 %v4236, %v4459
        %v4542 = vadd.f32 %v4237, %v4464
        %v4543 = vadd.f32 %v4238, %v4467
        %v4544 = vadd.f32 %v4239, %v4472
        %v4545 = vadd.f32 %v4240, %v4475
        %v4546 = vadd.f32 %v4241, %v4480
        %v4547 = vadd.f32 %v4242, %v4483
        %v4548 = vadd.f32 %v4243, %v4488
        %v4549 = vadd.f32 %v4244, %v4491
        %v4550 = vadd.f32 %v4245, %v4496
        %v4551 = vadd.f32 %v4246, %v4499
        %v4552 = vadd.f32 %v4247, %v4504
        %v4553 = vadd.f32 %v4248, %v4507
        %v4554 = vadd.f32 %v4249, %v4512
        %v4555 = vadd.f32 %v4250, %v4515
        %v4556 = vadd.f32 %v4251, %v4520
        %v4557 = vadd.f32 %v4252, %v4523
        %v4558 = vld [vmem:[%s3032 + $0x2] sm:$0xff]
        %v4559 = vld [vmem:[%s3032 + $0xa] sm:$0xff]
        %v4560 = vld [vmem:[%s3032 + $0x1a] sm:$0xff]
        %v4561 = vld [vmem:[%s3032 + $0x22] sm:$0xff]
        %v4562 = vld [vmem:[%s3032 + $0x32] sm:$0xff]
        %v4563 = vld [vmem:[%s3032 + $0x3a] sm:$0xff]
        %v4564 = vld [vmem:[%s3032 + $0x4a] sm:$0xff]
        %v4565 = vld [vmem:[%s3032 + $0x52] sm:$0xff]
        %v4566 = vld [vmem:[%s3032 + $0x62] sm:$0xff]
        %v4567 = vld [vmem:[%s3032 + $0x6a] sm:$0xff]
        %v4568 = vld [vmem:[%s3032 + $0x7a] sm:$0xff]
        %v4569 = vld [vmem:[%s3032 + $0x82] sm:$0xff]
        %v4570 = vld [vmem:[%s3032 + $0x92] sm:$0xff]
        %v4571 = vld [vmem:[%s3032 + $0x9a] sm:$0xff]
        %v4572 = vld [vmem:[%s3032 + $0xaa] sm:$0xff]
        %v4573 = vld [vmem:[%s3032 + $0xb2] sm:$0xff]
        %v4574 = vld [vmem:[%s3032 + $0xc2] sm:$0xff]
        %v4575 = vld [vmem:[%s3032 + $0xca] sm:$0xff]
        %v4576 = vld [vmem:[%s3032 + $0xda] sm:$0xff]
        %v4577 = vld [vmem:[%s3032 + $0xe2] sm:$0xff]
        %v4578 = vld [vmem:[%s3032 + $0xf2] sm:$0xff]
        %v4579 = vld [vmem:[%s3032 + $0xfa] sm:$0xff]
        %v4580 = vld [vmem:[%s3032 + $0x10a] sm:$0xff]
        %v4581 = vld [vmem:[%s3032 + $0x112] sm:$0xff]
        %v4582 = vld [vmem:[%s3032 + $0x122] sm:$0xff]
        %v4583 = vld [vmem:[%s3032 + $0x12a] sm:$0xff]
        %v4584 = vld [vmem:[%s3032 + $0x13a] sm:$0xff]
        %v4585 = vld [vmem:[%s3032 + $0x142] sm:$0xff]
        %v4586 = vld [vmem:[%s3032 + $0x152] sm:$0xff]
        %v4587 = vld [vmem:[%s3032 + $0x15a] sm:$0xff]
        %v4588 = vld [vmem:[%s3032 + $0x16a] sm:$0xff]
        %v4589 = vld [vmem:[%s3032 + $0x172] sm:$0xff]
        %v4590 = vpack.c.bf16 %v4559, %v4558
        %v4591 = vpack.c.bf16 %v4561, %v4560
        %v4592 = vpack.c.bf16 %v4563, %v4562
        %v4593 = vpack.c.bf16 %v4565, %v4564
        %v4594 = vpack.c.bf16 %v4567, %v4566
        %v4595 = vpack.c.bf16 %v4569, %v4568
        %v4596 = vpack.c.bf16 %v4571, %v4570
        %v4597 = vpack.c.bf16 %v4573, %v4572
        %v4598 = vpack.c.bf16 %v4575, %v4574
        %v4599 = vpack.c.bf16 %v4577, %v4576
        %v4600 = vpack.c.bf16 %v4579, %v4578
        %v4601 = vpack.c.bf16 %v4581, %v4580
        %v4602 = vpack.c.bf16 %v4583, %v4582
        %v4603 = vpack.c.bf16 %v4585, %v4584
        %v4604 = vpack.c.bf16 %v4587, %v4586
        %v4605 = vpack.c.bf16 %v4589, %v4588
        %v4606 = vld [vmem:[%s3 + $0x140] sm:$0xf]
        %v4607 = vld [vmem:[%s3 + $0x144] sm:$0xf]
        %v4608 = vld [vmem:[%s3 + $0x148] sm:$0xf]
        %v4609 = vld [vmem:[%s3 + $0x14c] sm:$0xf]
        %v4610 = vld [vmem:[%s3 + $0x150] sm:$0xf]
        %v4611 = vld [vmem:[%s3 + $0x154] sm:$0xf]
        %v4612 = vld [vmem:[%s3 + $0x158] sm:$0xf]
        %v4613 = vld [vmem:[%s3 + $0x15c] sm:$0xf]
        %v4614 = vld [vmem:[%s3 + $0x160] sm:$0xf]
        %v4615 = vld [vmem:[%s3 + $0x164] sm:$0xf]
        %v4616 = vld [vmem:[%s3 + $0x168] sm:$0xf]
        %v4617 = vld [vmem:[%s3 + $0x16c] sm:$0xf]
        %v4618 = vld [vmem:[%s3 + $0x170] sm:$0xf]
        %v4619 = vld [vmem:[%s3 + $0x174] sm:$0xf]
        %v4620 = vld [vmem:[%s3 + $0x178] sm:$0xf]
        %v4621 = vld [vmem:[%s3 + $0x17c] sm:$0xf]
        %v4638 = vunpack.c.l.b16 %v4606
        %v4639 = vunpack.c.l.b16 %v4607
        %v4640 = vunpack.c.l.b16 %v4608
        %v4641 = vunpack.c.l.b16 %v4609
        %v4642 = vunpack.c.l.b16 %v4610
        %v4643 = vunpack.c.l.b16 %v4611
        %v4644 = vunpack.c.l.b16 %v4612
        %v4645 = vunpack.c.l.b16 %v4613
        %v4646 = vunpack.c.l.b16 %v4614
        %v4647 = vunpack.c.l.b16 %v4615
        %v4648 = vunpack.c.l.b16 %v4616
        %v4649 = vunpack.c.l.b16 %v4617
        %v4650 = vunpack.c.l.b16 %v4618
        %v4651 = vunpack.c.l.b16 %v4619
        %v4652 = vunpack.c.l.b16 %v4620
        %v4653 = vunpack.c.l.b16 %v4621
        %v4654 = vpack.c.b16 %v4639, %v4638
        %v4655 = vpack.c.b16 %v4641, %v4640
        %v4656 = vpack.c.b16 %v4643, %v4642
        %v4657 = vpack.c.b16 %v4645, %v4644
        %v4658 = vpack.c.b16 %v4647, %v4646
        %v4659 = vpack.c.b16 %v4649, %v4648
        %v4660 = vpack.c.b16 %v4651, %v4650
        %v4661 = vpack.c.b16 %v4653, %v4652
        %4670 = vmatprep.subr.bf16.mxu0 0
        %4671 = vmatpush1.bf16.msra.mxu0 %v4654
        %4672 = vmatprep.subr.bf16.mxu0 0
        %4673 = vmatpush1.bf16.msra.mxu0 %v4655
        %4674 = vmatprep.subr.bf16.mxu0 0
        %4675 = vmatpush1.bf16.msra.mxu0 %v4656
        %4676 = vmatprep.subr.bf16.mxu0 0
        %4677 = vmatpush1.bf16.msra.mxu0 %v4657
        %4678 = vmatprep.subr.bf16.mxu0 0
        %4679 = vmatpush1.bf16.msra.mxu0 %v4658
        %4680 = vmatprep.subr.bf16.mxu0 0
        %4681 = vmatpush1.bf16.msra.mxu0 %v4659
        %4682 = vmatprep.subr.bf16.mxu0 0
        %4683 = vmatpush1.bf16.msra.mxu0 %v4660
        %4684 = vmatprep.subr.bf16.mxu0 0
        %4685 = vmatpush1.bf16.msra.mxu0 %v4661
        %4686 = vmatprep.subr.bf16.mxu0 0
        %4687 = vmatpush1.bf16.msra.mxu0 0
        %4688 = vmatprep.subr.bf16.mxu0 0
        %4689 = vmatpush1.bf16.msra.mxu0 0
        %4690 = vmatprep.subr.bf16.mxu0 0
        %4691 = vmatpush1.bf16.msra.mxu0 0
        %4692 = vmatprep.subr.bf16.mxu0 0
        %4693 = vmatpush1.bf16.msra.mxu0 0
        %4694 = vmatprep.subr.bf16.mxu0 0
        %4695 = vmatpush1.bf16.msra.mxu0 0
        %4696 = vmatprep.subr.bf16.mxu0 0
        %4697 = vmatpush1.bf16.msra.mxu0 0
        %4698 = vmatprep.subr.bf16.mxu0 0
        %4699 = vmatpush1.bf16.msra.mxu0 0
        %4700 = vmatprep.subr.bf16.mxu0 0
        %4701 = vmatpush1.bf16.msra.mxu0 0
        %4702 = vmatprep.mubr.bf16.mxu0 0
        %4703 = vmatmul.mubr.bf16.gmra.mrb[0].mxu0 %v4590
        %v4704 = vpop.f32.mrb[0].mxu0
        %v4705 = vadd.f32 0.0, %v4704
        %v4706 = vpop.f32.mrb[0].mxu0
        %v4707 = vpop.f32.mrb[0].mxu0
        %v4708 = vadd.f32 0.0, %v4707
        %v4709 = vpop.f32.mrb[0].mxu0
        %4710 = vmatprep.mubr.bf16.mxu0 0
        %4711 = vmatmul.mubr.bf16.gmra.mrb[0].mxu0 %v4591
        %v4712 = vpop.f32.mrb[0].mxu0
        %v4713 = vadd.f32 0.0, %v4712
        %v4714 = vpop.f32.mrb[0].mxu0
        %v4715 = vpop.f32.mrb[0].mxu0
        %v4716 = vadd.f32 0.0, %v4715
        %v4717 = vpop.f32.mrb[0].mxu0
        %4718 = vmatprep.mubr.bf16.mxu0 0
        %4719 = vmatmul.mubr.bf16.gmra.mrb[0].mxu0 %v4592
        %v4720 = vpop.f32.mrb[0].mxu0
        %v4721 = vadd.f32 0.0, %v4720
        %v4722 = vpop.f32.mrb[0].mxu0
        %v4723 = vpop.f32.mrb[0].mxu0
        %v4724 = vadd.f32 0.0, %v4723
        %v4725 = vpop.f32.mrb[0].mxu0
        %4726 = vmatprep.mubr.bf16.mxu0 0
        %4727 = vmatmul.mubr.bf16.gmra.mrb[0].mxu0 %v4593
        %v4728 = vpop.f32.mrb[0].mxu0
        %v4729 = vadd.f32 0.0, %v4728
        %v4730 = vpop.f32.mrb[0].mxu0
        %v4731 = vpop.f32.mrb[0].mxu0
        %v4732 = vadd.f32 0.0, %v4731
        %v4733 = vpop.f32.mrb[0].mxu0
        %4734 = vmatprep.mubr.bf16.mxu0 0
        %4735 = vmatmul.mubr.bf16.gmra.mrb[0].mxu0 %v4594
        %v4736 = vpop.f32.mrb[0].mxu0
        %v4737 = vadd.f32 0.0, %v4736
        %v4738 = vpop.f32.mrb[0].mxu0
        %v4739 = vpop.f32.mrb[0].mxu0
        %v4740 = vadd.f32 0.0, %v4739
        %v4741 = vpop.f32.mrb[0].mxu0
        %4742 = vmatprep.mubr.bf16.mxu0 0
        %4743 = vmatmul.mubr.bf16.gmra.mrb[0].mxu0 %v4595
        %v4744 = vpop.f32.mrb[0].mxu0
        %v4745 = vadd.f32 0.0, %v4744
        %v4746 = vpop.f32.mrb[0].mxu0
        %v4747 = vpop.f32.mrb[0].mxu0
        %v4748 = vadd.f32 0.0, %v4747
        %v4749 = vpop.f32.mrb[0].mxu0
        %4750 = vmatprep.mubr.bf16.mxu0 0
        %4751 = vmatmul.mubr.bf16.gmra.mrb[0].mxu0 %v4596
        %v4752 = vpop.f32.mrb[0].mxu0
        %v4753 = vadd.f32 0.0, %v4752
        %v4754 = vpop.f32.mrb[0].mxu0
        %v4755 = vpop.f32.mrb[0].mxu0
        %v4756 = vadd.f32 0.0, %v4755
        %v4757 = vpop.f32.mrb[0].mxu0
        %4758 = vmatprep.mubr.bf16.mxu0 0
        %4759 = vmatmul.mubr.bf16.gmra.mrb[0].mxu0 %v4597
        %v4760 = vpop.f32.mrb[0].mxu0
        %v4761 = vadd.f32 0.0, %v4760
        %v4762 = vpop.f32.mrb[0].mxu0
        %v4763 = vpop.f32.mrb[0].mxu0
        %v4764 = vadd.f32 0.0, %v4763
        %v4765 = vpop.f32.mrb[0].mxu0
        %4766 = vmatprep.mubr.bf16.mxu0 0
        %4767 = vmatmul.mubr.bf16.gmra.mrb[0].mxu0 %v4598
        %v4768 = vpop.f32.mrb[0].mxu0
        %v4769 = vadd.f32 0.0, %v4768
        %v4770 = vpop.f32.mrb[0].mxu0
        %v4771 = vpop.f32.mrb[0].mxu0
        %v4772 = vadd.f32 0.0, %v4771
        %v4773 = vpop.f32.mrb[0].mxu0
        %4774 = vmatprep.mubr.bf16.mxu0 0
        %4775 = vmatmul.mubr.bf16.gmra.mrb[0].mxu0 %v4599
        %v4776 = vpop.f32.mrb[0].mxu0
        %v4777 = vadd.f32 0.0, %v4776
        %v4778 = vpop.f32.mrb[0].mxu0
        %v4779 = vpop.f32.mrb[0].mxu0
        %v4780 = vadd.f32 0.0, %v4779
        %v4781 = vpop.f32.mrb[0].mxu0
        %4782 = vmatprep.mubr.bf16.mxu0 0
        %4783 = vmatmul.mubr.bf16.gmra.mrb[0].mxu0 %v4600
        %v4784 = vpop.f32.mrb[0].mxu0
        %v4785 = vadd.f32 0.0, %v4784
        %v4786 = vpop.f32.mrb[0].mxu0
        %v4787 = vpop.f32.mrb[0].mxu0
        %v4788 = vadd.f32 0.0, %v4787
        %v4789 = vpop.f32.mrb[0].mxu0
        %4790 = vmatprep.mubr.bf16.mxu0 0
        %4791 = vmatmul.mubr.bf16.gmra.mrb[0].mxu0 %v4601
        %v4792 = vpop.f32.mrb[0].mxu0
        %v4793 = vadd.f32 0.0, %v4792
        %v4794 = vpop.f32.mrb[0].mxu0
        %v4795 = vpop.f32.mrb[0].mxu0
        %v4796 = vadd.f32 0.0, %v4795
        %v4797 = vpop.f32.mrb[0].mxu0
        %4798 = vmatprep.mubr.bf16.mxu0 0
        %4799 = vmatmul.mubr.bf16.gmra.mrb[0].mxu0 %v4602
        %v4800 = vpop.f32.mrb[0].mxu0
        %v4801 = vadd.f32 0.0, %v4800
        %v4802 = vpop.f32.mrb[0].mxu0
        %v4803 = vpop.f32.mrb[0].mxu0
        %v4804 = vadd.f32 0.0, %v4803
        %v4805 = vpop.f32.mrb[0].mxu0
        %4806 = vmatprep.mubr.bf16.mxu0 0
        %4807 = vmatmul.mubr.bf16.gmra.mrb[0].mxu0 %v4603
        %v4808 = vpop.f32.mrb[0].mxu0
        %v4809 = vadd.f32 0.0, %v4808
        %v4810 = vpop.f32.mrb[0].mxu0
        %v4811 = vpop.f32.mrb[0].mxu0
        %v4812 = vadd.f32 0.0, %v4811
        %v4813 = vpop.f32.mrb[0].mxu0
        %4814 = vmatprep.mubr.bf16.mxu0 0
        %4815 = vmatmul.mubr.bf16.gmra.mrb[0].mxu0 %v4604
        %v4816 = vpop.f32.mrb[0].mxu0
        %v4817 = vadd.f32 0.0, %v4816
        %v4818 = vpop.f32.mrb[0].mxu0
        %v4819 = vpop.f32.mrb[0].mxu0
        %v4820 = vadd.f32 0.0, %v4819
        %v4821 = vpop.f32.mrb[0].mxu0
        %4822 = vmatprep.mubr.bf16.mxu0 0
        %4823 = vmatmul.mubr.bf16.gmra.mrb[0].mxu0 %v4605
        %v4824 = vpop.f32.mrb[0].mxu0
        %v4825 = vadd.f32 0.0, %v4824
        %v4826 = vpop.f32.mrb[0].mxu0
        %v4827 = vpop.f32.mrb[0].mxu0
        %v4828 = vadd.f32 0.0, %v4827
        %v4829 = vpop.f32.mrb[0].mxu0
        %4830 = vdwg.mxu0
        %v4831 = vadd.f32 %v4526, %v4705
        %v4832 = vadd.f32 %v4527, %v4708
        %v4833 = vadd.f32 %v4528, %v4713
        %v4834 = vadd.f32 %v4529, %v4716
        %v4835 = vadd.f32 %v4530, %v4721
        %v4836 = vadd.f32 %v4531, %v4724
        %v4837 = vadd.f32 %v4532, %v4729
        %v4838 = vadd.f32 %v4533, %v4732
        %v4839 = vadd.f32 %v4534, %v4737
        %v4840 = vadd.f32 %v4535, %v4740
        %v4841 = vadd.f32 %v4536, %v4745
        %v4842 = vadd.f32 %v4537, %v4748
        %v4843 = vadd.f32 %v4538, %v4753
        %v4844 = vadd.f32 %v4539, %v4756
        %v4845 = vadd.f32 %v4540, %v4761
        %v4846 = vadd.f32 %v4541, %v4764
        %v4847 = vadd.f32 %v4542, %v4769
        %v4848 = vadd.f32 %v4543, %v4772
        %v4849 = vadd.f32 %v4544, %v4777
        %v4850 = vadd.f32 %v4545, %v4780
        %v4851 = vadd.f32 %v4546, %v4785
        %v4852 = vadd.f32 %v4547, %v4788
        %v4853 = vadd.f32 %v4548, %v4793
        %v4854 = vadd.f32 %v4549, %v4796
        %v4855 = vadd.f32 %v4550, %v4801
        %v4856 = vadd.f32 %v4551, %v4804
        %v4857 = vadd.f32 %v4552, %v4809
        %v4858 = vadd.f32 %v4553, %v4812
        %v4859 = vadd.f32 %v4554, %v4817
        %v4860 = vadd.f32 %v4555, %v4820
        %v4861 = vadd.f32 %v4556, %v4825
        %v4862 = vadd.f32 %v4557, %v4828
        %s4863 = scalar_lea.vmem [#allocation2], 48
        %v4864 = vld [vmem:[%s4863] sm:$0xff]
        %v4865 = vld [vmem:[%s4863 + $0x8] sm:$0xff]
        %v4866 = vld [vmem:[%s4863 + $0x18] sm:$0xff]
        %v4867 = vld [vmem:[%s4863 + $0x20] sm:$0xff]
        %v4868 = vld [vmem:[%s4863 + $0x30] sm:$0xff]
        %v4869 = vld [vmem:[%s4863 + $0x38] sm:$0xff]
        %v4870 = vld [vmem:[%s4863 + $0x48] sm:$0xff]
        %v4871 = vld [vmem:[%s4863 + $0x50] sm:$0xff]
        %v4872 = vld [vmem:[%s4863 + $0x60] sm:$0xff]
        %v4873 = vld [vmem:[%s4863 + $0x68] sm:$0xff]
        %v4874 = vld [vmem:[%s4863 + $0x78] sm:$0xff]
        %v4875 = vld [vmem:[%s4863 + $0x80] sm:$0xff]
        %v4876 = vld [vmem:[%s4863 + $0x90] sm:$0xff]
        %v4877 = vld [vmem:[%s4863 + $0x98] sm:$0xff]
        %v4878 = vld [vmem:[%s4863 + $0xa8] sm:$0xff]
        %v4879 = vld [vmem:[%s4863 + $0xb0] sm:$0xff]
        %v4880 = vld [vmem:[%s4863 + $0xc0] sm:$0xff]
        %v4881 = vld [vmem:[%s4863 + $0xc8] sm:$0xff]
        %v4882 = vld [vmem:[%s4863 + $0xd8] sm:$0xff]
        %v4883 = vld [vmem:[%s4863 + $0xe0] sm:$0xff]
        %v4884 = vld [vmem:[%s4863 + $0xf0] sm:$0xff]
        %v4885 = vld [vmem:[%s4863 + $0xf8] sm:$0xff]
        %v4886 = vld [vmem:[%s4863 + $0x108] sm:$0xff]
        %v4887 = vld [vmem:[%s4863 + $0x110] sm:$0xff]
        %v4888 = vld [vmem:[%s4863 + $0x120] sm:$0xff]
        %v4889 = vld [vmem:[%s4863 + $0x128] sm:$0xff]
        %v4890 = vld [vmem:[%s4863 + $0x138] sm:$0xff]
        %v4891 = vld [vmem:[%s4863 + $0x140] sm:$0xff]
        %v4892 = vld [vmem:[%s4863 + $0x150] sm:$0xff]
        %v4893 = vld [vmem:[%s4863 + $0x158] sm:$0xff]
        %v4894 = vld [vmem:[%s4863 + $0x168] sm:$0xff]
        %v4895 = vld [vmem:[%s4863 + $0x170] sm:$0xff]
        %v4896 = vpack.c.bf16 %v4865, %v4864
        %v4897 = vpack.c.bf16 %v4867, %v4866
        %v4898 = vpack.c.bf16 %v4869, %v4868
        %v4899 = vpack.c.bf16 %v4871, %v4870
        %v4900 = vpack.c.bf16 %v4873, %v4872
        %v4901 = vpack.c.bf16 %v4875, %v4874
        %v4902 = vpack.c.bf16 %v4877, %v4876
        %v4903 = vpack.c.bf16 %v4879, %v4878
        %v4904 = vpack.c.bf16 %v4881, %v4880
        %v4905 = vpack.c.bf16 %v4883, %v4882
        %v4906 = vpack.c.bf16 %v4885, %v4884
        %v4907 = vpack.c.bf16 %v4887, %v4886
        %v4908 = vpack.c.bf16 %v4889, %v4888
        %v4909 = vpack.c.bf16 %v4891, %v4890
        %v4910 = vpack.c.bf16 %v4893, %v4892
        %v4911 = vpack.c.bf16 %v4895, %v4894
        %v4912 = vld [vmem:[%s3 + $0x180] sm:$0xf]
        %v4913 = vld [vmem:[%s3 + $0x184] sm:$0xf]
        %v4914 = vld [vmem:[%s3 + $0x188] sm:$0xf]
        %v4915 = vld [vmem:[%s3 + $0x18c] sm:$0xf]
        %v4916 = vld [vmem:[%s3 + $0x190] sm:$0xf]
        %v4917 = vld [vmem:[%s3 + $0x194] sm:$0xf]
        %v4918 = vld [vmem:[%s3 + $0x198] sm:$0xf]
        %v4919 = vld [vmem:[%s3 + $0x19c] sm:$0xf]
        %v4920 = vld [vmem:[%s3 + $0x1a0] sm:$0xf]
        %v4921 = vld [vmem:[%s3 + $0x1a4] sm:$0xf]
        %v4922 = vld [vmem:[%s3 + $0x1a8] sm:$0xf]
        %v4923 = vld [vmem:[%s3 + $0x1ac] sm:$0xf]
        %v4924 = vld [vmem:[%s3 + $0x1b0] sm:$0xf]
        %v4925 = vld [vmem:[%s3 + $0x1b4] sm:$0xf]
        %v4926 = vld [vmem:[%s3 + $0x1b8] sm:$0xf]
        %v4927 = vld [vmem:[%s3 + $0x1bc] sm:$0xf]
        %v4944 = vunpack.c.l.b16 %v4912
        %v4945 = vunpack.c.l.b16 %v4913
        %v4946 = vunpack.c.l.b16 %v4914
        %v4947 = vunpack.c.l.b16 %v4915
        %v4948 = vunpack.c.l.b16 %v4916
        %v4949 = vunpack.c.l.b16 %v4917
        %v4950 = vunpack.c.l.b16 %v4918
        %v4951 = vunpack.c.l.b16 %v4919
        %v4952 = vunpack.c.l.b16 %v4920
        %v4953 = vunpack.c.l.b16 %v4921
        %v4954 = vunpack.c.l.b16 %v4922
        %v4955 = vunpack.c.l.b16 %v4923
        %v4956 = vunpack.c.l.b16 %v4924
        %v4957 = vunpack.c.l.b16 %v4925
        %v4958 = vunpack.c.l.b16 %v4926
        %v4959 = vunpack.c.l.b16 %v4927
        %v4960 = vpack.c.b16 %v4945, %v4944
        %v4961 = vpack.c.b16 %v4947, %v4946
        %v4962 = vpack.c.b16 %v4949, %v4948
        %v4963 = vpack.c.b16 %v4951, %v4950
        %v4964 = vpack.c.b16 %v4953, %v4952
        %v4965 = vpack.c.b16 %v4955, %v4954
        %v4966 = vpack.c.b16 %v4957, %v4956
        %v4967 = vpack.c.b16 %v4959, %v4958
        %4976 = vmatprep.subr.bf16.mxu0 0
        %4977 = vmatpush1.bf16.msra.mxu0 %v4960
        %4978 = vmatprep.subr.bf16.mxu0 0
        %4979 = vmatpush1.bf16.msra.mxu0 %v4961
        %4980 = vmatprep.subr.bf16.mxu0 0
        %4981 = vmatpush1.bf16.msra.mxu0 %v4962
        %4982 = vmatprep.subr.bf16.mxu0 0
        %4983 = vmatpush1.bf16.msra.mxu0 %v4963
        %4984 = vmatprep.subr.bf16.mxu0 0
        %4985 = vmatpush1.bf16.msra.mxu0 %v4964
        %4986 = vmatprep.subr.bf16.mxu0 0
        %4987 = vmatpush1.bf16.msra.mxu0 %v4965
        %4988 = vmatprep.subr.bf16.mxu0 0
        %4989 = vmatpush1.bf16.msra.mxu0 %v4966
        %4990 = vmatprep.subr.bf16.mxu0 0
        %4991 = vmatpush1.bf16.msra.mxu0 %v4967
        %4992 = vmatprep.subr.bf16.mxu0 0
        %4993 = vmatpush1.bf16.msra.mxu0 0
        %4994 = vmatprep.subr.bf16.mxu0 0
        %4995 = vmatpush1.bf16.msra.mxu0 0
        %4996 = vmatprep.subr.bf16.mxu0 0
        %4997 = vmatpush1.bf16.msra.mxu0 0
        %4998 = vmatprep.subr.bf16.mxu0 0
        %4999 = vmatpush1.bf16.msra.mxu0 0
        %5000 = vmatprep.subr.bf16.mxu0 0
        %5001 = vmatpush1.bf16.msra.mxu0 0
        %5002 = vmatprep.subr.bf16.mxu0 0
        %5003 = vmatpush1.bf16.msra.mxu0 0
        %5004 = vmatprep.subr.bf16.mxu0 0
        %5005 = vmatpush1.bf16.msra.mxu0 0
        %5006 = vmatprep.subr.bf16.mxu0 0
        %5007 = vmatpush1.bf16.msra.mxu0 0
        %5008 = vmatprep.mubr.bf16.mxu0 0
        %5009 = vmatmul.mubr.bf16.gmra.mrb[0].mxu0 %v4896
        %v5010 = vpop.f32.mrb[0].mxu0
        %v5011 = vadd.f32 0.0, %v5010
        %v5012 = vpop.f32.mrb[0].mxu0
        %v5013 = vpop.f32.mrb[0].mxu0
        %v5014 = vadd.f32 0.0, %v5013
        %v5015 = vpop.f32.mrb[0].mxu0
        %5016 = vmatprep.mubr.bf16.mxu0 0
        %5017 = vmatmul.mubr.bf16.gmra.mrb[0].mxu0 %v4897
        %v5018 = vpop.f32.mrb[0].mxu0
        %v5019 = vadd.f32 0.0, %v5018
        %v5020 = vpop.f32.mrb[0].mxu0
        %v5021 = vpop.f32.mrb[0].mxu0
        %v5022 = vadd.f32 0.0, %v5021
        %v5023 = vpop.f32.mrb[0].mxu0
        %5024 = vmatprep.mubr.bf16.mxu0 0
        %5025 = vmatmul.mubr.bf16.gmra.mrb[0].mxu0 %v4898
        %v5026 = vpop.f32.mrb[0].mxu0
        %v5027 = vadd.f32 0.0, %v5026
        %v5028 = vpop.f32.mrb[0].mxu0
        %v5029 = vpop.f32.mrb[0].mxu0
        %v5030 = vadd.f32 0.0, %v5029
        %v5031 = vpop.f32.mrb[0].mxu0
        %5032 = vmatprep.mubr.bf16.mxu0 0
        %5033 = vmatmul.mubr.bf16.gmra.mrb[0].mxu0 %v4899
        %v5034 = vpop.f32.mrb[0].mxu0
        %v5035 = vadd.f32 0.0, %v5034
        %v5036 = vpop.f32.mrb[0].mxu0
        %v5037 = vpop.f32.mrb[0].mxu0
        %v5038 = vadd.f32 0.0, %v5037
        %v5039 = vpop.f32.mrb[0].mxu0
        %5040 = vmatprep.mubr.bf16.mxu0 0
        %5041 = vmatmul.mubr.bf16.gmra.mrb[0].mxu0 %v4900
        %v5042 = vpop.f32.mrb[0].mxu0
        %v5043 = vadd.f32 0.0, %v5042
        %v5044 = vpop.f32.mrb[0].mxu0
        %v5045 = vpop.f32.mrb[0].mxu0
        %v5046 = vadd.f32 0.0, %v5045
        %v5047 = vpop.f32.mrb[0].mxu0
        %5048 = vmatprep.mubr.bf16.mxu0 0
        %5049 = vmatmul.mubr.bf16.gmra.mrb[0].mxu0 %v4901
        %v5050 = vpop.f32.mrb[0].mxu0
        %v5051 = vadd.f32 0.0, %v5050
        %v5052 = vpop.f32.mrb[0].mxu0
        %v5053 = vpop.f32.mrb[0].mxu0
        %v5054 = vadd.f32 0.0, %v5053
        %v5055 = vpop.f32.mrb[0].mxu0
        %5056 = vmatprep.mubr.bf16.mxu0 0
        %5057 = vmatmul.mubr.bf16.gmra.mrb[0].mxu0 %v4902
        %v5058 = vpop.f32.mrb[0].mxu0
        %v5059 = vadd.f32 0.0, %v5058
        %v5060 = vpop.f32.mrb[0].mxu0
        %v5061 = vpop.f32.mrb[0].mxu0
        %v5062 = vadd.f32 0.0, %v5061
        %v5063 = vpop.f32.mrb[0].mxu0
        %5064 = vmatprep.mubr.bf16.mxu0 0
        %5065 = vmatmul.mubr.bf16.gmra.mrb[0].mxu0 %v4903
        %v5066 = vpop.f32.mrb[0].mxu0
        %v5067 = vadd.f32 0.0, %v5066
        %v5068 = vpop.f32.mrb[0].mxu0
        %v5069 = vpop.f32.mrb[0].mxu0
        %v5070 = vadd.f32 0.0, %v5069
        %v5071 = vpop.f32.mrb[0].mxu0
        %5072 = vmatprep.mubr.bf16.mxu0 0
        %5073 = vmatmul.mubr.bf16.gmra.mrb[0].mxu0 %v4904
        %v5074 = vpop.f32.mrb[0].mxu0
        %v5075 = vadd.f32 0.0, %v5074
        %v5076 = vpop.f32.mrb[0].mxu0
        %v5077 = vpop.f32.mrb[0].mxu0
        %v5078 = vadd.f32 0.0, %v5077
        %v5079 = vpop.f32.mrb[0].mxu0
        %5080 = vmatprep.mubr.bf16.mxu0 0
        %5081 = vmatmul.mubr.bf16.gmra.mrb[0].mxu0 %v4905
        %v5082 = vpop.f32.mrb[0].mxu0
        %v5083 = vadd.f32 0.0, %v5082
        %v5084 = vpop.f32.mrb[0].mxu0
        %v5085 = vpop.f32.mrb[0].mxu0
        %v5086 = vadd.f32 0.0, %v5085
        %v5087 = vpop.f32.mrb[0].mxu0
        %5088 = vmatprep.mubr.bf16.mxu0 0
        %5089 = vmatmul.mubr.bf16.gmra.mrb[0].mxu0 %v4906
        %v5090 = vpop.f32.mrb[0].mxu0
        %v5091 = vadd.f32 0.0, %v5090
        %v5092 = vpop.f32.mrb[0].mxu0
        %v5093 = vpop.f32.mrb[0].mxu0
        %v5094 = vadd.f32 0.0, %v5093
        %v5095 = vpop.f32.mrb[0].mxu0
        %5096 = vmatprep.mubr.bf16.mxu0 0
        %5097 = vmatmul.mubr.bf16.gmra.mrb[0].mxu0 %v4907
        %v5098 = vpop.f32.mrb[0].mxu0
        %v5099 = vadd.f32 0.0, %v5098
        %v5100 = vpop.f32.mrb[0].mxu0
        %v5101 = vpop.f32.mrb[0].mxu0
        %v5102 = vadd.f32 0.0, %v5101
        %v5103 = vpop.f32.mrb[0].mxu0
        %5104 = vmatprep.mubr.bf16.mxu0 0
        %5105 = vmatmul.mubr.bf16.gmra.mrb[0].mxu0 %v4908
        %v5106 = vpop.f32.mrb[0].mxu0
        %v5107 = vadd.f32 0.0, %v5106
        %v5108 = vpop.f32.mrb[0].mxu0
        %v5109 = vpop.f32.mrb[0].mxu0
        %v5110 = vadd.f32 0.0, %v5109
        %v5111 = vpop.f32.mrb[0].mxu0
        %5112 = vmatprep.mubr.bf16.mxu0 0
        %5113 = vmatmul.mubr.bf16.gmra.mrb[0].mxu0 %v4909
        %v5114 = vpop.f32.mrb[0].mxu0
        %v5115 = vadd.f32 0.0, %v5114
        %v5116 = vpop.f32.mrb[0].mxu0
        %v5117 = vpop.f32.mrb[0].mxu0
        %v5118 = vadd.f32 0.0, %v5117
        %v5119 = vpop.f32.mrb[0].mxu0
        %5120 = vmatprep.mubr.bf16.mxu0 0
        %5121 = vmatmul.mubr.bf16.gmra.mrb[0].mxu0 %v4910
        %v5122 = vpop.f32.mrb[0].mxu0
        %v5123 = vadd.f32 0.0, %v5122
        %v5124 = vpop.f32.mrb[0].mxu0
        %v5125 = vpop.f32.mrb[0].mxu0
        %v5126 = vadd.f32 0.0, %v5125
        %v5127 = vpop.f32.mrb[0].mxu0
        %5128 = vmatprep.mubr.bf16.mxu0 0
        %5129 = vmatmul.mubr.bf16.gmra.mrb[0].mxu0 %v4911
        %v5130 = vpop.f32.mrb[0].mxu0
        %v5131 = vadd.f32 0.0, %v5130
        %v5132 = vpop.f32.mrb[0].mxu0
        %v5133 = vpop.f32.mrb[0].mxu0
        %v5134 = vadd.f32 0.0, %v5133
        %v5135 = vpop.f32.mrb[0].mxu0
        %5136 = vdwg.mxu0
        %v5137 = vadd.f32 %v4831, %v5011
        %v5138 = vadd.f32 %v4832, %v5014
        %v5139 = vadd.f32 %v4833, %v5019
        %v5140 = vadd.f32 %v4834, %v5022
        %v5141 = vadd.f32 %v4835, %v5027
        %v5142 = vadd.f32 %v4836, %v5030
        %v5143 = vadd.f32 %v4837, %v5035
        %v5144 = vadd.f32 %v4838, %v5038
        %v5145 = vadd.f32 %v4839, %v5043
        %v5146 = vadd.f32 %v4840, %v5046
        %v5147 = vadd.f32 %v4841, %v5051
        %v5148 = vadd.f32 %v4842, %v5054
        %v5149 = vadd.f32 %v4843, %v5059
        %v5150 = vadd.f32 %v4844, %v5062
        %v5151 = vadd.f32 %v4845, %v5067
        %v5152 = vadd.f32 %v4846, %v5070
        %v5153 = vadd.f32 %v4847, %v5075
        %v5154 = vadd.f32 %v4848, %v5078
        %v5155 = vadd.f32 %v4849, %v5083
        %v5156 = vadd.f32 %v4850, %v5086
        %v5157 = vadd.f32 %v4851, %v5091
        %v5158 = vadd.f32 %v4852, %v5094
        %v5159 = vadd.f32 %v4853, %v5099
        %v5160 = vadd.f32 %v4854, %v5102
        %v5161 = vadd.f32 %v4855, %v5107
        %v5162 = vadd.f32 %v4856, %v5110
        %v5163 = vadd.f32 %v4857, %v5115
        %v5164 = vadd.f32 %v4858, %v5118
        %v5165 = vadd.f32 %v4859, %v5123
        %v5166 = vadd.f32 %v4860, %v5126
        %v5167 = vadd.f32 %v4861, %v5131
        %v5168 = vadd.f32 %v4862, %v5134
        %v5169 = vld [vmem:[%s4863 + $0x1] sm:$0xff]
        %v5170 = vld [vmem:[%s4863 + $0x9] sm:$0xff]
        %v5171 = vld [vmem:[%s4863 + $0x19] sm:$0xff]
        %v5172 = vld [vmem:[%s4863 + $0x21] sm:$0xff]
        %v5173 = vld [vmem:[%s4863 + $0x31] sm:$0xff]
        %v5174 = vld [vmem:[%s4863 + $0x39] sm:$0xff]
        %v5175 = vld [vmem:[%s4863 + $0x49] sm:$0xff]
        %v5176 = vld [vmem:[%s4863 + $0x51] sm:$0xff]
        %v5177 = vld [vmem:[%s4863 + $0x61] sm:$0xff]
        %v5178 = vld [vmem:[%s4863 + $0x69] sm:$0xff]
        %v5179 = vld [vmem:[%s4863 + $0x79] sm:$0xff]
        %v5180 = vld [vmem:[%s4863 + $0x81] sm:$0xff]
        %v5181 = vld [vmem:[%s4863 + $0x91] sm:$0xff]
        %v5182 = vld [vmem:[%s4863 + $0x99] sm:$0xff]
        %v5183 = vld [vmem:[%s4863 + $0xa9] sm:$0xff]
        %v5184 = vld [vmem:[%s4863 + $0xb1] sm:$0xff]
        %v5185 = vld [vmem:[%s4863 + $0xc1] sm:$0xff]
        %v5186 = vld [vmem:[%s4863 + $0xc9] sm:$0xff]
        %v5187 = vld [vmem:[%s4863 + $0xd9] sm:$0xff]
        %v5188 = vld [vmem:[%s4863 + $0xe1] sm:$0xff]
        %v5189 = vld [vmem:[%s4863 + $0xf1] sm:$0xff]
        %v5190 = vld [vmem:[%s4863 + $0xf9] sm:$0xff]
        %v5191 = vld [vmem:[%s4863 + $0x109] sm:$0xff]
        %v5192 = vld [vmem:[%s4863 + $0x111] sm:$0xff]
        %v5193 = vld [vmem:[%s4863 + $0x121] sm:$0xff]
        %v5194 = vld [vmem:[%s4863 + $0x129] sm:$0xff]
        %v5195 = vld [vmem:[%s4863 + $0x139] sm:$0xff]
        %v5196 = vld [vmem:[%s4863 + $0x141] sm:$0xff]
        %v5197 = vld [vmem:[%s4863 + $0x151] sm:$0xff]
        %v5198 = vld [vmem:[%s4863 + $0x159] sm:$0xff]
        %v5199 = vld [vmem:[%s4863 + $0x169] sm:$0xff]
        %v5200 = vld [vmem:[%s4863 + $0x171] sm:$0xff]
        %v5201 = vpack.c.bf16 %v5170, %v5169
        %v5202 = vpack.c.bf16 %v5172, %v5171
        %v5203 = vpack.c.bf16 %v5174, %v5173
        %v5204 = vpack.c.bf16 %v5176, %v5175
        %v5205 = vpack.c.bf16 %v5178, %v5177
        %v5206 = vpack.c.bf16 %v5180, %v5179
        %v5207 = vpack.c.bf16 %v5182, %v5181
        %v5208 = vpack.c.bf16 %v5184, %v5183
        %v5209 = vpack.c.bf16 %v5186, %v5185
        %v5210 = vpack.c.bf16 %v5188, %v5187
        %v5211 = vpack.c.bf16 %v5190, %v5189
        %v5212 = vpack.c.bf16 %v5192, %v5191
        %v5213 = vpack.c.bf16 %v5194, %v5193
        %v5214 = vpack.c.bf16 %v5196, %v5195
        %v5215 = vpack.c.bf16 %v5198, %v5197
        %v5216 = vpack.c.bf16 %v5200, %v5199
        %v5217 = vld [vmem:[%s3 + $0x1c0] sm:$0xf]
        %v5218 = vld [vmem:[%s3 + $0x1c4] sm:$0xf]
        %v5219 = vld [vmem:[%s3 + $0x1c8] sm:$0xf]
        %v5220 = vld [vmem:[%s3 + $0x1cc] sm:$0xf]
        %v5221 = vld [vmem:[%s3 + $0x1d0] sm:$0xf]
        %v5222 = vld [vmem:[%s3 + $0x1d4] sm:$0xf]
        %v5223 = vld [vmem:[%s3 + $0x1d8] sm:$0xf]
        %v5224 = vld [vmem:[%s3 + $0x1dc] sm:$0xf]
        %v5225 = vld [vmem:[%s3 + $0x1e0] sm:$0xf]
        %v5226 = vld [vmem:[%s3 + $0x1e4] sm:$0xf]
        %v5227 = vld [vmem:[%s3 + $0x1e8] sm:$0xf]
        %v5228 = vld [vmem:[%s3 + $0x1ec] sm:$0xf]
        %v5229 = vld [vmem:[%s3 + $0x1f0] sm:$0xf]
        %v5230 = vld [vmem:[%s3 + $0x1f4] sm:$0xf]
        %v5231 = vld [vmem:[%s3 + $0x1f8] sm:$0xf]
        %v5232 = vld [vmem:[%s3 + $0x1fc] sm:$0xf]
        %v5249 = vunpack.c.l.b16 %v5217
        %v5250 = vunpack.c.l.b16 %v5218
        %v5251 = vunpack.c.l.b16 %v5219
        %v5252 = vunpack.c.l.b16 %v5220
        %v5253 = vunpack.c.l.b16 %v5221
        %v5254 = vunpack.c.l.b16 %v5222
        %v5255 = vunpack.c.l.b16 %v5223
        %v5256 = vunpack.c.l.b16 %v5224
        %v5257 = vunpack.c.l.b16 %v5225
        %v5258 = vunpack.c.l.b16 %v5226
        %v5259 = vunpack.c.l.b16 %v5227
        %v5260 = vunpack.c.l.b16 %v5228
        %v5261 = vunpack.c.l.b16 %v5229
        %v5262 = vunpack.c.l.b16 %v5230
        %v5263 = vunpack.c.l.b16 %v5231
        %v5264 = vunpack.c.l.b16 %v5232
        %v5265 = vpack.c.b16 %v5250, %v5249
        %v5266 = vpack.c.b16 %v5252, %v5251
        %v5267 = vpack.c.b16 %v5254, %v5253
        %v5268 = vpack.c.b16 %v5256, %v5255
        %v5269 = vpack.c.b16 %v5258, %v5257
        %v5270 = vpack.c.b16 %v5260, %v5259
        %v5271 = vpack.c.b16 %v5262, %v5261
        %v5272 = vpack.c.b16 %v5264, %v5263
        %5281 = vmatprep.subr.bf16.mxu0 0
        %5282 = vmatpush1.bf16.msra.mxu0 %v5265
        %5283 = vmatprep.subr.bf16.mxu0 0
        %5284 = vmatpush1.bf16.msra.mxu0 %v5266
        %5285 = vmatprep.subr.bf16.mxu0 0
        %5286 = vmatpush1.bf16.msra.mxu0 %v5267
        %5287 = vmatprep.subr.bf16.mxu0 0
        %5288 = vmatpush1.bf16.msra.mxu0 %v5268
        %5289 = vmatprep.subr.bf16.mxu0 0
        %5290 = vmatpush1.bf16.msra.mxu0 %v5269
        %5291 = vmatprep.subr.bf16.mxu0 0
        %5292 = vmatpush1.bf16.msra.mxu0 %v5270
        %5293 = vmatprep.subr.bf16.mxu0 0
        %5294 = vmatpush1.bf16.msra.mxu0 %v5271
        %5295 = vmatprep.subr.bf16.mxu0 0
        %5296 = vmatpush1.bf16.msra.mxu0 %v5272
        %5297 = vmatprep.subr.bf16.mxu0 0
        %5298 = vmatpush1.bf16.msra.mxu0 0
        %5299 = vmatprep.subr.bf16.mxu0 0
        %5300 = vmatpush1.bf16.msra.mxu0 0
        %5301 = vmatprep.subr.bf16.mxu0 0
        %5302 = vmatpush1.bf16.msra.mxu0 0
        %5303 = vmatprep.subr.bf16.mxu0 0
        %5304 = vmatpush1.bf16.msra.mxu0 0
        %5305 = vmatprep.subr.bf16.mxu0 0
        %5306 = vmatpush1.bf16.msra.mxu0 0
        %5307 = vmatprep.subr.bf16.mxu0 0
        %5308 = vmatpush1.bf16.msra.mxu0 0
        %5309 = vmatprep.subr.bf16.mxu0 0
        %5310 = vmatpush1.bf16.msra.mxu0 0
        %5311 = vmatprep.subr.bf16.mxu0 0
        %5312 = vmatpush1.bf16.msra.mxu0 0
        %5313 = vmatprep.mubr.bf16.mxu0 0
        %5314 = vmatmul.mubr.bf16.gmra.mrb[0].mxu0 %v5201
        %v5315 = vpop.f32.mrb[0].mxu0
        %v5316 = vadd.f32 0.0, %v5315
        %v5317 = vpop.f32.mrb[0].mxu0
        %v5318 = vpop.f32.mrb[0].mxu0
        %v5319 = vadd.f32 0.0, %v5318
        %v5320 = vpop.f32.mrb[0].mxu0
        %5321 = vmatprep.mubr.bf16.mxu0 0
        %5322 = vmatmul.mubr.bf16.gmra.mrb[0].mxu0 %v5202
        %v5323 = vpop.f32.mrb[0].mxu0
        %v5324 = vadd.f32 0.0, %v5323
        %v5325 = vpop.f32.mrb[0].mxu0
        %v5326 = vpop.f32.mrb[0].mxu0
        %v5327 = vadd.f32 0.0, %v5326
        %v5328 = vpop.f32.mrb[0].mxu0
        %5329 = vmatprep.mubr.bf16.mxu0 0
        %5330 = vmatmul.mubr.bf16.gmra.mrb[0].mxu0 %v5203
        %v5331 = vpop.f32.mrb[0].mxu0
        %v5332 = vadd.f32 0.0, %v5331
        %v5333 = vpop.f32.mrb[0].mxu0
        %v5334 = vpop.f32.mrb[0].mxu0
        %v5335 = vadd.f32 0.0, %v5334
        %v5336 = vpop.f32.mrb[0].mxu0
        %5337 = vmatprep.mubr.bf16.mxu0 0
        %5338 = vmatmul.mubr.bf16.gmra.mrb[0].mxu0 %v5204
        %v5339 = vpop.f32.mrb[0].mxu0
        %v5340 = vadd.f32 0.0, %v5339
        %v5341 = vpop.f32.mrb[0].mxu0
        %v5342 = vpop.f32.mrb[0].mxu0
        %v5343 = vadd.f32 0.0, %v5342
        %v5344 = vpop.f32.mrb[0].mxu0
        %5345 = vmatprep.mubr.bf16.mxu0 0
        %5346 = vmatmul.mubr.bf16.gmra.mrb[0].mxu0 %v5205
        %v5347 = vpop.f32.mrb[0].mxu0
        %v5348 = vadd.f32 0.0, %v5347
        %v5349 = vpop.f32.mrb[0].mxu0
        %v5350 = vpop.f32.mrb[0].mxu0
        %v5351 = vadd.f32 0.0, %v5350
        %v5352 = vpop.f32.mrb[0].mxu0
        %5353 = vmatprep.mubr.bf16.mxu0 0
        %5354 = vmatmul.mubr.bf16.gmra.mrb[0].mxu0 %v5206
        %v5355 = vpop.f32.mrb[0].mxu0
        %v5356 = vadd.f32 0.0, %v5355
        %v5357 = vpop.f32.mrb[0].mxu0
        %v5358 = vpop.f32.mrb[0].mxu0
        %v5359 = vadd.f32 0.0, %v5358
        %v5360 = vpop.f32.mrb[0].mxu0
        %5361 = vmatprep.mubr.bf16.mxu0 0
        %5362 = vmatmul.mubr.bf16.gmra.mrb[0].mxu0 %v5207
        %v5363 = vpop.f32.mrb[0].mxu0
        %v5364 = vadd.f32 0.0, %v5363
        %v5365 = vpop.f32.mrb[0].mxu0
        %v5366 = vpop.f32.mrb[0].mxu0
        %v5367 = vadd.f32 0.0, %v5366
        %v5368 = vpop.f32.mrb[0].mxu0
        %5369 = vmatprep.mubr.bf16.mxu0 0
        %5370 = vmatmul.mubr.bf16.gmra.mrb[0].mxu0 %v5208
        %v5371 = vpop.f32.mrb[0].mxu0
        %v5372 = vadd.f32 0.0, %v5371
        %v5373 = vpop.f32.mrb[0].mxu0
        %v5374 = vpop.f32.mrb[0].mxu0
        %v5375 = vadd.f32 0.0, %v5374
        %v5376 = vpop.f32.mrb[0].mxu0
        %5377 = vmatprep.mubr.bf16.mxu0 0
        %5378 = vmatmul.mubr.bf16.gmra.mrb[0].mxu0 %v5209
        %v5379 = vpop.f32.mrb[0].mxu0
        %v5380 = vadd.f32 0.0, %v5379
        %v5381 = vpop.f32.mrb[0].mxu0
        %v5382 = vpop.f32.mrb[0].mxu0
        %v5383 = vadd.f32 0.0, %v5382
        %v5384 = vpop.f32.mrb[0].mxu0
        %5385 = vmatprep.mubr.bf16.mxu0 0
        %5386 = vmatmul.mubr.bf16.gmra.mrb[0].mxu0 %v5210
        %v5387 = vpop.f32.mrb[0].mxu0
        %v5388 = vadd.f32 0.0, %v5387
        %v5389 = vpop.f32.mrb[0].mxu0
        %v5390 = vpop.f32.mrb[0].mxu0
        %v5391 = vadd.f32 0.0, %v5390
        %v5392 = vpop.f32.mrb[0].mxu0
        %5393 = vmatprep.mubr.bf16.mxu0 0
        %5394 = vmatmul.mubr.bf16.gmra.mrb[0].mxu0 %v5211
        %v5395 = vpop.f32.mrb[0].mxu0
        %v5396 = vadd.f32 0.0, %v5395
        %v5397 = vpop.f32.mrb[0].mxu0
        %v5398 = vpop.f32.mrb[0].mxu0
        %v5399 = vadd.f32 0.0, %v5398
        %v5400 = vpop.f32.mrb[0].mxu0
        %5401 = vmatprep.mubr.bf16.mxu0 0
        %5402 = vmatmul.mubr.bf16.gmra.mrb[0].mxu0 %v5212
        %v5403 = vpop.f32.mrb[0].mxu0
        %v5404 = vadd.f32 0.0, %v5403
        %v5405 = vpop.f32.mrb[0].mxu0
        %v5406 = vpop.f32.mrb[0].mxu0
        %v5407 = vadd.f32 0.0, %v5406
        %v5408 = vpop.f32.mrb[0].mxu0
        %5409 = vmatprep.mubr.bf16.mxu0 0
        %5410 = vmatmul.mubr.bf16.gmra.mrb[0].mxu0 %v5213
        %v5411 = vpop.f32.mrb[0].mxu0
        %v5412 = vadd.f32 0.0, %v5411
        %v5413 = vpop.f32.mrb[0].mxu0
        %v5414 = vpop.f32.mrb[0].mxu0
        %v5415 = vadd.f32 0.0, %v5414
        %v5416 = vpop.f32.mrb[0].mxu0
        %5417 = vmatprep.mubr.bf16.mxu0 0
        %5418 = vmatmul.mubr.bf16.gmra.mrb[0].mxu0 %v5214
        %v5419 = vpop.f32.mrb[0].mxu0
        %v5420 = vadd.f32 0.0, %v5419
        %v5421 = vpop.f32.mrb[0].mxu0
        %v5422 = vpop.f32.mrb[0].mxu0
        %v5423 = vadd.f32 0.0, %v5422
        %v5424 = vpop.f32.mrb[0].mxu0
        %5425 = vmatprep.mubr.bf16.mxu0 0
        %5426 = vmatmul.mubr.bf16.gmra.mrb[0].mxu0 %v5215
        %v5427 = vpop.f32.mrb[0].mxu0
        %v5428 = vadd.f32 0.0, %v5427
        %v5429 = vpop.f32.mrb[0].mxu0
        %v5430 = vpop.f32.mrb[0].mxu0
        %v5431 = vadd.f32 0.0, %v5430
        %v5432 = vpop.f32.mrb[0].mxu0
        %5433 = vmatprep.mubr.bf16.mxu0 0
        %5434 = vmatmul.mubr.bf16.gmra.mrb[0].mxu0 %v5216
        %v5435 = vpop.f32.mrb[0].mxu0
        %v5436 = vadd.f32 0.0, %v5435
        %v5437 = vpop.f32.mrb[0].mxu0
        %v5438 = vpop.f32.mrb[0].mxu0
        %v5439 = vadd.f32 0.0, %v5438
        %v5440 = vpop.f32.mrb[0].mxu0
        %5441 = vdwg.mxu0
        %v5442 = vadd.f32 %v5137, %v5316
        %v5443 = vadd.f32 %v5138, %v5319
        %v5444 = vadd.f32 %v5139, %v5324
        %v5445 = vadd.f32 %v5140, %v5327
        %v5446 = vadd.f32 %v5141, %v5332
        %v5447 = vadd.f32 %v5142, %v5335
        %v5448 = vadd.f32 %v5143, %v5340
        %v5449 = vadd.f32 %v5144, %v5343
        %v5450 = vadd.f32 %v5145, %v5348
        %v5451 = vadd.f32 %v5146, %v5351
        %v5452 = vadd.f32 %v5147, %v5356
        %v5453 = vadd.f32 %v5148, %v5359
        %v5454 = vadd.f32 %v5149, %v5364
        %v5455 = vadd.f32 %v5150, %v5367
        %v5456 = vadd.f32 %v5151, %v5372
        %v5457 = vadd.f32 %v5152, %v5375
        %v5458 = vadd.f32 %v5153, %v5380
        %v5459 = vadd.f32 %v5154, %v5383
        %v5460 = vadd.f32 %v5155, %v5388
        %v5461 = vadd.f32 %v5156, %v5391
        %v5462 = vadd.f32 %v5157, %v5396
        %v5463 = vadd.f32 %v5158, %v5399
        %v5464 = vadd.f32 %v5159, %v5404
        %v5465 = vadd.f32 %v5160, %v5407
        %v5466 = vadd.f32 %v5161, %v5412
        %v5467 = vadd.f32 %v5162, %v5415
        %v5468 = vadd.f32 %v5163, %v5420
        %v5469 = vadd.f32 %v5164, %v5423
        %v5470 = vadd.f32 %v5165, %v5428
        %v5471 = vadd.f32 %v5166, %v5431
        %v5472 = vadd.f32 %v5167, %v5436
        %v5473 = vadd.f32 %v5168, %v5439
        %v5474 = vld [vmem:[%s4863 + $0x2] sm:$0xff]
        %v5475 = vld [vmem:[%s4863 + $0xa] sm:$0xff]
        %v5476 = vld [vmem:[%s4863 + $0x1a] sm:$0xff]
        %v5477 = vld [vmem:[%s4863 + $0x22] sm:$0xff]
        %v5478 = vld [vmem:[%s4863 + $0x32] sm:$0xff]
        %v5479 = vld [vmem:[%s4863 + $0x3a] sm:$0xff]
        %v5480 = vld [vmem:[%s4863 + $0x4a] sm:$0xff]
        %v5481 = vld [vmem:[%s4863 + $0x52] sm:$0xff]
        %v5482 = vld [vmem:[%s4863 + $0x62] sm:$0xff]
        %v5483 = vld [vmem:[%s4863 + $0x6a] sm:$0xff]
        %v5484 = vld [vmem:[%s4863 + $0x7a] sm:$0xff]
        %v5485 = vld [vmem:[%s4863 + $0x82] sm:$0xff]
        %v5486 = vld [vmem:[%s4863 + $0x92] sm:$0xff]
        %v5487 = vld [vmem:[%s4863 + $0x9a] sm:$0xff]
        %v5488 = vld [vmem:[%s4863 + $0xaa] sm:$0xff]
        %v5489 = vld [vmem:[%s4863 + $0xb2] sm:$0xff]
        %v5490 = vld [vmem:[%s4863 + $0xc2] sm:$0xff]
        %v5491 = vld [vmem:[%s4863 + $0xca] sm:$0xff]
        %v5492 = vld [vmem:[%s4863 + $0xda] sm:$0xff]
        %v5493 = vld [vmem:[%s4863 + $0xe2] sm:$0xff]
        %v5494 = vld [vmem:[%s4863 + $0xf2] sm:$0xff]
        %v5495 = vld [vmem:[%s4863 + $0xfa] sm:$0xff]
        %v5496 = vld [vmem:[%s4863 + $0x10a] sm:$0xff]
        %v5497 = vld [vmem:[%s4863 + $0x112] sm:$0xff]
        %v5498 = vld [vmem:[%s4863 + $0x122] sm:$0xff]
        %v5499 = vld [vmem:[%s4863 + $0x12a] sm:$0xff]
        %v5500 = vld [vmem:[%s4863 + $0x13a] sm:$0xff]
        %v5501 = vld [vmem:[%s4863 + $0x142] sm:$0xff]
        %v5502 = vld [vmem:[%s4863 + $0x152] sm:$0xff]
        %v5503 = vld [vmem:[%s4863 + $0x15a] sm:$0xff]
        %v5504 = vld [vmem:[%s4863 + $0x16a] sm:$0xff]
        %v5505 = vld [vmem:[%s4863 + $0x172] sm:$0xff]
        %v5506 = vpack.c.bf16 %v5475, %v5474
        %v5507 = vpack.c.bf16 %v5477, %v5476
        %v5508 = vpack.c.bf16 %v5479, %v5478
        %v5509 = vpack.c.bf16 %v5481, %v5480
        %v5510 = vpack.c.bf16 %v5483, %v5482
        %v5511 = vpack.c.bf16 %v5485, %v5484
        %v5512 = vpack.c.bf16 %v5487, %v5486
        %v5513 = vpack.c.bf16 %v5489, %v5488
        %v5514 = vpack.c.bf16 %v5491, %v5490
        %v5515 = vpack.c.bf16 %v5493, %v5492
        %v5516 = vpack.c.bf16 %v5495, %v5494
        %v5517 = vpack.c.bf16 %v5497, %v5496
        %v5518 = vpack.c.bf16 %v5499, %v5498
        %v5519 = vpack.c.bf16 %v5501, %v5500
        %v5520 = vpack.c.bf16 %v5503, %v5502
        %v5521 = vpack.c.bf16 %v5505, %v5504
        %v5522 = vld [vmem:[%s3 + $0x200] sm:$0xf]
        %v5523 = vld [vmem:[%s3 + $0x204] sm:$0xf]
        %v5524 = vld [vmem:[%s3 + $0x208] sm:$0xf]
        %v5525 = vld [vmem:[%s3 + $0x20c] sm:$0xf]
        %v5526 = vld [vmem:[%s3 + $0x210] sm:$0xf]
        %v5527 = vld [vmem:[%s3 + $0x214] sm:$0xf]
        %v5528 = vld [vmem:[%s3 + $0x218] sm:$0xf]
        %v5529 = vld [vmem:[%s3 + $0x21c] sm:$0xf]
        %v5530 = vld [vmem:[%s3 + $0x220] sm:$0xf]
        %v5531 = vld [vmem:[%s3 + $0x224] sm:$0xf]
        %v5532 = vld [vmem:[%s3 + $0x228] sm:$0xf]
        %v5533 = vld [vmem:[%s3 + $0x22c] sm:$0xf]
        %v5534 = vld [vmem:[%s3 + $0x230] sm:$0xf]
        %v5535 = vld [vmem:[%s3 + $0x234] sm:$0xf]
        %v5536 = vld [vmem:[%s3 + $0x238] sm:$0xf]
        %v5537 = vld [vmem:[%s3 + $0x23c] sm:$0xf]
        %v5554 = vunpack.c.l.b16 %v5522
        %v5555 = vunpack.c.l.b16 %v5523
        %v5556 = vunpack.c.l.b16 %v5524
        %v5557 = vunpack.c.l.b16 %v5525
        %v5558 = vunpack.c.l.b16 %v5526
        %v5559 = vunpack.c.l.b16 %v5527
        %v5560 = vunpack.c.l.b16 %v5528
        %v5561 = vunpack.c.l.b16 %v5529
        %v5562 = vunpack.c.l.b16 %v5530
        %v5563 = vunpack.c.l.b16 %v5531
        %v5564 = vunpack.c.l.b16 %v5532
        %v5565 = vunpack.c.l.b16 %v5533
        %v5566 = vunpack.c.l.b16 %v5534
        %v5567 = vunpack.c.l.b16 %v5535
        %v5568 = vunpack.c.l.b16 %v5536
        %v5569 = vunpack.c.l.b16 %v5537
        %v5570 = vpack.c.b16 %v5555, %v5554
        %v5571 = vpack.c.b16 %v5557, %v5556
        %v5572 = vpack.c.b16 %v5559, %v5558
        %v5573 = vpack.c.b16 %v5561, %v5560
        %v5574 = vpack.c.b16 %v5563, %v5562
        %v5575 = vpack.c.b16 %v5565, %v5564
        %v5576 = vpack.c.b16 %v5567, %v5566
        %v5577 = vpack.c.b16 %v5569, %v5568
        %5586 = vmatprep.subr.bf16.mxu0 0
        %5587 = vmatpush1.bf16.msra.mxu0 %v5570
        %5588 = vmatprep.subr.bf16.mxu0 0
        %5589 = vmatpush1.bf16.msra.mxu0 %v5571
        %5590 = vmatprep.subr.bf16.mxu0 0
        %5591 = vmatpush1.bf16.msra.mxu0 %v5572
        %5592 = vmatprep.subr.bf16.mxu0 0
        %5593 = vmatpush1.bf16.msra.mxu0 %v5573
        %5594 = vmatprep.subr.bf16.mxu0 0
        %5595 = vmatpush1.bf16.msra.mxu0 %v5574
        %5596 = vmatprep.subr.bf16.mxu0 0
        %5597 = vmatpush1.bf16.msra.mxu0 %v5575
        %5598 = vmatprep.subr.bf16.mxu0 0
        %5599 = vmatpush1.bf16.msra.mxu0 %v5576
        %5600 = vmatprep.subr.bf16.mxu0 0
        %5601 = vmatpush1.bf16.msra.mxu0 %v5577
        %5602 = vmatprep.subr.bf16.mxu0 0
        %5603 = vmatpush1.bf16.msra.mxu0 0
        %5604 = vmatprep.subr.bf16.mxu0 0
        %5605 = vmatpush1.bf16.msra.mxu0 0
        %5606 = vmatprep.subr.bf16.mxu0 0
        %5607 = vmatpush1.bf16.msra.mxu0 0
        %5608 = vmatprep.subr.bf16.mxu0 0
        %5609 = vmatpush1.bf16.msra.mxu0 0
        %5610 = vmatprep.subr.bf16.mxu0 0
        %5611 = vmatpush1.bf16.msra.mxu0 0
        %5612 = vmatprep.subr.bf16.mxu0 0
        %5613 = vmatpush1.bf16.msra.mxu0 0
        %5614 = vmatprep.subr.bf16.mxu0 0
        %5615 = vmatpush1.bf16.msra.mxu0 0
        %5616 = vmatprep.subr.bf16.mxu0 0
        %5617 = vmatpush1.bf16.msra.mxu0 0
        %5618 = vmatprep.mubr.bf16.mxu0 0
        %5619 = vmatmul.mubr.bf16.gmra.mrb[0].mxu0 %v5506
        %v5620 = vpop.f32.mrb[0].mxu0
        %v5621 = vadd.f32 0.0, %v5620
        %v5622 = vpop.f32.mrb[0].mxu0
        %v5623 = vpop.f32.mrb[0].mxu0
        %v5624 = vadd.f32 0.0, %v5623
        %v5625 = vpop.f32.mrb[0].mxu0
        %5626 = vmatprep.mubr.bf16.mxu0 0
        %5627 = vmatmul.mubr.bf16.gmra.mrb[0].mxu0 %v5507
        %v5628 = vpop.f32.mrb[0].mxu0
        %v5629 = vadd.f32 0.0, %v5628
        %v5630 = vpop.f32.mrb[0].mxu0
        %v5631 = vpop.f32.mrb[0].mxu0
        %v5632 = vadd.f32 0.0, %v5631
        %v5633 = vpop.f32.mrb[0].mxu0
        %5634 = vmatprep.mubr.bf16.mxu0 0
        %5635 = vmatmul.mubr.bf16.gmra.mrb[0].mxu0 %v5508
        %v5636 = vpop.f32.mrb[0].mxu0
        %v5637 = vadd.f32 0.0, %v5636
        %v5638 = vpop.f32.mrb[0].mxu0
        %v5639 = vpop.f32.mrb[0].mxu0
        %v5640 = vadd.f32 0.0, %v5639
        %v5641 = vpop.f32.mrb[0].mxu0
        %5642 = vmatprep.mubr.bf16.mxu0 0
        %5643 = vmatmul.mubr.bf16.gmra.mrb[0].mxu0 %v5509
        %v5644 = vpop.f32.mrb[0].mxu0
        %v5645 = vadd.f32 0.0, %v5644
        %v5646 = vpop.f32.mrb[0].mxu0
        %v5647 = vpop.f32.mrb[0].mxu0
        %v5648 = vadd.f32 0.0, %v5647
        %v5649 = vpop.f32.mrb[0].mxu0
        %5650 = vmatprep.mubr.bf16.mxu0 0
        %5651 = vmatmul.mubr.bf16.gmra.mrb[0].mxu0 %v5510
        %v5652 = vpop.f32.mrb[0].mxu0
        %v5653 = vadd.f32 0.0, %v5652
        %v5654 = vpop.f32.mrb[0].mxu0
        %v5655 = vpop.f32.mrb[0].mxu0
        %v5656 = vadd.f32 0.0, %v5655
        %v5657 = vpop.f32.mrb[0].mxu0
        %5658 = vmatprep.mubr.bf16.mxu0 0
        %5659 = vmatmul.mubr.bf16.gmra.mrb[0].mxu0 %v5511
        %v5660 = vpop.f32.mrb[0].mxu0
        %v5661 = vadd.f32 0.0, %v5660
        %v5662 = vpop.f32.mrb[0].mxu0
        %v5663 = vpop.f32.mrb[0].mxu0
        %v5664 = vadd.f32 0.0, %v5663
        %v5665 = vpop.f32.mrb[0].mxu0
        %5666 = vmatprep.mubr.bf16.mxu0 0
        %5667 = vmatmul.mubr.bf16.gmra.mrb[0].mxu0 %v5512
        %v5668 = vpop.f32.mrb[0].mxu0
        %v5669 = vadd.f32 0.0, %v5668
        %v5670 = vpop.f32.mrb[0].mxu0
        %v5671 = vpop.f32.mrb[0].mxu0
        %v5672 = vadd.f32 0.0, %v5671
        %v5673 = vpop.f32.mrb[0].mxu0
        %5674 = vmatprep.mubr.bf16.mxu0 0
        %5675 = vmatmul.mubr.bf16.gmra.mrb[0].mxu0 %v5513
        %v5676 = vpop.f32.mrb[0].mxu0
        %v5677 = vadd.f32 0.0, %v5676
        %v5678 = vpop.f32.mrb[0].mxu0
        %v5679 = vpop.f32.mrb[0].mxu0
        %v5680 = vadd.f32 0.0, %v5679
        %v5681 = vpop.f32.mrb[0].mxu0
        %5682 = vmatprep.mubr.bf16.mxu0 0
        %5683 = vmatmul.mubr.bf16.gmra.mrb[0].mxu0 %v5514
        %v5684 = vpop.f32.mrb[0].mxu0
        %v5685 = vadd.f32 0.0, %v5684
        %v5686 = vpop.f32.mrb[0].mxu0
        %v5687 = vpop.f32.mrb[0].mxu0
        %v5688 = vadd.f32 0.0, %v5687
        %v5689 = vpop.f32.mrb[0].mxu0
        %5690 = vmatprep.mubr.bf16.mxu0 0
        %5691 = vmatmul.mubr.bf16.gmra.mrb[0].mxu0 %v5515
        %v5692 = vpop.f32.mrb[0].mxu0
        %v5693 = vadd.f32 0.0, %v5692
        %v5694 = vpop.f32.mrb[0].mxu0
        %v5695 = vpop.f32.mrb[0].mxu0
        %v5696 = vadd.f32 0.0, %v5695
        %v5697 = vpop.f32.mrb[0].mxu0
        %5698 = vmatprep.mubr.bf16.mxu0 0
        %5699 = vmatmul.mubr.bf16.gmra.mrb[0].mxu0 %v5516
        %v5700 = vpop.f32.mrb[0].mxu0
        %v5701 = vadd.f32 0.0, %v5700
        %v5702 = vpop.f32.mrb[0].mxu0
        %v5703 = vpop.f32.mrb[0].mxu0
        %v5704 = vadd.f32 0.0, %v5703
        %v5705 = vpop.f32.mrb[0].mxu0
        %5706 = vmatprep.mubr.bf16.mxu0 0
        %5707 = vmatmul.mubr.bf16.gmra.mrb[0].mxu0 %v5517
        %v5708 = vpop.f32.mrb[0].mxu0
        %v5709 = vadd.f32 0.0, %v5708
        %v5710 = vpop.f32.mrb[0].mxu0
        %v5711 = vpop.f32.mrb[0].mxu0
        %v5712 = vadd.f32 0.0, %v5711
        %v5713 = vpop.f32.mrb[0].mxu0
        %5714 = vmatprep.mubr.bf16.mxu0 0
        %5715 = vmatmul.mubr.bf16.gmra.mrb[0].mxu0 %v5518
        %v5716 = vpop.f32.mrb[0].mxu0
        %v5717 = vadd.f32 0.0, %v5716
        %v5718 = vpop.f32.mrb[0].mxu0
        %v5719 = vpop.f32.mrb[0].mxu0
        %v5720 = vadd.f32 0.0, %v5719
        %v5721 = vpop.f32.mrb[0].mxu0
        %5722 = vmatprep.mubr.bf16.mxu0 0
        %5723 = vmatmul.mubr.bf16.gmra.mrb[0].mxu0 %v5519
        %v5724 = vpop.f32.mrb[0].mxu0
        %v5725 = vadd.f32 0.0, %v5724
        %v5726 = vpop.f32.mrb[0].mxu0
        %v5727 = vpop.f32.mrb[0].mxu0
        %v5728 = vadd.f32 0.0, %v5727
        %v5729 = vpop.f32.mrb[0].mxu0
        %5730 = vmatprep.mubr.bf16.mxu0 0
        %5731 = vmatmul.mubr.bf16.gmra.mrb[0].mxu0 %v5520
        %v5732 = vpop.f32.mrb[0].mxu0
        %v5733 = vadd.f32 0.0, %v5732
        %v5734 = vpop.f32.mrb[0].mxu0
        %v5735 = vpop.f32.mrb[0].mxu0
        %v5736 = vadd.f32 0.0, %v5735
        %v5737 = vpop.f32.mrb[0].mxu0
        %5738 = vmatprep.mubr.bf16.mxu0 0
        %5739 = vmatmul.mubr.bf16.gmra.mrb[0].mxu0 %v5521
        %v5740 = vpop.f32.mrb[0].mxu0
        %v5741 = vadd.f32 0.0, %v5740
        %v5742 = vpop.f32.mrb[0].mxu0
        %v5743 = vpop.f32.mrb[0].mxu0
        %v5744 = vadd.f32 0.0, %v5743
        %v5745 = vpop.f32.mrb[0].mxu0
        %5746 = vdwg.mxu0
        %v5747 = vadd.f32 %v5442, %v5621
        %v5748 = vadd.f32 %v5443, %v5624
        %v5749 = vadd.f32 %v5444, %v5629
        %v5750 = vadd.f32 %v5445, %v5632
        %v5751 = vadd.f32 %v5446, %v5637
        %v5752 = vadd.f32 %v5447, %v5640
        %v5753 = vadd.f32 %v5448, %v5645
        %v5754 = vadd.f32 %v5449, %v5648
        %v5755 = vadd.f32 %v5450, %v5653
        %v5756 = vadd.f32 %v5451, %v5656
        %v5757 = vadd.f32 %v5452, %v5661
        %v5758 = vadd.f32 %v5453, %v5664
        %v5759 = vadd.f32 %v5454, %v5669
        %v5760 = vadd.f32 %v5455, %v5672
        %v5761 = vadd.f32 %v5456, %v5677
        %v5762 = vadd.f32 %v5457, %v5680
        %v5763 = vadd.f32 %v5458, %v5685
        %v5764 = vadd.f32 %v5459, %v5688
        %v5765 = vadd.f32 %v5460, %v5693
        %v5766 = vadd.f32 %v5461, %v5696
        %v5767 = vadd.f32 %v5462, %v5701
        %v5768 = vadd.f32 %v5463, %v5704
        %v5769 = vadd.f32 %v5464, %v5709
        %v5770 = vadd.f32 %v5465, %v5712
        %v5771 = vadd.f32 %v5466, %v5717
        %v5772 = vadd.f32 %v5467, %v5720
        %v5773 = vadd.f32 %v5468, %v5725
        %v5774 = vadd.f32 %v5469, %v5728
        %v5775 = vadd.f32 %v5470, %v5733
        %v5776 = vadd.f32 %v5471, %v5736
        %v5777 = vadd.f32 %v5472, %v5741
        %v5778 = vadd.f32 %v5473, %v5744
        %v5779 = vld [vmem:[%s4] sm:$0x1]
        %v5781 = vlaneseq
        %v5782 = vshrl.u32 %v5781, 7
        %v5783 = vsub.s32 0, %v5782
        %v5784 = vrot.slane %v5779, %v5783
        %v5786 = vadd.f32 %v5747, %v5784
        %v5787 = vadd.f32 %v5748, %v5784
        %v5788 = vadd.f32 %v5749, %v5784
        %v5789 = vadd.f32 %v5750, %v5784
        %v5790 = vadd.f32 %v5751, %v5784
        %v5791 = vadd.f32 %v5752, %v5784
        %v5792 = vadd.f32 %v5753, %v5784
        %v5793 = vadd.f32 %v5754, %v5784
        %v5794 = vadd.f32 %v5755, %v5784
        %v5795 = vadd.f32 %v5756, %v5784
        %v5796 = vadd.f32 %v5757, %v5784
        %v5797 = vadd.f32 %v5758, %v5784
        %v5798 = vadd.f32 %v5759, %v5784
        %v5799 = vadd.f32 %v5760, %v5784
        %v5800 = vadd.f32 %v5761, %v5784
        %v5801 = vadd.f32 %v5762, %v5784
        %v5802 = vadd.f32 %v5763, %v5784
        %v5803 = vadd.f32 %v5764, %v5784
        %v5804 = vadd.f32 %v5765, %v5784
        %v5805 = vadd.f32 %v5766, %v5784
        %v5806 = vadd.f32 %v5767, %v5784
        %v5807 = vadd.f32 %v5768, %v5784
        %v5808 = vadd.f32 %v5769, %v5784
        %v5809 = vadd.f32 %v5770, %v5784
        %v5810 = vadd.f32 %v5771, %v5784
        %v5811 = vadd.f32 %v5772, %v5784
        %v5812 = vadd.f32 %v5773, %v5784
        %v5813 = vadd.f32 %v5774, %v5784
        %v5814 = vadd.f32 %v5775, %v5784
        %v5815 = vadd.f32 %v5776, %v5784
        %v5816 = vadd.f32 %v5777, %v5784
        %v5817 = vadd.f32 %v5778, %v5784
        %v5818 = vadd.f32 %v5786, %v3065
        %v5819 = vadd.f32 %v5787, %v3066
        %v5820 = vadd.f32 %v5788, %v3067
        %v5821 = vadd.f32 %v5789, %v3068
        %v5822 = vadd.f32 %v5790, %v3069
        %v5823 = vadd.f32 %v5791, %v3070
        %v5824 = vadd.f32 %v5792, %v3071
        %v5825 = vadd.f32 %v5793, %v3072
        %v5826 = vadd.f32 %v5794, %v3073
        %v5827 = vadd.f32 %v5795, %v3074
        %v5828 = vadd.f32 %v5796, %v3075
        %v5829 = vadd.f32 %v5797, %v3076
        %v5830 = vadd.f32 %v5798, %v3077
        %v5831 = vadd.f32 %v5799, %v3078
        %v5832 = vadd.f32 %v5800, %v3079
        %v5833 = vadd.f32 %v5801, %v3080
        %v5834 = vadd.f32 %v5802, %v3081
        %v5835 = vadd.f32 %v5803, %v3082
        %v5836 = vadd.f32 %v5804, %v3083
        %v5837 = vadd.f32 %v5805, %v3084
        %v5838 = vadd.f32 %v5806, %v3085
        %v5839 = vadd.f32 %v5807, %v3086
        %v5840 = vadd.f32 %v5808, %v3087
        %v5841 = vadd.f32 %v5809, %v3088
        %v5842 = vadd.f32 %v5810, %v3089
        %v5843 = vadd.f32 %v5811, %v3090
        %v5844 = vadd.f32 %v5812, %v3091
        %v5845 = vadd.f32 %v5813, %v3092
        %v5846 = vadd.f32 %v5814, %v3093
        %v5847 = vadd.f32 %v5815, %v3094
        %v5848 = vadd.f32 %v5816, %v3095
        %v5849 = vadd.f32 %v5817, %v3096
        %v5850 = vmax.f32 %v5818, 0.0
        %v5851 = vmax.f32 %v5819, 0.0
        %v5852 = vmax.f32 %v5820, 0.0
        %v5853 = vmax.f32 %v5821, 0.0
        %v5854 = vmax.f32 %v5822, 0.0
        %v5855 = vmax.f32 %v5823, 0.0
        %v5856 = vmax.f32 %v5824, 0.0
        %v5857 = vmax.f32 %v5825, 0.0
        %v5858 = vmax.f32 %v5826, 0.0
        %v5859 = vmax.f32 %v5827, 0.0
        %v5860 = vmax.f32 %v5828, 0.0
        %v5861 = vmax.f32 %v5829, 0.0
        %v5862 = vmax.f32 %v5830, 0.0
        %v5863 = vmax.f32 %v5831, 0.0
        %v5864 = vmax.f32 %v5832, 0.0
        %v5865 = vmax.f32 %v5833, 0.0
        %v5866 = vmax.f32 %v5834, 0.0
        %v5867 = vmax.f32 %v5835, 0.0
        %v5868 = vmax.f32 %v5836, 0.0
        %v5869 = vmax.f32 %v5837, 0.0
        %v5870 = vmax.f32 %v5838, 0.0
        %v5871 = vmax.f32 %v5839, 0.0
        %v5872 = vmax.f32 %v5840, 0.0
        %v5873 = vmax.f32 %v5841, 0.0
        %v5874 = vmax.f32 %v5842, 0.0
        %v5875 = vmax.f32 %v5843, 0.0
        %v5876 = vmax.f32 %v5844, 0.0
        %v5877 = vmax.f32 %v5845, 0.0
        %v5878 = vmax.f32 %v5846, 0.0
        %v5879 = vmax.f32 %v5847, 0.0
        %v5880 = vmax.f32 %v5848, 0.0
        %v5881 = vmax.f32 %v5849, 0.0
        %5882 = vst [vmem:[%s217] sm:$0xff] %v5850
        %5883 = vst [vmem:[%s217 + $0x8] sm:$0xff] %v5851
        %5884 = vst [vmem:[%s217 + $0x10] sm:$0xff] %v5852
        %5885 = vst [vmem:[%s217 + $0x18] sm:$0xff] %v5853
        %5886 = vst [vmem:[%s217 + $0x20] sm:$0xff] %v5854
        %5887 = vst [vmem:[%s217 + $0x28] sm:$0xff] %v5855
        %5888 = vst [vmem:[%s217 + $0x30] sm:$0xff] %v5856
        %5889 = vst [vmem:[%s217 + $0x38] sm:$0xff] %v5857
        %5890 = vst [vmem:[%s217 + $0x40] sm:$0xff] %v5858
        %5891 = vst [vmem:[%s217 + $0x48] sm:$0xff] %v5859
        %5892 = vst [vmem:[%s217 + $0x50] sm:$0xff] %v5860
        %5893 = vst [vmem:[%s217 + $0x58] sm:$0xff] %v5861
        %5894 = vst [vmem:[%s217 + $0x60] sm:$0xff] %v5862
        %5895 = vst [vmem:[%s217 + $0x68] sm:$0xff] %v5863
        %5896 = vst [vmem:[%s217 + $0x70] sm:$0xff] %v5864
        %5897 = vst [vmem:[%s217 + $0x78] sm:$0xff] %v5865
        %5898 = vst [vmem:[%s217 + $0x80] sm:$0xff] %v5866
        %5899 = vst [vmem:[%s217 + $0x88] sm:$0xff] %v5867
        %5900 = vst [vmem:[%s217 + $0x90] sm:$0xff] %v5868
        %5901 = vst [vmem:[%s217 + $0x98] sm:$0xff] %v5869
        %5902 = vst [vmem:[%s217 + $0xa0] sm:$0xff] %v5870
        %5903 = vst [vmem:[%s217 + $0xa8] sm:$0xff] %v5871
        %5904 = vst [vmem:[%s217 + $0xb0] sm:$0xff] %v5872
        %5905 = vst [vmem:[%s217 + $0xb8] sm:$0xff] %v5873
        %5906 = vst [vmem:[%s217 + $0xc0] sm:$0xff] %v5874
        %5907 = vst [vmem:[%s217 + $0xc8] sm:$0xff] %v5875
        %5908 = vst [vmem:[%s217 + $0xd0] sm:$0xff] %v5876
        %5909 = vst [vmem:[%s217 + $0xd8] sm:$0xff] %v5877
        %5910 = vst [vmem:[%s217 + $0xe0] sm:$0xff] %v5878
        %5911 = vst [vmem:[%s217 + $0xe8] sm:$0xff] %v5879
        %5912 = vst [vmem:[%s217 + $0xf0] sm:$0xff] %v5880
        %5913 = vst [vmem:[%s217 + $0xf8] sm:$0xff] %v5881
        %s5914 = sand.u32 %s137, 1
        %s5915 = scalar_lea.sflag [#allocation4], %s5914
        %s5916 = sand.u32 %s137, 1
        %s5917 = smul.addr %s5916, 256
        %s5918 = scalar_lea.vmem [#allocation3], %s5917
        // Predicated region
        $region41: #{tpu_custom_call.1} parent=39 // pred_check
          %p5919 = pneg %p147
        $region42: #{tpu_custom_call.1} parent=39 // pred_check_branch
          %5921 = sbr.rel (%p5919) target = $region44
        $region43: #{tpu_custom_call.1} parent=39 // pred_region
          %s5923 = ssub.s32 4096, 4096
          %5924 = vsyncadd %s5915, %s5923
          %s5925 = smul.addr %s19, 32
          %s5926 = smul.addr %s5925, 128
          %s5927 = scalar_lea.hbm %s5, %s5926
          %s5928 = sshll.u32 %s5918, 4
          %s5929 = int_to_ptr.vmem [resolvable:$true] %s5928
          %5934 = dma.vmem_to_hbm [thread:$0]  %s5929, 4096, %s5927, %s5915, 128, 128, 8
        $region44: #{tpu_custom_call.1} parent=39 // pred_fallthru
          _
      $region40: #{tpu_custom_call.1} parent=5 // pred_fallthru
        _
      %p5935 = scmp.le.s32.totalorder 2, %s14
      // Predicated region
      $region45: #{tpu_custom_call.1} parent=5 // pred_check
        %p5936 = pneg %p5935
      $region46: #{tpu_custom_call.1} parent=5 // pred_check_branch
        %5938 = sbr.rel (%p5936) target = $region48
      $region47: #{tpu_custom_call.1} parent=5 // pred_region
        %s5939 = ssub.s32 %s14, 2
        // Predicated region
        $region49: #{tpu_custom_call.1} parent=47 // pred_check
          %p5940 = pneg %p153
        $region50: #{tpu_custom_call.1} parent=47 // pred_check_branch
          %5942 = sbr.rel (%p5940) target = $region52
        $region51: #{tpu_custom_call.1} parent=47 // pred_region
          %s5943 = sand.u32 %s138, 1
          %s5944 = scalar_lea.sflag [#allocation4], %s5943
          %s5945 = sand.u32 %s138, 1
          %s5946 = smul.addr %s5945, 256
          %s5947 = scalar_lea.vmem [#allocation3], %s5946
          %5948 = dma.done %s5944, 4096
        $region52: #{tpu_custom_call.1} parent=47 // pred_fallthru
          _
      $region48: #{tpu_custom_call.1} parent=5 // pred_fallthru
        _
    $region6: #{tpu_custom_call.1} parent=1 // loop_footer
      %s18 = sadd.s32 1, %s14
    $region7: #{tpu_custom_call.1} parent=1 // loop_footer_branch
      %13 = sbr.rel target = $region3
    $region8: #{tpu_custom_call.1} parent=1 // loop_exit
      _
    %5949 = vsyncpa [#allocation4], 1
    %s5950 = scalar_lea.sflag [#allocation4], 1
    %5951 = vsyncpa %s5950, 1

</llo_original>
